<compile_context>
chip_gen: v5e
topology: v5e:2x2
jax: 0.10.0
libtpu: 0.0.40
codegen_flags: <defaults>
</compile_context>

<pallas_src>
import functools

import jax
import jax.numpy as jnp
from jax import lax
from jax.experimental import pallas as pl
from jax.experimental.pallas import tpu as pltpu

# ----------------------------------------------------------------------------
# Configuration (mirrors PointNet2SSGSeg.__init__ defaults, small spatial size)
# ----------------------------------------------------------------------------
C_IN = 3            # extra feature channels: pointcloud is (B, N, 3 + C_IN)
K_CLASSES = 13
K_PAD = 128         # lane-dense classifier output width (sliced to K_CLASSES)
USE_XYZ = True
FC = 128
NPOINTS = [32, 16, 8, 4]       # args['npoints'] (hierarchical downsampling)
NSAMPLES = [8, 8, 8, 8]        # args['nsamples'] (small for the test shapes)
SA_MLPS = [[C_IN, 32, 32, 64], [64, 64, 64, 128],
           [128, 128, 128, 256], [256, 256, 256, 512]]
FP_MLPS = [[128 + C_IN, 128, 128, 128], [256 + 64, 256, 128],
           [256 + 128, 256, 256], [512 + 256, 256, 256]]
BN_EPS = 1e-5
MAX_TILE = 256      # cap on the point-tile per grid step (VMEM head-room)

# TODO(synk): PAConv (weight-bank + ScoreNet) SA path not implemented; the
#             standard shared-MLP PointNet++ SA path is used
#             (== pointnet2_paconv=[False]*8).
# TODO(synk): nn.Dropout in the FC head is treated as eval-mode identity.
# TODO(synk): kNN grouping replaces the CUDA ball-query of the reference SA
#             modules (same as the previous version).


def _choose_tile(total, max_tile=MAX_TILE):
    """Largest tile that divides `total`, is sublane-friendly (multiple of 8
    or == total), is <= max_tile, and yields >= 2 grid steps when possible
    (so both v7x TensorCores get work)."""
    cands = [t for t in range(1, total + 1)
             if total % t == 0 and t <= max_tile and (t % 8 == 0 or t == total)]
    if not cands:
        return total
    two_step = [t for t in cands if total // t >= 2]
    return max(two_step) if two_step else max(cands)


# ----------------------------------------------------------------------------
# Pallas kernels (hot path)
# ----------------------------------------------------------------------------
def _mlp_chain_kernel(*refs, n_layers, relu_flags):
    """Fused chain of (matmul + folded-BN shift [+ ReLU]) layers, 2D input.

    refs = (x_ref, w_0..w_{n-1}, b_0..b_{n-1}, o_ref); all intermediates stay
    in VMEM / vregs.
    """
    x_ref = refs[0]
    w_refs = refs[1:1 + n_layers]
    b_refs = refs[1 + n_layers:1 + 2 * n_layers]
    o_ref = refs[1 + 2 * n_layers]

    x = x_ref[...]
    for w_ref, b_ref, relu in zip(w_refs, b_refs, relu_flags):
        x = jnp.dot(x, w_ref[...], preferred_element_type=jnp.float32)
        x = x + b_ref[...]
        if relu:
            x = jnp.maximum(x, 0.0)
    o_ref[...] = x.astype(o_ref.dtype)


def _sa_chain_kernel(*refs, n_layers):
    """Fused SA block: shared-MLP chain over (tile_P, S, Cin) grouped points
    followed by the neighbour max-pool, all in one kernel.

    refs = (grouped_ref, w_0..w_{n-1}, b_0..b_{n-1}, o_ref)
    grouped_ref: (tile_P, S, Cin)   o_ref: (tile_P, Cout)
    """
    x_ref = refs[0]
    w_refs = refs[1:1 + n_layers]
    b_refs = refs[1 + n_layers:1 + 2 * n_layers]
    o_ref = refs[1 + 2 * n_layers]

    tp, s, cin = x_ref.shape
    x = x_ref[...].reshape(tp * s, cin)
    for w_ref, b_ref in zip(w_refs, b_refs):
        x = jnp.dot(x, w_ref[...], preferred_element_type=jnp.float32)
        x = jnp.maximum(x + b_ref[...], 0.0)
    cout = x.shape[-1]
    # Neighbour max-pool fused in VMEM (the (P, S, C) activation never hits HBM).
    o_ref[...] = jnp.max(x.reshape(tp, s, cout), axis=1).astype(o_ref.dtype)


# ----------------------------------------------------------------------------
# Pallas wrappers
# ----------------------------------------------------------------------------
def fused_pointwise_mlp(x, layers, *, relu_last=True):
    """x: (M, Cin).  layers: list of (w_folded, shift(1,Cout)).  One pallas_call
    for the whole chain; returns (M, Cout_last)."""
    M, cin = x.shape
    n_layers = len(layers)
    ws = [w for (w, _) in layers]
    bs = [b for (_, b) in layers]
    cout = ws[-1].shape[1]
    tile_m = _choose_tile(M)
    relu_flags = tuple([True] * (n_layers - 1) + [bool(relu_last)])

    in_specs = [pl.BlockSpec((tile_m, cin), lambda i: (i, 0))]
    in_specs += [pl.BlockSpec(w.shape, lambda i: (0, 0)) for w in ws]
    in_specs += [pl.BlockSpec(b.shape, lambda i: (0, 0)) for b in bs]

    return pl.pallas_call(
        functools.partial(_mlp_chain_kernel, n_layers=n_layers,
                          relu_flags=relu_flags),
        out_shape=jax.ShapeDtypeStruct((M, cout), jnp.float32),
        grid=(M // tile_m,),
        in_specs=in_specs,
        out_specs=pl.BlockSpec((tile_m, cout), lambda i: (i, 0)),
        compiler_params=pltpu.CompilerParams(dimension_semantics=("parallel",)),
    )(x, *ws, *bs)


def fused_sa_mlp_maxpool(grouped, layers):
    """grouped: (P, S, Cin) centred/concatenated neighbourhoods.
    Returns (P, Cout) = max_over_S(MLP_chain(grouped)) in one pallas_call."""
    P, S, cin = grouped.shape
    n_layers = len(layers)
    ws = [w for (w, _) in layers]
    bs = [b for (_, b) in layers]
    cout = ws[-1].shape[1]
    tile_p = _choose_tile(P)

    in_specs = [pl.BlockSpec((tile_p, S, cin), lambda i: (i, 0, 0))]
    in_specs += [pl.BlockSpec(w.shape, lambda i: (0, 0)) for w in ws]
    in_specs += [pl.BlockSpec(b.shape, lambda i: (0, 0)) for b in bs]

    return pl.pallas_call(
        functools.partial(_sa_chain_kernel, n_layers=n_layers),
        out_shape=jax.ShapeDtypeStruct((P, cout), jnp.float32),
        grid=(P // tile_p,),
        in_specs=in_specs,
        out_specs=pl.BlockSpec((tile_p, cout), lambda i: (i, 0)),
        compiler_params=pltpu.CompilerParams(dimension_semantics=("parallel",)),
    )(grouped, *ws, *bs)


# ----------------------------------------------------------------------------
# Plain-JAX glue: sampling / grouping / interpolation indices
# TODO(synk): FPS / kNN / gathers stay in plain JAX (they dominate at toy
#             sizes); a scalar-prefetch Pallas gather kernel is future work.
# ----------------------------------------------------------------------------
def _fps_single(xyz, npoint):
    """Furthest point sampling for one cloud. xyz: (N, 3) -> (npoint,) int32."""
    N = xyz.shape[0]

    def body(i, state):
        dists, idxs = state
        last = xyz[idxs[i - 1]]
        d = jnp.sum((xyz - last) ** 2, axis=-1)
        dists = jnp.minimum(dists, d)
        idxs = idxs.at[i].set(jnp.argmax(dists).astype(jnp.int32))
        return dists, idxs

    dists = jnp.full((N,), 1e10, jnp.float32)
    idxs = jnp.zeros((npoint,), jnp.int32)
    _, idxs = lax.fori_loop(1, npoint, body, (dists, idxs))
    return idxs


def gather_points(x, idx):
    """x: (B, N, C), idx: (B, S) -> (B, S, C)."""
    return jnp.take_along_axis(x, idx[..., None], axis=1)


def gather_groups(x, idx):
    """x: (B, N, C), idx: (B, S, K) -> (B, S, K, C)."""
    B, S, K = idx.shape
    g = jnp.take_along_axis(x, idx.reshape(B, S * K)[..., None], axis=1)
    return g.reshape(B, S, K, x.shape[-1])


def knn_group(query_xyz, xyz, nsample):
    """query: (B, S, 3), xyz: (B, N, 3) -> (B, S, nsample) neighbour indices."""
    d = jnp.sum((query_xyz[:, :, None, :] - xyz[:, None, :, :]) ** 2, axis=-1)
    _, idx = lax.top_k(-d, nsample)
    return idx


def three_interpolate(unknown, known, known_feats_cl):
    """Inverse-distance weighted 3-NN feature interpolation (channels-last)."""
    d = jnp.sum((unknown[:, :, None, :] - known[:, None, :, :]) ** 2, axis=-1)
    neg_d, idx = lax.top_k(-d, 3)
    dist = -neg_d
    w = 1.0 / (dist + 1e-8)
    w = w / jnp.sum(w, axis=-1, keepdims=True)            # (B, n, 3)
    gathered = gather_groups(known_feats_cl, idx)          # (B, n, 3, C)
    return jnp.sum(gathered * w[..., None], axis=2)        # (B, n, C)


# ----------------------------------------------------------------------------
# Module building blocks
# ----------------------------------------------------------------------------
def sa_module(xyz, feats_cl, npoint, nsample, layers):
    """Set-abstraction (SSG): FPS -> kNN group -> fused (shared MLP + max pool)."""
    B = xyz.shape[0]
    fps_idx = jax.vmap(lambda p: _fps_single(p, npoint))(xyz)          # (B, np)
    new_xyz = gather_points(xyz, fps_idx)                              # (B, np, 3)
    idx = knn_group(new_xyz, xyz, nsample)                             # (B, np, ns)
    grouped_xyz = gather_groups(xyz, idx) - new_xyz[:, :, None, :]     # (B, np, ns, 3)
    if feats_cl is not None:
        grouped_feats = gather_groups(feats_cl, idx)
        grouped = (jnp.concatenate([grouped_xyz, grouped_feats], axis=-1)
                   if USE_XYZ else grouped_feats)
    else:
        grouped = grouped_xyz
    P = B * npoint
    grouped = grouped.reshape(P, nsample, grouped.shape[-1])
    pooled = fused_sa_mlp_maxpool(grouped, layers)                     # (P, Cout)
    return new_xyz, pooled.reshape(B, npoint, -1)


def fp_module(unknown_xyz, known_xyz, unknown_feats_cl, known_feats_cl, layers):
    """Feature propagation: 3-NN interpolate -> concat skip -> fused shared MLP."""
    interp = three_interpolate(unknown_xyz, known_xyz, known_feats_cl)
    if unknown_feats_cl is not None:
        newf = jnp.concatenate([interp, unknown_feats_cl], axis=-1)
    else:
        newf = interp
    B, n, C = newf.shape
    x = fused_pointwise_mlp(newf.reshape(B * n, C), layers, relu_last=True)
    return x.reshape(B, n, -1)


# ----------------------------------------------------------------------------
# Parameters (deterministic synthetic init, BN folded into weights, eval mode)
# ----------------------------------------------------------------------------
def _make_layer(key, cin, cout, *, bn=True, bias=False):
    k_w, k_g, k_b = jax.random.split(key, 3)
    w = jax.random.normal(k_w, (cin, cout), jnp.float32) / jnp.sqrt(float(cin))
    if bn:
        gamma = 1.0 + 0.1 * jax.random.normal(k_g, (cout,), jnp.float32)
        beta = 0.05 * jax.random.normal(k_b, (cout,), jnp.float32)
        run_mean = jnp.zeros((cout,), jnp.float32)
        run_var = jnp.ones((cout,), jnp.float32)
        scale = gamma / jnp.sqrt(run_var + BN_EPS)
        shift = beta - run_mean * scale
        w = w * scale[None, :]                      # fold BN scale into weights
    else:
        shift = (0.01 * jax.random.normal(k_b, (cout,), jnp.float32)
                 if bias else jnp.zeros((cout,), jnp.float32))
    return (w, shift.reshape(1, cout))


def build_params(key):
    params = {"sa": [], "fp": [], "fc": []}
    for mlp in SA_MLPS:
        spec = [mlp[0] + (3 if USE_XYZ else 0)] + list(mlp[1:])
        layers = []
        for cin, cout in zip(spec[:-1], spec[1:]):
            key, sub = jax.random.split(key)
            layers.append(_make_layer(sub, cin, cout, bn=True))
        params["sa"].append(layers)
    for mlp in FP_MLPS:
        layers = []
        for cin, cout in zip(mlp[:-1], mlp[1:]):
            key, sub = jax.random.split(key)
            layers.append(_make_layer(sub, cin, cout, bn=True))
        params["fp"].append(layers)
    key, s1 = jax.random.split(key)
    key, s2 = jax.random.split(key)
    fc1 = _make_layer(s1, FC, FC, bn=True)
    w2, b2 = _make_layer(s2, FC, K_CLASSES, bn=False, bias=True)
    # Lane-dense classifier: pad output columns to 128 (wrapper slices to 13).
    w2 = jnp.pad(w2, ((0, 0), (0, K_PAD - K_CLASSES)))
    b2 = jnp.pad(b2, ((0, 0), (0, K_PAD - K_CLASSES)))
    params["fc"] = [fc1, (w2, b2)]
    return params


# ----------------------------------------------------------------------------
# Full forward (mirrors PointNet2SSGSeg.forward)
# ----------------------------------------------------------------------------
@jax.jit
def pointnet2_ssg_seg_forward(pointcloud, params):
    # _break_up_pc
    xyz = pointcloud[..., 0:3]                                         # (B, N, 3)
    feats = pointcloud[..., 3:] if pointcloud.shape[-1] > 3 else None  # (B, N, c)

    l_xyz, l_feats = [xyz], [feats]
    for i in range(4):
        nx, nf = sa_module(l_xyz[i], l_feats[i], NPOINTS[i], NSAMPLES[i],
                           params["sa"][i])
        l_xyz.append(nx)
        l_feats.append(nf)

    for i in range(-1, -5, -1):
        l_feats[i - 1] = fp_module(l_xyz[i - 1], l_xyz[i],
                                   l_feats[i - 1], l_feats[i],
                                   params["fp"][i])

    # FC head: Conv2d(fc, fc, bn) -> Dropout (identity) -> Conv2d(fc, k),
    # fused into a single pallas_call with a lane-dense (128-wide) output.
    B, N, C = l_feats[0].shape
    x = fused_pointwise_mlp(l_feats[0].reshape(B * N, C), params["fc"],
                            relu_last=False)
    x = x[:, :K_CLASSES]
    out = x.reshape(B, N, K_CLASSES)
    # back to PyTorch NCHW: (B, k, N, 1)
    return jnp.transpose(out, (0, 2, 1))[..., None]


# ----------------------------------------------------------------------------
if __name__ == "__main__":
    key = jax.random.PRNGKey(0)
    k_pc, k_params = jax.random.split(key)

    B, N = 2, 64
    pointcloud = jax.random.normal(k_pc, (B, N, 3 + C_IN), jnp.float32)
    params = build_params(k_params)

    out = pointnet2_ssg_seg_forward(pointcloud, params)
    out = jax.block_until_ready(out)

    assert out.shape == (B, K_CLASSES, N, 1), out.shape
    assert jnp.all(jnp.isfinite(out))
    print("KERNEL_OK")
</pallas_src>

<mosaic_0001>
module attributes {stable_mosaic.version = 11 : i64} {
  func.func @_sa_chain_kernel(%arg0: i32, %arg1: memref<32x8x6xf32, #tpu.memory_space<vmem>>, %arg2: memref<6x32xf32, #tpu.memory_space<vmem>>, %arg3: memref<32x32xf32, #tpu.memory_space<vmem>>, %arg4: memref<32x64xf32, #tpu.memory_space<vmem>>, %arg5: memref<1x32xf32, #tpu.memory_space<vmem>>, %arg6: memref<1x32xf32, #tpu.memory_space<vmem>>, %arg7: memref<1x64xf32, #tpu.memory_space<vmem>>, %arg8: memref<32x64xf32, #tpu.memory_space<vmem>>) attributes {dimension_semantics = [#tpu.dimension_semantics<parallel>], iteration_bounds = array<i64: 2>, scalar_prefetch = 0 : i64, scratch_operands = 0 : i64, tpu.core_type = #tpu.core_type<tc>, window_params = [{transform_indices = @transform_0, window_bounds = array<i64: 32, 8, 6>}, {pipeline_mode = #tpu.pipeline_mode<synchronous>, transform_indices = @transform_1, window_bounds = array<i64: 6, 32>}, {pipeline_mode = #tpu.pipeline_mode<synchronous>, transform_indices = @transform_2, window_bounds = array<i64: 32, 32>}, {pipeline_mode = #tpu.pipeline_mode<synchronous>, transform_indices = @transform_3, window_bounds = array<i64: 32, 64>}, {pipeline_mode = #tpu.pipeline_mode<synchronous>, transform_indices = @transform_4, window_bounds = array<i64: 1, 32>}, {pipeline_mode = #tpu.pipeline_mode<synchronous>, transform_indices = @transform_5, window_bounds = array<i64: 1, 32>}, {pipeline_mode = #tpu.pipeline_mode<synchronous>, transform_indices = @transform_6, window_bounds = array<i64: 1, 64>}, {transform_indices = @transform_7, window_bounds = array<i64: 32, 64>}]} {
    %c0 = arith.constant 0 : index
    %c0_0 = arith.constant 0 : index
    %c0_1 = arith.constant 0 : index
    %0 = vector.load %arg1[%c0, %c0_0, %c0_1] : memref<32x8x6xf32, #tpu.memory_space<vmem>>, vector<32x8x6xf32>
    %1 = vector.shape_cast %0 : vector<32x8x6xf32> to vector<256x6xf32>
    %c0_2 = arith.constant 0 : index
    %c0_3 = arith.constant 0 : index
    %2 = vector.load %arg2[%c0_2, %c0_3] : memref<6x32xf32, #tpu.memory_space<vmem>>, vector<6x32xf32>
    %cst = arith.constant dense<0.000000e+00> : vector<256x32xf32>
    %3 = tpu.matmul %1, %2, %cst {dimension_numbers = #tpu.dot_dimension_numbers<[1], [0], [0], [1], [0, 0, 1, 1], [], []>} : vector<256x6xf32>, vector<6x32xf32>, vector<256x32xf32> -> vector<256x32xf32>
    %c0_4 = arith.constant 0 : index
    %c0_5 = arith.constant 0 : index
    %4 = vector.load %arg5[%c0_4, %c0_5] : memref<1x32xf32, #tpu.memory_space<vmem>>, vector<1x32xf32>
    %5 = vector.broadcast %4 : vector<1x32xf32> to vector<256x32xf32>
    %6 = arith.addf %3, %5 : vector<256x32xf32>
    %cst_6 = arith.constant 0.000000e+00 : f32
    %7 = vector.broadcast %cst_6 : f32 to vector<256x32xf32>
    %8 = arith.maximumf %6, %7 : vector<256x32xf32>
    %c0_7 = arith.constant 0 : index
    %c0_8 = arith.constant 0 : index
    %9 = vector.load %arg3[%c0_7, %c0_8] : memref<32x32xf32, #tpu.memory_space<vmem>>, vector<32x32xf32>
    %cst_9 = arith.constant dense<0.000000e+00> : vector<256x32xf32>
    %10 = tpu.matmul %8, %9, %cst_9 {dimension_numbers = #tpu.dot_dimension_numbers<[1], [0], [0], [1], [0, 0, 1, 1], [], []>} : vector<256x32xf32>, vector<32x32xf32>, vector<256x32xf32> -> vector<256x32xf32>
    %c0_10 = arith.constant 0 : index
    %c0_11 = arith.constant 0 : index
    %11 = vector.load %arg6[%c0_10, %c0_11] : memref<1x32xf32, #tpu.memory_space<vmem>>, vector<1x32xf32>
    %12 = vector.broadcast %11 : vector<1x32xf32> to vector<256x32xf32>
    %13 = arith.addf %10, %12 : vector<256x32xf32>
    %cst_12 = arith.constant 0.000000e+00 : f32
    %14 = vector.broadcast %cst_12 : f32 to vector<256x32xf32>
    %15 = arith.maximumf %13, %14 : vector<256x32xf32>
    %c0_13 = arith.constant 0 : index
    %c0_14 = arith.constant 0 : index
    %16 = vector.load %arg4[%c0_13, %c0_14] : memref<32x64xf32, #tpu.memory_space<vmem>>, vector<32x64xf32>
    %cst_15 = arith.constant dense<0.000000e+00> : vector<256x64xf32>
    %17 = tpu.matmul %15, %16, %cst_15 {dimension_numbers = #tpu.dot_dimension_numbers<[1], [0], [0], [1], [0, 0, 1, 1], [], []>} : vector<256x32xf32>, vector<32x64xf32>, vector<256x64xf32> -> vector<256x64xf32>
    %c0_16 = arith.constant 0 : index
    %c0_17 = arith.constant 0 : index
    %18 = vector.load %arg7[%c0_16, %c0_17] : memref<1x64xf32, #tpu.memory_space<vmem>>, vector<1x64xf32>
    %19 = vector.broadcast %18 : vector<1x64xf32> to vector<256x64xf32>
    %20 = arith.addf %17, %19 : vector<256x64xf32>
    %cst_18 = arith.constant 0.000000e+00 : f32
    %21 = vector.broadcast %cst_18 : f32 to vector<256x64xf32>
    %22 = arith.maximumf %20, %21 : vector<256x64xf32>
    %23 = vector.shape_cast %22 : vector<256x64xf32> to vector<32x8x64xf32>
    %cst_19 = arith.constant dense<0xFF800000> : vector<32x64xf32>
    %24 = vector.multi_reduction <maximumf>, %23, %cst_19 [1] : vector<32x8x64xf32> to vector<32x64xf32>
    %c0_20 = arith.constant 0 : index
    %c0_21 = arith.constant 0 : index
    %25 = vector.load %arg8[%c0_20, %c0_21] : memref<32x64xf32, #tpu.memory_space<vmem>>, vector<32x64xf32>
    tpu.vector_store %arg8[%c0_20, %c0_21], %24 {strides = array<i32>} : memref<32x64xf32, #tpu.memory_space<vmem>>, vector<32x64xf32>,
    return
  }
  func.func @transform_0(%arg0: i32) -> (i32, i32, i32) {
    %c0_i32 = arith.constant 0 : i32
    %c0_i32_0 = arith.constant 0 : i32
    %c0_i32_1 = arith.constant 0 : i32
    return %arg0, %c0_i32, %c0_i32_0 : i32, i32, i32
  }
  func.func @transform_1(%arg0: i32) -> (i32, i32) {
    %c0_i32 = arith.constant 0 : i32
    %c0_i32_0 = arith.constant 0 : i32
    %c0_i32_1 = arith.constant 0 : i32
    return %c0_i32, %c0_i32_0 : i32, i32
  }
  func.func @transform_2(%arg0: i32) -> (i32, i32) {
    %c0_i32 = arith.constant 0 : i32
    %c0_i32_0 = arith.constant 0 : i32
    %c0_i32_1 = arith.constant 0 : i32
    return %c0_i32, %c0_i32_0 : i32, i32
  }
  func.func @transform_3(%arg0: i32) -> (i32, i32) {
    %c0_i32 = arith.constant 0 : i32
    %c0_i32_0 = arith.constant 0 : i32
    %c0_i32_1 = arith.constant 0 : i32
    return %c0_i32, %c0_i32_0 : i32, i32
  }
  func.func @transform_4(%arg0: i32) -> (i32, i32) {
    %c0_i32 = arith.constant 0 : i32
    %c0_i32_0 = arith.constant 0 : i32
    %c0_i32_1 = arith.constant 0 : i32
    return %c0_i32, %c0_i32_0 : i32, i32
  }
  func.func @transform_5(%arg0: i32) -> (i32, i32) {
    %c0_i32 = arith.constant 0 : i32
    %c0_i32_0 = arith.constant 0 : i32
    %c0_i32_1 = arith.constant 0 : i32
    return %c0_i32, %c0_i32_0 : i32, i32
  }
  func.func @transform_6(%arg0: i32) -> (i32, i32) {
    %c0_i32 = arith.constant 0 : i32
    %c0_i32_0 = arith.constant 0 : i32
    %c0_i32_1 = arith.constant 0 : i32
    return %c0_i32, %c0_i32_0 : i32, i32
  }
  func.func @transform_7(%arg0: i32) -> (i32, i32) {
    %c0_i32 = arith.constant 0 : i32
    %c0_i32_0 = arith.constant 0 : i32
    return %arg0, %c0_i32 : i32, i32
  }
}

module attributes {stable_mosaic.version = 11 : i64} {
  func.func @_sa_chain_kernel(%arg0: i32, %arg1: memref<16x8x67xf32, #tpu.memory_space<vmem>>, %arg2: memref<67x64xf32, #tpu.memory_space<vmem>>, %arg3: memref<64x64xf32, #tpu.memory_space<vmem>>, %arg4: memref<64x128xf32, #tpu.memory_space<vmem>>, %arg5: memref<1x64xf32, #tpu.memory_space<vmem>>, %arg6: memref<1x64xf32, #tpu.memory_space<vmem>>, %arg7: memref<1x128xf32, #tpu.memory_space<vmem>>, %arg8: memref<16x128xf32, #tpu.memory_space<vmem>>) attributes {dimension_semantics = [#tpu.dimension_semantics<parallel>], iteration_bounds = array<i64: 2>, scalar_prefetch = 0 : i64, scratch_operands = 0 : i64, tpu.core_type = #tpu.core_type<tc>, window_params = [{transform_indices = @transform_0, window_bounds = array<i64: 16, 8, 67>}, {pipeline_mode = #tpu.pipeline_mode<synchronous>, transform_indices = @transform_1, window_bounds = array<i64: 67, 64>}, {pipeline_mode = #tpu.pipeline_mode<synchronous>, transform_indices = @transform_2, window_bounds = array<i64: 64, 64>}, {pipeline_mode = #tpu.pipeline_mode<synchronous>, transform_indices = @transform_3, window_bounds = array<i64: 64, 128>}, {pipeline_mode = #tpu.pipeline_mode<synchronous>, transform_indices = @transform_4, window_bounds = array<i64: 1, 64>}, {pipeline_mode = #tpu.pipeline_mode<synchronous>, transform_indices = @transform_5, window_bounds = array<i64: 1, 64>}, {pipeline_mode = #tpu.pipeline_mode<synchronous>, transform_indices = @transform_6, window_bounds = array<i64: 1, 128>}, {transform_indices = @transform_7, window_bounds = array<i64: 16, 128>}]} {
    %c0 = arith.constant 0 : index
    %c0_0 = arith.constant 0 : index
    %c0_1 = arith.constant 0 : index
    %0 = vector.load %arg1[%c0, %c0_0, %c0_1] : memref<16x8x67xf32, #tpu.memory_space<vmem>>, vector<16x8x67xf32>
    %1 = vector.shape_cast %0 : vector<16x8x67xf32> to vector<128x67xf32>
    %c0_2 = arith.constant 0 : index
    %c0_3 = arith.constant 0 : index
    %2 = vector.load %arg2[%c0_2, %c0_3] : memref<67x64xf32, #tpu.memory_space<vmem>>, vector<67x64xf32>
    %cst = arith.constant dense<0.000000e+00> : vector<128x64xf32>
    %3 = tpu.matmul %1, %2, %cst {dimension_numbers = #tpu.dot_dimension_numbers<[1], [0], [0], [1], [0, 0, 1, 1], [], []>} : vector<128x67xf32>, vector<67x64xf32>, vector<128x64xf32> -> vector<128x64xf32>
    %c0_4 = arith.constant 0 : index
    %c0_5 = arith.constant 0 : index
    %4 = vector.load %arg5[%c0_4, %c0_5] : memref<1x64xf32, #tpu.memory_space<vmem>>, vector<1x64xf32>
    %5 = vector.broadcast %4 : vector<1x64xf32> to vector<128x64xf32>
    %6 = arith.addf %3, %5 : vector<128x64xf32>
    %cst_6 = arith.constant 0.000000e+00 : f32
    %7 = vector.broadcast %cst_6 : f32 to vector<128x64xf32>
    %8 = arith.maximumf %6, %7 : vector<128x64xf32>
    %c0_7 = arith.constant 0 : index
    %c0_8 = arith.constant 0 : index
    %9 = vector.load %arg3[%c0_7, %c0_8] : memref<64x64xf32, #tpu.memory_space<vmem>>, vector<64x64xf32>
    %cst_9 = arith.constant dense<0.000000e+00> : vector<128x64xf32>
    %10 = tpu.matmul %8, %9, %cst_9 {dimension_numbers = #tpu.dot_dimension_numbers<[1], [0], [0], [1], [0, 0, 1, 1], [], []>} : vector<128x64xf32>, vector<64x64xf32>, vector<128x64xf32> -> vector<128x64xf32>
    %c0_10 = arith.constant 0 : index
    %c0_11 = arith.constant 0 : index
    %11 = vector.load %arg6[%c0_10, %c0_11] : memref<1x64xf32, #tpu.memory_space<vmem>>, vector<1x64xf32>
    %12 = vector.broadcast %11 : vector<1x64xf32> to vector<128x64xf32>
    %13 = arith.addf %10, %12 : vector<128x64xf32>
    %cst_12 = arith.constant 0.000000e+00 : f32
    %14 = vector.broadcast %cst_12 : f32 to vector<128x64xf32>
    %15 = arith.maximumf %13, %14 : vector<128x64xf32>
    %c0_13 = arith.constant 0 : index
    %c0_14 = arith.constant 0 : index
    %16 = vector.load %arg4[%c0_13, %c0_14] : memref<64x128xf32, #tpu.memory_space<vmem>>, vector<64x128xf32>
    %cst_15 = arith.constant dense<0.000000e+00> : vector<128x128xf32>
    %17 = tpu.matmul %15, %16, %cst_15 {dimension_numbers = #tpu.dot_dimension_numbers<[1], [0], [0], [1], [0, 0, 1, 1], [], []>} : vector<128x64xf32>, vector<64x128xf32>, vector<128x128xf32> -> vector<128x128xf32>
    %c0_16 = arith.constant 0 : index
    %c0_17 = arith.constant 0 : index
    %18 = vector.load %arg7[%c0_16, %c0_17] : memref<1x128xf32, #tpu.memory_space<vmem>>, vector<1x128xf32>
    %19 = vector.broadcast %18 : vector<1x128xf32> to vector<128x128xf32>
    %20 = arith.addf %17, %19 : vector<128x128xf32>
    %cst_18 = arith.constant 0.000000e+00 : f32
    %21 = vector.broadcast %cst_18 : f32 to vector<128x128xf32>
    %22 = arith.maximumf %20, %21 : vector<128x128xf32>
    %23 = vector.shape_cast %22 : vector<128x128xf32> to vector<16x8x128xf32>
    %cst_19 = arith.constant dense<0xFF800000> : vector<16x128xf32>
    %24 = vector.multi_reduction <maximumf>, %23, %cst_19 [1] : vector<16x8x128xf32> to vector<16x128xf32>
    %c0_20 = arith.constant 0 : index
    %c0_21 = arith.constant 0 : index
    %25 = vector.load %arg8[%c0_20, %c0_21] : memref<16x128xf32, #tpu.memory_space<vmem>>, vector<16x128xf32>
    tpu.vector_store %arg8[%c0_20, %c0_21], %24 {strides = array<i32>} : memref<16x128xf32, #tpu.memory_space<vmem>>, vector<16x128xf32>,
    return
  }
  func.func @transform_0(%arg0: i32) -> (i32, i32, i32) {
    %c0_i32 = arith.constant 0 : i32
    %c0_i32_0 = arith.constant 0 : i32
    %c0_i32_1 = arith.constant 0 : i32
    return %arg0, %c0_i32, %c0_i32_0 : i32, i32, i32
  }
  func.func @transform_1(%arg0: i32) -> (i32, i32) {
    %c0_i32 = arith.constant 0 : i32
    %c0_i32_0 = arith.constant 0 : i32
    %c0_i32_1 = arith.constant 0 : i32
    return %c0_i32, %c0_i32_0 : i32, i32
  }
  func.func @transform_2(%arg0: i32) -> (i32, i32) {
    %c0_i32 = arith.constant 0 : i32
    %c0_i32_0 = arith.constant 0 : i32
    %c0_i32_1 = arith.constant 0 : i32
    return %c0_i32, %c0_i32_0 : i32, i32
  }
  func.func @transform_3(%arg0: i32) -> (i32, i32) {
    %c0_i32 = arith.constant 0 : i32
    %c0_i32_0 = arith.constant 0 : i32
    %c0_i32_1 = arith.constant 0 : i32
    return %c0_i32, %c0_i32_0 : i32, i32
  }
  func.func @transform_4(%arg0: i32) -> (i32, i32) {
    %c0_i32 = arith.constant 0 : i32
    %c0_i32_0 = arith.constant 0 : i32
    %c0_i32_1 = arith.constant 0 : i32
    return %c0_i32, %c0_i32_0 : i32, i32
  }
  func.func @transform_5(%arg0: i32) -> (i32, i32) {
    %c0_i32 = arith.constant 0 : i32
    %c0_i32_0 = arith.constant 0 : i32
    %c0_i32_1 = arith.constant 0 : i32
    return %c0_i32, %c0_i32_0 : i32, i32
  }
  func.func @transform_6(%arg0: i32) -> (i32, i32) {
    %c0_i32 = arith.constant 0 : i32
    %c0_i32_0 = arith.constant 0 : i32
    %c0_i32_1 = arith.constant 0 : i32
    return %c0_i32, %c0_i32_0 : i32, i32
  }
  func.func @transform_7(%arg0: i32) -> (i32, i32) {
    %c0_i32 = arith.constant 0 : i32
    %c0_i32_0 = arith.constant 0 : i32
    return %arg0, %c0_i32 : i32, i32
  }
}

module attributes {stable_mosaic.version = 11 : i64} {
  func.func @_sa_chain_kernel(%arg0: i32, %arg1: memref<8x8x131xf32, #tpu.memory_space<vmem>>, %arg2: memref<131x128xf32, #tpu.memory_space<vmem>>, %arg3: memref<128x128xf32, #tpu.memory_space<vmem>>, %arg4: memref<128x256xf32, #tpu.memory_space<vmem>>, %arg5: memref<1x128xf32, #tpu.memory_space<vmem>>, %arg6: memref<1x128xf32, #tpu.memory_space<vmem>>, %arg7: memref<1x256xf32, #tpu.memory_space<vmem>>, %arg8: memref<8x256xf32, #tpu.memory_space<vmem>>) attributes {dimension_semantics = [#tpu.dimension_semantics<parallel>], iteration_bounds = array<i64: 2>, scalar_prefetch = 0 : i64, scratch_operands = 0 : i64, tpu.core_type = #tpu.core_type<tc>, window_params = [{transform_indices = @transform_0, window_bounds = array<i64: 8, 8, 131>}, {pipeline_mode = #tpu.pipeline_mode<synchronous>, transform_indices = @transform_1, window_bounds = array<i64: 131, 128>}, {pipeline_mode = #tpu.pipeline_mode<synchronous>, transform_indices = @transform_2, window_bounds = array<i64: 128, 128>}, {pipeline_mode = #tpu.pipeline_mode<synchronous>, transform_indices = @transform_3, window_bounds = array<i64: 128, 256>}, {pipeline_mode = #tpu.pipeline_mode<synchronous>, transform_indices = @transform_4, window_bounds = array<i64: 1, 128>}, {pipeline_mode = #tpu.pipeline_mode<synchronous>, transform_indices = @transform_5, window_bounds = array<i64: 1, 128>}, {pipeline_mode = #tpu.pipeline_mode<synchronous>, transform_indices = @transform_6, window_bounds = array<i64: 1, 256>}, {transform_indices = @transform_7, window_bounds = array<i64: 8, 256>}]} {
    %c0 = arith.constant 0 : index
    %c0_0 = arith.constant 0 : index
    %c0_1 = arith.constant 0 : index
    %0 = vector.load %arg1[%c0, %c0_0, %c0_1] : memref<8x8x131xf32, #tpu.memory_space<vmem>>, vector<8x8x131xf32>
    %1 = vector.shape_cast %0 : vector<8x8x131xf32> to vector<64x131xf32>
    %c0_2 = arith.constant 0 : index
    %c0_3 = arith.constant 0 : index
    %2 = vector.load %arg2[%c0_2, %c0_3] : memref<131x128xf32, #tpu.memory_space<vmem>>, vector<131x128xf32>
    %cst = arith.constant dense<0.000000e+00> : vector<64x128xf32>
    %3 = tpu.matmul %1, %2, %cst {dimension_numbers = #tpu.dot_dimension_numbers<[1], [0], [0], [1], [0, 0, 1, 1], [], []>} : vector<64x131xf32>, vector<131x128xf32>, vector<64x128xf32> -> vector<64x128xf32>
    %c0_4 = arith.constant 0 : index
    %c0_5 = arith.constant 0 : index
    %4 = vector.load %arg5[%c0_4, %c0_5] : memref<1x128xf32, #tpu.memory_space<vmem>>, vector<1x128xf32>
    %5 = vector.broadcast %4 : vector<1x128xf32> to vector<64x128xf32>
    %6 = arith.addf %3, %5 : vector<64x128xf32>
    %cst_6 = arith.constant 0.000000e+00 : f32
    %7 = vector.broadcast %cst_6 : f32 to vector<64x128xf32>
    %8 = arith.maximumf %6, %7 : vector<64x128xf32>
    %c0_7 = arith.constant 0 : index
    %c0_8 = arith.constant 0 : index
    %9 = vector.load %arg3[%c0_7, %c0_8] : memref<128x128xf32, #tpu.memory_space<vmem>>, vector<128x128xf32>
    %cst_9 = arith.constant dense<0.000000e+00> : vector<64x128xf32>
    %10 = tpu.matmul %8, %9, %cst_9 {dimension_numbers = #tpu.dot_dimension_numbers<[1], [0], [0], [1], [0, 0, 1, 1], [], []>} : vector<64x128xf32>, vector<128x128xf32>, vector<64x128xf32> -> vector<64x128xf32>
    %c0_10 = arith.constant 0 : index
    %c0_11 = arith.constant 0 : index
    %11 = vector.load %arg6[%c0_10, %c0_11] : memref<1x128xf32, #tpu.memory_space<vmem>>, vector<1x128xf32>
    %12 = vector.broadcast %11 : vector<1x128xf32> to vector<64x128xf32>
    %13 = arith.addf %10, %12 : vector<64x128xf32>
    %cst_12 = arith.constant 0.000000e+00 : f32
    %14 = vector.broadcast %cst_12 : f32 to vector<64x128xf32>
    %15 = arith.maximumf %13, %14 : vector<64x128xf32>
    %c0_13 = arith.constant 0 : index
    %c0_14 = arith.constant 0 : index
    %16 = vector.load %arg4[%c0_13, %c0_14] : memref<128x256xf32, #tpu.memory_space<vmem>>, vector<128x256xf32>
    %cst_15 = arith.constant dense<0.000000e+00> : vector<64x256xf32>
    %17 = tpu.matmul %15, %16, %cst_15 {dimension_numbers = #tpu.dot_dimension_numbers<[1], [0], [0], [1], [0, 0, 1, 1], [], []>} : vector<64x128xf32>, vector<128x256xf32>, vector<64x256xf32> -> vector<64x256xf32>
    %c0_16 = arith.constant 0 : index
    %c0_17 = arith.constant 0 : index
    %18 = vector.load %arg7[%c0_16, %c0_17] : memref<1x256xf32, #tpu.memory_space<vmem>>, vector<1x256xf32>
    %19 = vector.broadcast %18 : vector<1x256xf32> to vector<64x256xf32>
    %20 = arith.addf %17, %19 : vector<64x256xf32>
    %cst_18 = arith.constant 0.000000e+00 : f32
    %21 = vector.broadcast %cst_18 : f32 to vector<64x256xf32>
    %22 = arith.maximumf %20, %21 : vector<64x256xf32>
    %23 = vector.shape_cast %22 : vector<64x256xf32> to vector<8x8x256xf32>
    %cst_19 = arith.constant dense<0xFF800000> : vector<8x256xf32>
    %24 = vector.multi_reduction <maximumf>, %23, %cst_19 [1] : vector<8x8x256xf32> to vector<8x256xf32>
    %c0_20 = arith.constant 0 : index
    %c0_21 = arith.constant 0 : index
    %25 = vector.load %arg8[%c0_20, %c0_21] : memref<8x256xf32, #tpu.memory_space<vmem>>, vector<8x256xf32>
    tpu.vector_store %arg8[%c0_20, %c0_21], %24 {strides = array<i32>} : memref<8x256xf32, #tpu.memory_space<vmem>>, vector<8x256xf32>,
    return
  }
  func.func @transform_0(%arg0: i32) -> (i32, i32, i32) {
    %c0_i32 = arith.constant 0 : i32
    %c0_i32_0 = arith.constant 0 : i32
    %c0_i32_1 = arith.constant 0 : i32
    return %arg0, %c0_i32, %c0_i32_0 : i32, i32, i32
  }
  func.func @transform_1(%arg0: i32) -> (i32, i32) {
    %c0_i32 = arith.constant 0 : i32
    %c0_i32_0 = arith.constant 0 : i32
    %c0_i32_1 = arith.constant 0 : i32
    return %c0_i32, %c0_i32_0 : i32, i32
  }
  func.func @transform_2(%arg0: i32) -> (i32, i32) {
    %c0_i32 = arith.constant 0 : i32
    %c0_i32_0 = arith.constant 0 : i32
    %c0_i32_1 = arith.constant 0 : i32
    return %c0_i32, %c0_i32_0 : i32, i32
  }
  func.func @transform_3(%arg0: i32) -> (i32, i32) {
    %c0_i32 = arith.constant 0 : i32
    %c0_i32_0 = arith.constant 0 : i32
    %c0_i32_1 = arith.constant 0 : i32
    return %c0_i32, %c0_i32_0 : i32, i32
  }
  func.func @transform_4(%arg0: i32) -> (i32, i32) {
    %c0_i32 = arith.constant 0 : i32
    %c0_i32_0 = arith.constant 0 : i32
    %c0_i32_1 = arith.constant 0 : i32
    return %c0_i32, %c0_i32_0 : i32, i32
  }
  func.func @transform_5(%arg0: i32) -> (i32, i32) {
    %c0_i32 = arith.constant 0 : i32
    %c0_i32_0 = arith.constant 0 : i32
    %c0_i32_1 = arith.constant 0 : i32
    return %c0_i32, %c0_i32_0 : i32, i32
  }
  func.func @transform_6(%arg0: i32) -> (i32, i32) {
    %c0_i32 = arith.constant 0 : i32
    %c0_i32_0 = arith.constant 0 : i32
    %c0_i32_1 = arith.constant 0 : i32
    return %c0_i32, %c0_i32_0 : i32, i32
  }
  func.func @transform_7(%arg0: i32) -> (i32, i32) {
    %c0_i32 = arith.constant 0 : i32
    %c0_i32_0 = arith.constant 0 : i32
    return %arg0, %c0_i32 : i32, i32
  }
}

module attributes {stable_mosaic.version = 11 : i64} {
  func.func @_sa_chain_kernel(%arg0: i32, %arg1: memref<8x8x259xf32, #tpu.memory_space<vmem>>, %arg2: memref<259x256xf32, #tpu.memory_space<vmem>>, %arg3: memref<256x256xf32, #tpu.memory_space<vmem>>, %arg4: memref<256x512xf32, #tpu.memory_space<vmem>>, %arg5: memref<1x256xf32, #tpu.memory_space<vmem>>, %arg6: memref<1x256xf32, #tpu.memory_space<vmem>>, %arg7: memref<1x512xf32, #tpu.memory_space<vmem>>, %arg8: memref<8x512xf32, #tpu.memory_space<vmem>>) attributes {dimension_semantics = [#tpu.dimension_semantics<parallel>], iteration_bounds = array<i64: 1>, scalar_prefetch = 0 : i64, scratch_operands = 0 : i64, tpu.core_type = #tpu.core_type<tc>, window_params = [{transform_indices = @transform_0, window_bounds = array<i64: 8, 8, 259>}, {pipeline_mode = #tpu.pipeline_mode<synchronous>, transform_indices = @transform_1, window_bounds = array<i64: 259, 256>}, {pipeline_mode = #tpu.pipeline_mode<synchronous>, transform_indices = @transform_2, window_bounds = array<i64: 256, 256>}, {pipeline_mode = #tpu.pipeline_mode<synchronous>, transform_indices = @transform_3, window_bounds = array<i64: 256, 512>}, {pipeline_mode = #tpu.pipeline_mode<synchronous>, transform_indices = @transform_4, window_bounds = array<i64: 1, 256>}, {pipeline_mode = #tpu.pipeline_mode<synchronous>, transform_indices = @transform_5, window_bounds = array<i64: 1, 256>}, {pipeline_mode = #tpu.pipeline_mode<synchronous>, transform_indices = @transform_6, window_bounds = array<i64: 1, 512>}, {transform_indices = @transform_7, window_bounds = array<i64: 8, 512>}]} {
    %c0 = arith.constant 0 : index
    %c0_0 = arith.constant 0 : index
    %c0_1 = arith.constant 0 : index
    %0 = vector.load %arg1[%c0, %c0_0, %c0_1] : memref<8x8x259xf32, #tpu.memory_space<vmem>>, vector<8x8x259xf32>
    %1 = vector.shape_cast %0 : vector<8x8x259xf32> to vector<64x259xf32>
    %c0_2 = arith.constant 0 : index
    %c0_3 = arith.constant 0 : index
    %2 = vector.load %arg2[%c0_2, %c0_3] : memref<259x256xf32, #tpu.memory_space<vmem>>, vector<259x256xf32>
    %cst = arith.constant dense<0.000000e+00> : vector<64x256xf32>
    %3 = tpu.matmul %1, %2, %cst {dimension_numbers = #tpu.dot_dimension_numbers<[1], [0], [0], [1], [0, 0, 1, 1], [], []>} : vector<64x259xf32>, vector<259x256xf32>, vector<64x256xf32> -> vector<64x256xf32>
    %c0_4 = arith.constant 0 : index
    %c0_5 = arith.constant 0 : index
    %4 = vector.load %arg5[%c0_4, %c0_5] : memref<1x256xf32, #tpu.memory_space<vmem>>, vector<1x256xf32>
    %5 = vector.broadcast %4 : vector<1x256xf32> to vector<64x256xf32>
    %6 = arith.addf %3, %5 : vector<64x256xf32>
    %cst_6 = arith.constant 0.000000e+00 : f32
    %7 = vector.broadcast %cst_6 : f32 to vector<64x256xf32>
    %8 = arith.maximumf %6, %7 : vector<64x256xf32>
    %c0_7 = arith.constant 0 : index
    %c0_8 = arith.constant 0 : index
    %9 = vector.load %arg3[%c0_7, %c0_8] : memref<256x256xf32, #tpu.memory_space<vmem>>, vector<256x256xf32>
    %cst_9 = arith.constant dense<0.000000e+00> : vector<64x256xf32>
    %10 = tpu.matmul %8, %9, %cst_9 {dimension_numbers = #tpu.dot_dimension_numbers<[1], [0], [0], [1], [0, 0, 1, 1], [], []>} : vector<64x256xf32>, vector<256x256xf32>, vector<64x256xf32> -> vector<64x256xf32>
    %c0_10 = arith.constant 0 : index
    %c0_11 = arith.constant 0 : index
    %11 = vector.load %arg6[%c0_10, %c0_11] : memref<1x256xf32, #tpu.memory_space<vmem>>, vector<1x256xf32>
    %12 = vector.broadcast %11 : vector<1x256xf32> to vector<64x256xf32>
    %13 = arith.addf %10, %12 : vector<64x256xf32>
    %cst_12 = arith.constant 0.000000e+00 : f32
    %14 = vector.broadcast %cst_12 : f32 to vector<64x256xf32>
    %15 = arith.maximumf %13, %14 : vector<64x256xf32>
    %c0_13 = arith.constant 0 : index
    %c0_14 = arith.constant 0 : index
    %16 = vector.load %arg4[%c0_13, %c0_14] : memref<256x512xf32, #tpu.memory_space<vmem>>, vector<256x512xf32>
    %cst_15 = arith.constant dense<0.000000e+00> : vector<64x512xf32>
    %17 = tpu.matmul %15, %16, %cst_15 {dimension_numbers = #tpu.dot_dimension_numbers<[1], [0], [0], [1], [0, 0, 1, 1], [], []>} : vector<64x256xf32>, vector<256x512xf32>, vector<64x512xf32> -> vector<64x512xf32>
    %c0_16 = arith.constant 0 : index
    %c0_17 = arith.constant 0 : index
    %18 = vector.load %arg7[%c0_16, %c0_17] : memref<1x512xf32, #tpu.memory_space<vmem>>, vector<1x512xf32>
    %19 = vector.broadcast %18 : vector<1x512xf32> to vector<64x512xf32>
    %20 = arith.addf %17, %19 : vector<64x512xf32>
    %cst_18 = arith.constant 0.000000e+00 : f32
    %21 = vector.broadcast %cst_18 : f32 to vector<64x512xf32>
    %22 = arith.maximumf %20, %21 : vector<64x512xf32>
    %23 = vector.shape_cast %22 : vector<64x512xf32> to vector<8x8x512xf32>
    %cst_19 = arith.constant dense<0xFF800000> : vector<8x512xf32>
    %24 = vector.multi_reduction <maximumf>, %23, %cst_19 [1] : vector<8x8x512xf32> to vector<8x512xf32>
    %c0_20 = arith.constant 0 : index
    %c0_21 = arith.constant 0 : index
    %25 = vector.load %arg8[%c0_20, %c0_21] : memref<8x512xf32, #tpu.memory_space<vmem>>, vector<8x512xf32>
    tpu.vector_store %arg8[%c0_20, %c0_21], %24 {strides = array<i32>} : memref<8x512xf32, #tpu.memory_space<vmem>>, vector<8x512xf32>,
    return
  }
  func.func @transform_0(%arg0: i32) -> (i32, i32, i32) {
    %c0_i32 = arith.constant 0 : i32
    %c0_i32_0 = arith.constant 0 : i32
    %c0_i32_1 = arith.constant 0 : i32
    return %arg0, %c0_i32, %c0_i32_0 : i32, i32, i32
  }
  func.func @transform_1(%arg0: i32) -> (i32, i32) {
    %c0_i32 = arith.constant 0 : i32
    %c0_i32_0 = arith.constant 0 : i32
    %c0_i32_1 = arith.constant 0 : i32
    return %c0_i32, %c0_i32_0 : i32, i32
  }
  func.func @transform_2(%arg0: i32) -> (i32, i32) {
    %c0_i32 = arith.constant 0 : i32
    %c0_i32_0 = arith.constant 0 : i32
    %c0_i32_1 = arith.constant 0 : i32
    return %c0_i32, %c0_i32_0 : i32, i32
  }
  func.func @transform_3(%arg0: i32) -> (i32, i32) {
    %c0_i32 = arith.constant 0 : i32
    %c0_i32_0 = arith.constant 0 : i32
    %c0_i32_1 = arith.constant 0 : i32
    return %c0_i32, %c0_i32_0 : i32, i32
  }
  func.func @transform_4(%arg0: i32) -> (i32, i32) {
    %c0_i32 = arith.constant 0 : i32
    %c0_i32_0 = arith.constant 0 : i32
    %c0_i32_1 = arith.constant 0 : i32
    return %c0_i32, %c0_i32_0 : i32, i32
  }
  func.func @transform_5(%arg0: i32) -> (i32, i32) {
    %c0_i32 = arith.constant 0 : i32
    %c0_i32_0 = arith.constant 0 : i32
    %c0_i32_1 = arith.constant 0 : i32
    return %c0_i32, %c0_i32_0 : i32, i32
  }
  func.func @transform_6(%arg0: i32) -> (i32, i32) {
    %c0_i32 = arith.constant 0 : i32
    %c0_i32_0 = arith.constant 0 : i32
    %c0_i32_1 = arith.constant 0 : i32
    return %c0_i32, %c0_i32_0 : i32, i32
  }
  func.func @transform_7(%arg0: i32) -> (i32, i32) {
    %c0_i32 = arith.constant 0 : i32
    %c0_i32_0 = arith.constant 0 : i32
    return %arg0, %c0_i32 : i32, i32
  }
}

module attributes {stable_mosaic.version = 11 : i64} {
  func.func @_mlp_chain_kernel(%arg0: i32, %arg1: memref<8x768xf32, #tpu.memory_space<vmem>>, %arg2: memref<768x256xf32, #tpu.memory_space<vmem>>, %arg3: memref<256x256xf32, #tpu.memory_space<vmem>>, %arg4: memref<1x256xf32, #tpu.memory_space<vmem>>, %arg5: memref<1x256xf32, #tpu.memory_space<vmem>>, %arg6: memref<8x256xf32, #tpu.memory_space<vmem>>) attributes {dimension_semantics = [#tpu.dimension_semantics<parallel>], iteration_bounds = array<i64: 2>, scalar_prefetch = 0 : i64, scratch_operands = 0 : i64, tpu.core_type = #tpu.core_type<tc>, window_params = [{transform_indices = @transform_0, window_bounds = array<i64: 8, 768>}, {pipeline_mode = #tpu.pipeline_mode<synchronous>, transform_indices = @transform_1, window_bounds = array<i64: 768, 256>}, {pipeline_mode = #tpu.pipeline_mode<synchronous>, transform_indices = @transform_2, window_bounds = array<i64: 256, 256>}, {pipeline_mode = #tpu.pipeline_mode<synchronous>, transform_indices = @transform_3, window_bounds = array<i64: 1, 256>}, {pipeline_mode = #tpu.pipeline_mode<synchronous>, transform_indices = @transform_4, window_bounds = array<i64: 1, 256>}, {transform_indices = @transform_5, window_bounds = array<i64: 8, 256>}]} {
    %c0 = arith.constant 0 : index
    %c0_0 = arith.constant 0 : index
    %0 = vector.load %arg1[%c0, %c0_0] : memref<8x768xf32, #tpu.memory_space<vmem>>, vector<8x768xf32>
    %c0_1 = arith.constant 0 : index
    %c0_2 = arith.constant 0 : index
    %1 = vector.load %arg2[%c0_1, %c0_2] : memref<768x256xf32, #tpu.memory_space<vmem>>, vector<768x256xf32>
    %cst = arith.constant dense<0.000000e+00> : vector<8x256xf32>
    %2 = tpu.matmul %0, %1, %cst {dimension_numbers = #tpu.dot_dimension_numbers<[1], [0], [0], [1], [0, 0, 1, 1], [], []>} : vector<8x768xf32>, vector<768x256xf32>, vector<8x256xf32> -> vector<8x256xf32>
    %c0_3 = arith.constant 0 : index
    %c0_4 = arith.constant 0 : index
    %3 = vector.load %arg4[%c0_3, %c0_4] : memref<1x256xf32, #tpu.memory_space<vmem>>, vector<1x256xf32>
    %4 = vector.broadcast %3 : vector<1x256xf32> to vector<8x256xf32>
    %5 = arith.addf %2, %4 : vector<8x256xf32>
    %cst_5 = arith.constant 0.000000e+00 : f32
    %6 = vector.broadcast %cst_5 : f32 to vector<8x256xf32>
    %7 = arith.maximumf %5, %6 : vector<8x256xf32>
    %c0_6 = arith.constant 0 : index
    %c0_7 = arith.constant 0 : index
    %8 = vector.load %arg3[%c0_6, %c0_7] : memref<256x256xf32, #tpu.memory_space<vmem>>, vector<256x256xf32>
    %cst_8 = arith.constant dense<0.000000e+00> : vector<8x256xf32>
    %9 = tpu.matmul %7, %8, %cst_8 {dimension_numbers = #tpu.dot_dimension_numbers<[1], [0], [0], [1], [0, 0, 1, 1], [], []>} : vector<8x256xf32>, vector<256x256xf32>, vector<8x256xf32> -> vector<8x256xf32>
    %c0_9 = arith.constant 0 : index
    %c0_10 = arith.constant 0 : index
    %10 = vector.load %arg5[%c0_9, %c0_10] : memref<1x256xf32, #tpu.memory_space<vmem>>, vector<1x256xf32>
    %11 = vector.broadcast %10 : vector<1x256xf32> to vector<8x256xf32>
    %12 = arith.addf %9, %11 : vector<8x256xf32>
    %cst_11 = arith.constant 0.000000e+00 : f32
    %13 = vector.broadcast %cst_11 : f32 to vector<8x256xf32>
    %14 = arith.maximumf %12, %13 : vector<8x256xf32>
    %c0_12 = arith.constant 0 : index
    %c0_13 = arith.constant 0 : index
    %15 = vector.load %arg6[%c0_12, %c0_13] : memref<8x256xf32, #tpu.memory_space<vmem>>, vector<8x256xf32>
    tpu.vector_store %arg6[%c0_12, %c0_13], %14 {strides = array<i32>} : memref<8x256xf32, #tpu.memory_space<vmem>>, vector<8x256xf32>,
    return
  }
  func.func @transform_0(%arg0: i32) -> (i32, i32) {
    %c0_i32 = arith.constant 0 : i32
    %c0_i32_0 = arith.constant 0 : i32
    return %arg0, %c0_i32 : i32, i32
  }
  func.func @transform_1(%arg0: i32) -> (i32, i32) {
    %c0_i32 = arith.constant 0 : i32
    %c0_i32_0 = arith.constant 0 : i32
    %c0_i32_1 = arith.constant 0 : i32
    return %c0_i32, %c0_i32_0 : i32, i32
  }
  func.func @transform_2(%arg0: i32) -> (i32, i32) {
    %c0_i32 = arith.constant 0 : i32
    %c0_i32_0 = arith.constant 0 : i32
    %c0_i32_1 = arith.constant 0 : i32
    return %c0_i32, %c0_i32_0 : i32, i32
  }
  func.func @transform_3(%arg0: i32) -> (i32, i32) {
    %c0_i32 = arith.constant 0 : i32
    %c0_i32_0 = arith.constant 0 : i32
    %c0_i32_1 = arith.constant 0 : i32
    return %c0_i32, %c0_i32_0 : i32, i32
  }
  func.func @transform_4(%arg0: i32) -> (i32, i32) {
    %c0_i32 = arith.constant 0 : i32
    %c0_i32_0 = arith.constant 0 : i32
    %c0_i32_1 = arith.constant 0 : i32
    return %c0_i32, %c0_i32_0 : i32, i32
  }
  func.func @transform_5(%arg0: i32) -> (i32, i32) {
    %c0_i32 = arith.constant 0 : i32
    %c0_i32_0 = arith.constant 0 : i32
    return %arg0, %c0_i32 : i32, i32
  }
}

module attributes {stable_mosaic.version = 11 : i64} {
  func.func @_mlp_chain_kernel(%arg0: i32, %arg1: memref<16x384xf32, #tpu.memory_space<vmem>>, %arg2: memref<384x256xf32, #tpu.memory_space<vmem>>, %arg3: memref<256x256xf32, #tpu.memory_space<vmem>>, %arg4: memref<1x256xf32, #tpu.memory_space<vmem>>, %arg5: memref<1x256xf32, #tpu.memory_space<vmem>>, %arg6: memref<16x256xf32, #tpu.memory_space<vmem>>) attributes {dimension_semantics = [#tpu.dimension_semantics<parallel>], iteration_bounds = array<i64: 2>, scalar_prefetch = 0 : i64, scratch_operands = 0 : i64, tpu.core_type = #tpu.core_type<tc>, window_params = [{transform_indices = @transform_0, window_bounds = array<i64: 16, 384>}, {pipeline_mode = #tpu.pipeline_mode<synchronous>, transform_indices = @transform_1, window_bounds = array<i64: 384, 256>}, {pipeline_mode = #tpu.pipeline_mode<synchronous>, transform_indices = @transform_2, window_bounds = array<i64: 256, 256>}, {pipeline_mode = #tpu.pipeline_mode<synchronous>, transform_indices = @transform_3, window_bounds = array<i64: 1, 256>}, {pipeline_mode = #tpu.pipeline_mode<synchronous>, transform_indices = @transform_4, window_bounds = array<i64: 1, 256>}, {transform_indices = @transform_5, window_bounds = array<i64: 16, 256>}]} {
    %c0 = arith.constant 0 : index
    %c0_0 = arith.constant 0 : index
    %0 = vector.load %arg1[%c0, %c0_0] : memref<16x384xf32, #tpu.memory_space<vmem>>, vector<16x384xf32>
    %c0_1 = arith.constant 0 : index
    %c0_2 = arith.constant 0 : index
    %1 = vector.load %arg2[%c0_1, %c0_2] : memref<384x256xf32, #tpu.memory_space<vmem>>, vector<384x256xf32>
    %cst = arith.constant dense<0.000000e+00> : vector<16x256xf32>
    %2 = tpu.matmul %0, %1, %cst {dimension_numbers = #tpu.dot_dimension_numbers<[1], [0], [0], [1], [0, 0, 1, 1], [], []>} : vector<16x384xf32>, vector<384x256xf32>, vector<16x256xf32> -> vector<16x256xf32>
    %c0_3 = arith.constant 0 : index
    %c0_4 = arith.constant 0 : index
    %3 = vector.load %arg4[%c0_3, %c0_4] : memref<1x256xf32, #tpu.memory_space<vmem>>, vector<1x256xf32>
    %4 = vector.broadcast %3 : vector<1x256xf32> to vector<16x256xf32>
    %5 = arith.addf %2, %4 : vector<16x256xf32>
    %cst_5 = arith.constant 0.000000e+00 : f32
    %6 = vector.broadcast %cst_5 : f32 to vector<16x256xf32>
    %7 = arith.maximumf %5, %6 : vector<16x256xf32>
    %c0_6 = arith.constant 0 : index
    %c0_7 = arith.constant 0 : index
    %8 = vector.load %arg3[%c0_6, %c0_7] : memref<256x256xf32, #tpu.memory_space<vmem>>, vector<256x256xf32>
    %cst_8 = arith.constant dense<0.000000e+00> : vector<16x256xf32>
    %9 = tpu.matmul %7, %8, %cst_8 {dimension_numbers = #tpu.dot_dimension_numbers<[1], [0], [0], [1], [0, 0, 1, 1], [], []>} : vector<16x256xf32>, vector<256x256xf32>, vector<16x256xf32> -> vector<16x256xf32>
    %c0_9 = arith.constant 0 : index
    %c0_10 = arith.constant 0 : index
    %10 = vector.load %arg5[%c0_9, %c0_10] : memref<1x256xf32, #tpu.memory_space<vmem>>, vector<1x256xf32>
    %11 = vector.broadcast %10 : vector<1x256xf32> to vector<16x256xf32>
    %12 = arith.addf %9, %11 : vector<16x256xf32>
    %cst_11 = arith.constant 0.000000e+00 : f32
    %13 = vector.broadcast %cst_11 : f32 to vector<16x256xf32>
    %14 = arith.maximumf %12, %13 : vector<16x256xf32>
    %c0_12 = arith.constant 0 : index
    %c0_13 = arith.constant 0 : index
    %15 = vector.load %arg6[%c0_12, %c0_13] : memref<16x256xf32, #tpu.memory_space<vmem>>, vector<16x256xf32>
    tpu.vector_store %arg6[%c0_12, %c0_13], %14 {strides = array<i32>} : memref<16x256xf32, #tpu.memory_space<vmem>>, vector<16x256xf32>,
    return
  }
  func.func @transform_0(%arg0: i32) -> (i32, i32) {
    %c0_i32 = arith.constant 0 : i32
    %c0_i32_0 = arith.constant 0 : i32
    return %arg0, %c0_i32 : i32, i32
  }
  func.func @transform_1(%arg0: i32) -> (i32, i32) {
    %c0_i32 = arith.constant 0 : i32
    %c0_i32_0 = arith.constant 0 : i32
    %c0_i32_1 = arith.constant 0 : i32
    return %c0_i32, %c0_i32_0 : i32, i32
  }
  func.func @transform_2(%arg0: i32) -> (i32, i32) {
    %c0_i32 = arith.constant 0 : i32
    %c0_i32_0 = arith.constant 0 : i32
    %c0_i32_1 = arith.constant 0 : i32
    return %c0_i32, %c0_i32_0 : i32, i32
  }
  func.func @transform_3(%arg0: i32) -> (i32, i32) {
    %c0_i32 = arith.constant 0 : i32
    %c0_i32_0 = arith.constant 0 : i32
    %c0_i32_1 = arith.constant 0 : i32
    return %c0_i32, %c0_i32_0 : i32, i32
  }
  func.func @transform_4(%arg0: i32) -> (i32, i32) {
    %c0_i32 = arith.constant 0 : i32
    %c0_i32_0 = arith.constant 0 : i32
    %c0_i32_1 = arith.constant 0 : i32
    return %c0_i32, %c0_i32_0 : i32, i32
  }
  func.func @transform_5(%arg0: i32) -> (i32, i32) {
    %c0_i32 = arith.constant 0 : i32
    %c0_i32_0 = arith.constant 0 : i32
    return %arg0, %c0_i32 : i32, i32
  }
}

module attributes {stable_mosaic.version = 11 : i64} {
  func.func @_mlp_chain_kernel(%arg0: i32, %arg1: memref<32x320xf32, #tpu.memory_space<vmem>>, %arg2: memref<320x256xf32, #tpu.memory_space<vmem>>, %arg3: memref<256x128xf32, #tpu.memory_space<vmem>>, %arg4: memref<1x256xf32, #tpu.memory_space<vmem>>, %arg5: memref<1x128xf32, #tpu.memory_space<vmem>>, %arg6: memref<32x128xf32, #tpu.memory_space<vmem>>) attributes {dimension_semantics = [#tpu.dimension_semantics<parallel>], iteration_bounds = array<i64: 2>, scalar_prefetch = 0 : i64, scratch_operands = 0 : i64, tpu.core_type = #tpu.core_type<tc>, window_params = [{transform_indices = @transform_0, window_bounds = array<i64: 32, 320>}, {pipeline_mode = #tpu.pipeline_mode<synchronous>, transform_indices = @transform_1, window_bounds = array<i64: 320, 256>}, {pipeline_mode = #tpu.pipeline_mode<synchronous>, transform_indices = @transform_2, window_bounds = array<i64: 256, 128>}, {pipeline_mode = #tpu.pipeline_mode<synchronous>, transform_indices = @transform_3, window_bounds = array<i64: 1, 256>}, {pipeline_mode = #tpu.pipeline_mode<synchronous>, transform_indices = @transform_4, window_bounds = array<i64: 1, 128>}, {transform_indices = @transform_5, window_bounds = array<i64: 32, 128>}]} {
    %c0 = arith.constant 0 : index
    %c0_0 = arith.constant 0 : index
    %0 = vector.load %arg1[%c0, %c0_0] : memref<32x320xf32, #tpu.memory_space<vmem>>, vector<32x320xf32>
    %c0_1 = arith.constant 0 : index
    %c0_2 = arith.constant 0 : index
    %1 = vector.load %arg2[%c0_1, %c0_2] : memref<320x256xf32, #tpu.memory_space<vmem>>, vector<320x256xf32>
    %cst = arith.constant dense<0.000000e+00> : vector<32x256xf32>
    %2 = tpu.matmul %0, %1, %cst {dimension_numbers = #tpu.dot_dimension_numbers<[1], [0], [0], [1], [0, 0, 1, 1], [], []>} : vector<32x320xf32>, vector<320x256xf32>, vector<32x256xf32> -> vector<32x256xf32>
    %c0_3 = arith.constant 0 : index
    %c0_4 = arith.constant 0 : index
    %3 = vector.load %arg4[%c0_3, %c0_4] : memref<1x256xf32, #tpu.memory_space<vmem>>, vector<1x256xf32>
    %4 = vector.broadcast %3 : vector<1x256xf32> to vector<32x256xf32>
    %5 = arith.addf %2, %4 : vector<32x256xf32>
    %cst_5 = arith.constant 0.000000e+00 : f32
    %6 = vector.broadcast %cst_5 : f32 to vector<32x256xf32>
    %7 = arith.maximumf %5, %6 : vector<32x256xf32>
    %c0_6 = arith.constant 0 : index
    %c0_7 = arith.constant 0 : index
    %8 = vector.load %arg3[%c0_6, %c0_7] : memref<256x128xf32, #tpu.memory_space<vmem>>, vector<256x128xf32>
    %cst_8 = arith.constant dense<0.000000e+00> : vector<32x128xf32>
    %9 = tpu.matmul %7, %8, %cst_8 {dimension_numbers = #tpu.dot_dimension_numbers<[1], [0], [0], [1], [0, 0, 1, 1], [], []>} : vector<32x256xf32>, vector<256x128xf32>, vector<32x128xf32> -> vector<32x128xf32>
    %c0_9 = arith.constant 0 : index
    %c0_10 = arith.constant 0 : index
    %10 = vector.load %arg5[%c0_9, %c0_10] : memref<1x128xf32, #tpu.memory_space<vmem>>, vector<1x128xf32>
    %11 = vector.broadcast %10 : vector<1x128xf32> to vector<32x128xf32>
    %12 = arith.addf %9, %11 : vector<32x128xf32>
    %cst_11 = arith.constant 0.000000e+00 : f32
    %13 = vector.broadcast %cst_11 : f32 to vector<32x128xf32>
    %14 = arith.maximumf %12, %13 : vector<32x128xf32>
    %c0_12 = arith.constant 0 : index
    %c0_13 = arith.constant 0 : index
    %15 = vector.load %arg6[%c0_12, %c0_13] : memref<32x128xf32, #tpu.memory_space<vmem>>, vector<32x128xf32>
    tpu.vector_store %arg6[%c0_12, %c0_13], %14 {strides = array<i32>} : memref<32x128xf32, #tpu.memory_space<vmem>>, vector<32x128xf32>,
    return
  }
  func.func @transform_0(%arg0: i32) -> (i32, i32) {
    %c0_i32 = arith.constant 0 : i32
    %c0_i32_0 = arith.constant 0 : i32
    return %arg0, %c0_i32 : i32, i32
  }
  func.func @transform_1(%arg0: i32) -> (i32, i32) {
    %c0_i32 = arith.constant 0 : i32
    %c0_i32_0 = arith.constant 0 : i32
    %c0_i32_1 = arith.constant 0 : i32
    return %c0_i32, %c0_i32_0 : i32, i32
  }
  func.func @transform_2(%arg0: i32) -> (i32, i32) {
    %c0_i32 = arith.constant 0 : i32
    %c0_i32_0 = arith.constant 0 : i32
    %c0_i32_1 = arith.constant 0 : i32
    return %c0_i32, %c0_i32_0 : i32, i32
  }
  func.func @transform_3(%arg0: i32) -> (i32, i32) {
    %c0_i32 = arith.constant 0 : i32
    %c0_i32_0 = arith.constant 0 : i32
    %c0_i32_1 = arith.constant 0 : i32
    return %c0_i32, %c0_i32_0 : i32, i32
  }
  func.func @transform_4(%arg0: i32) -> (i32, i32) {
    %c0_i32 = arith.constant 0 : i32
    %c0_i32_0 = arith.constant 0 : i32
    %c0_i32_1 = arith.constant 0 : i32
    return %c0_i32, %c0_i32_0 : i32, i32
  }
  func.func @transform_5(%arg0: i32) -> (i32, i32) {
    %c0_i32 = arith.constant 0 : i32
    %c0_i32_0 = arith.constant 0 : i32
    return %arg0, %c0_i32 : i32, i32
  }
}

module attributes {stable_mosaic.version = 11 : i64} {
  func.func @_mlp_chain_kernel(%arg0: i32, %arg1: memref<64x131xf32, #tpu.memory_space<vmem>>, %arg2: memref<131x128xf32, #tpu.memory_space<vmem>>, %arg3: memref<128x128xf32, #tpu.memory_space<vmem>>, %arg4: memref<128x128xf32, #tpu.memory_space<vmem>>, %arg5: memref<1x128xf32, #tpu.memory_space<vmem>>, %arg6: memref<1x128xf32, #tpu.memory_space<vmem>>, %arg7: memref<1x128xf32, #tpu.memory_space<vmem>>, %arg8: memref<64x128xf32, #tpu.memory_space<vmem>>) attributes {dimension_semantics = [#tpu.dimension_semantics<parallel>], iteration_bounds = array<i64: 2>, scalar_prefetch = 0 : i64, scratch_operands = 0 : i64, tpu.core_type = #tpu.core_type<tc>, window_params = [{transform_indices = @transform_0, window_bounds = array<i64: 64, 131>}, {pipeline_mode = #tpu.pipeline_mode<synchronous>, transform_indices = @transform_1, window_bounds = array<i64: 131, 128>}, {pipeline_mode = #tpu.pipeline_mode<synchronous>, transform_indices = @transform_2, window_bounds = array<i64: 128, 128>}, {pipeline_mode = #tpu.pipeline_mode<synchronous>, transform_indices = @transform_3, window_bounds = array<i64: 128, 128>}, {pipeline_mode = #tpu.pipeline_mode<synchronous>, transform_indices = @transform_4, window_bounds = array<i64: 1, 128>}, {pipeline_mode = #tpu.pipeline_mode<synchronous>, transform_indices = @transform_5, window_bounds = array<i64: 1, 128>}, {pipeline_mode = #tpu.pipeline_mode<synchronous>, transform_indices = @transform_6, window_bounds = array<i64: 1, 128>}, {transform_indices = @transform_7, window_bounds = array<i64: 64, 128>}]} {
    %c0 = arith.constant 0 : index
    %c0_0 = arith.constant 0 : index
    %0 = vector.load %arg1[%c0, %c0_0] : memref<64x131xf32, #tpu.memory_space<vmem>>, vector<64x131xf32>
    %c0_1 = arith.constant 0 : index
    %c0_2 = arith.constant 0 : index
    %1 = vector.load %arg2[%c0_1, %c0_2] : memref<131x128xf32, #tpu.memory_space<vmem>>, vector<131x128xf32>
    %cst = arith.constant dense<0.000000e+00> : vector<64x128xf32>
    %2 = tpu.matmul %0, %1, %cst {dimension_numbers = #tpu.dot_dimension_numbers<[1], [0], [0], [1], [0, 0, 1, 1], [], []>} : vector<64x131xf32>, vector<131x128xf32>, vector<64x128xf32> -> vector<64x128xf32>
    %c0_3 = arith.constant 0 : index
    %c0_4 = arith.constant 0 : index
    %3 = vector.load %arg5[%c0_3, %c0_4] : memref<1x128xf32, #tpu.memory_space<vmem>>, vector<1x128xf32>
    %4 = vector.broadcast %3 : vector<1x128xf32> to vector<64x128xf32>
    %5 = arith.addf %2, %4 : vector<64x128xf32>
    %cst_5 = arith.constant 0.000000e+00 : f32
    %6 = vector.broadcast %cst_5 : f32 to vector<64x128xf32>
    %7 = arith.maximumf %5, %6 : vector<64x128xf32>
    %c0_6 = arith.constant 0 : index
    %c0_7 = arith.constant 0 : index
    %8 = vector.load %arg3[%c0_6, %c0_7] : memref<128x128xf32, #tpu.memory_space<vmem>>, vector<128x128xf32>
    %cst_8 = arith.constant dense<0.000000e+00> : vector<64x128xf32>
    %9 = tpu.matmul %7, %8, %cst_8 {dimension_numbers = #tpu.dot_dimension_numbers<[1], [0], [0], [1], [0, 0, 1, 1], [], []>} : vector<64x128xf32>, vector<128x128xf32>, vector<64x128xf32> -> vector<64x128xf32>
    %c0_9 = arith.constant 0 : index
    %c0_10 = arith.constant 0 : index
    %10 = vector.load %arg6[%c0_9, %c0_10] : memref<1x128xf32, #tpu.memory_space<vmem>>, vector<1x128xf32>
    %11 = vector.broadcast %10 : vector<1x128xf32> to vector<64x128xf32>
    %12 = arith.addf %9, %11 : vector<64x128xf32>
    %cst_11 = arith.constant 0.000000e+00 : f32
    %13 = vector.broadcast %cst_11 : f32 to vector<64x128xf32>
    %14 = arith.maximumf %12, %13 : vector<64x128xf32>
    %c0_12 = arith.constant 0 : index
    %c0_13 = arith.constant 0 : index
    %15 = vector.load %arg4[%c0_12, %c0_13] : memref<128x128xf32, #tpu.memory_space<vmem>>, vector<128x128xf32>
    %cst_14 = arith.constant dense<0.000000e+00> : vector<64x128xf32>
    %16 = tpu.matmul %14, %15, %cst_14 {dimension_numbers = #tpu.dot_dimension_numbers<[1], [0], [0], [1], [0, 0, 1, 1], [], []>} : vector<64x128xf32>, vector<128x128xf32>, vector<64x128xf32> -> vector<64x128xf32>
    %c0_15 = arith.constant 0 : index
    %c0_16 = arith.constant 0 : index
    %17 = vector.load %arg7[%c0_15, %c0_16] : memref<1x128xf32, #tpu.memory_space<vmem>>, vector<1x128xf32>
    %18 = vector.broadcast %17 : vector<1x128xf32> to vector<64x128xf32>
    %19 = arith.addf %16, %18 : vector<64x128xf32>
    %cst_17 = arith.constant 0.000000e+00 : f32
    %20 = vector.broadcast %cst_17 : f32 to vector<64x128xf32>
    %21 = arith.maximumf %19, %20 : vector<64x128xf32>
    %c0_18 = arith.constant 0 : index
    %c0_19 = arith.constant 0 : index
    %22 = vector.load %arg8[%c0_18, %c0_19] : memref<64x128xf32, #tpu.memory_space<vmem>>, vector<64x128xf32>
    tpu.vector_store %arg8[%c0_18, %c0_19], %21 {strides = array<i32>} : memref<64x128xf32, #tpu.memory_space<vmem>>, vector<64x128xf32>,
    return
  }
  func.func @transform_0(%arg0: i32) -> (i32, i32) {
    %c0_i32 = arith.constant 0 : i32
    %c0_i32_0 = arith.constant 0 : i32
    return %arg0, %c0_i32 : i32, i32
  }
  func.func @transform_1(%arg0: i32) -> (i32, i32) {
    %c0_i32 = arith.constant 0 : i32
    %c0_i32_0 = arith.constant 0 : i32
    %c0_i32_1 = arith.constant 0 : i32
    return %c0_i32, %c0_i32_0 : i32, i32
  }
  func.func @transform_2(%arg0: i32) -> (i32, i32) {
    %c0_i32 = arith.constant 0 : i32
    %c0_i32_0 = arith.constant 0 : i32
    %c0_i32_1 = arith.constant 0 : i32
    return %c0_i32, %c0_i32_0 : i32, i32
  }
  func.func @transform_3(%arg0: i32) -> (i32, i32) {
    %c0_i32 = arith.constant 0 : i32
    %c0_i32_0 = arith.constant 0 : i32
    %c0_i32_1 = arith.constant 0 : i32
    return %c0_i32, %c0_i32_0 : i32, i32
  }
  func.func @transform_4(%arg0: i32) -> (i32, i32) {
    %c0_i32 = arith.constant 0 : i32
    %c0_i32_0 = arith.constant 0 : i32
    %c0_i32_1 = arith.constant 0 : i32
    return %c0_i32, %c0_i32_0 : i32, i32
  }
  func.func @transform_5(%arg0: i32) -> (i32, i32) {
    %c0_i32 = arith.constant 0 : i32
    %c0_i32_0 = arith.constant 0 : i32
    %c0_i32_1 = arith.constant 0 : i32
    return %c0_i32, %c0_i32_0 : i32, i32
  }
  func.func @transform_6(%arg0: i32) -> (i32, i32) {
    %c0_i32 = arith.constant 0 : i32
    %c0_i32_0 = arith.constant 0 : i32
    %c0_i32_1 = arith.constant 0 : i32
    return %c0_i32, %c0_i32_0 : i32, i32
  }
  func.func @transform_7(%arg0: i32) -> (i32, i32) {
    %c0_i32 = arith.constant 0 : i32
    %c0_i32_0 = arith.constant 0 : i32
    return %arg0, %c0_i32 : i32, i32
  }
}

module attributes {stable_mosaic.version = 11 : i64} {
  func.func @_mlp_chain_kernel(%arg0: i32, %arg1: memref<64x128xf32, #tpu.memory_space<vmem>>, %arg2: memref<128x128xf32, #tpu.memory_space<vmem>>, %arg3: memref<128x128xf32, #tpu.memory_space<vmem>>, %arg4: memref<1x128xf32, #tpu.memory_space<vmem>>, %arg5: memref<1x128xf32, #tpu.memory_space<vmem>>, %arg6: memref<64x128xf32, #tpu.memory_space<vmem>>) attributes {dimension_semantics = [#tpu.dimension_semantics<parallel>], iteration_bounds = array<i64: 2>, scalar_prefetch = 0 : i64, scratch_operands = 0 : i64, tpu.core_type = #tpu.core_type<tc>, window_params = [{transform_indices = @transform_0, window_bounds = array<i64: 64, 128>}, {pipeline_mode = #tpu.pipeline_mode<synchronous>, transform_indices = @transform_1, window_bounds = array<i64: 128, 128>}, {pipeline_mode = #tpu.pipeline_mode<synchronous>, transform_indices = @transform_2, window_bounds = array<i64: 128, 128>}, {pipeline_mode = #tpu.pipeline_mode<synchronous>, transform_indices = @transform_3, window_bounds = array<i64: 1, 128>}, {pipeline_mode = #tpu.pipeline_mode<synchronous>, transform_indices = @transform_4, window_bounds = array<i64: 1, 128>}, {transform_indices = @transform_5, window_bounds = array<i64: 64, 128>}]} {
    %c0 = arith.constant 0 : index
    %c0_0 = arith.constant 0 : index
    %0 = vector.load %arg1[%c0, %c0_0] : memref<64x128xf32, #tpu.memory_space<vmem>>, vector<64x128xf32>
    %c0_1 = arith.constant 0 : index
    %c0_2 = arith.constant 0 : index
    %1 = vector.load %arg2[%c0_1, %c0_2] : memref<128x128xf32, #tpu.memory_space<vmem>>, vector<128x128xf32>
    %cst = arith.constant dense<0.000000e+00> : vector<64x128xf32>
    %2 = tpu.matmul %0, %1, %cst {dimension_numbers = #tpu.dot_dimension_numbers<[1], [0], [0], [1], [0, 0, 1, 1], [], []>} : vector<64x128xf32>, vector<128x128xf32>, vector<64x128xf32> -> vector<64x128xf32>
    %c0_3 = arith.constant 0 : index
    %c0_4 = arith.constant 0 : index
    %3 = vector.load %arg4[%c0_3, %c0_4] : memref<1x128xf32, #tpu.memory_space<vmem>>, vector<1x128xf32>
    %4 = vector.broadcast %3 : vector<1x128xf32> to vector<64x128xf32>
    %5 = arith.addf %2, %4 : vector<64x128xf32>
    %cst_5 = arith.constant 0.000000e+00 : f32
    %6 = vector.broadcast %cst_5 : f32 to vector<64x128xf32>
    %7 = arith.maximumf %5, %6 : vector<64x128xf32>
    %c0_6 = arith.constant 0 : index
    %c0_7 = arith.constant 0 : index
    %8 = vector.load %arg3[%c0_6, %c0_7] : memref<128x128xf32, #tpu.memory_space<vmem>>, vector<128x128xf32>
    %cst_8 = arith.constant dense<0.000000e+00> : vector<64x128xf32>
    %9 = tpu.matmul %7, %8, %cst_8 {dimension_numbers = #tpu.dot_dimension_numbers<[1], [0], [0], [1], [0, 0, 1, 1], [], []>} : vector<64x128xf32>, vector<128x128xf32>, vector<64x128xf32> -> vector<64x128xf32>
    %c0_9 = arith.constant 0 : index
    %c0_10 = arith.constant 0 : index
    %10 = vector.load %arg5[%c0_9, %c0_10] : memref<1x128xf32, #tpu.memory_space<vmem>>, vector<1x128xf32>
    %11 = vector.broadcast %10 : vector<1x128xf32> to vector<64x128xf32>
    %12 = arith.addf %9, %11 : vector<64x128xf32>
    %c0_11 = arith.constant 0 : index
    %c0_12 = arith.constant 0 : index
    %13 = vector.load %arg6[%c0_11, %c0_12] : memref<64x128xf32, #tpu.memory_space<vmem>>, vector<64x128xf32>
    tpu.vector_store %arg6[%c0_11, %c0_12], %12 {strides = array<i32>} : memref<64x128xf32, #tpu.memory_space<vmem>>, vector<64x128xf32>,
    return
  }
  func.func @transform_0(%arg0: i32) -> (i32, i32) {
    %c0_i32 = arith.constant 0 : i32
    %c0_i32_0 = arith.constant 0 : i32
    return %arg0, %c0_i32 : i32, i32
  }
  func.func @transform_1(%arg0: i32) -> (i32, i32) {
    %c0_i32 = arith.constant 0 : i32
    %c0_i32_0 = arith.constant 0 : i32
    %c0_i32_1 = arith.constant 0 : i32
    return %c0_i32, %c0_i32_0 : i32, i32
  }
  func.func @transform_2(%arg0: i32) -> (i32, i32) {
    %c0_i32 = arith.constant 0 : i32
    %c0_i32_0 = arith.constant 0 : i32
    %c0_i32_1 = arith.constant 0 : i32
    return %c0_i32, %c0_i32_0 : i32, i32
  }
  func.func @transform_3(%arg0: i32) -> (i32, i32) {
    %c0_i32 = arith.constant 0 : i32
    %c0_i32_0 = arith.constant 0 : i32
    %c0_i32_1 = arith.constant 0 : i32
    return %c0_i32, %c0_i32_0 : i32, i32
  }
  func.func @transform_4(%arg0: i32) -> (i32, i32) {
    %c0_i32 = arith.constant 0 : i32
    %c0_i32_0 = arith.constant 0 : i32
    %c0_i32_1 = arith.constant 0 : i32
    return %c0_i32, %c0_i32_0 : i32, i32
  }
  func.func @transform_5(%arg0: i32) -> (i32, i32) {
    %c0_i32 = arith.constant 0 : i32
    %c0_i32_0 = arith.constant 0 : i32
    return %arg0, %c0_i32 : i32, i32
  }
}

</mosaic_0001>

<llo_original>
// kernel: custom-call.40
$region0: #{custom-call.40}
  %s0 = inlined_call_operand.vmem [shape: f32[2,64], index: 0, kind: output, shape index: {}]

// kernel: neg.12
$region0: #{neg.12}
  #allocation0 [shape = 's32[1]{0}', space=sflag, size = 0x4, scoped, tag = 'scoped memory for neg.12']
  %s0 = inlined_call_operand.vmem [shape: f32[2,32,64], index: 0, kind: input, shape index: {}]
  %s1 = inlined_call_operand.vmem [shape: f32[2,32,64], index: 1, kind: output, shape index: {}]
  %v2 = vld [vmem:[%s0] sm:$0xff]
  %3 = xla_tuple %v2
  %4 = xla_tuple %3
  %v5 = vxor.u32 %v2, 2147483648
  %6 = xla_tuple %v5
  %7 = vst [vmem:[%s1] sm:$0xff] %v5
  %s8 = scalar_lea.vmem %s0, 32
  %v9 = vld [vmem:[%s8] sm:$0xff]
  %10 = xla_tuple %v9
  %11 = xla_tuple %10
  %v12 = vxor.u32 %v9, 2147483648
  %13 = xla_tuple %v12
  %s14 = scalar_lea.vmem %s1, 32
  %15 = vst [vmem:[%s14] sm:$0xff] %v12
  %s16 = scalar_lea.vmem %s0, 8
  %v17 = vld [vmem:[%s16] sm:$0xff]
  %18 = xla_tuple %v17
  %19 = xla_tuple %18
  %v20 = vxor.u32 %v17, 2147483648
  %21 = xla_tuple %v20
  %s22 = scalar_lea.vmem %s1, 8
  %23 = vst [vmem:[%s22] sm:$0xff] %v20
  %s24 = scalar_lea.vmem %s0, 40
  %v25 = vld [vmem:[%s24] sm:$0xff]
  %26 = xla_tuple %v25
  %27 = xla_tuple %26
  %v28 = vxor.u32 %v25, 2147483648
  %29 = xla_tuple %v28
  %s30 = scalar_lea.vmem %s1, 40
  %31 = vst [vmem:[%s30] sm:$0xff] %v28
  %s32 = scalar_lea.vmem %s0, 16
  %v33 = vld [vmem:[%s32] sm:$0xff]
  %34 = xla_tuple %v33
  %35 = xla_tuple %34
  %v36 = vxor.u32 %v33, 2147483648
  %37 = xla_tuple %v36
  %s38 = scalar_lea.vmem %s1, 16
  %39 = vst [vmem:[%s38] sm:$0xff] %v36
  %s40 = scalar_lea.vmem %s0, 48
  %v41 = vld [vmem:[%s40] sm:$0xff]
  %42 = xla_tuple %v41
  %43 = xla_tuple %42
  %v44 = vxor.u32 %v41, 2147483648
  %45 = xla_tuple %v44
  %s46 = scalar_lea.vmem %s1, 48
  %47 = vst [vmem:[%s46] sm:$0xff] %v44
  %s48 = scalar_lea.vmem %s0, 24
  %v49 = vld [vmem:[%s48] sm:$0xff]
  %50 = xla_tuple %v49
  %51 = xla_tuple %50
  %v52 = vxor.u32 %v49, 2147483648
  %53 = xla_tuple %v52
  %s54 = scalar_lea.vmem %s1, 24
  %55 = vst [vmem:[%s54] sm:$0xff] %v52
  %s56 = scalar_lea.vmem %s0, 56
  %v57 = vld [vmem:[%s56] sm:$0xff]
  %58 = xla_tuple %v57
  %59 = xla_tuple %58
  %v60 = vxor.u32 %v57, 2147483648
  %61 = xla_tuple %v60
  %s62 = scalar_lea.vmem %s1, 56
  %63 = vst [vmem:[%s62] sm:$0xff] %v60

// kernel: custom-call.41
$region0: #{custom-call.41}
  %s0 = inlined_call_operand.vmem [shape: f32[2,32], index: 0, kind: output, shape index: {}]

// kernel: pointnet2_ssg_seg_forward.9
$region0: #{pointnet2_ssg_seg_forward.9}
  #allocation0 [shape = 'u32[]', space=smem, size = 0x4, offset = 0x4, fixed_abs, tag = 'smem constant byte address 0x4 - core index']
  #allocation1 [shape = 'u32[72,128]{1,0:T(1,128)}', space=vmem, size = 0x9000, scoped, tag = 'internal scratch']
  %s0 = inlined_call_operand.vmem [shape: f32[64,8,6], index: 0, kind: input, shape index: {}]
  %s1 = inlined_call_operand.vmem [shape: f32[6,32], index: 1, kind: input, shape index: {}]
  %s2 = inlined_call_operand.vmem [shape: f32[32,32], index: 2, kind: input, shape index: {}]
  %s3 = inlined_call_operand.vmem [shape: f32[32,64], index: 3, kind: input, shape index: {}]
  %s4 = inlined_call_operand.vmem [shape: f32[1,32], index: 4, kind: input, shape index: {}]
  %s5 = inlined_call_operand.vmem [shape: f32[1,32], index: 5, kind: input, shape index: {}]
  %s6 = inlined_call_operand.vmem [shape: f32[1,64], index: 6, kind: input, shape index: {}]
  %s7 = inlined_call_operand.vmem [shape: f32[64,64], index: 7, kind: output, shape index: {}]
  %s8 = sld [smem:[#allocation0]]
  $region61: #{pointnet2_ssg_seg_forward.9} parent=0
    _
  %s10 = ssub.s32 1, %s8
  %s11 = scalar_select 0, %s10, %s8
  loop: start=0, step=1, limit=4
  $region2: #{pointnet2_ssg_seg_forward.9} parent=0 // loop_pre_header
    _
  $region3: #{pointnet2_ssg_seg_forward.9} parent=0 // loop_header
    %s13 = sphi 0, %s17
    %p14 = scmp.ge.s32.totalorder %s13, 4
    %s23 = sphi 0, %s25
    %s26 = sphi 0, %s23
    %s27 = sphi 0, %s26
    %s43 = sphi 0, %s27
    %s47 = sphi 0, %s47
    %s49 = sphi 0, %s47
    %s50 = sphi 0, %s49
    %s64 = sphi 0, %s50
    %s68 = sphi 0, %s68
    %s70 = sphi 0, %s68
    %s71 = sphi 0, %s70
    %s85 = sphi 0, %s71
    %s89 = sphi 0, %s89
    %s91 = sphi 0, %s89
    %s92 = sphi 0, %s91
    %s106 = sphi 0, %s92
    %s110 = sphi 0, %s110
    %s112 = sphi 0, %s110
    %s113 = sphi 0, %s112
    %s127 = sphi 0, %s113
    %s131 = sphi 0, %s131
    %s133 = sphi 0, %s131
    %s134 = sphi 0, %s133
    %s148 = sphi 0, %s134
    %s152 = sphi 0, %s152
    %s154 = sphi 0, %s152
    %s155 = sphi 0, %s154
    %s169 = sphi 0, %s155
    %s175 = sphi 0, %s177
    %s178 = sphi 0, %s175
    %s179 = sphi 0, %s178
    %s195 = sphi 0, %s179
  $region4: #{pointnet2_ssg_seg_forward.9} parent=0 // loop_header_branch
    %16 = sbr.rel (%p14) target = $region8
  $region5: #{pointnet2_ssg_seg_forward.9} parent=0 // loop_body
    %s18 = ssub.s32 %s13, 1
    %s19 = ssub.s32 %s13, 2
    %s20 = sadd.s32 %s13, 1
    %s21 = ssub.s32 %s13, %s20
    %p22 = scmp.eq.s32.totalorder %s21, 0
    %s24 = sadd.s32 %s23, 1
    %s25 = scalar_select %p22, %s23, %s24
    %p28 = pneg %p22
    %p29 = scmp.eq.s32.totalorder %s13, 1
    %p30 = por %p28, %p29
    %p31 = scmp.ne.s32.totalorder %s23, %s26
    %p32 = scmp.eq.s32.totalorder %s13, 0
    %p33 = por %p31, %p32
    %p34 = scmp.ne.s32.totalorder %s23, %s26
    %p35 = scmp.eq.s32.totalorder %s18, 1
    %p36 = por %p34, %p35
    %p37 = scmp.ne.s32.totalorder %s26, %s27
    %p38 = scmp.eq.s32.totalorder %s18, 0
    %p39 = por %p37, %p38
    %p40 = scmp.ne.s32.totalorder %s26, %s27
    %p41 = scmp.eq.s32.totalorder %s19, 1
    %p42 = por %p40, %p41
    %p44 = scmp.ne.s32.totalorder %s27, %s43
    %p45 = scmp.eq.s32.totalorder %s19, 0
    %p46 = por %p44, %p45
    %s48 = sadd.s32 %s47, 1
    %p51 = scmp.eq.s32.totalorder %s13, 1
    %p52 = scmp.ne.s32.totalorder %s47, %s49
    %p53 = scmp.eq.s32.totalorder %s13, 0
    %p54 = por %p52, %p53
    %p55 = scmp.ne.s32.totalorder %s47, %s49
    %p56 = scmp.eq.s32.totalorder %s18, 1
    %p57 = por %p55, %p56
    %p58 = scmp.ne.s32.totalorder %s49, %s50
    %p59 = scmp.eq.s32.totalorder %s18, 0
    %p60 = por %p58, %p59
    %p61 = scmp.ne.s32.totalorder %s49, %s50
    %p62 = scmp.eq.s32.totalorder %s19, 1
    %p63 = por %p61, %p62
    %p65 = scmp.ne.s32.totalorder %s50, %s64
    %p66 = scmp.eq.s32.totalorder %s19, 0
    %p67 = por %p65, %p66
    %s69 = sadd.s32 %s68, 1
    %p72 = scmp.eq.s32.totalorder %s13, 1
    %p73 = scmp.ne.s32.totalorder %s68, %s70
    %p74 = scmp.eq.s32.totalorder %s13, 0
    %p75 = por %p73, %p74
    %p76 = scmp.ne.s32.totalorder %s68, %s70
    %p77 = scmp.eq.s32.totalorder %s18, 1
    %p78 = por %p76, %p77
    %p79 = scmp.ne.s32.totalorder %s70, %s71
    %p80 = scmp.eq.s32.totalorder %s18, 0
    %p81 = por %p79, %p80
    %p82 = scmp.ne.s32.totalorder %s70, %s71
    %p83 = scmp.eq.s32.totalorder %s19, 1
    %p84 = por %p82, %p83
    %p86 = scmp.ne.s32.totalorder %s71, %s85
    %p87 = scmp.eq.s32.totalorder %s19, 0
    %p88 = por %p86, %p87
    %s90 = sadd.s32 %s89, 1
    %p93 = scmp.eq.s32.totalorder %s13, 1
    %p94 = scmp.ne.s32.totalorder %s89, %s91
    %p95 = scmp.eq.s32.totalorder %s13, 0
    %p96 = por %p94, %p95
    %p97 = scmp.ne.s32.totalorder %s89, %s91
    %p98 = scmp.eq.s32.totalorder %s18, 1
    %p99 = por %p97, %p98
    %p100 = scmp.ne.s32.totalorder %s91, %s92
    %p101 = scmp.eq.s32.totalorder %s18, 0
    %p102 = por %p100, %p101
    %p103 = scmp.ne.s32.totalorder %s91, %s92
    %p104 = scmp.eq.s32.totalorder %s19, 1
    %p105 = por %p103, %p104
    %p107 = scmp.ne.s32.totalorder %s92, %s106
    %p108 = scmp.eq.s32.totalorder %s19, 0
    %p109 = por %p107, %p108
    %s111 = sadd.s32 %s110, 1
    %p114 = scmp.eq.s32.totalorder %s13, 1
    %p115 = scmp.ne.s32.totalorder %s110, %s112
    %p116 = scmp.eq.s32.totalorder %s13, 0
    %p117 = por %p115, %p116
    %p118 = scmp.ne.s32.totalorder %s110, %s112
    %p119 = scmp.eq.s32.totalorder %s18, 1
    %p120 = por %p118, %p119
    %p121 = scmp.ne.s32.totalorder %s112, %s113
    %p122 = scmp.eq.s32.totalorder %s18, 0
    %p123 = por %p121, %p122
    %p124 = scmp.ne.s32.totalorder %s112, %s113
    %p125 = scmp.eq.s32.totalorder %s19, 1
    %p126 = por %p124, %p125
    %p128 = scmp.ne.s32.totalorder %s113, %s127
    %p129 = scmp.eq.s32.totalorder %s19, 0
    %p130 = por %p128, %p129
    %s132 = sadd.s32 %s131, 1
    %p135 = scmp.eq.s32.totalorder %s13, 1
    %p136 = scmp.ne.s32.totalorder %s131, %s133
    %p137 = scmp.eq.s32.totalorder %s13, 0
    %p138 = por %p136, %p137
    %p139 = scmp.ne.s32.totalorder %s131, %s133
    %p140 = scmp.eq.s32.totalorder %s18, 1
    %p141 = por %p139, %p140
    %p142 = scmp.ne.s32.totalorder %s133, %s134
    %p143 = scmp.eq.s32.totalorder %s18, 0
    %p144 = por %p142, %p143
    %p145 = scmp.ne.s32.totalorder %s133, %s134
    %p146 = scmp.eq.s32.totalorder %s19, 1
    %p147 = por %p145, %p146
    %p149 = scmp.ne.s32.totalorder %s134, %s148
    %p150 = scmp.eq.s32.totalorder %s19, 0
    %p151 = por %p149, %p150
    %s153 = sadd.s32 %s152, 1
    %p156 = scmp.eq.s32.totalorder %s13, 1
    %p157 = scmp.ne.s32.totalorder %s152, %s154
    %p158 = scmp.eq.s32.totalorder %s13, 0
    %p159 = por %p157, %p158
    %p160 = scmp.ne.s32.totalorder %s152, %s154
    %p161 = scmp.eq.s32.totalorder %s18, 1
    %p162 = por %p160, %p161
    %p163 = scmp.ne.s32.totalorder %s154, %s155
    %p164 = scmp.eq.s32.totalorder %s18, 0
    %p165 = por %p163, %p164
    %p166 = scmp.ne.s32.totalorder %s154, %s155
    %p167 = scmp.eq.s32.totalorder %s19, 1
    %p168 = por %p166, %p167
    %p170 = scmp.ne.s32.totalorder %s155, %s169
    %p171 = scmp.eq.s32.totalorder %s19, 0
    %p172 = por %p170, %p171
    %s173 = ssub.s32 %s13, %s20
    %p174 = scmp.eq.s32.totalorder %s173, 0
    %s176 = sadd.s32 %s175, 1
    %s177 = scalar_select %p174, %s175, %s176
    %p180 = pneg %p174
    %p181 = scmp.eq.s32.totalorder %s13, 1
    %p182 = por %p180, %p181
    %p183 = scmp.ne.s32.totalorder %s175, %s178
    %p184 = scmp.eq.s32.totalorder %s13, 0
    %p185 = por %p183, %p184
    %p186 = scmp.ne.s32.totalorder %s175, %s178
    %p187 = scmp.eq.s32.totalorder %s18, 1
    %p188 = por %p186, %p187
    %p189 = scmp.ne.s32.totalorder %s178, %s179
    %p190 = scmp.eq.s32.totalorder %s18, 0
    %p191 = por %p189, %p190
    %p192 = scmp.ne.s32.totalorder %s178, %s179
    %p193 = scmp.eq.s32.totalorder %s19, 1
    %p194 = por %p192, %p193
    %p196 = scmp.ne.s32.totalorder %s179, %s195
    %p197 = scmp.eq.s32.totalorder %s19, 0
    %p198 = por %p196, %p197
    %p199 = scmp.le.s32.totalorder 1, %s13
    %p200 = scmp.lt.s32.totalorder %s13, 3
    %p201 = pnand %p199, %p200
    %p202 = pneg %p201
    // Predicated region
    $region9: #{pointnet2_ssg_seg_forward.9} parent=5 // pred_check
      _
    $region10: #{pointnet2_ssg_seg_forward.9} parent=5 // pred_check_branch
      %204 = sbr.rel (%p201) target = $region12
    $region11: #{pointnet2_ssg_seg_forward.9} parent=5 // pred_region
      %s205 = ssub.s32 %s13, 1
      // Predicated region
      $region13: #{pointnet2_ssg_seg_forward.9} parent=11 // pred_check
        %p206 = pneg %p60
      $region14: #{pointnet2_ssg_seg_forward.9} parent=11 // pred_check_branch
        %208 = sbr.rel (%p206) target = $region16
      $region15: #{pointnet2_ssg_seg_forward.9} parent=11 // pred_region
        _
      $region16: #{pointnet2_ssg_seg_forward.9} parent=11 // pred_fallthru
        _
      // Predicated region
      $region17: #{pointnet2_ssg_seg_forward.9} parent=11 // pred_check
        %p209 = pneg %p81
      $region18: #{pointnet2_ssg_seg_forward.9} parent=11 // pred_check_branch
        %211 = sbr.rel (%p209) target = $region20
      $region19: #{pointnet2_ssg_seg_forward.9} parent=11 // pred_region
        _
      $region20: #{pointnet2_ssg_seg_forward.9} parent=11 // pred_fallthru
        _
      // Predicated region
      $region21: #{pointnet2_ssg_seg_forward.9} parent=11 // pred_check
        %p212 = pneg %p102
      $region22: #{pointnet2_ssg_seg_forward.9} parent=11 // pred_check_branch
        %214 = sbr.rel (%p212) target = $region24
      $region23: #{pointnet2_ssg_seg_forward.9} parent=11 // pred_region
        _
      $region24: #{pointnet2_ssg_seg_forward.9} parent=11 // pred_fallthru
        _
      // Predicated region
      $region25: #{pointnet2_ssg_seg_forward.9} parent=11 // pred_check
        %p215 = pneg %p123
      $region26: #{pointnet2_ssg_seg_forward.9} parent=11 // pred_check_branch
        %217 = sbr.rel (%p215) target = $region28
      $region27: #{pointnet2_ssg_seg_forward.9} parent=11 // pred_region
        _
      $region28: #{pointnet2_ssg_seg_forward.9} parent=11 // pred_fallthru
        _
      // Predicated region
      $region29: #{pointnet2_ssg_seg_forward.9} parent=11 // pred_check
        %p218 = pneg %p144
      $region30: #{pointnet2_ssg_seg_forward.9} parent=11 // pred_check_branch
        %220 = sbr.rel (%p218) target = $region32
      $region31: #{pointnet2_ssg_seg_forward.9} parent=11 // pred_region
        _
      $region32: #{pointnet2_ssg_seg_forward.9} parent=11 // pred_fallthru
        _
      // Predicated region
      $region33: #{pointnet2_ssg_seg_forward.9} parent=11 // pred_check
        %p221 = pneg %p165
      $region34: #{pointnet2_ssg_seg_forward.9} parent=11 // pred_check_branch
        %223 = sbr.rel (%p221) target = $region36
      $region35: #{pointnet2_ssg_seg_forward.9} parent=11 // pred_region
        _
      $region36: #{pointnet2_ssg_seg_forward.9} parent=11 // pred_fallthru
        _
    $region12: #{pointnet2_ssg_seg_forward.9} parent=5 // pred_fallthru
      _
    %p224 = scmp.lt.s32.totalorder %s13, 2
    // Predicated region
    $region37: #{pointnet2_ssg_seg_forward.9} parent=5 // pred_check
      %p225 = pneg %p224
    $region38: #{pointnet2_ssg_seg_forward.9} parent=5 // pred_check_branch
      %227 = sbr.rel (%p225) target = $region40
    $region39: #{pointnet2_ssg_seg_forward.9} parent=5 // pred_region
      // Predicated region
      $region41: #{pointnet2_ssg_seg_forward.9} parent=39 // pred_check
        %p228 = pneg %p33
      $region42: #{pointnet2_ssg_seg_forward.9} parent=39 // pred_check_branch
        %230 = sbr.rel (%p228) target = $region44
      $region43: #{pointnet2_ssg_seg_forward.9} parent=39 // pred_region
        %s231 = smul.u32 32, %s13
        %p232 = scmp.lt.s32.totalorder %s231, 63
        %s233 = scalar_select %p232, %s231, 63
        %s234 = smul.addr %s233, 8
        %s235 = scalar_lea.vmem %s0, %s234
        %s236 = smul.u32 32, %s13
      $region44: #{pointnet2_ssg_seg_forward.9} parent=39 // pred_fallthru
        _
    $region40: #{pointnet2_ssg_seg_forward.9} parent=5 // pred_fallthru
      _
    %p237 = scmp.le.s32.totalorder 1, %s13
    %p238 = scmp.lt.s32.totalorder %s13, 3
    %p239 = pnand %p237, %p238
    %p240 = pneg %p239
    // Predicated region
    $region45: #{pointnet2_ssg_seg_forward.9} parent=5 // pred_check
      _
    $region46: #{pointnet2_ssg_seg_forward.9} parent=5 // pred_check_branch
      %242 = sbr.rel (%p239) target = $region48
    $region47: #{pointnet2_ssg_seg_forward.9} parent=5 // pred_region
      %s243 = ssub.s32 %s13, 1
      %s244 = smul.u32 32, %s18
      %p245 = scmp.lt.s32.totalorder %s244, 63
      %s246 = scalar_select %p245, %s244, 63
      %s247 = smul.addr %s246, 8
      %s248 = scalar_lea.vmem %s0, %s247
      %p249 = pneg %p39
      %p250 = pneg %p36
      %p251 = pneg %p60
      %p252 = pneg %p57
      %p253 = pneg %p81
      %p254 = pneg %p78
      %p255 = pneg %p102
      %p256 = pneg %p99
      %p257 = pneg %p123
      %p258 = pneg %p120
      %p259 = pneg %p144
      %p260 = pneg %p141
      %p261 = pneg %p165
      %p262 = pneg %p162
      %p263 = pneg %p191
      %p264 = pneg %p188
      %s265 = smul.u32 4, %s18
      %p266 = scmp.lt.s32.totalorder %s265, 7
      %s267 = scalar_select %p266, %s265, 7
      %s268 = smul.addr %s267, 8
      %s269 = scalar_lea.vmem %s7, %s268
      %s270 = smul.u32 32, %s18
      %p271 = scmp.lt.s32.totalorder %s270, 63
      %s272 = scalar_select %p271, %s270, 63
      %s273 = smul.addr %s272, 8
      %s274 = scalar_lea.vmem %s0, %s273
      %s275 = smul.u32 32, %s18
      %s276 = smul.u32 4, %s18
      %p277 = scmp.lt.s32.totalorder %s276, 7
      %s278 = scalar_select %p277, %s276, 7
      %s279 = smul.addr %s278, 8
      %s280 = scalar_lea.vmem %s7, %s279
      %s281 = smul.u32 4, %s18
      %v282 = vld [vmem:[%s274] sm:$0xff]
      %v283 = vld [vmem:[%s274 + $0x8] sm:$0xff]
      %v284 = vld [vmem:[%s274 + $0x10] sm:$0xff]
      %v285 = vld [vmem:[%s274 + $0x18] sm:$0xff]
      %v286 = vld [vmem:[%s274 + $0x20] sm:$0xff]
      %v287 = vld [vmem:[%s274 + $0x28] sm:$0xff]
      %v288 = vld [vmem:[%s274 + $0x30] sm:$0xff]
      %v289 = vld [vmem:[%s274 + $0x38] sm:$0xff]
      %v290 = vld [vmem:[%s274 + $0x40] sm:$0xff]
      %v291 = vld [vmem:[%s274 + $0x48] sm:$0xff]
      %v292 = vld [vmem:[%s274 + $0x50] sm:$0xff]
      %v293 = vld [vmem:[%s274 + $0x58] sm:$0xff]
      %v294 = vld [vmem:[%s274 + $0x60] sm:$0xff]
      %v295 = vld [vmem:[%s274 + $0x68] sm:$0xff]
      %v296 = vld [vmem:[%s274 + $0x70] sm:$0xff]
      %v297 = vld [vmem:[%s274 + $0x78] sm:$0xff]
      %v298 = vld [vmem:[%s274 + $0x80] sm:$0xff]
      %v299 = vld [vmem:[%s274 + $0x88] sm:$0xff]
      %v300 = vld [vmem:[%s274 + $0x90] sm:$0xff]
      %v301 = vld [vmem:[%s274 + $0x98] sm:$0xff]
      %v302 = vld [vmem:[%s274 + $0xa0] sm:$0xff]
      %v303 = vld [vmem:[%s274 + $0xa8] sm:$0xff]
      %v304 = vld [vmem:[%s274 + $0xb0] sm:$0xff]
      %v305 = vld [vmem:[%s274 + $0xb8] sm:$0xff]
      %v306 = vld [vmem:[%s274 + $0xc0] sm:$0xff]
      %v307 = vld [vmem:[%s274 + $0xc8] sm:$0xff]
      %v308 = vld [vmem:[%s274 + $0xd0] sm:$0xff]
      %v309 = vld [vmem:[%s274 + $0xd8] sm:$0xff]
      %v310 = vld [vmem:[%s274 + $0xe0] sm:$0xff]
      %v311 = vld [vmem:[%s274 + $0xe8] sm:$0xff]
      %v312 = vld [vmem:[%s274 + $0xf0] sm:$0xff]
      %v313 = vld [vmem:[%s274 + $0xf8] sm:$0xff]
      %v314 = vld [vmem:[%s1] sm:$0x3f]
      %v315 = vld [vmem:[%s4] sm:$0x1]
      %v317 = vperm.slane %v315, 0
      %vm319 = vcmask 48128
      %v321 = vsel %vm319, %v282, 0
      %v324 = vsel %vm319, %v283, 0
      %v327 = vsel %vm319, %v284, 0
      %v330 = vsel %vm319, %v285, 0
      %v333 = vsel %vm319, %v286, 0
      %v336 = vsel %vm319, %v287, 0
      %v339 = vsel %vm319, %v288, 0
      %v342 = vsel %vm319, %v289, 0
      %v345 = vsel %vm319, %v290, 0
      %v348 = vsel %vm319, %v291, 0
      %v351 = vsel %vm319, %v292, 0
      %v354 = vsel %vm319, %v293, 0
      %v357 = vsel %vm319, %v294, 0
      %v360 = vsel %vm319, %v295, 0
      %v363 = vsel %vm319, %v296, 0
      %v366 = vsel %vm319, %v297, 0
      %v369 = vsel %vm319, %v298, 0
      %v372 = vsel %vm319, %v299, 0
      %v375 = vsel %vm319, %v300, 0
      %v378 = vsel %vm319, %v301, 0
      %v381 = vsel %vm319, %v302, 0
      %v384 = vsel %vm319, %v303, 0
      %v387 = vsel %vm319, %v304, 0
      %v390 = vsel %vm319, %v305, 0
      %v393 = vsel %vm319, %v306, 0
      %v396 = vsel %vm319, %v307, 0
      %v399 = vsel %vm319, %v308, 0
      %v402 = vsel %vm319, %v309, 0
      %v405 = vsel %vm319, %v310, 0
      %v408 = vsel %vm319, %v311, 0
      %v411 = vsel %vm319, %v312, 0
      %v414 = vsel %vm319, %v313, 0
      %vm416 = vcmask 1045504
      %v418 = vsel %vm416, %v314, 0
      %420 = vmatpush.msra.mxu0 0.0
      %421 = vmatpush.msra.mxu0 0.0
      %422 = vmatpush.msra.mxu0 0.0
      %423 = vmatpush.msra.mxu0 0.0
      %424 = vmatpush.msra.mxu0 0.0
      %425 = vmatpush.msra.mxu0 0.0
      %426 = vmatpush.msra.mxu0 0.0
      %427 = vmatpush.msra.mxu0 0.0
      %428 = vmatpush.msra.mxu0 0.0
      %429 = vmatpush.msra.mxu0 0.0
      %430 = vmatpush.msra.mxu0 0.0
      %431 = vmatpush.msra.mxu0 0.0
      %432 = vmatpush.msra.mxu0 0.0
      %433 = vmatpush.msra.mxu0 0.0
      %434 = vmatpush.msra.mxu0 0.0
      %435 = vmatpush.msra.mxu0 %v418
      %436 = vmatmul.f32.gmra.mxu0 %v321
      %v437 = vpop.f32.mrf.mxu0
      %v438 = vadd.f32 %v317, %v437
      %439 = vmatmul.f32.gmra.mxu0 %v324
      %v440 = vpop.f32.mrf.mxu0
      %v441 = vadd.f32 %v317, %v440
      %442 = vmatmul.f32.gmra.mxu0 %v327
      %v443 = vpop.f32.mrf.mxu0
      %v444 = vadd.f32 %v317, %v443
      %445 = vmatmul.f32.gmra.mxu0 %v330
      %v446 = vpop.f32.mrf.mxu0
      %v447 = vadd.f32 %v317, %v446
      %448 = vmatmul.f32.gmra.mxu0 %v333
      %v449 = vpop.f32.mrf.mxu0
      %v450 = vadd.f32 %v317, %v449
      %451 = vmatmul.f32.gmra.mxu0 %v336
      %v452 = vpop.f32.mrf.mxu0
      %v453 = vadd.f32 %v317, %v452
      %454 = vmatmul.f32.gmra.mxu0 %v339
      %v455 = vpop.f32.mrf.mxu0
      %v456 = vadd.f32 %v317, %v455
      %457 = vmatmul.f32.gmra.mxu0 %v342
      %v458 = vpop.f32.mrf.mxu0
      %v459 = vadd.f32 %v317, %v458
      %460 = vmatmul.f32.gmra.mxu0 %v345
      %v461 = vpop.f32.mrf.mxu0
      %v462 = vadd.f32 %v317, %v461
      %463 = vmatmul.f32.gmra.mxu0 %v348
      %v464 = vpop.f32.mrf.mxu0
      %v465 = vadd.f32 %v317, %v464
      %466 = vmatmul.f32.gmra.mxu0 %v351
      %v467 = vpop.f32.mrf.mxu0
      %v468 = vadd.f32 %v317, %v467
      %469 = vmatmul.f32.gmra.mxu0 %v354
      %v470 = vpop.f32.mrf.mxu0
      %v471 = vadd.f32 %v317, %v470
      %472 = vmatmul.f32.gmra.mxu0 %v357
      %v473 = vpop.f32.mrf.mxu0
      %v474 = vadd.f32 %v317, %v473
      %475 = vmatmul.f32.gmra.mxu0 %v360
      %v476 = vpop.f32.mrf.mxu0
      %v477 = vadd.f32 %v317, %v476
      %478 = vmatmul.f32.gmra.mxu0 %v363
      %v479 = vpop.f32.mrf.mxu0
      %v480 = vadd.f32 %v317, %v479
      %481 = vmatmul.f32.gmra.mxu0 %v366
      %v482 = vpop.f32.mrf.mxu0
      %v483 = vadd.f32 %v317, %v482
      %484 = vmatmul.f32.gmra.mxu0 %v369
      %v485 = vpop.f32.mrf.mxu0
      %v486 = vadd.f32 %v317, %v485
      %487 = vmatmul.f32.gmra.mxu0 %v372
      %v488 = vpop.f32.mrf.mxu0
      %v489 = vadd.f32 %v317, %v488
      %490 = vmatmul.f32.gmra.mxu0 %v375
      %v491 = vpop.f32.mrf.mxu0
      %v492 = vadd.f32 %v317, %v491
      %493 = vmatmul.f32.gmra.mxu0 %v378
      %v494 = vpop.f32.mrf.mxu0
      %v495 = vadd.f32 %v317, %v494
      %496 = vmatmul.f32.gmra.mxu0 %v381
      %v497 = vpop.f32.mrf.mxu0
      %v498 = vadd.f32 %v317, %v497
      %499 = vmatmul.f32.gmra.mxu0 %v384
      %v500 = vpop.f32.mrf.mxu0
      %v501 = vadd.f32 %v317, %v500
      %502 = vmatmul.f32.gmra.mxu0 %v387
      %v503 = vpop.f32.mrf.mxu0
      %v504 = vadd.f32 %v317, %v503
      %505 = vmatmul.f32.gmra.mxu0 %v390
      %v506 = vpop.f32.mrf.mxu0
      %v507 = vadd.f32 %v317, %v506
      %508 = vmatmul.f32.gmra.mxu0 %v393
      %v509 = vpop.f32.mrf.mxu0
      %v510 = vadd.f32 %v317, %v509
      %511 = vmatmul.f32.gmra.mxu0 %v396
      %v512 = vpop.f32.mrf.mxu0
      %v513 = vadd.f32 %v317, %v512
      %514 = vmatmul.f32.gmra.mxu0 %v399
      %v515 = vpop.f32.mrf.mxu0
      %v516 = vadd.f32 %v317, %v515
      %517 = vmatmul.f32.gmra.mxu0 %v402
      %v518 = vpop.f32.mrf.mxu0
      %v519 = vadd.f32 %v317, %v518
      %520 = vmatmul.f32.gmra.mxu0 %v405
      %v521 = vpop.f32.mrf.mxu0
      %v522 = vadd.f32 %v317, %v521
      %523 = vmatmul.f32.gmra.mxu0 %v408
      %v524 = vpop.f32.mrf.mxu0
      %v525 = vadd.f32 %v317, %v524
      %526 = vmatmul.f32.gmra.mxu0 %v411
      %v527 = vpop.f32.mrf.mxu0
      %v528 = vadd.f32 %v317, %v527
      %529 = vmatmul.f32.gmra.mxu0 %v414
      %v530 = vpop.f32.mrf.mxu0
      %v531 = vadd.f32 %v317, %v530
      %532 = vdwg.mxu0
      %v533 = vmax.f32 %v438, 0.0
      %v534 = vmax.f32 %v441, 0.0
      %v535 = vmax.f32 %v444, 0.0
      %v536 = vmax.f32 %v447, 0.0
      %v537 = vmax.f32 %v450, 0.0
      %v538 = vmax.f32 %v453, 0.0
      %v539 = vmax.f32 %v456, 0.0
      %v540 = vmax.f32 %v459, 0.0
      %v541 = vmax.f32 %v462, 0.0
      %v542 = vmax.f32 %v465, 0.0
      %v543 = vmax.f32 %v468, 0.0
      %v544 = vmax.f32 %v471, 0.0
      %v545 = vmax.f32 %v474, 0.0
      %v546 = vmax.f32 %v477, 0.0
      %v547 = vmax.f32 %v480, 0.0
      %v548 = vmax.f32 %v483, 0.0
      %v549 = vmax.f32 %v486, 0.0
      %v550 = vmax.f32 %v489, 0.0
      %v551 = vmax.f32 %v492, 0.0
      %v552 = vmax.f32 %v495, 0.0
      %v553 = vmax.f32 %v498, 0.0
      %v554 = vmax.f32 %v501, 0.0
      %v555 = vmax.f32 %v504, 0.0
      %v556 = vmax.f32 %v507, 0.0
      %v557 = vmax.f32 %v510, 0.0
      %v558 = vmax.f32 %v513, 0.0
      %v559 = vmax.f32 %v516, 0.0
      %v560 = vmax.f32 %v519, 0.0
      %v561 = vmax.f32 %v522, 0.0
      %v562 = vmax.f32 %v525, 0.0
      %v563 = vmax.f32 %v528, 0.0
      %v564 = vmax.f32 %v531, 0.0
      %v565 = vld [vmem:[%s2] sm:$0xff]
      %v566 = vld [vmem:[%s2 + $0x8] sm:$0xff]
      %v567 = vld [vmem:[%s2 + $0x10] sm:$0xff]
      %v568 = vld [vmem:[%s2 + $0x18] sm:$0xff]
      %v569 = vld [vmem:[%s5] sm:$0x1]
      %v571 = vperm.slane %v569, 0
      %vm573 = vcmask 261120
      %v575 = vsel %vm573, %v533, 0
      %v578 = vsel %vm573, %v534, 0
      %v581 = vsel %vm573, %v535, 0
      %v584 = vsel %vm573, %v536, 0
      %v587 = vsel %vm573, %v537, 0
      %v590 = vsel %vm573, %v538, 0
      %v593 = vsel %vm573, %v539, 0
      %v596 = vsel %vm573, %v540, 0
      %v599 = vsel %vm573, %v541, 0
      %v602 = vsel %vm573, %v542, 0
      %v605 = vsel %vm573, %v543, 0
      %v608 = vsel %vm573, %v544, 0
      %v611 = vsel %vm573, %v545, 0
      %v614 = vsel %vm573, %v546, 0
      %v617 = vsel %vm573, %v547, 0
      %v620 = vsel %vm573, %v548, 0
      %v623 = vsel %vm573, %v549, 0
      %v626 = vsel %vm573, %v550, 0
      %v629 = vsel %vm573, %v551, 0
      %v632 = vsel %vm573, %v552, 0
      %v635 = vsel %vm573, %v553, 0
      %v638 = vsel %vm573, %v554, 0
      %v641 = vsel %vm573, %v555, 0
      %v644 = vsel %vm573, %v556, 0
      %v647 = vsel %vm573, %v557, 0
      %v650 = vsel %vm573, %v558, 0
      %v653 = vsel %vm573, %v559, 0
      %v656 = vsel %vm573, %v560, 0
      %v659 = vsel %vm573, %v561, 0
      %v662 = vsel %vm573, %v562, 0
      %v665 = vsel %vm573, %v563, 0
      %v668 = vsel %vm573, %v564, 0
      %670 = vmatpush.msra.mxu0 0.0
      %671 = vmatpush.msra.mxu0 0.0
      %672 = vmatpush.msra.mxu0 0.0
      %673 = vmatpush.msra.mxu0 0.0
      %674 = vmatpush.msra.mxu0 0.0
      %675 = vmatpush.msra.mxu0 0.0
      %676 = vmatpush.msra.mxu0 0.0
      %677 = vmatpush.msra.mxu0 0.0
      %678 = vmatpush.msra.mxu0 0.0
      %679 = vmatpush.msra.mxu0 0.0
      %680 = vmatpush.msra.mxu0 0.0
      %681 = vmatpush.msra.mxu0 0.0
      %682 = vmatpush.msra.mxu0 %v568
      %683 = vmatpush.msra.mxu0 %v567
      %684 = vmatpush.msra.mxu0 %v566
      %685 = vmatpush.msra.mxu0 %v565
      %686 = vmatmul.f32.gmra.mxu0 %v575
      %v687 = vpop.f32.mrf.mxu0
      %v688 = vadd.f32 %v571, %v687
      %689 = vmatmul.f32.gmra.mxu0 %v578
      %v690 = vpop.f32.mrf.mxu0
      %v691 = vadd.f32 %v571, %v690
      %692 = vmatmul.f32.gmra.mxu0 %v581
      %v693 = vpop.f32.mrf.mxu0
      %v694 = vadd.f32 %v571, %v693
      %695 = vmatmul.f32.gmra.mxu0 %v584
      %v696 = vpop.f32.mrf.mxu0
      %v697 = vadd.f32 %v571, %v696
      %698 = vmatmul.f32.gmra.mxu0 %v587
      %v699 = vpop.f32.mrf.mxu0
      %v700 = vadd.f32 %v571, %v699
      %701 = vmatmul.f32.gmra.mxu0 %v590
      %v702 = vpop.f32.mrf.mxu0
      %v703 = vadd.f32 %v571, %v702
      %704 = vmatmul.f32.gmra.mxu0 %v593
      %v705 = vpop.f32.mrf.mxu0
      %v706 = vadd.f32 %v571, %v705
      %707 = vmatmul.f32.gmra.mxu0 %v596
      %v708 = vpop.f32.mrf.mxu0
      %v709 = vadd.f32 %v571, %v708
      %710 = vmatmul.f32.gmra.mxu0 %v599
      %v711 = vpop.f32.mrf.mxu0
      %v712 = vadd.f32 %v571, %v711
      %713 = vmatmul.f32.gmra.mxu0 %v602
      %v714 = vpop.f32.mrf.mxu0
      %v715 = vadd.f32 %v571, %v714
      %716 = vmatmul.f32.gmra.mxu0 %v605
      %v717 = vpop.f32.mrf.mxu0
      %v718 = vadd.f32 %v571, %v717
      %719 = vmatmul.f32.gmra.mxu0 %v608
      %v720 = vpop.f32.mrf.mxu0
      %v721 = vadd.f32 %v571, %v720
      %722 = vmatmul.f32.gmra.mxu0 %v611
      %v723 = vpop.f32.mrf.mxu0
      %v724 = vadd.f32 %v571, %v723
      %725 = vmatmul.f32.gmra.mxu0 %v614
      %v726 = vpop.f32.mrf.mxu0
      %v727 = vadd.f32 %v571, %v726
      %728 = vmatmul.f32.gmra.mxu0 %v617
      %v729 = vpop.f32.mrf.mxu0
      %v730 = vadd.f32 %v571, %v729
      %731 = vmatmul.f32.gmra.mxu0 %v620
      %v732 = vpop.f32.mrf.mxu0
      %v733 = vadd.f32 %v571, %v732
      %734 = vmatmul.f32.gmra.mxu0 %v623
      %v735 = vpop.f32.mrf.mxu0
      %v736 = vadd.f32 %v571, %v735
      %737 = vmatmul.f32.gmra.mxu0 %v626
      %v738 = vpop.f32.mrf.mxu0
      %v739 = vadd.f32 %v571, %v738
      %740 = vmatmul.f32.gmra.mxu0 %v629
      %v741 = vpop.f32.mrf.mxu0
      %v742 = vadd.f32 %v571, %v741
      %743 = vmatmul.f32.gmra.mxu0 %v632
      %v744 = vpop.f32.mrf.mxu0
      %v745 = vadd.f32 %v571, %v744
      %746 = vmatmul.f32.gmra.mxu0 %v635
      %v747 = vpop.f32.mrf.mxu0
      %v748 = vadd.f32 %v571, %v747
      %749 = vmatmul.f32.gmra.mxu0 %v638
      %v750 = vpop.f32.mrf.mxu0
      %v751 = vadd.f32 %v571, %v750
      %752 = vmatmul.f32.gmra.mxu0 %v641
      %v753 = vpop.f32.mrf.mxu0
      %v754 = vadd.f32 %v571, %v753
      %755 = vmatmul.f32.gmra.mxu0 %v644
      %v756 = vpop.f32.mrf.mxu0
      %v757 = vadd.f32 %v571, %v756
      %758 = vmatmul.f32.gmra.mxu0 %v647
      %v759 = vpop.f32.mrf.mxu0
      %v760 = vadd.f32 %v571, %v759
      %761 = vmatmul.f32.gmra.mxu0 %v650
      %v762 = vpop.f32.mrf.mxu0
      %v763 = vadd.f32 %v571, %v762
      %764 = vmatmul.f32.gmra.mxu0 %v653
      %v765 = vpop.f32.mrf.mxu0
      %v766 = vadd.f32 %v571, %v765
      %767 = vmatmul.f32.gmra.mxu0 %v656
      %v768 = vpop.f32.mrf.mxu0
      %v769 = vadd.f32 %v571, %v768
      %770 = vmatmul.f32.gmra.mxu0 %v659
      %v771 = vpop.f32.mrf.mxu0
      %v772 = vadd.f32 %v571, %v771
      %773 = vmatmul.f32.gmra.mxu0 %v662
      %v774 = vpop.f32.mrf.mxu0
      %v775 = vadd.f32 %v571, %v774
      %776 = vmatmul.f32.gmra.mxu0 %v665
      %v777 = vpop.f32.mrf.mxu0
      %v778 = vadd.f32 %v571, %v777
      %779 = vmatmul.f32.gmra.mxu0 %v668
      %v780 = vpop.f32.mrf.mxu0
      %v781 = vadd.f32 %v571, %v780
      %782 = vdwg.mxu0
      %v783 = vmax.f32 %v688, 0.0
      %v784 = vmax.f32 %v691, 0.0
      %v785 = vmax.f32 %v694, 0.0
      %v786 = vmax.f32 %v697, 0.0
      %v787 = vmax.f32 %v700, 0.0
      %v788 = vmax.f32 %v703, 0.0
      %v789 = vmax.f32 %v706, 0.0
      %v790 = vmax.f32 %v709, 0.0
      %v791 = vmax.f32 %v712, 0.0
      %v792 = vmax.f32 %v715, 0.0
      %v793 = vmax.f32 %v718, 0.0
      %v794 = vmax.f32 %v721, 0.0
      %v795 = vmax.f32 %v724, 0.0
      %v796 = vmax.f32 %v727, 0.0
      %v797 = vmax.f32 %v730, 0.0
      %v798 = vmax.f32 %v733, 0.0
      %v799 = vmax.f32 %v736, 0.0
      %v800 = vmax.f32 %v739, 0.0
      %v801 = vmax.f32 %v742, 0.0
      %v802 = vmax.f32 %v745, 0.0
      %v803 = vmax.f32 %v748, 0.0
      %v804 = vmax.f32 %v751, 0.0
      %v805 = vmax.f32 %v754, 0.0
      %v806 = vmax.f32 %v757, 0.0
      %v807 = vmax.f32 %v760, 0.0
      %v808 = vmax.f32 %v763, 0.0
      %v809 = vmax.f32 %v766, 0.0
      %v810 = vmax.f32 %v769, 0.0
      %v811 = vmax.f32 %v772, 0.0
      %v812 = vmax.f32 %v775, 0.0
      %v813 = vmax.f32 %v778, 0.0
      %v814 = vmax.f32 %v781, 0.0
      %v815 = vld [vmem:[%s3] sm:$0xff]
      %v816 = vld [vmem:[%s3 + $0x8] sm:$0xff]
      %v817 = vld [vmem:[%s3 + $0x10] sm:$0xff]
      %v818 = vld [vmem:[%s3 + $0x18] sm:$0xff]
      %v819 = vld [vmem:[%s6] sm:$0x1]
      %v821 = vperm.slane %v819, 0
      %v824 = vsel %vm573, %v783, 0
      %v827 = vsel %vm573, %v784, 0
      %v830 = vsel %vm573, %v785, 0
      %v833 = vsel %vm573, %v786, 0
      %v836 = vsel %vm573, %v787, 0
      %v839 = vsel %vm573, %v788, 0
      %v842 = vsel %vm573, %v789, 0
      %v845 = vsel %vm573, %v790, 0
      %v848 = vsel %vm573, %v791, 0
      %v851 = vsel %vm573, %v792, 0
      %v854 = vsel %vm573, %v793, 0
      %v857 = vsel %vm573, %v794, 0
      %v860 = vsel %vm573, %v795, 0
      %v863 = vsel %vm573, %v796, 0
      %v866 = vsel %vm573, %v797, 0
      %v869 = vsel %vm573, %v798, 0
      %v872 = vsel %vm573, %v799, 0
      %v875 = vsel %vm573, %v800, 0
      %v878 = vsel %vm573, %v801, 0
      %v881 = vsel %vm573, %v802, 0
      %v884 = vsel %vm573, %v803, 0
      %v887 = vsel %vm573, %v804, 0
      %v890 = vsel %vm573, %v805, 0
      %v893 = vsel %vm573, %v806, 0
      %v896 = vsel %vm573, %v807, 0
      %v899 = vsel %vm573, %v808, 0
      %v902 = vsel %vm573, %v809, 0
      %v905 = vsel %vm573, %v810, 0
      %v908 = vsel %vm573, %v811, 0
      %v911 = vsel %vm573, %v812, 0
      %v914 = vsel %vm573, %v813, 0
      %v917 = vsel %vm573, %v814, 0
      %919 = vmatpush.msra.mxu0 0.0
      %920 = vmatpush.msra.mxu0 0.0
      %921 = vmatpush.msra.mxu0 0.0
      %922 = vmatpush.msra.mxu0 0.0
      %923 = vmatpush.msra.mxu0 0.0
      %924 = vmatpush.msra.mxu0 0.0
      %925 = vmatpush.msra.mxu0 0.0
      %926 = vmatpush.msra.mxu0 0.0
      %927 = vmatpush.msra.mxu0 0.0
      %928 = vmatpush.msra.mxu0 0.0
      %929 = vmatpush.msra.mxu0 0.0
      %930 = vmatpush.msra.mxu0 0.0
      %931 = vmatpush.msra.mxu0 %v818
      %932 = vmatpush.msra.mxu0 %v817
      %933 = vmatpush.msra.mxu0 %v816
      %934 = vmatpush.msra.mxu0 %v815
      %935 = vmatmul.f32.gmra.mxu0 %v824
      %v936 = vpop.f32.mrf.mxu0
      %v937 = vadd.f32 %v821, %v936
      %938 = vmatmul.f32.gmra.mxu0 %v827
      %v939 = vpop.f32.mrf.mxu0
      %v940 = vadd.f32 %v821, %v939
      %941 = vmatmul.f32.gmra.mxu0 %v830
      %v942 = vpop.f32.mrf.mxu0
      %v943 = vadd.f32 %v821, %v942
      %944 = vmatmul.f32.gmra.mxu0 %v833
      %v945 = vpop.f32.mrf.mxu0
      %v946 = vadd.f32 %v821, %v945
      %947 = vmatmul.f32.gmra.mxu0 %v836
      %v948 = vpop.f32.mrf.mxu0
      %v949 = vadd.f32 %v821, %v948
      %950 = vmatmul.f32.gmra.mxu0 %v839
      %v951 = vpop.f32.mrf.mxu0
      %v952 = vadd.f32 %v821, %v951
      %953 = vmatmul.f32.gmra.mxu0 %v842
      %v954 = vpop.f32.mrf.mxu0
      %v955 = vadd.f32 %v821, %v954
      %956 = vmatmul.f32.gmra.mxu0 %v845
      %v957 = vpop.f32.mrf.mxu0
      %v958 = vadd.f32 %v821, %v957
      %959 = vmatmul.f32.gmra.mxu0 %v848
      %v960 = vpop.f32.mrf.mxu0
      %v961 = vadd.f32 %v821, %v960
      %962 = vmatmul.f32.gmra.mxu0 %v851
      %v963 = vpop.f32.mrf.mxu0
      %v964 = vadd.f32 %v821, %v963
      %965 = vmatmul.f32.gmra.mxu0 %v854
      %v966 = vpop.f32.mrf.mxu0
      %v967 = vadd.f32 %v821, %v966
      %968 = vmatmul.f32.gmra.mxu0 %v857
      %v969 = vpop.f32.mrf.mxu0
      %v970 = vadd.f32 %v821, %v969
      %971 = vmatmul.f32.gmra.mxu0 %v860
      %v972 = vpop.f32.mrf.mxu0
      %v973 = vadd.f32 %v821, %v972
      %974 = vmatmul.f32.gmra.mxu0 %v863
      %v975 = vpop.f32.mrf.mxu0
      %v976 = vadd.f32 %v821, %v975
      %977 = vmatmul.f32.gmra.mxu0 %v866
      %v978 = vpop.f32.mrf.mxu0
      %v979 = vadd.f32 %v821, %v978
      %980 = vmatmul.f32.gmra.mxu0 %v869
      %v981 = vpop.f32.mrf.mxu0
      %v982 = vadd.f32 %v821, %v981
      %983 = vmatmul.f32.gmra.mxu0 %v872
      %v984 = vpop.f32.mrf.mxu0
      %v985 = vadd.f32 %v821, %v984
      %986 = vmatmul.f32.gmra.mxu0 %v875
      %v987 = vpop.f32.mrf.mxu0
      %v988 = vadd.f32 %v821, %v987
      %989 = vmatmul.f32.gmra.mxu0 %v878
      %v990 = vpop.f32.mrf.mxu0
      %v991 = vadd.f32 %v821, %v990
      %992 = vmatmul.f32.gmra.mxu0 %v881
      %v993 = vpop.f32.mrf.mxu0
      %v994 = vadd.f32 %v821, %v993
      %995 = vmatmul.f32.gmra.mxu0 %v884
      %v996 = vpop.f32.mrf.mxu0
      %v997 = vadd.f32 %v821, %v996
      %998 = vmatmul.f32.gmra.mxu0 %v887
      %v999 = vpop.f32.mrf.mxu0
      %v1000 = vadd.f32 %v821, %v999
      %1001 = vmatmul.f32.gmra.mxu0 %v890
      %v1002 = vpop.f32.mrf.mxu0
      %v1003 = vadd.f32 %v821, %v1002
      %1004 = vmatmul.f32.gmra.mxu0 %v893
      %v1005 = vpop.f32.mrf.mxu0
      %v1006 = vadd.f32 %v821, %v1005
      %1007 = vmatmul.f32.gmra.mxu0 %v896
      %v1008 = vpop.f32.mrf.mxu0
      %v1009 = vadd.f32 %v821, %v1008
      %1010 = vmatmul.f32.gmra.mxu0 %v899
      %v1011 = vpop.f32.mrf.mxu0
      %v1012 = vadd.f32 %v821, %v1011
      %1013 = vmatmul.f32.gmra.mxu0 %v902
      %v1014 = vpop.f32.mrf.mxu0
      %v1015 = vadd.f32 %v821, %v1014
      %1016 = vmatmul.f32.gmra.mxu0 %v905
      %v1017 = vpop.f32.mrf.mxu0
      %v1018 = vadd.f32 %v821, %v1017
      %1019 = vmatmul.f32.gmra.mxu0 %v908
      %v1020 = vpop.f32.mrf.mxu0
      %v1021 = vadd.f32 %v821, %v1020
      %1022 = vmatmul.f32.gmra.mxu0 %v911
      %v1023 = vpop.f32.mrf.mxu0
      %v1024 = vadd.f32 %v821, %v1023
      %1025 = vmatmul.f32.gmra.mxu0 %v914
      %v1026 = vpop.f32.mrf.mxu0
      %v1027 = vadd.f32 %v821, %v1026
      %1028 = vmatmul.f32.gmra.mxu0 %v917
      %v1029 = vpop.f32.mrf.mxu0
      %v1030 = vadd.f32 %v821, %v1029
      %1031 = vdwg.mxu0
      %v1032 = vmax.f32 %v937, 0.0
      %v1033 = vmax.f32 %v940, 0.0
      %v1034 = vmax.f32 %v943, 0.0
      %v1035 = vmax.f32 %v946, 0.0
      %v1036 = vmax.f32 %v949, 0.0
      %v1037 = vmax.f32 %v952, 0.0
      %v1038 = vmax.f32 %v955, 0.0
      %v1039 = vmax.f32 %v958, 0.0
      %v1040 = vmax.f32 %v961, 0.0
      %v1041 = vmax.f32 %v964, 0.0
      %v1042 = vmax.f32 %v967, 0.0
      %v1043 = vmax.f32 %v970, 0.0
      %v1044 = vmax.f32 %v973, 0.0
      %v1045 = vmax.f32 %v976, 0.0
      %v1046 = vmax.f32 %v979, 0.0
      %v1047 = vmax.f32 %v982, 0.0
      %v1048 = vmax.f32 %v985, 0.0
      %v1049 = vmax.f32 %v988, 0.0
      %v1050 = vmax.f32 %v991, 0.0
      %v1051 = vmax.f32 %v994, 0.0
      %v1052 = vmax.f32 %v997, 0.0
      %v1053 = vmax.f32 %v1000, 0.0
      %v1054 = vmax.f32 %v1003, 0.0
      %v1055 = vmax.f32 %v1006, 0.0
      %v1056 = vmax.f32 %v1009, 0.0
      %v1057 = vmax.f32 %v1012, 0.0
      %v1058 = vmax.f32 %v1015, 0.0
      %v1059 = vmax.f32 %v1018, 0.0
      %v1060 = vmax.f32 %v1021, 0.0
      %v1061 = vmax.f32 %v1024, 0.0
      %v1062 = vmax.f32 %v1027, 0.0
      %v1063 = vmax.f32 %v1030, 0.0
      %vm1064 = vcmask 523264
      %v1065 = vsel %vm1064, %v1032, -inf
      %v1066 = vrot.slane %v1065, 4
      %v1067 = vmax.f32 %v1065, %v1066
      %v1068 = vrot.slane %v1067, 2
      %v1069 = vmax.f32 %v1067, %v1068
      %v1070 = vrot.slane %v1069, 1
      %v1071 = vmax.f32 %v1069, %v1070
      %v1072 = vsel %vm1064, %v1033, -inf
      %v1073 = vrot.slane %v1072, 4
      %v1074 = vmax.f32 %v1072, %v1073
      %v1075 = vrot.slane %v1074, 2
      %v1076 = vmax.f32 %v1074, %v1075
      %v1077 = vrot.slane %v1076, 1
      %v1078 = vmax.f32 %v1076, %v1077
      %v1079 = vsel %vm1064, %v1034, -inf
      %v1080 = vrot.slane %v1079, 4
      %v1081 = vmax.f32 %v1079, %v1080
      %v1082 = vrot.slane %v1081, 2
      %v1083 = vmax.f32 %v1081, %v1082
      %v1084 = vrot.slane %v1083, 1
      %v1085 = vmax.f32 %v1083, %v1084
      %v1086 = vsel %vm1064, %v1035, -inf
      %v1087 = vrot.slane %v1086, 4
      %v1088 = vmax.f32 %v1086, %v1087
      %v1089 = vrot.slane %v1088, 2
      %v1090 = vmax.f32 %v1088, %v1089
      %v1091 = vrot.slane %v1090, 1
      %v1092 = vmax.f32 %v1090, %v1091
      %v1093 = vsel %vm1064, %v1036, -inf
      %v1094 = vrot.slane %v1093, 4
      %v1095 = vmax.f32 %v1093, %v1094
      %v1096 = vrot.slane %v1095, 2
      %v1097 = vmax.f32 %v1095, %v1096
      %v1098 = vrot.slane %v1097, 1
      %v1099 = vmax.f32 %v1097, %v1098
      %v1100 = vsel %vm1064, %v1037, -inf
      %v1101 = vrot.slane %v1100, 4
      %v1102 = vmax.f32 %v1100, %v1101
      %v1103 = vrot.slane %v1102, 2
      %v1104 = vmax.f32 %v1102, %v1103
      %v1105 = vrot.slane %v1104, 1
      %v1106 = vmax.f32 %v1104, %v1105
      %v1107 = vsel %vm1064, %v1038, -inf
      %v1108 = vrot.slane %v1107, 4
      %v1109 = vmax.f32 %v1107, %v1108
      %v1110 = vrot.slane %v1109, 2
      %v1111 = vmax.f32 %v1109, %v1110
      %v1112 = vrot.slane %v1111, 1
      %v1113 = vmax.f32 %v1111, %v1112
      %v1114 = vsel %vm1064, %v1039, -inf
      %v1115 = vrot.slane %v1114, 4
      %v1116 = vmax.f32 %v1114, %v1115
      %v1117 = vrot.slane %v1116, 2
      %v1118 = vmax.f32 %v1116, %v1117
      %v1119 = vrot.slane %v1118, 1
      %v1120 = vmax.f32 %v1118, %v1119
      %v1121 = vsel %vm1064, %v1040, -inf
      %v1122 = vrot.slane %v1121, 4
      %v1123 = vmax.f32 %v1121, %v1122
      %v1124 = vrot.slane %v1123, 2
      %v1125 = vmax.f32 %v1123, %v1124
      %v1126 = vrot.slane %v1125, 1
      %v1127 = vmax.f32 %v1125, %v1126
      %v1128 = vsel %vm1064, %v1041, -inf
      %v1129 = vrot.slane %v1128, 4
      %v1130 = vmax.f32 %v1128, %v1129
      %v1131 = vrot.slane %v1130, 2
      %v1132 = vmax.f32 %v1130, %v1131
      %v1133 = vrot.slane %v1132, 1
      %v1134 = vmax.f32 %v1132, %v1133
      %v1135 = vsel %vm1064, %v1042, -inf
      %v1136 = vrot.slane %v1135, 4
      %v1137 = vmax.f32 %v1135, %v1136
      %v1138 = vrot.slane %v1137, 2
      %v1139 = vmax.f32 %v1137, %v1138
      %v1140 = vrot.slane %v1139, 1
      %v1141 = vmax.f32 %v1139, %v1140
      %v1142 = vsel %vm1064, %v1043, -inf
      %v1143 = vrot.slane %v1142, 4
      %v1144 = vmax.f32 %v1142, %v1143
      %v1145 = vrot.slane %v1144, 2
      %v1146 = vmax.f32 %v1144, %v1145
      %v1147 = vrot.slane %v1146, 1
      %v1148 = vmax.f32 %v1146, %v1147
      %v1149 = vsel %vm1064, %v1044, -inf
      %v1150 = vrot.slane %v1149, 4
      %v1151 = vmax.f32 %v1149, %v1150
      %v1152 = vrot.slane %v1151, 2
      %v1153 = vmax.f32 %v1151, %v1152
      %v1154 = vrot.slane %v1153, 1
      %v1155 = vmax.f32 %v1153, %v1154
      %v1156 = vsel %vm1064, %v1045, -inf
      %v1157 = vrot.slane %v1156, 4
      %v1158 = vmax.f32 %v1156, %v1157
      %v1159 = vrot.slane %v1158, 2
      %v1160 = vmax.f32 %v1158, %v1159
      %v1161 = vrot.slane %v1160, 1
      %v1162 = vmax.f32 %v1160, %v1161
      %v1163 = vsel %vm1064, %v1046, -inf
      %v1164 = vrot.slane %v1163, 4
      %v1165 = vmax.f32 %v1163, %v1164
      %v1166 = vrot.slane %v1165, 2
      %v1167 = vmax.f32 %v1165, %v1166
      %v1168 = vrot.slane %v1167, 1
      %v1169 = vmax.f32 %v1167, %v1168
      %v1170 = vsel %vm1064, %v1047, -inf
      %v1171 = vrot.slane %v1170, 4
      %v1172 = vmax.f32 %v1170, %v1171
      %v1173 = vrot.slane %v1172, 2
      %v1174 = vmax.f32 %v1172, %v1173
      %v1175 = vrot.slane %v1174, 1
      %v1176 = vmax.f32 %v1174, %v1175
      %v1177 = vsel %vm1064, %v1048, -inf
      %v1178 = vrot.slane %v1177, 4
      %v1179 = vmax.f32 %v1177, %v1178
      %v1180 = vrot.slane %v1179, 2
      %v1181 = vmax.f32 %v1179, %v1180
      %v1182 = vrot.slane %v1181, 1
      %v1183 = vmax.f32 %v1181, %v1182
      %v1184 = vsel %vm1064, %v1049, -inf
      %v1185 = vrot.slane %v1184, 4
      %v1186 = vmax.f32 %v1184, %v1185
      %v1187 = vrot.slane %v1186, 2
      %v1188 = vmax.f32 %v1186, %v1187
      %v1189 = vrot.slane %v1188, 1
      %v1190 = vmax.f32 %v1188, %v1189
      %v1191 = vsel %vm1064, %v1050, -inf
      %v1192 = vrot.slane %v1191, 4
      %v1193 = vmax.f32 %v1191, %v1192
      %v1194 = vrot.slane %v1193, 2
      %v1195 = vmax.f32 %v1193, %v1194
      %v1196 = vrot.slane %v1195, 1
      %v1197 = vmax.f32 %v1195, %v1196
      %v1198 = vsel %vm1064, %v1051, -inf
      %v1199 = vrot.slane %v1198, 4
      %v1200 = vmax.f32 %v1198, %v1199
      %v1201 = vrot.slane %v1200, 2
      %v1202 = vmax.f32 %v1200, %v1201
      %v1203 = vrot.slane %v1202, 1
      %v1204 = vmax.f32 %v1202, %v1203
      %v1205 = vsel %vm1064, %v1052, -inf
      %v1206 = vrot.slane %v1205, 4
      %v1207 = vmax.f32 %v1205, %v1206
      %v1208 = vrot.slane %v1207, 2
      %v1209 = vmax.f32 %v1207, %v1208
      %v1210 = vrot.slane %v1209, 1
      %v1211 = vmax.f32 %v1209, %v1210
      %v1212 = vsel %vm1064, %v1053, -inf
      %v1213 = vrot.slane %v1212, 4
      %v1214 = vmax.f32 %v1212, %v1213
      %v1215 = vrot.slane %v1214, 2
      %v1216 = vmax.f32 %v1214, %v1215
      %v1217 = vrot.slane %v1216, 1
      %v1218 = vmax.f32 %v1216, %v1217
      %v1219 = vsel %vm1064, %v1054, -inf
      %v1220 = vrot.slane %v1219, 4
      %v1221 = vmax.f32 %v1219, %v1220
      %v1222 = vrot.slane %v1221, 2
      %v1223 = vmax.f32 %v1221, %v1222
      %v1224 = vrot.slane %v1223, 1
      %v1225 = vmax.f32 %v1223, %v1224
      %v1226 = vsel %vm1064, %v1055, -inf
      %v1227 = vrot.slane %v1226, 4
      %v1228 = vmax.f32 %v1226, %v1227
      %v1229 = vrot.slane %v1228, 2
      %v1230 = vmax.f32 %v1228, %v1229
      %v1231 = vrot.slane %v1230, 1
      %v1232 = vmax.f32 %v1230, %v1231
      %v1233 = vsel %vm1064, %v1056, -inf
      %v1234 = vrot.slane %v1233, 4
      %v1235 = vmax.f32 %v1233, %v1234
      %v1236 = vrot.slane %v1235, 2
      %v1237 = vmax.f32 %v1235, %v1236
      %v1238 = vrot.slane %v1237, 1
      %v1239 = vmax.f32 %v1237, %v1238
      %v1240 = vsel %vm1064, %v1057, -inf
      %v1241 = vrot.slane %v1240, 4
      %v1242 = vmax.f32 %v1240, %v1241
      %v1243 = vrot.slane %v1242, 2
      %v1244 = vmax.f32 %v1242, %v1243
      %v1245 = vrot.slane %v1244, 1
      %v1246 = vmax.f32 %v1244, %v1245
      %v1247 = vsel %vm1064, %v1058, -inf
      %v1248 = vrot.slane %v1247, 4
      %v1249 = vmax.f32 %v1247, %v1248
      %v1250 = vrot.slane %v1249, 2
      %v1251 = vmax.f32 %v1249, %v1250
      %v1252 = vrot.slane %v1251, 1
      %v1253 = vmax.f32 %v1251, %v1252
      %v1254 = vsel %vm1064, %v1059, -inf
      %v1255 = vrot.slane %v1254, 4
      %v1256 = vmax.f32 %v1254, %v1255
      %v1257 = vrot.slane %v1256, 2
      %v1258 = vmax.f32 %v1256, %v1257
      %v1259 = vrot.slane %v1258, 1
      %v1260 = vmax.f32 %v1258, %v1259
      %v1261 = vsel %vm1064, %v1060, -inf
      %v1262 = vrot.slane %v1261, 4
      %v1263 = vmax.f32 %v1261, %v1262
      %v1264 = vrot.slane %v1263, 2
      %v1265 = vmax.f32 %v1263, %v1264
      %v1266 = vrot.slane %v1265, 1
      %v1267 = vmax.f32 %v1265, %v1266
      %v1268 = vsel %vm1064, %v1061, -inf
      %v1269 = vrot.slane %v1268, 4
      %v1270 = vmax.f32 %v1268, %v1269
      %v1271 = vrot.slane %v1270, 2
      %v1272 = vmax.f32 %v1270, %v1271
      %v1273 = vrot.slane %v1272, 1
      %v1274 = vmax.f32 %v1272, %v1273
      %v1275 = vsel %vm1064, %v1062, -inf
      %v1276 = vrot.slane %v1275, 4
      %v1277 = vmax.f32 %v1275, %v1276
      %v1278 = vrot.slane %v1277, 2
      %v1279 = vmax.f32 %v1277, %v1278
      %v1280 = vrot.slane %v1279, 1
      %v1281 = vmax.f32 %v1279, %v1280
      %v1282 = vsel %vm1064, %v1063, -inf
      %v1283 = vrot.slane %v1282, 4
      %v1284 = vmax.f32 %v1282, %v1283
      %v1285 = vrot.slane %v1284, 2
      %v1286 = vmax.f32 %v1284, %v1285
      %v1287 = vrot.slane %v1286, 1
      %v1288 = vmax.f32 %v1286, %v1287
      %vm1321 = vcmask 1041409
      %v1322 = vsel %vm1321, %v1078, %v1071
      %vm1323 = vcmask 1042434
      %v1324 = vsel %vm1323, %v1085, %v1322
      %vm1325 = vcmask 1043459
      %v1326 = vsel %vm1325, %v1092, %v1324
      %vm1327 = vcmask 1044484
      %v1328 = vsel %vm1327, %v1099, %v1326
      %vm1329 = vcmask 1045509
      %v1330 = vsel %vm1329, %v1106, %v1328
      %vm1331 = vcmask 1046534
      %v1332 = vsel %vm1331, %v1113, %v1330
      %vm1333 = vcmask 1047559
      %v1334 = vsel %vm1333, %v1120, %v1332
      %v1335 = vsel %vm1321, %v1134, %v1127
      %v1336 = vsel %vm1323, %v1141, %v1335
      %v1337 = vsel %vm1325, %v1148, %v1336
      %v1338 = vsel %vm1327, %v1155, %v1337
      %v1339 = vsel %vm1329, %v1162, %v1338
      %v1340 = vsel %vm1331, %v1169, %v1339
      %v1341 = vsel %vm1333, %v1176, %v1340
      %v1342 = vsel %vm1321, %v1190, %v1183
      %v1343 = vsel %vm1323, %v1197, %v1342
      %v1344 = vsel %vm1325, %v1204, %v1343
      %v1345 = vsel %vm1327, %v1211, %v1344
      %v1346 = vsel %vm1329, %v1218, %v1345
      %v1347 = vsel %vm1331, %v1225, %v1346
      %v1348 = vsel %vm1333, %v1232, %v1347
      %v1349 = vsel %vm1321, %v1246, %v1239
      %v1350 = vsel %vm1323, %v1253, %v1349
      %v1351 = vsel %vm1325, %v1260, %v1350
      %v1352 = vsel %vm1327, %v1267, %v1351
      %v1353 = vsel %vm1329, %v1274, %v1352
      %v1354 = vsel %vm1331, %v1281, %v1353
      %v1355 = vsel %vm1333, %v1288, %v1354
      %1360 = vst.msk [vmem:[%s280] sm:$0xff] %vm1064, %v1334
      %1361 = vst.msk [vmem:[%s280 + $0x8] sm:$0xff] %vm1064, %v1341
      %1362 = vst.msk [vmem:[%s280 + $0x10] sm:$0xff] %vm1064, %v1348
      %1363 = vst.msk [vmem:[%s280 + $0x18] sm:$0xff] %vm1064, %v1355
      %s1364 = smul.u32 4, %s18
      %p1365 = scmp.lt.s32.totalorder %s1364, 7
      %s1366 = scalar_select %p1365, %s1364, 7
      %s1367 = smul.addr %s1366, 8
      %s1368 = scalar_lea.vmem %s7, %s1367
      // Predicated region
      $region49: #{pointnet2_ssg_seg_forward.9} parent=47 // pred_check
        %p1369 = pneg %p188
      $region50: #{pointnet2_ssg_seg_forward.9} parent=47 // pred_check_branch
        %1371 = sbr.rel (%p1369) target = $region52
      $region51: #{pointnet2_ssg_seg_forward.9} parent=47 // pred_region
        %s1372 = smul.u32 4, %s18
      $region52: #{pointnet2_ssg_seg_forward.9} parent=47 // pred_fallthru
        _
    $region48: #{pointnet2_ssg_seg_forward.9} parent=5 // pred_fallthru
      _
    %p1373 = scmp.le.s32.totalorder 2, %s13
    // Predicated region
    $region53: #{pointnet2_ssg_seg_forward.9} parent=5 // pred_check
      %p1374 = pneg %p1373
    $region54: #{pointnet2_ssg_seg_forward.9} parent=5 // pred_check_branch
      %1376 = sbr.rel (%p1374) target = $region56
    $region55: #{pointnet2_ssg_seg_forward.9} parent=5 // pred_region
      %s1377 = ssub.s32 %s13, 2
      // Predicated region
      $region57: #{pointnet2_ssg_seg_forward.9} parent=55 // pred_check
        %p1378 = pneg %p194
      $region58: #{pointnet2_ssg_seg_forward.9} parent=55 // pred_check_branch
        %1380 = sbr.rel (%p1378) target = $region60
      $region59: #{pointnet2_ssg_seg_forward.9} parent=55 // pred_region
        %s1381 = smul.u32 4, %s19
        %p1382 = scmp.lt.s32.totalorder %s1381, 7
        %s1383 = scalar_select %p1382, %s1381, 7
        %s1384 = smul.addr %s1383, 8
        %s1385 = scalar_lea.vmem %s7, %s1384
      $region60: #{pointnet2_ssg_seg_forward.9} parent=55 // pred_fallthru
        _
    $region56: #{pointnet2_ssg_seg_forward.9} parent=5 // pred_fallthru
      _
  $region6: #{pointnet2_ssg_seg_forward.9} parent=0 // loop_footer
    %s17 = sadd.s32 1, %s13
  $region7: #{pointnet2_ssg_seg_forward.9} parent=0 // loop_footer_branch
    %12 = sbr.rel target = $region3
  $region8: #{pointnet2_ssg_seg_forward.9} parent=0 // loop_exit
    _

// kernel: neg.13
$region0: #{neg.13}
  #allocation0 [shape = 's32[1]{0}', space=sflag, size = 0x4, scoped, tag = 'scoped memory for neg.13']
  %s0 = inlined_call_operand.vmem [shape: f32[2,16,32], index: 0, kind: input, shape index: {}]
  %s1 = inlined_call_operand.vmem [shape: f32[2,16,32], index: 1, kind: output, shape index: {}]
  %v2 = vld [vmem:[%s0] sm:$0xff]
  %3 = xla_tuple %v2
  %4 = xla_tuple %3
  %v5 = vxor.u32 %v2, 2147483648
  %6 = xla_tuple %v5
  %7 = vst [vmem:[%s1] sm:$0xff] %v5
  %s8 = scalar_lea.vmem %s0, 16
  %v9 = vld [vmem:[%s8] sm:$0xff]
  %10 = xla_tuple %v9
  %11 = xla_tuple %10
  %v12 = vxor.u32 %v9, 2147483648
  %13 = xla_tuple %v12
  %s14 = scalar_lea.vmem %s1, 16
  %15 = vst [vmem:[%s14] sm:$0xff] %v12
  %s16 = scalar_lea.vmem %s0, 8
  %v17 = vld [vmem:[%s16] sm:$0xff]
  %18 = xla_tuple %v17
  %19 = xla_tuple %18
  %v20 = vxor.u32 %v17, 2147483648
  %21 = xla_tuple %v20
  %s22 = scalar_lea.vmem %s1, 8
  %23 = vst [vmem:[%s22] sm:$0xff] %v20
  %s24 = scalar_lea.vmem %s0, 24
  %v25 = vld [vmem:[%s24] sm:$0xff]
  %26 = xla_tuple %v25
  %27 = xla_tuple %26
  %v28 = vxor.u32 %v25, 2147483648
  %29 = xla_tuple %v28
  %s30 = scalar_lea.vmem %s1, 24
  %31 = vst [vmem:[%s30] sm:$0xff] %v28

// kernel: custom-call.42
$region0: #{custom-call.42}
  %s0 = inlined_call_operand.vmem [shape: f32[2,16], index: 0, kind: output, shape index: {}]

// kernel: pointnet2_ssg_seg_forward.10
$region0: #{pointnet2_ssg_seg_forward.10}
  #allocation0 [shape = 'u32[]', space=smem, size = 0x4, offset = 0x4, fixed_abs, tag = 'smem constant byte address 0x4 - core index']
  #allocation1 [shape = 'u32[72,128]{1,0:T(1,128)}', space=vmem, size = 0x9000, scoped, tag = 'internal scratch']
  %s0 = inlined_call_operand.vmem [shape: f32[32,8,67], index: 0, kind: input, shape index: {}]
  %s1 = inlined_call_operand.vmem [shape: f32[67,64], index: 1, kind: input, shape index: {}]
  %s2 = inlined_call_operand.vmem [shape: f32[64,64], index: 2, kind: input, shape index: {}]
  %s3 = inlined_call_operand.vmem [shape: f32[64,128], index: 3, kind: input, shape index: {}]
  %s4 = inlined_call_operand.vmem [shape: f32[1,64], index: 4, kind: input, shape index: {}]
  %s5 = inlined_call_operand.vmem [shape: f32[1,64], index: 5, kind: input, shape index: {}]
  %s6 = inlined_call_operand.vmem [shape: f32[1,128], index: 6, kind: input, shape index: {}]
  %s7 = inlined_call_operand.vmem [shape: f32[32,128], index: 7, kind: output, shape index: {}]
  %s8 = sld [smem:[#allocation0]]
  $region61: #{pointnet2_ssg_seg_forward.10} parent=0
    _
  %s10 = ssub.s32 1, %s8
  %s11 = scalar_select 0, %s10, %s8
  loop: start=0, step=1, limit=4
  $region2: #{pointnet2_ssg_seg_forward.10} parent=0 // loop_pre_header
    _
  $region3: #{pointnet2_ssg_seg_forward.10} parent=0 // loop_header
    %s13 = sphi 0, %s17
    %p14 = scmp.ge.s32.totalorder %s13, 4
    %s23 = sphi 0, %s25
    %s26 = sphi 0, %s23
    %s27 = sphi 0, %s26
    %s43 = sphi 0, %s27
    %s47 = sphi 0, %s47
    %s49 = sphi 0, %s47
    %s50 = sphi 0, %s49
    %s64 = sphi 0, %s50
    %s68 = sphi 0, %s68
    %s70 = sphi 0, %s68
    %s71 = sphi 0, %s70
    %s85 = sphi 0, %s71
    %s89 = sphi 0, %s89
    %s91 = sphi 0, %s89
    %s92 = sphi 0, %s91
    %s106 = sphi 0, %s92
    %s110 = sphi 0, %s110
    %s112 = sphi 0, %s110
    %s113 = sphi 0, %s112
    %s127 = sphi 0, %s113
    %s131 = sphi 0, %s131
    %s133 = sphi 0, %s131
    %s134 = sphi 0, %s133
    %s148 = sphi 0, %s134
    %s152 = sphi 0, %s152
    %s154 = sphi 0, %s152
    %s155 = sphi 0, %s154
    %s169 = sphi 0, %s155
    %s175 = sphi 0, %s177
    %s178 = sphi 0, %s175
    %s179 = sphi 0, %s178
    %s195 = sphi 0, %s179
  $region4: #{pointnet2_ssg_seg_forward.10} parent=0 // loop_header_branch
    %16 = sbr.rel (%p14) target = $region8
  $region5: #{pointnet2_ssg_seg_forward.10} parent=0 // loop_body
    %s18 = ssub.s32 %s13, 1
    %s19 = ssub.s32 %s13, 2
    %s20 = sadd.s32 %s13, 1
    %s21 = ssub.s32 %s13, %s20
    %p22 = scmp.eq.s32.totalorder %s21, 0
    %s24 = sadd.s32 %s23, 1
    %s25 = scalar_select %p22, %s23, %s24
    %p28 = pneg %p22
    %p29 = scmp.eq.s32.totalorder %s13, 1
    %p30 = por %p28, %p29
    %p31 = scmp.ne.s32.totalorder %s23, %s26
    %p32 = scmp.eq.s32.totalorder %s13, 0
    %p33 = por %p31, %p32
    %p34 = scmp.ne.s32.totalorder %s23, %s26
    %p35 = scmp.eq.s32.totalorder %s18, 1
    %p36 = por %p34, %p35
    %p37 = scmp.ne.s32.totalorder %s26, %s27
    %p38 = scmp.eq.s32.totalorder %s18, 0
    %p39 = por %p37, %p38
    %p40 = scmp.ne.s32.totalorder %s26, %s27
    %p41 = scmp.eq.s32.totalorder %s19, 1
    %p42 = por %p40, %p41
    %p44 = scmp.ne.s32.totalorder %s27, %s43
    %p45 = scmp.eq.s32.totalorder %s19, 0
    %p46 = por %p44, %p45
    %s48 = sadd.s32 %s47, 1
    %p51 = scmp.eq.s32.totalorder %s13, 1
    %p52 = scmp.ne.s32.totalorder %s47, %s49
    %p53 = scmp.eq.s32.totalorder %s13, 0
    %p54 = por %p52, %p53
    %p55 = scmp.ne.s32.totalorder %s47, %s49
    %p56 = scmp.eq.s32.totalorder %s18, 1
    %p57 = por %p55, %p56
    %p58 = scmp.ne.s32.totalorder %s49, %s50
    %p59 = scmp.eq.s32.totalorder %s18, 0
    %p60 = por %p58, %p59
    %p61 = scmp.ne.s32.totalorder %s49, %s50
    %p62 = scmp.eq.s32.totalorder %s19, 1
    %p63 = por %p61, %p62
    %p65 = scmp.ne.s32.totalorder %s50, %s64
    %p66 = scmp.eq.s32.totalorder %s19, 0
    %p67 = por %p65, %p66
    %s69 = sadd.s32 %s68, 1
    %p72 = scmp.eq.s32.totalorder %s13, 1
    %p73 = scmp.ne.s32.totalorder %s68, %s70
    %p74 = scmp.eq.s32.totalorder %s13, 0
    %p75 = por %p73, %p74
    %p76 = scmp.ne.s32.totalorder %s68, %s70
    %p77 = scmp.eq.s32.totalorder %s18, 1
    %p78 = por %p76, %p77
    %p79 = scmp.ne.s32.totalorder %s70, %s71
    %p80 = scmp.eq.s32.totalorder %s18, 0
    %p81 = por %p79, %p80
    %p82 = scmp.ne.s32.totalorder %s70, %s71
    %p83 = scmp.eq.s32.totalorder %s19, 1
    %p84 = por %p82, %p83
    %p86 = scmp.ne.s32.totalorder %s71, %s85
    %p87 = scmp.eq.s32.totalorder %s19, 0
    %p88 = por %p86, %p87
    %s90 = sadd.s32 %s89, 1
    %p93 = scmp.eq.s32.totalorder %s13, 1
    %p94 = scmp.ne.s32.totalorder %s89, %s91
    %p95 = scmp.eq.s32.totalorder %s13, 0
    %p96 = por %p94, %p95
    %p97 = scmp.ne.s32.totalorder %s89, %s91
    %p98 = scmp.eq.s32.totalorder %s18, 1
    %p99 = por %p97, %p98
    %p100 = scmp.ne.s32.totalorder %s91, %s92
    %p101 = scmp.eq.s32.totalorder %s18, 0
    %p102 = por %p100, %p101
    %p103 = scmp.ne.s32.totalorder %s91, %s92
    %p104 = scmp.eq.s32.totalorder %s19, 1
    %p105 = por %p103, %p104
    %p107 = scmp.ne.s32.totalorder %s92, %s106
    %p108 = scmp.eq.s32.totalorder %s19, 0
    %p109 = por %p107, %p108
    %s111 = sadd.s32 %s110, 1
    %p114 = scmp.eq.s32.totalorder %s13, 1
    %p115 = scmp.ne.s32.totalorder %s110, %s112
    %p116 = scmp.eq.s32.totalorder %s13, 0
    %p117 = por %p115, %p116
    %p118 = scmp.ne.s32.totalorder %s110, %s112
    %p119 = scmp.eq.s32.totalorder %s18, 1
    %p120 = por %p118, %p119
    %p121 = scmp.ne.s32.totalorder %s112, %s113
    %p122 = scmp.eq.s32.totalorder %s18, 0
    %p123 = por %p121, %p122
    %p124 = scmp.ne.s32.totalorder %s112, %s113
    %p125 = scmp.eq.s32.totalorder %s19, 1
    %p126 = por %p124, %p125
    %p128 = scmp.ne.s32.totalorder %s113, %s127
    %p129 = scmp.eq.s32.totalorder %s19, 0
    %p130 = por %p128, %p129
    %s132 = sadd.s32 %s131, 1
    %p135 = scmp.eq.s32.totalorder %s13, 1
    %p136 = scmp.ne.s32.totalorder %s131, %s133
    %p137 = scmp.eq.s32.totalorder %s13, 0
    %p138 = por %p136, %p137
    %p139 = scmp.ne.s32.totalorder %s131, %s133
    %p140 = scmp.eq.s32.totalorder %s18, 1
    %p141 = por %p139, %p140
    %p142 = scmp.ne.s32.totalorder %s133, %s134
    %p143 = scmp.eq.s32.totalorder %s18, 0
    %p144 = por %p142, %p143
    %p145 = scmp.ne.s32.totalorder %s133, %s134
    %p146 = scmp.eq.s32.totalorder %s19, 1
    %p147 = por %p145, %p146
    %p149 = scmp.ne.s32.totalorder %s134, %s148
    %p150 = scmp.eq.s32.totalorder %s19, 0
    %p151 = por %p149, %p150
    %s153 = sadd.s32 %s152, 1
    %p156 = scmp.eq.s32.totalorder %s13, 1
    %p157 = scmp.ne.s32.totalorder %s152, %s154
    %p158 = scmp.eq.s32.totalorder %s13, 0
    %p159 = por %p157, %p158
    %p160 = scmp.ne.s32.totalorder %s152, %s154
    %p161 = scmp.eq.s32.totalorder %s18, 1
    %p162 = por %p160, %p161
    %p163 = scmp.ne.s32.totalorder %s154, %s155
    %p164 = scmp.eq.s32.totalorder %s18, 0
    %p165 = por %p163, %p164
    %p166 = scmp.ne.s32.totalorder %s154, %s155
    %p167 = scmp.eq.s32.totalorder %s19, 1
    %p168 = por %p166, %p167
    %p170 = scmp.ne.s32.totalorder %s155, %s169
    %p171 = scmp.eq.s32.totalorder %s19, 0
    %p172 = por %p170, %p171
    %s173 = ssub.s32 %s13, %s20
    %p174 = scmp.eq.s32.totalorder %s173, 0
    %s176 = sadd.s32 %s175, 1
    %s177 = scalar_select %p174, %s175, %s176
    %p180 = pneg %p174
    %p181 = scmp.eq.s32.totalorder %s13, 1
    %p182 = por %p180, %p181
    %p183 = scmp.ne.s32.totalorder %s175, %s178
    %p184 = scmp.eq.s32.totalorder %s13, 0
    %p185 = por %p183, %p184
    %p186 = scmp.ne.s32.totalorder %s175, %s178
    %p187 = scmp.eq.s32.totalorder %s18, 1
    %p188 = por %p186, %p187
    %p189 = scmp.ne.s32.totalorder %s178, %s179
    %p190 = scmp.eq.s32.totalorder %s18, 0
    %p191 = por %p189, %p190
    %p192 = scmp.ne.s32.totalorder %s178, %s179
    %p193 = scmp.eq.s32.totalorder %s19, 1
    %p194 = por %p192, %p193
    %p196 = scmp.ne.s32.totalorder %s179, %s195
    %p197 = scmp.eq.s32.totalorder %s19, 0
    %p198 = por %p196, %p197
    %p199 = scmp.le.s32.totalorder 1, %s13
    %p200 = scmp.lt.s32.totalorder %s13, 3
    %p201 = pnand %p199, %p200
    %p202 = pneg %p201
    // Predicated region
    $region9: #{pointnet2_ssg_seg_forward.10} parent=5 // pred_check
      _
    $region10: #{pointnet2_ssg_seg_forward.10} parent=5 // pred_check_branch
      %204 = sbr.rel (%p201) target = $region12
    $region11: #{pointnet2_ssg_seg_forward.10} parent=5 // pred_region
      %s205 = ssub.s32 %s13, 1
      // Predicated region
      $region13: #{pointnet2_ssg_seg_forward.10} parent=11 // pred_check
        %p206 = pneg %p60
      $region14: #{pointnet2_ssg_seg_forward.10} parent=11 // pred_check_branch
        %208 = sbr.rel (%p206) target = $region16
      $region15: #{pointnet2_ssg_seg_forward.10} parent=11 // pred_region
        _
      $region16: #{pointnet2_ssg_seg_forward.10} parent=11 // pred_fallthru
        _
      // Predicated region
      $region17: #{pointnet2_ssg_seg_forward.10} parent=11 // pred_check
        %p209 = pneg %p81
      $region18: #{pointnet2_ssg_seg_forward.10} parent=11 // pred_check_branch
        %211 = sbr.rel (%p209) target = $region20
      $region19: #{pointnet2_ssg_seg_forward.10} parent=11 // pred_region
        _
      $region20: #{pointnet2_ssg_seg_forward.10} parent=11 // pred_fallthru
        _
      // Predicated region
      $region21: #{pointnet2_ssg_seg_forward.10} parent=11 // pred_check
        %p212 = pneg %p102
      $region22: #{pointnet2_ssg_seg_forward.10} parent=11 // pred_check_branch
        %214 = sbr.rel (%p212) target = $region24
      $region23: #{pointnet2_ssg_seg_forward.10} parent=11 // pred_region
        _
      $region24: #{pointnet2_ssg_seg_forward.10} parent=11 // pred_fallthru
        _
      // Predicated region
      $region25: #{pointnet2_ssg_seg_forward.10} parent=11 // pred_check
        %p215 = pneg %p123
      $region26: #{pointnet2_ssg_seg_forward.10} parent=11 // pred_check_branch
        %217 = sbr.rel (%p215) target = $region28
      $region27: #{pointnet2_ssg_seg_forward.10} parent=11 // pred_region
        _
      $region28: #{pointnet2_ssg_seg_forward.10} parent=11 // pred_fallthru
        _
      // Predicated region
      $region29: #{pointnet2_ssg_seg_forward.10} parent=11 // pred_check
        %p218 = pneg %p144
      $region30: #{pointnet2_ssg_seg_forward.10} parent=11 // pred_check_branch
        %220 = sbr.rel (%p218) target = $region32
      $region31: #{pointnet2_ssg_seg_forward.10} parent=11 // pred_region
        _
      $region32: #{pointnet2_ssg_seg_forward.10} parent=11 // pred_fallthru
        _
      // Predicated region
      $region33: #{pointnet2_ssg_seg_forward.10} parent=11 // pred_check
        %p221 = pneg %p165
      $region34: #{pointnet2_ssg_seg_forward.10} parent=11 // pred_check_branch
        %223 = sbr.rel (%p221) target = $region36
      $region35: #{pointnet2_ssg_seg_forward.10} parent=11 // pred_region
        _
      $region36: #{pointnet2_ssg_seg_forward.10} parent=11 // pred_fallthru
        _
    $region12: #{pointnet2_ssg_seg_forward.10} parent=5 // pred_fallthru
      _
    %p224 = scmp.lt.s32.totalorder %s13, 2
    // Predicated region
    $region37: #{pointnet2_ssg_seg_forward.10} parent=5 // pred_check
      %p225 = pneg %p224
    $region38: #{pointnet2_ssg_seg_forward.10} parent=5 // pred_check_branch
      %227 = sbr.rel (%p225) target = $region40
    $region39: #{pointnet2_ssg_seg_forward.10} parent=5 // pred_region
      // Predicated region
      $region41: #{pointnet2_ssg_seg_forward.10} parent=39 // pred_check
        %p228 = pneg %p33
      $region42: #{pointnet2_ssg_seg_forward.10} parent=39 // pred_check_branch
        %230 = sbr.rel (%p228) target = $region44
      $region43: #{pointnet2_ssg_seg_forward.10} parent=39 // pred_region
        %s231 = smul.u32 16, %s13
        %p232 = scmp.lt.s32.totalorder %s231, 31
        %s233 = scalar_select %p232, %s231, 31
        %s234 = smul.addr %s233, 8
        %s235 = scalar_lea.vmem %s0, %s234
        %s236 = smul.u32 16, %s13
      $region44: #{pointnet2_ssg_seg_forward.10} parent=39 // pred_fallthru
        _
    $region40: #{pointnet2_ssg_seg_forward.10} parent=5 // pred_fallthru
      _
    %p237 = scmp.le.s32.totalorder 1, %s13
    %p238 = scmp.lt.s32.totalorder %s13, 3
    %p239 = pnand %p237, %p238
    %p240 = pneg %p239
    // Predicated region
    $region45: #{pointnet2_ssg_seg_forward.10} parent=5 // pred_check
      _
    $region46: #{pointnet2_ssg_seg_forward.10} parent=5 // pred_check_branch
      %242 = sbr.rel (%p239) target = $region48
    $region47: #{pointnet2_ssg_seg_forward.10} parent=5 // pred_region
      %s243 = ssub.s32 %s13, 1
      %s244 = smul.u32 16, %s18
      %p245 = scmp.lt.s32.totalorder %s244, 31
      %s246 = scalar_select %p245, %s244, 31
      %s247 = smul.addr %s246, 8
      %s248 = scalar_lea.vmem %s0, %s247
      %p249 = pneg %p39
      %p250 = pneg %p36
      %p251 = pneg %p60
      %p252 = pneg %p57
      %p253 = pneg %p81
      %p254 = pneg %p78
      %p255 = pneg %p102
      %p256 = pneg %p99
      %p257 = pneg %p123
      %p258 = pneg %p120
      %p259 = pneg %p144
      %p260 = pneg %p141
      %p261 = pneg %p165
      %p262 = pneg %p162
      %p263 = pneg %p191
      %p264 = pneg %p188
      %s265 = smul.u32 2, %s18
      %p266 = scmp.lt.s32.totalorder %s265, 3
      %s267 = scalar_select %p266, %s265, 3
      %s268 = smul.addr %s267, 8
      %s269 = scalar_lea.vmem %s7, %s268
      %s270 = smul.u32 16, %s18
      %p271 = scmp.lt.s32.totalorder %s270, 31
      %s272 = scalar_select %p271, %s270, 31
      %s273 = smul.addr %s272, 8
      %s274 = scalar_lea.vmem %s0, %s273
      %s275 = smul.u32 16, %s18
      %s276 = smul.u32 2, %s18
      %p277 = scmp.lt.s32.totalorder %s276, 3
      %s278 = scalar_select %p277, %s276, 3
      %s279 = smul.addr %s278, 8
      %s280 = scalar_lea.vmem %s7, %s279
      %s281 = smul.u32 2, %s18
      %v282 = vld [vmem:[%s274] sm:$0xff]
      %v283 = vld [vmem:[%s274 + $0x8] sm:$0xff]
      %v284 = vld [vmem:[%s274 + $0x10] sm:$0xff]
      %v285 = vld [vmem:[%s274 + $0x18] sm:$0xff]
      %v286 = vld [vmem:[%s274 + $0x20] sm:$0xff]
      %v287 = vld [vmem:[%s274 + $0x28] sm:$0xff]
      %v288 = vld [vmem:[%s274 + $0x30] sm:$0xff]
      %v289 = vld [vmem:[%s274 + $0x38] sm:$0xff]
      %v290 = vld [vmem:[%s274 + $0x40] sm:$0xff]
      %v291 = vld [vmem:[%s274 + $0x48] sm:$0xff]
      %v292 = vld [vmem:[%s274 + $0x50] sm:$0xff]
      %v293 = vld [vmem:[%s274 + $0x58] sm:$0xff]
      %v294 = vld [vmem:[%s274 + $0x60] sm:$0xff]
      %v295 = vld [vmem:[%s274 + $0x68] sm:$0xff]
      %v296 = vld [vmem:[%s274 + $0x70] sm:$0xff]
      %v297 = vld [vmem:[%s274 + $0x78] sm:$0xff]
      %v298 = vld [vmem:[%s1] sm:$0xff]
      %v299 = vld [vmem:[%s1 + $0x8] sm:$0xff]
      %v300 = vld [vmem:[%s1 + $0x10] sm:$0xff]
      %v301 = vld [vmem:[%s1 + $0x18] sm:$0xff]
      %v302 = vld [vmem:[%s1 + $0x20] sm:$0xff]
      %v303 = vld [vmem:[%s1 + $0x28] sm:$0xff]
      %v304 = vld [vmem:[%s1 + $0x30] sm:$0xff]
      %v305 = vld [vmem:[%s1 + $0x38] sm:$0xff]
      %v306 = vld [vmem:[%s1 + $0x40] sm:$0x7]
      %v307 = vld [vmem:[%s4] sm:$0x1]
      %v309 = vperm.slane %v307, 0
      %vm311 = vcmask 547840
      %v313 = vsel %vm311, %v282, 0
      %v316 = vsel %vm311, %v283, 0
      %v319 = vsel %vm311, %v284, 0
      %v322 = vsel %vm311, %v285, 0
      %v325 = vsel %vm311, %v286, 0
      %v328 = vsel %vm311, %v287, 0
      %v331 = vsel %vm311, %v288, 0
      %v334 = vsel %vm311, %v289, 0
      %v337 = vsel %vm311, %v290, 0
      %v340 = vsel %vm311, %v291, 0
      %v343 = vsel %vm311, %v292, 0
      %v346 = vsel %vm311, %v293, 0
      %v349 = vsel %vm311, %v294, 0
      %v352 = vsel %vm311, %v295, 0
      %v355 = vsel %vm311, %v296, 0
      %v358 = vsel %vm311, %v297, 0
      %vm360 = vcmask 1042432
      %v362 = vsel %vm360, %v306, 0
      %364 = vmatpush.msra.mxu0 0.0
      %365 = vmatpush.msra.mxu0 0.0
      %366 = vmatpush.msra.mxu0 0.0
      %367 = vmatpush.msra.mxu0 0.0
      %368 = vmatpush.msra.mxu0 0.0
      %369 = vmatpush.msra.mxu0 0.0
      %370 = vmatpush.msra.mxu0 0.0
      %371 = vmatpush.msra.mxu0 %v362
      %372 = vmatpush.msra.mxu0 %v305
      %373 = vmatpush.msra.mxu0 %v304
      %374 = vmatpush.msra.mxu0 %v303
      %375 = vmatpush.msra.mxu0 %v302
      %376 = vmatpush.msra.mxu0 %v301
      %377 = vmatpush.msra.mxu0 %v300
      %378 = vmatpush.msra.mxu0 %v299
      %379 = vmatpush.msra.mxu0 %v298
      %380 = vmatmul.f32.gmra.mxu0 %v313
      %v381 = vpop.f32.mrf.mxu0
      %v382 = vadd.f32 %v309, %v381
      %383 = vmatmul.f32.gmra.mxu0 %v316
      %v384 = vpop.f32.mrf.mxu0
      %v385 = vadd.f32 %v309, %v384
      %386 = vmatmul.f32.gmra.mxu0 %v319
      %v387 = vpop.f32.mrf.mxu0
      %v388 = vadd.f32 %v309, %v387
      %389 = vmatmul.f32.gmra.mxu0 %v322
      %v390 = vpop.f32.mrf.mxu0
      %v391 = vadd.f32 %v309, %v390
      %392 = vmatmul.f32.gmra.mxu0 %v325
      %v393 = vpop.f32.mrf.mxu0
      %v394 = vadd.f32 %v309, %v393
      %395 = vmatmul.f32.gmra.mxu0 %v328
      %v396 = vpop.f32.mrf.mxu0
      %v397 = vadd.f32 %v309, %v396
      %398 = vmatmul.f32.gmra.mxu0 %v331
      %v399 = vpop.f32.mrf.mxu0
      %v400 = vadd.f32 %v309, %v399
      %401 = vmatmul.f32.gmra.mxu0 %v334
      %v402 = vpop.f32.mrf.mxu0
      %v403 = vadd.f32 %v309, %v402
      %404 = vmatmul.f32.gmra.mxu0 %v337
      %v405 = vpop.f32.mrf.mxu0
      %v406 = vadd.f32 %v309, %v405
      %407 = vmatmul.f32.gmra.mxu0 %v340
      %v408 = vpop.f32.mrf.mxu0
      %v409 = vadd.f32 %v309, %v408
      %410 = vmatmul.f32.gmra.mxu0 %v343
      %v411 = vpop.f32.mrf.mxu0
      %v412 = vadd.f32 %v309, %v411
      %413 = vmatmul.f32.gmra.mxu0 %v346
      %v414 = vpop.f32.mrf.mxu0
      %v415 = vadd.f32 %v309, %v414
      %416 = vmatmul.f32.gmra.mxu0 %v349
      %v417 = vpop.f32.mrf.mxu0
      %v418 = vadd.f32 %v309, %v417
      %419 = vmatmul.f32.gmra.mxu0 %v352
      %v420 = vpop.f32.mrf.mxu0
      %v421 = vadd.f32 %v309, %v420
      %422 = vmatmul.f32.gmra.mxu0 %v355
      %v423 = vpop.f32.mrf.mxu0
      %v424 = vadd.f32 %v309, %v423
      %425 = vmatmul.f32.gmra.mxu0 %v358
      %v426 = vpop.f32.mrf.mxu0
      %v427 = vadd.f32 %v309, %v426
      %428 = vdwg.mxu0
      %v429 = vmax.f32 %v382, 0.0
      %v430 = vmax.f32 %v385, 0.0
      %v431 = vmax.f32 %v388, 0.0
      %v432 = vmax.f32 %v391, 0.0
      %v433 = vmax.f32 %v394, 0.0
      %v434 = vmax.f32 %v397, 0.0
      %v435 = vmax.f32 %v400, 0.0
      %v436 = vmax.f32 %v403, 0.0
      %v437 = vmax.f32 %v406, 0.0
      %v438 = vmax.f32 %v409, 0.0
      %v439 = vmax.f32 %v412, 0.0
      %v440 = vmax.f32 %v415, 0.0
      %v441 = vmax.f32 %v418, 0.0
      %v442 = vmax.f32 %v421, 0.0
      %v443 = vmax.f32 %v424, 0.0
      %v444 = vmax.f32 %v427, 0.0
      %v445 = vld [vmem:[%s2] sm:$0xff]
      %v446 = vld [vmem:[%s2 + $0x8] sm:$0xff]
      %v447 = vld [vmem:[%s2 + $0x10] sm:$0xff]
      %v448 = vld [vmem:[%s2 + $0x18] sm:$0xff]
      %v449 = vld [vmem:[%s2 + $0x20] sm:$0xff]
      %v450 = vld [vmem:[%s2 + $0x28] sm:$0xff]
      %v451 = vld [vmem:[%s2 + $0x30] sm:$0xff]
      %v452 = vld [vmem:[%s2 + $0x38] sm:$0xff]
      %v453 = vld [vmem:[%s5] sm:$0x1]
      %v455 = vperm.slane %v453, 0
      %vm457 = vcmask 523264
      %v459 = vsel %vm457, %v429, 0
      %v462 = vsel %vm457, %v430, 0
      %v465 = vsel %vm457, %v431, 0
      %v468 = vsel %vm457, %v432, 0
      %v471 = vsel %vm457, %v433, 0
      %v474 = vsel %vm457, %v434, 0
      %v477 = vsel %vm457, %v435, 0
      %v480 = vsel %vm457, %v436, 0
      %v483 = vsel %vm457, %v437, 0
      %v486 = vsel %vm457, %v438, 0
      %v489 = vsel %vm457, %v439, 0
      %v492 = vsel %vm457, %v440, 0
      %v495 = vsel %vm457, %v441, 0
      %v498 = vsel %vm457, %v442, 0
      %v501 = vsel %vm457, %v443, 0
      %v504 = vsel %vm457, %v444, 0
      %506 = vmatpush.msra.mxu0 0.0
      %507 = vmatpush.msra.mxu0 0.0
      %508 = vmatpush.msra.mxu0 0.0
      %509 = vmatpush.msra.mxu0 0.0
      %510 = vmatpush.msra.mxu0 0.0
      %511 = vmatpush.msra.mxu0 0.0
      %512 = vmatpush.msra.mxu0 0.0
      %513 = vmatpush.msra.mxu0 0.0
      %514 = vmatpush.msra.mxu0 %v452
      %515 = vmatpush.msra.mxu0 %v451
      %516 = vmatpush.msra.mxu0 %v450
      %517 = vmatpush.msra.mxu0 %v449
      %518 = vmatpush.msra.mxu0 %v448
      %519 = vmatpush.msra.mxu0 %v447
      %520 = vmatpush.msra.mxu0 %v446
      %521 = vmatpush.msra.mxu0 %v445
      %522 = vmatmul.f32.gmra.mxu0 %v459
      %v523 = vpop.f32.mrf.mxu0
      %v524 = vadd.f32 %v455, %v523
      %525 = vmatmul.f32.gmra.mxu0 %v462
      %v526 = vpop.f32.mrf.mxu0
      %v527 = vadd.f32 %v455, %v526
      %528 = vmatmul.f32.gmra.mxu0 %v465
      %v529 = vpop.f32.mrf.mxu0
      %v530 = vadd.f32 %v455, %v529
      %531 = vmatmul.f32.gmra.mxu0 %v468
      %v532 = vpop.f32.mrf.mxu0
      %v533 = vadd.f32 %v455, %v532
      %534 = vmatmul.f32.gmra.mxu0 %v471
      %v535 = vpop.f32.mrf.mxu0
      %v536 = vadd.f32 %v455, %v535
      %537 = vmatmul.f32.gmra.mxu0 %v474
      %v538 = vpop.f32.mrf.mxu0
      %v539 = vadd.f32 %v455, %v538
      %540 = vmatmul.f32.gmra.mxu0 %v477
      %v541 = vpop.f32.mrf.mxu0
      %v542 = vadd.f32 %v455, %v541
      %543 = vmatmul.f32.gmra.mxu0 %v480
      %v544 = vpop.f32.mrf.mxu0
      %v545 = vadd.f32 %v455, %v544
      %546 = vmatmul.f32.gmra.mxu0 %v483
      %v547 = vpop.f32.mrf.mxu0
      %v548 = vadd.f32 %v455, %v547
      %549 = vmatmul.f32.gmra.mxu0 %v486
      %v550 = vpop.f32.mrf.mxu0
      %v551 = vadd.f32 %v455, %v550
      %552 = vmatmul.f32.gmra.mxu0 %v489
      %v553 = vpop.f32.mrf.mxu0
      %v554 = vadd.f32 %v455, %v553
      %555 = vmatmul.f32.gmra.mxu0 %v492
      %v556 = vpop.f32.mrf.mxu0
      %v557 = vadd.f32 %v455, %v556
      %558 = vmatmul.f32.gmra.mxu0 %v495
      %v559 = vpop.f32.mrf.mxu0
      %v560 = vadd.f32 %v455, %v559
      %561 = vmatmul.f32.gmra.mxu0 %v498
      %v562 = vpop.f32.mrf.mxu0
      %v563 = vadd.f32 %v455, %v562
      %564 = vmatmul.f32.gmra.mxu0 %v501
      %v565 = vpop.f32.mrf.mxu0
      %v566 = vadd.f32 %v455, %v565
      %567 = vmatmul.f32.gmra.mxu0 %v504
      %v568 = vpop.f32.mrf.mxu0
      %v569 = vadd.f32 %v455, %v568
      %570 = vdwg.mxu0
      %v571 = vmax.f32 %v524, 0.0
      %v572 = vmax.f32 %v527, 0.0
      %v573 = vmax.f32 %v530, 0.0
      %v574 = vmax.f32 %v533, 0.0
      %v575 = vmax.f32 %v536, 0.0
      %v576 = vmax.f32 %v539, 0.0
      %v577 = vmax.f32 %v542, 0.0
      %v578 = vmax.f32 %v545, 0.0
      %v579 = vmax.f32 %v548, 0.0
      %v580 = vmax.f32 %v551, 0.0
      %v581 = vmax.f32 %v554, 0.0
      %v582 = vmax.f32 %v557, 0.0
      %v583 = vmax.f32 %v560, 0.0
      %v584 = vmax.f32 %v563, 0.0
      %v585 = vmax.f32 %v566, 0.0
      %v586 = vmax.f32 %v569, 0.0
      %v587 = vld [vmem:[%s3] sm:$0xff]
      %v588 = vld [vmem:[%s3 + $0x8] sm:$0xff]
      %v589 = vld [vmem:[%s3 + $0x10] sm:$0xff]
      %v590 = vld [vmem:[%s3 + $0x18] sm:$0xff]
      %v591 = vld [vmem:[%s3 + $0x20] sm:$0xff]
      %v592 = vld [vmem:[%s3 + $0x28] sm:$0xff]
      %v593 = vld [vmem:[%s3 + $0x30] sm:$0xff]
      %v594 = vld [vmem:[%s3 + $0x38] sm:$0xff]
      %v595 = vld [vmem:[%s6] sm:$0x1]
      %v597 = vperm.slane %v595, 0
      %v600 = vsel %vm457, %v571, 0
      %v603 = vsel %vm457, %v572, 0
      %v606 = vsel %vm457, %v573, 0
      %v609 = vsel %vm457, %v574, 0
      %v612 = vsel %vm457, %v575, 0
      %v615 = vsel %vm457, %v576, 0
      %v618 = vsel %vm457, %v577, 0
      %v621 = vsel %vm457, %v578, 0
      %v624 = vsel %vm457, %v579, 0
      %v627 = vsel %vm457, %v580, 0
      %v630 = vsel %vm457, %v581, 0
      %v633 = vsel %vm457, %v582, 0
      %v636 = vsel %vm457, %v583, 0
      %v639 = vsel %vm457, %v584, 0
      %v642 = vsel %vm457, %v585, 0
      %v645 = vsel %vm457, %v586, 0
      %647 = vmatpush.msra.mxu0 0.0
      %648 = vmatpush.msra.mxu0 0.0
      %649 = vmatpush.msra.mxu0 0.0
      %650 = vmatpush.msra.mxu0 0.0
      %651 = vmatpush.msra.mxu0 0.0
      %652 = vmatpush.msra.mxu0 0.0
      %653 = vmatpush.msra.mxu0 0.0
      %654 = vmatpush.msra.mxu0 0.0
      %655 = vmatpush.msra.mxu0 %v594
      %656 = vmatpush.msra.mxu0 %v593
      %657 = vmatpush.msra.mxu0 %v592
      %658 = vmatpush.msra.mxu0 %v591
      %659 = vmatpush.msra.mxu0 %v590
      %660 = vmatpush.msra.mxu0 %v589
      %661 = vmatpush.msra.mxu0 %v588
      %662 = vmatpush.msra.mxu0 %v587
      %663 = vmatmul.f32.gmra.mxu0 %v600
      %v664 = vpop.f32.mrf.mxu0
      %v665 = vadd.f32 %v597, %v664
      %666 = vmatmul.f32.gmra.mxu0 %v603
      %v667 = vpop.f32.mrf.mxu0
      %v668 = vadd.f32 %v597, %v667
      %669 = vmatmul.f32.gmra.mxu0 %v606
      %v670 = vpop.f32.mrf.mxu0
      %v671 = vadd.f32 %v597, %v670
      %672 = vmatmul.f32.gmra.mxu0 %v609
      %v673 = vpop.f32.mrf.mxu0
      %v674 = vadd.f32 %v597, %v673
      %675 = vmatmul.f32.gmra.mxu0 %v612
      %v676 = vpop.f32.mrf.mxu0
      %v677 = vadd.f32 %v597, %v676
      %678 = vmatmul.f32.gmra.mxu0 %v615
      %v679 = vpop.f32.mrf.mxu0
      %v680 = vadd.f32 %v597, %v679
      %681 = vmatmul.f32.gmra.mxu0 %v618
      %v682 = vpop.f32.mrf.mxu0
      %v683 = vadd.f32 %v597, %v682
      %684 = vmatmul.f32.gmra.mxu0 %v621
      %v685 = vpop.f32.mrf.mxu0
      %v686 = vadd.f32 %v597, %v685
      %687 = vmatmul.f32.gmra.mxu0 %v624
      %v688 = vpop.f32.mrf.mxu0
      %v689 = vadd.f32 %v597, %v688
      %690 = vmatmul.f32.gmra.mxu0 %v627
      %v691 = vpop.f32.mrf.mxu0
      %v692 = vadd.f32 %v597, %v691
      %693 = vmatmul.f32.gmra.mxu0 %v630
      %v694 = vpop.f32.mrf.mxu0
      %v695 = vadd.f32 %v597, %v694
      %696 = vmatmul.f32.gmra.mxu0 %v633
      %v697 = vpop.f32.mrf.mxu0
      %v698 = vadd.f32 %v597, %v697
      %699 = vmatmul.f32.gmra.mxu0 %v636
      %v700 = vpop.f32.mrf.mxu0
      %v701 = vadd.f32 %v597, %v700
      %702 = vmatmul.f32.gmra.mxu0 %v639
      %v703 = vpop.f32.mrf.mxu0
      %v704 = vadd.f32 %v597, %v703
      %705 = vmatmul.f32.gmra.mxu0 %v642
      %v706 = vpop.f32.mrf.mxu0
      %v707 = vadd.f32 %v597, %v706
      %708 = vmatmul.f32.gmra.mxu0 %v645
      %v709 = vpop.f32.mrf.mxu0
      %v710 = vadd.f32 %v597, %v709
      %711 = vdwg.mxu0
      %v712 = vmax.f32 %v665, 0.0
      %v713 = vmax.f32 %v668, 0.0
      %v714 = vmax.f32 %v671, 0.0
      %v715 = vmax.f32 %v674, 0.0
      %v716 = vmax.f32 %v677, 0.0
      %v717 = vmax.f32 %v680, 0.0
      %v718 = vmax.f32 %v683, 0.0
      %v719 = vmax.f32 %v686, 0.0
      %v720 = vmax.f32 %v689, 0.0
      %v721 = vmax.f32 %v692, 0.0
      %v722 = vmax.f32 %v695, 0.0
      %v723 = vmax.f32 %v698, 0.0
      %v724 = vmax.f32 %v701, 0.0
      %v725 = vmax.f32 %v704, 0.0
      %v726 = vmax.f32 %v707, 0.0
      %v727 = vmax.f32 %v710, 0.0
      %v728 = vrot.slane %v712, 4
      %v729 = vmax.f32 %v712, %v728
      %v730 = vrot.slane %v729, 2
      %v731 = vmax.f32 %v729, %v730
      %v732 = vrot.slane %v731, 1
      %v733 = vmax.f32 %v731, %v732
      %v734 = vrot.slane %v713, 4
      %v735 = vmax.f32 %v713, %v734
      %v736 = vrot.slane %v735, 2
      %v737 = vmax.f32 %v735, %v736
      %v738 = vrot.slane %v737, 1
      %v739 = vmax.f32 %v737, %v738
      %v740 = vrot.slane %v714, 4
      %v741 = vmax.f32 %v714, %v740
      %v742 = vrot.slane %v741, 2
      %v743 = vmax.f32 %v741, %v742
      %v744 = vrot.slane %v743, 1
      %v745 = vmax.f32 %v743, %v744
      %v746 = vrot.slane %v715, 4
      %v747 = vmax.f32 %v715, %v746
      %v748 = vrot.slane %v747, 2
      %v749 = vmax.f32 %v747, %v748
      %v750 = vrot.slane %v749, 1
      %v751 = vmax.f32 %v749, %v750
      %v752 = vrot.slane %v716, 4
      %v753 = vmax.f32 %v716, %v752
      %v754 = vrot.slane %v753, 2
      %v755 = vmax.f32 %v753, %v754
      %v756 = vrot.slane %v755, 1
      %v757 = vmax.f32 %v755, %v756
      %v758 = vrot.slane %v717, 4
      %v759 = vmax.f32 %v717, %v758
      %v760 = vrot.slane %v759, 2
      %v761 = vmax.f32 %v759, %v760
      %v762 = vrot.slane %v761, 1
      %v763 = vmax.f32 %v761, %v762
      %v764 = vrot.slane %v718, 4
      %v765 = vmax.f32 %v718, %v764
      %v766 = vrot.slane %v765, 2
      %v767 = vmax.f32 %v765, %v766
      %v768 = vrot.slane %v767, 1
      %v769 = vmax.f32 %v767, %v768
      %v770 = vrot.slane %v719, 4
      %v771 = vmax.f32 %v719, %v770
      %v772 = vrot.slane %v771, 2
      %v773 = vmax.f32 %v771, %v772
      %v774 = vrot.slane %v773, 1
      %v775 = vmax.f32 %v773, %v774
      %v776 = vrot.slane %v720, 4
      %v777 = vmax.f32 %v720, %v776
      %v778 = vrot.slane %v777, 2
      %v779 = vmax.f32 %v777, %v778
      %v780 = vrot.slane %v779, 1
      %v781 = vmax.f32 %v779, %v780
      %v782 = vrot.slane %v721, 4
      %v783 = vmax.f32 %v721, %v782
      %v784 = vrot.slane %v783, 2
      %v785 = vmax.f32 %v783, %v784
      %v786 = vrot.slane %v785, 1
      %v787 = vmax.f32 %v785, %v786
      %v788 = vrot.slane %v722, 4
      %v789 = vmax.f32 %v722, %v788
      %v790 = vrot.slane %v789, 2
      %v791 = vmax.f32 %v789, %v790
      %v792 = vrot.slane %v791, 1
      %v793 = vmax.f32 %v791, %v792
      %v794 = vrot.slane %v723, 4
      %v795 = vmax.f32 %v723, %v794
      %v796 = vrot.slane %v795, 2
      %v797 = vmax.f32 %v795, %v796
      %v798 = vrot.slane %v797, 1
      %v799 = vmax.f32 %v797, %v798
      %v800 = vrot.slane %v724, 4
      %v801 = vmax.f32 %v724, %v800
      %v802 = vrot.slane %v801, 2
      %v803 = vmax.f32 %v801, %v802
      %v804 = vrot.slane %v803, 1
      %v805 = vmax.f32 %v803, %v804
      %v806 = vrot.slane %v725, 4
      %v807 = vmax.f32 %v725, %v806
      %v808 = vrot.slane %v807, 2
      %v809 = vmax.f32 %v807, %v808
      %v810 = vrot.slane %v809, 1
      %v811 = vmax.f32 %v809, %v810
      %v812 = vrot.slane %v726, 4
      %v813 = vmax.f32 %v726, %v812
      %v814 = vrot.slane %v813, 2
      %v815 = vmax.f32 %v813, %v814
      %v816 = vrot.slane %v815, 1
      %v817 = vmax.f32 %v815, %v816
      %v818 = vrot.slane %v727, 4
      %v819 = vmax.f32 %v727, %v818
      %v820 = vrot.slane %v819, 2
      %v821 = vmax.f32 %v819, %v820
      %v822 = vrot.slane %v821, 1
      %v823 = vmax.f32 %v821, %v822
      %vm840 = vcmask 1041409
      %v841 = vsel %vm840, %v739, %v733
      %vm842 = vcmask 1042434
      %v843 = vsel %vm842, %v745, %v841
      %vm844 = vcmask 1043459
      %v845 = vsel %vm844, %v751, %v843
      %vm846 = vcmask 1044484
      %v847 = vsel %vm846, %v757, %v845
      %vm848 = vcmask 1045509
      %v849 = vsel %vm848, %v763, %v847
      %vm850 = vcmask 1046534
      %v851 = vsel %vm850, %v769, %v849
      %vm852 = vcmask 1047559
      %v853 = vsel %vm852, %v775, %v851
      %v854 = vsel %vm840, %v787, %v781
      %v855 = vsel %vm842, %v793, %v854
      %v856 = vsel %vm844, %v799, %v855
      %v857 = vsel %vm846, %v805, %v856
      %v858 = vsel %vm848, %v811, %v857
      %v859 = vsel %vm850, %v817, %v858
      %v860 = vsel %vm852, %v823, %v859
      %863 = vst [vmem:[%s280] sm:$0xff] %v853
      %864 = vst [vmem:[%s280 + $0x8] sm:$0xff] %v860
      %s865 = smul.u32 2, %s18
      %p866 = scmp.lt.s32.totalorder %s865, 3
      %s867 = scalar_select %p866, %s865, 3
      %s868 = smul.addr %s867, 8
      %s869 = scalar_lea.vmem %s7, %s868
      // Predicated region
      $region49: #{pointnet2_ssg_seg_forward.10} parent=47 // pred_check
        %p870 = pneg %p188
      $region50: #{pointnet2_ssg_seg_forward.10} parent=47 // pred_check_branch
        %872 = sbr.rel (%p870) target = $region52
      $region51: #{pointnet2_ssg_seg_forward.10} parent=47 // pred_region
        %s873 = smul.u32 2, %s18
      $region52: #{pointnet2_ssg_seg_forward.10} parent=47 // pred_fallthru
        _
    $region48: #{pointnet2_ssg_seg_forward.10} parent=5 // pred_fallthru
      _
    %p874 = scmp.le.s32.totalorder 2, %s13
    // Predicated region
    $region53: #{pointnet2_ssg_seg_forward.10} parent=5 // pred_check
      %p875 = pneg %p874
    $region54: #{pointnet2_ssg_seg_forward.10} parent=5 // pred_check_branch
      %877 = sbr.rel (%p875) target = $region56
    $region55: #{pointnet2_ssg_seg_forward.10} parent=5 // pred_region
      %s878 = ssub.s32 %s13, 2
      // Predicated region
      $region57: #{pointnet2_ssg_seg_forward.10} parent=55 // pred_check
        %p879 = pneg %p194
      $region58: #{pointnet2_ssg_seg_forward.10} parent=55 // pred_check_branch
        %881 = sbr.rel (%p879) target = $region60
      $region59: #{pointnet2_ssg_seg_forward.10} parent=55 // pred_region
        %s882 = smul.u32 2, %s19
        %p883 = scmp.lt.s32.totalorder %s882, 3
        %s884 = scalar_select %p883, %s882, 3
        %s885 = smul.addr %s884, 8
        %s886 = scalar_lea.vmem %s7, %s885
      $region60: #{pointnet2_ssg_seg_forward.10} parent=55 // pred_fallthru
        _
    $region56: #{pointnet2_ssg_seg_forward.10} parent=5 // pred_fallthru
      _
  $region6: #{pointnet2_ssg_seg_forward.10} parent=0 // loop_footer
    %s17 = sadd.s32 1, %s13
  $region7: #{pointnet2_ssg_seg_forward.10} parent=0 // loop_footer_branch
    %12 = sbr.rel target = $region3
  $region8: #{pointnet2_ssg_seg_forward.10} parent=0 // loop_exit
    _

// kernel: neg.14
$region0: #{neg.14}
  #allocation0 [shape = 's32[1]{0}', space=sflag, size = 0x4, scoped, tag = 'scoped memory for neg.14']
  %s0 = inlined_call_operand.vmem [shape: f32[2,8,16], index: 0, kind: input, shape index: {}]
  %s1 = inlined_call_operand.vmem [shape: f32[2,8,16], index: 1, kind: output, shape index: {}]
  %v2 = vld [vmem:[%s0] sm:$0xff]
  %3 = xla_tuple %v2
  %4 = xla_tuple %3
  %v5 = vxor.u32 %v2, 2147483648
  %6 = xla_tuple %v5
  %7 = vst [vmem:[%s1] sm:$0xff] %v5
  %s8 = scalar_lea.vmem %s0, 8
  %v9 = vld [vmem:[%s8] sm:$0xff]
  %10 = xla_tuple %v9
  %11 = xla_tuple %10
  %v12 = vxor.u32 %v9, 2147483648
  %13 = xla_tuple %v12
  %s14 = scalar_lea.vmem %s1, 8
  %15 = vst [vmem:[%s14] sm:$0xff] %v12

// kernel: custom-call.43
$region0: #{custom-call.43}
  %s0 = inlined_call_operand.vmem [shape: f32[2,8], index: 0, kind: output, shape index: {}]

// kernel: pointnet2_ssg_seg_forward.11
$region0: #{pointnet2_ssg_seg_forward.11}
  #allocation0 [shape = 'u32[]', space=smem, size = 0x4, offset = 0x4, fixed_abs, tag = 'smem constant byte address 0x4 - core index']
  #allocation1 [shape = 'u32[72,128]{1,0:T(1,128)}', space=vmem, size = 0x9000, scoped, tag = 'internal scratch']
  %s0 = inlined_call_operand.vmem [shape: f32[16,8,131], index: 0, kind: input, shape index: {}]
  %s1 = inlined_call_operand.vmem [shape: f32[131,128], index: 1, kind: input, shape index: {}]
  %s2 = inlined_call_operand.vmem [shape: f32[128,128], index: 2, kind: input, shape index: {}]
  %s3 = inlined_call_operand.vmem [shape: f32[128,256], index: 3, kind: input, shape index: {}]
  %s4 = inlined_call_operand.vmem [shape: f32[1,128], index: 4, kind: input, shape index: {}]
  %s5 = inlined_call_operand.vmem [shape: f32[1,128], index: 5, kind: input, shape index: {}]
  %s6 = inlined_call_operand.vmem [shape: f32[1,256], index: 6, kind: input, shape index: {}]
  %s7 = inlined_call_operand.vmem [shape: f32[16,256], index: 7, kind: output, shape index: {}]
  %s8 = sld [smem:[#allocation0]]
  $region61: #{pointnet2_ssg_seg_forward.11} parent=0
    _
  %s10 = ssub.s32 1, %s8
  %s11 = scalar_select 0, %s10, %s8
  loop: start=0, step=1, limit=4
  $region2: #{pointnet2_ssg_seg_forward.11} parent=0 // loop_pre_header
    _
  $region3: #{pointnet2_ssg_seg_forward.11} parent=0 // loop_header
    %s13 = sphi 0, %s17
    %p14 = scmp.ge.s32.totalorder %s13, 4
    %s23 = sphi 0, %s25
    %s26 = sphi 0, %s23
    %s27 = sphi 0, %s26
    %s43 = sphi 0, %s27
    %s47 = sphi 0, %s47
    %s49 = sphi 0, %s47
    %s50 = sphi 0, %s49
    %s64 = sphi 0, %s50
    %s68 = sphi 0, %s68
    %s70 = sphi 0, %s68
    %s71 = sphi 0, %s70
    %s85 = sphi 0, %s71
    %s89 = sphi 0, %s89
    %s91 = sphi 0, %s89
    %s92 = sphi 0, %s91
    %s106 = sphi 0, %s92
    %s110 = sphi 0, %s110
    %s112 = sphi 0, %s110
    %s113 = sphi 0, %s112
    %s127 = sphi 0, %s113
    %s131 = sphi 0, %s131
    %s133 = sphi 0, %s131
    %s134 = sphi 0, %s133
    %s148 = sphi 0, %s134
    %s152 = sphi 0, %s152
    %s154 = sphi 0, %s152
    %s155 = sphi 0, %s154
    %s169 = sphi 0, %s155
    %s175 = sphi 0, %s177
    %s178 = sphi 0, %s175
    %s179 = sphi 0, %s178
    %s195 = sphi 0, %s179
  $region4: #{pointnet2_ssg_seg_forward.11} parent=0 // loop_header_branch
    %16 = sbr.rel (%p14) target = $region8
  $region5: #{pointnet2_ssg_seg_forward.11} parent=0 // loop_body
    %s18 = ssub.s32 %s13, 1
    %s19 = ssub.s32 %s13, 2
    %s20 = sadd.s32 %s13, 1
    %s21 = ssub.s32 %s13, %s20
    %p22 = scmp.eq.s32.totalorder %s21, 0
    %s24 = sadd.s32 %s23, 1
    %s25 = scalar_select %p22, %s23, %s24
    %p28 = pneg %p22
    %p29 = scmp.eq.s32.totalorder %s13, 1
    %p30 = por %p28, %p29
    %p31 = scmp.ne.s32.totalorder %s23, %s26
    %p32 = scmp.eq.s32.totalorder %s13, 0
    %p33 = por %p31, %p32
    %p34 = scmp.ne.s32.totalorder %s23, %s26
    %p35 = scmp.eq.s32.totalorder %s18, 1
    %p36 = por %p34, %p35
    %p37 = scmp.ne.s32.totalorder %s26, %s27
    %p38 = scmp.eq.s32.totalorder %s18, 0
    %p39 = por %p37, %p38
    %p40 = scmp.ne.s32.totalorder %s26, %s27
    %p41 = scmp.eq.s32.totalorder %s19, 1
    %p42 = por %p40, %p41
    %p44 = scmp.ne.s32.totalorder %s27, %s43
    %p45 = scmp.eq.s32.totalorder %s19, 0
    %p46 = por %p44, %p45
    %s48 = sadd.s32 %s47, 1
    %p51 = scmp.eq.s32.totalorder %s13, 1
    %p52 = scmp.ne.s32.totalorder %s47, %s49
    %p53 = scmp.eq.s32.totalorder %s13, 0
    %p54 = por %p52, %p53
    %p55 = scmp.ne.s32.totalorder %s47, %s49
    %p56 = scmp.eq.s32.totalorder %s18, 1
    %p57 = por %p55, %p56
    %p58 = scmp.ne.s32.totalorder %s49, %s50
    %p59 = scmp.eq.s32.totalorder %s18, 0
    %p60 = por %p58, %p59
    %p61 = scmp.ne.s32.totalorder %s49, %s50
    %p62 = scmp.eq.s32.totalorder %s19, 1
    %p63 = por %p61, %p62
    %p65 = scmp.ne.s32.totalorder %s50, %s64
    %p66 = scmp.eq.s32.totalorder %s19, 0
    %p67 = por %p65, %p66
    %s69 = sadd.s32 %s68, 1
    %p72 = scmp.eq.s32.totalorder %s13, 1
    %p73 = scmp.ne.s32.totalorder %s68, %s70
    %p74 = scmp.eq.s32.totalorder %s13, 0
    %p75 = por %p73, %p74
    %p76 = scmp.ne.s32.totalorder %s68, %s70
    %p77 = scmp.eq.s32.totalorder %s18, 1
    %p78 = por %p76, %p77
    %p79 = scmp.ne.s32.totalorder %s70, %s71
    %p80 = scmp.eq.s32.totalorder %s18, 0
    %p81 = por %p79, %p80
    %p82 = scmp.ne.s32.totalorder %s70, %s71
    %p83 = scmp.eq.s32.totalorder %s19, 1
    %p84 = por %p82, %p83
    %p86 = scmp.ne.s32.totalorder %s71, %s85
    %p87 = scmp.eq.s32.totalorder %s19, 0
    %p88 = por %p86, %p87
    %s90 = sadd.s32 %s89, 1
    %p93 = scmp.eq.s32.totalorder %s13, 1
    %p94 = scmp.ne.s32.totalorder %s89, %s91
    %p95 = scmp.eq.s32.totalorder %s13, 0
    %p96 = por %p94, %p95
    %p97 = scmp.ne.s32.totalorder %s89, %s91
    %p98 = scmp.eq.s32.totalorder %s18, 1
    %p99 = por %p97, %p98
    %p100 = scmp.ne.s32.totalorder %s91, %s92
    %p101 = scmp.eq.s32.totalorder %s18, 0
    %p102 = por %p100, %p101
    %p103 = scmp.ne.s32.totalorder %s91, %s92
    %p104 = scmp.eq.s32.totalorder %s19, 1
    %p105 = por %p103, %p104
    %p107 = scmp.ne.s32.totalorder %s92, %s106
    %p108 = scmp.eq.s32.totalorder %s19, 0
    %p109 = por %p107, %p108
    %s111 = sadd.s32 %s110, 1
    %p114 = scmp.eq.s32.totalorder %s13, 1
    %p115 = scmp.ne.s32.totalorder %s110, %s112
    %p116 = scmp.eq.s32.totalorder %s13, 0
    %p117 = por %p115, %p116
    %p118 = scmp.ne.s32.totalorder %s110, %s112
    %p119 = scmp.eq.s32.totalorder %s18, 1
    %p120 = por %p118, %p119
    %p121 = scmp.ne.s32.totalorder %s112, %s113
    %p122 = scmp.eq.s32.totalorder %s18, 0
    %p123 = por %p121, %p122
    %p124 = scmp.ne.s32.totalorder %s112, %s113
    %p125 = scmp.eq.s32.totalorder %s19, 1
    %p126 = por %p124, %p125
    %p128 = scmp.ne.s32.totalorder %s113, %s127
    %p129 = scmp.eq.s32.totalorder %s19, 0
    %p130 = por %p128, %p129
    %s132 = sadd.s32 %s131, 1
    %p135 = scmp.eq.s32.totalorder %s13, 1
    %p136 = scmp.ne.s32.totalorder %s131, %s133
    %p137 = scmp.eq.s32.totalorder %s13, 0
    %p138 = por %p136, %p137
    %p139 = scmp.ne.s32.totalorder %s131, %s133
    %p140 = scmp.eq.s32.totalorder %s18, 1
    %p141 = por %p139, %p140
    %p142 = scmp.ne.s32.totalorder %s133, %s134
    %p143 = scmp.eq.s32.totalorder %s18, 0
    %p144 = por %p142, %p143
    %p145 = scmp.ne.s32.totalorder %s133, %s134
    %p146 = scmp.eq.s32.totalorder %s19, 1
    %p147 = por %p145, %p146
    %p149 = scmp.ne.s32.totalorder %s134, %s148
    %p150 = scmp.eq.s32.totalorder %s19, 0
    %p151 = por %p149, %p150
    %s153 = sadd.s32 %s152, 1
    %p156 = scmp.eq.s32.totalorder %s13, 1
    %p157 = scmp.ne.s32.totalorder %s152, %s154
    %p158 = scmp.eq.s32.totalorder %s13, 0
    %p159 = por %p157, %p158
    %p160 = scmp.ne.s32.totalorder %s152, %s154
    %p161 = scmp.eq.s32.totalorder %s18, 1
    %p162 = por %p160, %p161
    %p163 = scmp.ne.s32.totalorder %s154, %s155
    %p164 = scmp.eq.s32.totalorder %s18, 0
    %p165 = por %p163, %p164
    %p166 = scmp.ne.s32.totalorder %s154, %s155
    %p167 = scmp.eq.s32.totalorder %s19, 1
    %p168 = por %p166, %p167
    %p170 = scmp.ne.s32.totalorder %s155, %s169
    %p171 = scmp.eq.s32.totalorder %s19, 0
    %p172 = por %p170, %p171
    %s173 = ssub.s32 %s13, %s20
    %p174 = scmp.eq.s32.totalorder %s173, 0
    %s176 = sadd.s32 %s175, 1
    %s177 = scalar_select %p174, %s175, %s176
    %p180 = pneg %p174
    %p181 = scmp.eq.s32.totalorder %s13, 1
    %p182 = por %p180, %p181
    %p183 = scmp.ne.s32.totalorder %s175, %s178
    %p184 = scmp.eq.s32.totalorder %s13, 0
    %p185 = por %p183, %p184
    %p186 = scmp.ne.s32.totalorder %s175, %s178
    %p187 = scmp.eq.s32.totalorder %s18, 1
    %p188 = por %p186, %p187
    %p189 = scmp.ne.s32.totalorder %s178, %s179
    %p190 = scmp.eq.s32.totalorder %s18, 0
    %p191 = por %p189, %p190
    %p192 = scmp.ne.s32.totalorder %s178, %s179
    %p193 = scmp.eq.s32.totalorder %s19, 1
    %p194 = por %p192, %p193
    %p196 = scmp.ne.s32.totalorder %s179, %s195
    %p197 = scmp.eq.s32.totalorder %s19, 0
    %p198 = por %p196, %p197
    %p199 = scmp.le.s32.totalorder 1, %s13
    %p200 = scmp.lt.s32.totalorder %s13, 3
    %p201 = pnand %p199, %p200
    %p202 = pneg %p201
    // Predicated region
    $region9: #{pointnet2_ssg_seg_forward.11} parent=5 // pred_check
      _
    $region10: #{pointnet2_ssg_seg_forward.11} parent=5 // pred_check_branch
      %204 = sbr.rel (%p201) target = $region12
    $region11: #{pointnet2_ssg_seg_forward.11} parent=5 // pred_region
      %s205 = ssub.s32 %s13, 1
      // Predicated region
      $region13: #{pointnet2_ssg_seg_forward.11} parent=11 // pred_check
        %p206 = pneg %p60
      $region14: #{pointnet2_ssg_seg_forward.11} parent=11 // pred_check_branch
        %208 = sbr.rel (%p206) target = $region16
      $region15: #{pointnet2_ssg_seg_forward.11} parent=11 // pred_region
        _
      $region16: #{pointnet2_ssg_seg_forward.11} parent=11 // pred_fallthru
        _
      // Predicated region
      $region17: #{pointnet2_ssg_seg_forward.11} parent=11 // pred_check
        %p209 = pneg %p81
      $region18: #{pointnet2_ssg_seg_forward.11} parent=11 // pred_check_branch
        %211 = sbr.rel (%p209) target = $region20
      $region19: #{pointnet2_ssg_seg_forward.11} parent=11 // pred_region
        _
      $region20: #{pointnet2_ssg_seg_forward.11} parent=11 // pred_fallthru
        _
      // Predicated region
      $region21: #{pointnet2_ssg_seg_forward.11} parent=11 // pred_check
        %p212 = pneg %p102
      $region22: #{pointnet2_ssg_seg_forward.11} parent=11 // pred_check_branch
        %214 = sbr.rel (%p212) target = $region24
      $region23: #{pointnet2_ssg_seg_forward.11} parent=11 // pred_region
        _
      $region24: #{pointnet2_ssg_seg_forward.11} parent=11 // pred_fallthru
        _
      // Predicated region
      $region25: #{pointnet2_ssg_seg_forward.11} parent=11 // pred_check
        %p215 = pneg %p123
      $region26: #{pointnet2_ssg_seg_forward.11} parent=11 // pred_check_branch
        %217 = sbr.rel (%p215) target = $region28
      $region27: #{pointnet2_ssg_seg_forward.11} parent=11 // pred_region
        _
      $region28: #{pointnet2_ssg_seg_forward.11} parent=11 // pred_fallthru
        _
      // Predicated region
      $region29: #{pointnet2_ssg_seg_forward.11} parent=11 // pred_check
        %p218 = pneg %p144
      $region30: #{pointnet2_ssg_seg_forward.11} parent=11 // pred_check_branch
        %220 = sbr.rel (%p218) target = $region32
      $region31: #{pointnet2_ssg_seg_forward.11} parent=11 // pred_region
        _
      $region32: #{pointnet2_ssg_seg_forward.11} parent=11 // pred_fallthru
        _
      // Predicated region
      $region33: #{pointnet2_ssg_seg_forward.11} parent=11 // pred_check
        %p221 = pneg %p165
      $region34: #{pointnet2_ssg_seg_forward.11} parent=11 // pred_check_branch
        %223 = sbr.rel (%p221) target = $region36
      $region35: #{pointnet2_ssg_seg_forward.11} parent=11 // pred_region
        _
      $region36: #{pointnet2_ssg_seg_forward.11} parent=11 // pred_fallthru
        _
    $region12: #{pointnet2_ssg_seg_forward.11} parent=5 // pred_fallthru
      _
    %p224 = scmp.lt.s32.totalorder %s13, 2
    // Predicated region
    $region37: #{pointnet2_ssg_seg_forward.11} parent=5 // pred_check
      %p225 = pneg %p224
    $region38: #{pointnet2_ssg_seg_forward.11} parent=5 // pred_check_branch
      %227 = sbr.rel (%p225) target = $region40
    $region39: #{pointnet2_ssg_seg_forward.11} parent=5 // pred_region
      // Predicated region
      $region41: #{pointnet2_ssg_seg_forward.11} parent=39 // pred_check
        %p228 = pneg %p33
      $region42: #{pointnet2_ssg_seg_forward.11} parent=39 // pred_check_branch
        %230 = sbr.rel (%p228) target = $region44
      $region43: #{pointnet2_ssg_seg_forward.11} parent=39 // pred_region
        %s231 = smul.u32 8, %s13
        %p232 = scmp.lt.s32.totalorder %s231, 15
        %s233 = scalar_select %p232, %s231, 15
        %s234 = smul.addr %s233, 2
        %s235 = smul.addr %s234, 8
        %s236 = scalar_lea.vmem %s0, %s235
        %s237 = smul.u32 8, %s13
      $region44: #{pointnet2_ssg_seg_forward.11} parent=39 // pred_fallthru
        _
    $region40: #{pointnet2_ssg_seg_forward.11} parent=5 // pred_fallthru
      _
    %p238 = scmp.le.s32.totalorder 1, %s13
    %p239 = scmp.lt.s32.totalorder %s13, 3
    %p240 = pnand %p238, %p239
    %p241 = pneg %p240
    // Predicated region
    $region45: #{pointnet2_ssg_seg_forward.11} parent=5 // pred_check
      _
    $region46: #{pointnet2_ssg_seg_forward.11} parent=5 // pred_check_branch
      %243 = sbr.rel (%p240) target = $region48
    $region47: #{pointnet2_ssg_seg_forward.11} parent=5 // pred_region
      %s244 = ssub.s32 %s13, 1
      %s245 = smul.u32 8, %s18
      %p246 = scmp.lt.s32.totalorder %s245, 15
      %s247 = scalar_select %p246, %s245, 15
      %s248 = smul.addr %s247, 2
      %s249 = smul.addr %s248, 8
      %s250 = scalar_lea.vmem %s0, %s249
      %p251 = pneg %p39
      %p252 = pneg %p36
      %p253 = pneg %p60
      %p254 = pneg %p57
      %p255 = pneg %p81
      %p256 = pneg %p78
      %p257 = pneg %p102
      %p258 = pneg %p99
      %p259 = pneg %p123
      %p260 = pneg %p120
      %p261 = pneg %p144
      %p262 = pneg %p141
      %p263 = pneg %p165
      %p264 = pneg %p162
      %p265 = pneg %p191
      %p266 = pneg %p188
      %p267 = scmp.lt.s32.totalorder %s18, 1
      %s268 = scalar_select %p267, %s18, 1
      %s269 = smul.addr %s268, 2
      %s270 = smul.addr %s269, 8
      %s271 = scalar_lea.vmem %s7, %s270
      %s272 = smul.u32 8, %s18
      %p273 = scmp.lt.s32.totalorder %s272, 15
      %s274 = scalar_select %p273, %s272, 15
      %s275 = smul.addr %s274, 2
      %s276 = smul.addr %s275, 8
      %s277 = scalar_lea.vmem %s0, %s276
      %s278 = smul.u32 8, %s18
      %p279 = scmp.lt.s32.totalorder %s18, 1
      %s280 = scalar_select %p279, %s18, 1
      %s281 = smul.addr %s280, 2
      %s282 = smul.addr %s281, 8
      %s283 = scalar_lea.vmem %s7, %s282
      %v284 = vld [vmem:[%s277] sm:$0xff]
      %v285 = vld [vmem:[%s277 + $0x8] sm:$0xff]
      %v286 = vld [vmem:[%s277 + $0x10] sm:$0xff]
      %v287 = vld [vmem:[%s277 + $0x18] sm:$0xff]
      %v288 = vld [vmem:[%s277 + $0x20] sm:$0xff]
      %v289 = vld [vmem:[%s277 + $0x28] sm:$0xff]
      %v290 = vld [vmem:[%s277 + $0x30] sm:$0xff]
      %v291 = vld [vmem:[%s277 + $0x38] sm:$0xff]
      %v292 = vld [vmem:[%s277 + $0x40] sm:$0xff]
      %v293 = vld [vmem:[%s277 + $0x48] sm:$0xff]
      %v294 = vld [vmem:[%s277 + $0x50] sm:$0xff]
      %v295 = vld [vmem:[%s277 + $0x58] sm:$0xff]
      %v296 = vld [vmem:[%s277 + $0x60] sm:$0xff]
      %v297 = vld [vmem:[%s277 + $0x68] sm:$0xff]
      %v298 = vld [vmem:[%s277 + $0x70] sm:$0xff]
      %v299 = vld [vmem:[%s277 + $0x78] sm:$0xff]
      %v300 = vld [vmem:[%s1] sm:$0xff]
      %v301 = vld [vmem:[%s1 + $0x8] sm:$0xff]
      %v302 = vld [vmem:[%s1 + $0x10] sm:$0xff]
      %v303 = vld [vmem:[%s1 + $0x18] sm:$0xff]
      %v304 = vld [vmem:[%s1 + $0x20] sm:$0xff]
      %v305 = vld [vmem:[%s1 + $0x28] sm:$0xff]
      %v306 = vld [vmem:[%s1 + $0x30] sm:$0xff]
      %v307 = vld [vmem:[%s1 + $0x38] sm:$0xff]
      %v308 = vld [vmem:[%s1 + $0x40] sm:$0xff]
      %v309 = vld [vmem:[%s1 + $0x48] sm:$0xff]
      %v310 = vld [vmem:[%s1 + $0x50] sm:$0xff]
      %v311 = vld [vmem:[%s1 + $0x58] sm:$0xff]
      %v312 = vld [vmem:[%s1 + $0x60] sm:$0xff]
      %v313 = vld [vmem:[%s1 + $0x68] sm:$0xff]
      %v314 = vld [vmem:[%s1 + $0x70] sm:$0xff]
      %v315 = vld [vmem:[%s1 + $0x78] sm:$0xff]
      %v316 = vld [vmem:[%s1 + $0x80] sm:$0x7]
      %v317 = vld [vmem:[%s4] sm:$0x1]
      %v319 = vperm.slane %v317, 0
      %vm321 = vcmask 23552
      %v323 = vsel %vm321, %v285, 0
      %v326 = vsel %vm321, %v287, 0
      %v329 = vsel %vm321, %v289, 0
      %v332 = vsel %vm321, %v291, 0
      %v335 = vsel %vm321, %v293, 0
      %v338 = vsel %vm321, %v295, 0
      %v341 = vsel %vm321, %v297, 0
      %v344 = vsel %vm321, %v299, 0
      %vm346 = vcmask 1042432
      %v348 = vsel %vm346, %v316, 0
      %350 = vmatpush.msra.mxu0 %v315
      %351 = vmatpush.msra.mxu0 %v314
      %352 = vmatpush.msra.mxu0 %v313
      %353 = vmatpush.msra.mxu0 %v312
      %354 = vmatpush.msra.mxu0 %v311
      %355 = vmatpush.msra.mxu0 %v310
      %356 = vmatpush.msra.mxu0 %v309
      %357 = vmatpush.msra.mxu0 %v308
      %358 = vmatpush.msra.mxu0 %v307
      %359 = vmatpush.msra.mxu0 %v306
      %360 = vmatpush.msra.mxu0 %v305
      %361 = vmatpush.msra.mxu0 %v304
      %362 = vmatpush.msra.mxu0 %v303
      %363 = vmatpush.msra.mxu0 %v302
      %364 = vmatpush.msra.mxu0 %v301
      %365 = vmatpush.msra.mxu0 %v300
      %366 = vmatmul.f32.gmra.mxu0 %v284
      %v367 = vpop.f32.mrf.mxu0
      %v368 = vadd.f32 %v319, %v367
      %369 = vmatmul.f32.gmra.mxu0 %v286
      %v370 = vpop.f32.mrf.mxu0
      %v371 = vadd.f32 %v319, %v370
      %372 = vmatmul.f32.gmra.mxu0 %v288
      %v373 = vpop.f32.mrf.mxu0
      %v374 = vadd.f32 %v319, %v373
      %375 = vmatmul.f32.gmra.mxu0 %v290
      %v376 = vpop.f32.mrf.mxu0
      %v377 = vadd.f32 %v319, %v376
      %378 = vmatmul.f32.gmra.mxu0 %v292
      %v379 = vpop.f32.mrf.mxu0
      %v380 = vadd.f32 %v319, %v379
      %381 = vmatmul.f32.gmra.mxu0 %v294
      %v382 = vpop.f32.mrf.mxu0
      %v383 = vadd.f32 %v319, %v382
      %384 = vmatmul.f32.gmra.mxu0 %v296
      %v385 = vpop.f32.mrf.mxu0
      %v386 = vadd.f32 %v319, %v385
      %387 = vmatmul.f32.gmra.mxu0 %v298
      %v388 = vpop.f32.mrf.mxu0
      %v389 = vadd.f32 %v319, %v388
      %390 = vdwg.mxu0
      %391 = vmatpush.msra.mxu0 0.0
      %392 = vmatpush.msra.mxu0 0.0
      %393 = vmatpush.msra.mxu0 0.0
      %394 = vmatpush.msra.mxu0 0.0
      %395 = vmatpush.msra.mxu0 0.0
      %396 = vmatpush.msra.mxu0 0.0
      %397 = vmatpush.msra.mxu0 0.0
      %398 = vmatpush.msra.mxu0 0.0
      %399 = vmatpush.msra.mxu0 0.0
      %400 = vmatpush.msra.mxu0 0.0
      %401 = vmatpush.msra.mxu0 0.0
      %402 = vmatpush.msra.mxu0 0.0
      %403 = vmatpush.msra.mxu0 0.0
      %404 = vmatpush.msra.mxu0 0.0
      %405 = vmatpush.msra.mxu0 0.0
      %406 = vmatpush.msra.mxu0 %v348
      %407 = vmatmul.f32.gmra.mxu0 %v323
      %v408 = vpop.f32.mrf.mxu0
      %v409 = vadd.f32 %v368, %v408
      %410 = vmatmul.f32.gmra.mxu0 %v326
      %v411 = vpop.f32.mrf.mxu0
      %v412 = vadd.f32 %v371, %v411
      %413 = vmatmul.f32.gmra.mxu0 %v329
      %v414 = vpop.f32.mrf.mxu0
      %v415 = vadd.f32 %v374, %v414
      %416 = vmatmul.f32.gmra.mxu0 %v332
      %v417 = vpop.f32.mrf.mxu0
      %v418 = vadd.f32 %v377, %v417
      %419 = vmatmul.f32.gmra.mxu0 %v335
      %v420 = vpop.f32.mrf.mxu0
      %v421 = vadd.f32 %v380, %v420
      %422 = vmatmul.f32.gmra.mxu0 %v338
      %v423 = vpop.f32.mrf.mxu0
      %v424 = vadd.f32 %v383, %v423
      %425 = vmatmul.f32.gmra.mxu0 %v341
      %v426 = vpop.f32.mrf.mxu0
      %v427 = vadd.f32 %v386, %v426
      %428 = vmatmul.f32.gmra.mxu0 %v344
      %v429 = vpop.f32.mrf.mxu0
      %v430 = vadd.f32 %v389, %v429
      %431 = vdwg.mxu0
      %v432 = vmax.f32 %v409, 0.0
      %v433 = vmax.f32 %v412, 0.0
      %v434 = vmax.f32 %v415, 0.0
      %v435 = vmax.f32 %v418, 0.0
      %v436 = vmax.f32 %v421, 0.0
      %v437 = vmax.f32 %v424, 0.0
      %v438 = vmax.f32 %v427, 0.0
      %v439 = vmax.f32 %v430, 0.0
      %v440 = vld [vmem:[%s2] sm:$0xff]
      %v441 = vld [vmem:[%s2 + $0x8] sm:$0xff]
      %v442 = vld [vmem:[%s2 + $0x10] sm:$0xff]
      %v443 = vld [vmem:[%s2 + $0x18] sm:$0xff]
      %v444 = vld [vmem:[%s2 + $0x20] sm:$0xff]
      %v445 = vld [vmem:[%s2 + $0x28] sm:$0xff]
      %v446 = vld [vmem:[%s2 + $0x30] sm:$0xff]
      %v447 = vld [vmem:[%s2 + $0x38] sm:$0xff]
      %v448 = vld [vmem:[%s2 + $0x40] sm:$0xff]
      %v449 = vld [vmem:[%s2 + $0x48] sm:$0xff]
      %v450 = vld [vmem:[%s2 + $0x50] sm:$0xff]
      %v451 = vld [vmem:[%s2 + $0x58] sm:$0xff]
      %v452 = vld [vmem:[%s2 + $0x60] sm:$0xff]
      %v453 = vld [vmem:[%s2 + $0x68] sm:$0xff]
      %v454 = vld [vmem:[%s2 + $0x70] sm:$0xff]
      %v455 = vld [vmem:[%s2 + $0x78] sm:$0xff]
      %v456 = vld [vmem:[%s5] sm:$0x1]
      %v458 = vperm.slane %v456, 0
      %460 = vmatpush.msra.mxu0 %v455
      %461 = vmatpush.msra.mxu0 %v454
      %462 = vmatpush.msra.mxu0 %v453
      %463 = vmatpush.msra.mxu0 %v452
      %464 = vmatpush.msra.mxu0 %v451
      %465 = vmatpush.msra.mxu0 %v450
      %466 = vmatpush.msra.mxu0 %v449
      %467 = vmatpush.msra.mxu0 %v448
      %468 = vmatpush.msra.mxu0 %v447
      %469 = vmatpush.msra.mxu0 %v446
      %470 = vmatpush.msra.mxu0 %v445
      %471 = vmatpush.msra.mxu0 %v444
      %472 = vmatpush.msra.mxu0 %v443
      %473 = vmatpush.msra.mxu0 %v442
      %474 = vmatpush.msra.mxu0 %v441
      %475 = vmatpush.msra.mxu0 %v440
      %476 = vmatmul.f32.gmra.mxu0 %v432
      %v477 = vpop.f32.mrf.mxu0
      %v478 = vadd.f32 %v458, %v477
      %479 = vmatmul.f32.gmra.mxu0 %v433
      %v480 = vpop.f32.mrf.mxu0
      %v481 = vadd.f32 %v458, %v480
      %482 = vmatmul.f32.gmra.mxu0 %v434
      %v483 = vpop.f32.mrf.mxu0
      %v484 = vadd.f32 %v458, %v483
      %485 = vmatmul.f32.gmra.mxu0 %v435
      %v486 = vpop.f32.mrf.mxu0
      %v487 = vadd.f32 %v458, %v486
      %488 = vmatmul.f32.gmra.mxu0 %v436
      %v489 = vpop.f32.mrf.mxu0
      %v490 = vadd.f32 %v458, %v489
      %491 = vmatmul.f32.gmra.mxu0 %v437
      %v492 = vpop.f32.mrf.mxu0
      %v493 = vadd.f32 %v458, %v492
      %494 = vmatmul.f32.gmra.mxu0 %v438
      %v495 = vpop.f32.mrf.mxu0
      %v496 = vadd.f32 %v458, %v495
      %497 = vmatmul.f32.gmra.mxu0 %v439
      %v498 = vpop.f32.mrf.mxu0
      %v499 = vadd.f32 %v458, %v498
      %500 = vdwg.mxu0
      %v501 = vmax.f32 %v478, 0.0
      %v502 = vmax.f32 %v481, 0.0
      %v503 = vmax.f32 %v484, 0.0
      %v504 = vmax.f32 %v487, 0.0
      %v505 = vmax.f32 %v490, 0.0
      %v506 = vmax.f32 %v493, 0.0
      %v507 = vmax.f32 %v496, 0.0
      %v508 = vmax.f32 %v499, 0.0
      %v509 = vld [vmem:[%s3] sm:$0xff]
      %v510 = vld [vmem:[%s3 + $0x8] sm:$0xff]
      %v511 = vld [vmem:[%s3 + $0x10] sm:$0xff]
      %v512 = vld [vmem:[%s3 + $0x18] sm:$0xff]
      %v513 = vld [vmem:[%s3 + $0x20] sm:$0xff]
      %v514 = vld [vmem:[%s3 + $0x28] sm:$0xff]
      %v515 = vld [vmem:[%s3 + $0x30] sm:$0xff]
      %v516 = vld [vmem:[%s3 + $0x38] sm:$0xff]
      %v517 = vld [vmem:[%s3 + $0x40] sm:$0xff]
      %v518 = vld [vmem:[%s3 + $0x48] sm:$0xff]
      %v519 = vld [vmem:[%s3 + $0x50] sm:$0xff]
      %v520 = vld [vmem:[%s3 + $0x58] sm:$0xff]
      %v521 = vld [vmem:[%s3 + $0x60] sm:$0xff]
      %v522 = vld [vmem:[%s3 + $0x68] sm:$0xff]
      %v523 = vld [vmem:[%s3 + $0x70] sm:$0xff]
      %v524 = vld [vmem:[%s3 + $0x78] sm:$0xff]
      %v525 = vld [vmem:[%s3 + $0x80] sm:$0xff]
      %v526 = vld [vmem:[%s3 + $0x88] sm:$0xff]
      %v527 = vld [vmem:[%s3 + $0x90] sm:$0xff]
      %v528 = vld [vmem:[%s3 + $0x98] sm:$0xff]
      %v529 = vld [vmem:[%s3 + $0xa0] sm:$0xff]
      %v530 = vld [vmem:[%s3 + $0xa8] sm:$0xff]
      %v531 = vld [vmem:[%s3 + $0xb0] sm:$0xff]
      %v532 = vld [vmem:[%s3 + $0xb8] sm:$0xff]
      %v533 = vld [vmem:[%s3 + $0xc0] sm:$0xff]
      %v534 = vld [vmem:[%s3 + $0xc8] sm:$0xff]
      %v535 = vld [vmem:[%s3 + $0xd0] sm:$0xff]
      %v536 = vld [vmem:[%s3 + $0xd8] sm:$0xff]
      %v537 = vld [vmem:[%s3 + $0xe0] sm:$0xff]
      %v538 = vld [vmem:[%s3 + $0xe8] sm:$0xff]
      %v539 = vld [vmem:[%s3 + $0xf0] sm:$0xff]
      %v540 = vld [vmem:[%s3 + $0xf8] sm:$0xff]
      %v541 = vld [vmem:[%s6] sm:$0x3]
      %v543 = vperm.slane %v541, 0
      %v544 = vperm.slane %v541, 1
      %547 = vmatpush.msra.mxu0 %v539
      %548 = vmatpush.msra.mxu0 %v537
      %549 = vmatpush.msra.mxu0 %v535
      %550 = vmatpush.msra.mxu0 %v533
      %551 = vmatpush.msra.mxu0 %v531
      %552 = vmatpush.msra.mxu0 %v529
      %553 = vmatpush.msra.mxu0 %v527
      %554 = vmatpush.msra.mxu0 %v525
      %555 = vmatpush.msra.mxu0 %v523
      %556 = vmatpush.msra.mxu0 %v521
      %557 = vmatpush.msra.mxu0 %v519
      %558 = vmatpush.msra.mxu0 %v517
      %559 = vmatpush.msra.mxu0 %v515
      %560 = vmatpush.msra.mxu0 %v513
      %561 = vmatpush.msra.mxu0 %v511
      %562 = vmatpush.msra.mxu0 %v509
      %563 = vmatmul.f32.gmra.mxu0 %v501
      %v564 = vpop.f32.mrf.mxu0
      %v565 = vadd.f32 %v543, %v564
      %566 = vmatmul.f32.gmra.mxu0 %v502
      %v567 = vpop.f32.mrf.mxu0
      %v568 = vadd.f32 %v543, %v567
      %569 = vmatmul.f32.gmra.mxu0 %v503
      %v570 = vpop.f32.mrf.mxu0
      %v571 = vadd.f32 %v543, %v570
      %572 = vmatmul.f32.gmra.mxu0 %v504
      %v573 = vpop.f32.mrf.mxu0
      %v574 = vadd.f32 %v543, %v573
      %575 = vmatmul.f32.gmra.mxu0 %v505
      %v576 = vpop.f32.mrf.mxu0
      %v577 = vadd.f32 %v543, %v576
      %578 = vmatmul.f32.gmra.mxu0 %v506
      %v579 = vpop.f32.mrf.mxu0
      %v580 = vadd.f32 %v543, %v579
      %581 = vmatmul.f32.gmra.mxu0 %v507
      %v582 = vpop.f32.mrf.mxu0
      %v583 = vadd.f32 %v543, %v582
      %584 = vmatmul.f32.gmra.mxu0 %v508
      %v585 = vpop.f32.mrf.mxu0
      %v586 = vadd.f32 %v543, %v585
      %587 = vdwg.mxu0
      %588 = vmatpush.msra.mxu0 %v540
      %589 = vmatpush.msra.mxu0 %v538
      %590 = vmatpush.msra.mxu0 %v536
      %591 = vmatpush.msra.mxu0 %v534
      %592 = vmatpush.msra.mxu0 %v532
      %593 = vmatpush.msra.mxu0 %v530
      %594 = vmatpush.msra.mxu0 %v528
      %595 = vmatpush.msra.mxu0 %v526
      %596 = vmatpush.msra.mxu0 %v524
      %597 = vmatpush.msra.mxu0 %v522
      %598 = vmatpush.msra.mxu0 %v520
      %599 = vmatpush.msra.mxu0 %v518
      %600 = vmatpush.msra.mxu0 %v516
      %601 = vmatpush.msra.mxu0 %v514
      %602 = vmatpush.msra.mxu0 %v512
      %603 = vmatpush.msra.mxu0 %v510
      %604 = vmatmul.f32.gmra.mxu0 %v501
      %v605 = vpop.f32.mrf.mxu0
      %v606 = vadd.f32 %v544, %v605
      %607 = vmatmul.f32.gmra.mxu0 %v502
      %v608 = vpop.f32.mrf.mxu0
      %v609 = vadd.f32 %v544, %v608
      %610 = vmatmul.f32.gmra.mxu0 %v503
      %v611 = vpop.f32.mrf.mxu0
      %v612 = vadd.f32 %v544, %v611
      %613 = vmatmul.f32.gmra.mxu0 %v504
      %v614 = vpop.f32.mrf.mxu0
      %v615 = vadd.f32 %v544, %v614
      %616 = vmatmul.f32.gmra.mxu0 %v505
      %v617 = vpop.f32.mrf.mxu0
      %v618 = vadd.f32 %v544, %v617
      %619 = vmatmul.f32.gmra.mxu0 %v506
      %v620 = vpop.f32.mrf.mxu0
      %v621 = vadd.f32 %v544, %v620
      %622 = vmatmul.f32.gmra.mxu0 %v507
      %v623 = vpop.f32.mrf.mxu0
      %v624 = vadd.f32 %v544, %v623
      %625 = vmatmul.f32.gmra.mxu0 %v508
      %v626 = vpop.f32.mrf.mxu0
      %v627 = vadd.f32 %v544, %v626
      %628 = vdwg.mxu0
      %v629 = vmax.f32 %v565, 0.0
      %v630 = vmax.f32 %v606, 0.0
      %v631 = vmax.f32 %v568, 0.0
      %v632 = vmax.f32 %v609, 0.0
      %v633 = vmax.f32 %v571, 0.0
      %v634 = vmax.f32 %v612, 0.0
      %v635 = vmax.f32 %v574, 0.0
      %v636 = vmax.f32 %v615, 0.0
      %v637 = vmax.f32 %v577, 0.0
      %v638 = vmax.f32 %v618, 0.0
      %v639 = vmax.f32 %v580, 0.0
      %v640 = vmax.f32 %v621, 0.0
      %v641 = vmax.f32 %v583, 0.0
      %v642 = vmax.f32 %v624, 0.0
      %v643 = vmax.f32 %v586, 0.0
      %v644 = vmax.f32 %v627, 0.0
      %v645 = vrot.slane %v629, 4
      %v646 = vmax.f32 %v629, %v645
      %v647 = vrot.slane %v646, 2
      %v648 = vmax.f32 %v646, %v647
      %v649 = vrot.slane %v648, 1
      %v650 = vmax.f32 %v648, %v649
      %v651 = vrot.slane %v630, 4
      %v652 = vmax.f32 %v630, %v651
      %v653 = vrot.slane %v652, 2
      %v654 = vmax.f32 %v652, %v653
      %v655 = vrot.slane %v654, 1
      %v656 = vmax.f32 %v654, %v655
      %v657 = vrot.slane %v631, 4
      %v658 = vmax.f32 %v631, %v657
      %v659 = vrot.slane %v658, 2
      %v660 = vmax.f32 %v658, %v659
      %v661 = vrot.slane %v660, 1
      %v662 = vmax.f32 %v660, %v661
      %v663 = vrot.slane %v632, 4
      %v664 = vmax.f32 %v632, %v663
      %v665 = vrot.slane %v664, 2
      %v666 = vmax.f32 %v664, %v665
      %v667 = vrot.slane %v666, 1
      %v668 = vmax.f32 %v666, %v667
      %v669 = vrot.slane %v633, 4
      %v670 = vmax.f32 %v633, %v669
      %v671 = vrot.slane %v670, 2
      %v672 = vmax.f32 %v670, %v671
      %v673 = vrot.slane %v672, 1
      %v674 = vmax.f32 %v672, %v673
      %v675 = vrot.slane %v634, 4
      %v676 = vmax.f32 %v634, %v675
      %v677 = vrot.slane %v676, 2
      %v678 = vmax.f32 %v676, %v677
      %v679 = vrot.slane %v678, 1
      %v680 = vmax.f32 %v678, %v679
      %v681 = vrot.slane %v635, 4
      %v682 = vmax.f32 %v635, %v681
      %v683 = vrot.slane %v682, 2
      %v684 = vmax.f32 %v682, %v683
      %v685 = vrot.slane %v684, 1
      %v686 = vmax.f32 %v684, %v685
      %v687 = vrot.slane %v636, 4
      %v688 = vmax.f32 %v636, %v687
      %v689 = vrot.slane %v688, 2
      %v690 = vmax.f32 %v688, %v689
      %v691 = vrot.slane %v690, 1
      %v692 = vmax.f32 %v690, %v691
      %v693 = vrot.slane %v637, 4
      %v694 = vmax.f32 %v637, %v693
      %v695 = vrot.slane %v694, 2
      %v696 = vmax.f32 %v694, %v695
      %v697 = vrot.slane %v696, 1
      %v698 = vmax.f32 %v696, %v697
      %v699 = vrot.slane %v638, 4
      %v700 = vmax.f32 %v638, %v699
      %v701 = vrot.slane %v700, 2
      %v702 = vmax.f32 %v700, %v701
      %v703 = vrot.slane %v702, 1
      %v704 = vmax.f32 %v702, %v703
      %v705 = vrot.slane %v639, 4
      %v706 = vmax.f32 %v639, %v705
      %v707 = vrot.slane %v706, 2
      %v708 = vmax.f32 %v706, %v707
      %v709 = vrot.slane %v708, 1
      %v710 = vmax.f32 %v708, %v709
      %v711 = vrot.slane %v640, 4
      %v712 = vmax.f32 %v640, %v711
      %v713 = vrot.slane %v712, 2
      %v714 = vmax.f32 %v712, %v713
      %v715 = vrot.slane %v714, 1
      %v716 = vmax.f32 %v714, %v715
      %v717 = vrot.slane %v641, 4
      %v718 = vmax.f32 %v641, %v717
      %v719 = vrot.slane %v718, 2
      %v720 = vmax.f32 %v718, %v719
      %v721 = vrot.slane %v720, 1
      %v722 = vmax.f32 %v720, %v721
      %v723 = vrot.slane %v642, 4
      %v724 = vmax.f32 %v642, %v723
      %v725 = vrot.slane %v724, 2
      %v726 = vmax.f32 %v724, %v725
      %v727 = vrot.slane %v726, 1
      %v728 = vmax.f32 %v726, %v727
      %v729 = vrot.slane %v643, 4
      %v730 = vmax.f32 %v643, %v729
      %v731 = vrot.slane %v730, 2
      %v732 = vmax.f32 %v730, %v731
      %v733 = vrot.slane %v732, 1
      %v734 = vmax.f32 %v732, %v733
      %v735 = vrot.slane %v644, 4
      %v736 = vmax.f32 %v644, %v735
      %v737 = vrot.slane %v736, 2
      %v738 = vmax.f32 %v736, %v737
      %v739 = vrot.slane %v738, 1
      %v740 = vmax.f32 %v738, %v739
      %vm757 = vcmask 1041409
      %v758 = vsel %vm757, %v662, %v650
      %vm759 = vcmask 1042434
      %v760 = vsel %vm759, %v674, %v758
      %vm761 = vcmask 1043459
      %v762 = vsel %vm761, %v686, %v760
      %vm763 = vcmask 1044484
      %v764 = vsel %vm763, %v698, %v762
      %vm765 = vcmask 1045509
      %v766 = vsel %vm765, %v710, %v764
      %vm767 = vcmask 1046534
      %v768 = vsel %vm767, %v722, %v766
      %vm769 = vcmask 1047559
      %v770 = vsel %vm769, %v734, %v768
      %v771 = vsel %vm757, %v668, %v656
      %v772 = vsel %vm759, %v680, %v771
      %v773 = vsel %vm761, %v692, %v772
      %v774 = vsel %vm763, %v704, %v773
      %v775 = vsel %vm765, %v716, %v774
      %v776 = vsel %vm767, %v728, %v775
      %v777 = vsel %vm769, %v740, %v776
      %780 = vst [vmem:[%s283] sm:$0xff] %v770
      %781 = vst [vmem:[%s283 + $0x8] sm:$0xff] %v777
      %p782 = scmp.lt.s32.totalorder %s18, 1
      %s783 = scalar_select %p782, %s18, 1
      %s784 = smul.addr %s783, 2
      %s785 = smul.addr %s784, 8
      %s786 = scalar_lea.vmem %s7, %s785
      // Predicated region
      $region49: #{pointnet2_ssg_seg_forward.11} parent=47 // pred_check
        %p787 = pneg %p188
      $region50: #{pointnet2_ssg_seg_forward.11} parent=47 // pred_check_branch
        %789 = sbr.rel (%p787) target = $region52
      $region51: #{pointnet2_ssg_seg_forward.11} parent=47 // pred_region
        _
      $region52: #{pointnet2_ssg_seg_forward.11} parent=47 // pred_fallthru
        _
    $region48: #{pointnet2_ssg_seg_forward.11} parent=5 // pred_fallthru
      _
    %p790 = scmp.le.s32.totalorder 2, %s13
    // Predicated region
    $region53: #{pointnet2_ssg_seg_forward.11} parent=5 // pred_check
      %p791 = pneg %p790
    $region54: #{pointnet2_ssg_seg_forward.11} parent=5 // pred_check_branch
      %793 = sbr.rel (%p791) target = $region56
    $region55: #{pointnet2_ssg_seg_forward.11} parent=5 // pred_region
      %s794 = ssub.s32 %s13, 2
      // Predicated region
      $region57: #{pointnet2_ssg_seg_forward.11} parent=55 // pred_check
        %p795 = pneg %p194
      $region58: #{pointnet2_ssg_seg_forward.11} parent=55 // pred_check_branch
        %797 = sbr.rel (%p795) target = $region60
      $region59: #{pointnet2_ssg_seg_forward.11} parent=55 // pred_region
        %p798 = scmp.lt.s32.totalorder %s19, 1
        %s799 = scalar_select %p798, %s19, 1
        %s800 = smul.addr %s799, 2
        %s801 = smul.addr %s800, 8
        %s802 = scalar_lea.vmem %s7, %s801
      $region60: #{pointnet2_ssg_seg_forward.11} parent=55 // pred_fallthru
        _
    $region56: #{pointnet2_ssg_seg_forward.11} parent=5 // pred_fallthru
      _
  $region6: #{pointnet2_ssg_seg_forward.11} parent=0 // loop_footer
    %s17 = sadd.s32 1, %s13
  $region7: #{pointnet2_ssg_seg_forward.11} parent=0 // loop_footer_branch
    %12 = sbr.rel target = $region3
  $region8: #{pointnet2_ssg_seg_forward.11} parent=0 // loop_exit
    _

// kernel: neg.15
$region0: #{neg.15}
  #allocation0 [shape = 's32[1]{0}', space=sflag, size = 0x4, scoped, tag = 'scoped memory for neg.15']
  %s0 = inlined_call_operand.vmem [shape: f32[2,4,8], index: 0, kind: input, shape index: {}]
  %s1 = inlined_call_operand.vmem [shape: f32[2,4,8], index: 1, kind: output, shape index: {}]
  %v2 = vld [vmem:[%s0] sm:$0xf]
  %3 = xla_tuple %v2
  %4 = xla_tuple %3
  %v5 = vxor.u32 %v2, 2147483648
  %6 = xla_tuple %v5
  %7 = vst [vmem:[%s1] sm:$0xf] %v5
  %s8 = scalar_lea.vmem %s0, 4
  %v9 = vld [vmem:[%s8] sm:$0xf]
  %10 = xla_tuple %v9
  %11 = xla_tuple %10
  %v12 = vxor.u32 %v9, 2147483648
  %13 = xla_tuple %v12
  %s14 = scalar_lea.vmem %s1, 4
  %15 = vst [vmem:[%s14] sm:$0xf] %v12

// kernel: neg.16
$region0: #{neg.16}
  #allocation0 [shape = 's32[1]{0}', space=sflag, size = 0x4, scoped, tag = 'scoped memory for neg.16']
  %s0 = inlined_call_operand.vmem [shape: f32[2,8,4], index: 0, kind: input, shape index: {}]
  %s1 = inlined_call_operand.vmem [shape: f32[2,8,4], index: 1, kind: output, shape index: {}]
  %v2 = vld [vmem:[%s0] sm:$0xf]
  %3 = xla_tuple %v2
  %4 = xla_tuple %3
  %v5 = vxor.u32 %v2, 2147483648
  %6 = xla_tuple %v5
  %7 = vst [vmem:[%s1] sm:$0xf] %v5
  %s8 = scalar_lea.vmem %s0, 4
  %v9 = vld [vmem:[%s8] sm:$0xf]
  %10 = xla_tuple %v9
  %11 = xla_tuple %10
  %v12 = vxor.u32 %v9, 2147483648
  %13 = xla_tuple %v12
  %s14 = scalar_lea.vmem %s1, 4
  %15 = vst [vmem:[%s14] sm:$0xf] %v12

// kernel: pointnet2_ssg_seg_forward.12
$region0: #{pointnet2_ssg_seg_forward.12}
  #allocation0 [shape = 'u32[]', space=smem, size = 0x4, offset = 0x4, fixed_abs, tag = 'smem constant byte address 0x4 - core index']
  #allocation1 [shape = 'u32[72,128]{1,0:T(1,128)}', space=vmem, size = 0x9000, scoped, tag = 'internal scratch']
  %s0 = inlined_call_operand.vmem [shape: f32[8,8,259], index: 0, kind: input, shape index: {}]
  %s1 = inlined_call_operand.vmem [shape: f32[259,256], index: 1, kind: input, shape index: {}]
  %s2 = inlined_call_operand.vmem [shape: f32[256,256], index: 2, kind: input, shape index: {}]
  %s3 = inlined_call_operand.vmem [shape: f32[256,512], index: 3, kind: input, shape index: {}]
  %s4 = inlined_call_operand.vmem [shape: f32[1,256], index: 4, kind: input, shape index: {}]
  %s5 = inlined_call_operand.vmem [shape: f32[1,256], index: 5, kind: input, shape index: {}]
  %s6 = inlined_call_operand.vmem [shape: f32[1,512], index: 6, kind: input, shape index: {}]
  %s7 = inlined_call_operand.vmem [shape: f32[8,512], index: 7, kind: output, shape index: {}]
  %s8 = sld [smem:[#allocation0]]
  $region38: #{pointnet2_ssg_seg_forward.12} parent=0
    _
  %s10 = ssub.s32 1, %s8
  %s11 = scalar_select 0, %s10, %s8
  // Predicated region
  $region2: #{pointnet2_ssg_seg_forward.12} parent=0 // pred_check
    _
  $region3: #{pointnet2_ssg_seg_forward.12} parent=0 // pred_check_branch
    %13 = sbr.rel (0) target = $region5
  $region4: #{pointnet2_ssg_seg_forward.12} parent=0 // pred_region
    _
  $region5: #{pointnet2_ssg_seg_forward.12} parent=0 // pred_fallthru
    _
  // Predicated region
  $region6: #{pointnet2_ssg_seg_forward.12} parent=0 // pred_check
    _
  $region7: #{pointnet2_ssg_seg_forward.12} parent=0 // pred_check_branch
    %15 = sbr.rel (0) target = $region9
  $region8: #{pointnet2_ssg_seg_forward.12} parent=0 // pred_region
    _
  $region9: #{pointnet2_ssg_seg_forward.12} parent=0 // pred_fallthru
    _
  // Predicated region
  $region10: #{pointnet2_ssg_seg_forward.12} parent=0 // pred_check
    _
  $region11: #{pointnet2_ssg_seg_forward.12} parent=0 // pred_check_branch
    %17 = sbr.rel (0) target = $region13
  $region12: #{pointnet2_ssg_seg_forward.12} parent=0 // pred_region
    _
  $region13: #{pointnet2_ssg_seg_forward.12} parent=0 // pred_fallthru
    _
  // Predicated region
  $region14: #{pointnet2_ssg_seg_forward.12} parent=0 // pred_check
    _
  $region15: #{pointnet2_ssg_seg_forward.12} parent=0 // pred_check_branch
    %19 = sbr.rel (0) target = $region17
  $region16: #{pointnet2_ssg_seg_forward.12} parent=0 // pred_region
    _
  $region17: #{pointnet2_ssg_seg_forward.12} parent=0 // pred_fallthru
    _
  // Predicated region
  $region18: #{pointnet2_ssg_seg_forward.12} parent=0 // pred_check
    _
  $region19: #{pointnet2_ssg_seg_forward.12} parent=0 // pred_check_branch
    %21 = sbr.rel (0) target = $region21
  $region20: #{pointnet2_ssg_seg_forward.12} parent=0 // pred_region
    _
  $region21: #{pointnet2_ssg_seg_forward.12} parent=0 // pred_fallthru
    _
  // Predicated region
  $region22: #{pointnet2_ssg_seg_forward.12} parent=0 // pred_check
    _
  $region23: #{pointnet2_ssg_seg_forward.12} parent=0 // pred_check_branch
    %23 = sbr.rel (0) target = $region25
  $region24: #{pointnet2_ssg_seg_forward.12} parent=0 // pred_region
    _
  $region25: #{pointnet2_ssg_seg_forward.12} parent=0 // pred_fallthru
    _
  // Predicated region
  $region26: #{pointnet2_ssg_seg_forward.12} parent=0 // pred_check
    _
  $region27: #{pointnet2_ssg_seg_forward.12} parent=0 // pred_check_branch
    %25 = sbr.rel (0) target = $region29
  $region28: #{pointnet2_ssg_seg_forward.12} parent=0 // pred_region
    _
  $region29: #{pointnet2_ssg_seg_forward.12} parent=0 // pred_fallthru
    _
  %v26 = vld [vmem:[%s0] sm:$0xff]
  %v27 = vld [vmem:[%s0 + $0x8] sm:$0xff]
  %v28 = vld [vmem:[%s0 + $0x10] sm:$0xff]
  %v29 = vld [vmem:[%s0 + $0x18] sm:$0xff]
  %v30 = vld [vmem:[%s0 + $0x20] sm:$0xff]
  %v31 = vld [vmem:[%s0 + $0x28] sm:$0xff]
  %v32 = vld [vmem:[%s0 + $0x30] sm:$0xff]
  %v33 = vld [vmem:[%s0 + $0x38] sm:$0xff]
  %v34 = vld [vmem:[%s0 + $0x40] sm:$0xff]
  %v35 = vld [vmem:[%s0 + $0x48] sm:$0xff]
  %v36 = vld [vmem:[%s0 + $0x50] sm:$0xff]
  %v37 = vld [vmem:[%s0 + $0x58] sm:$0xff]
  %v38 = vld [vmem:[%s0 + $0x60] sm:$0xff]
  %v39 = vld [vmem:[%s0 + $0x68] sm:$0xff]
  %v40 = vld [vmem:[%s0 + $0x70] sm:$0xff]
  %v41 = vld [vmem:[%s0 + $0x78] sm:$0xff]
  %v42 = vld [vmem:[%s0 + $0x80] sm:$0xff]
  %v43 = vld [vmem:[%s0 + $0x88] sm:$0xff]
  %v44 = vld [vmem:[%s0 + $0x90] sm:$0xff]
  %v45 = vld [vmem:[%s0 + $0x98] sm:$0xff]
  %v46 = vld [vmem:[%s0 + $0xa0] sm:$0xff]
  %v47 = vld [vmem:[%s0 + $0xa8] sm:$0xff]
  %v48 = vld [vmem:[%s0 + $0xb0] sm:$0xff]
  %v49 = vld [vmem:[%s0 + $0xb8] sm:$0xff]
  %v50 = vld [vmem:[%s1] sm:$0xff]
  %v51 = vld [vmem:[%s1 + $0x8] sm:$0xff]
  %v52 = vld [vmem:[%s1 + $0x10] sm:$0xff]
  %v53 = vld [vmem:[%s1 + $0x18] sm:$0xff]
  %v54 = vld [vmem:[%s1 + $0x20] sm:$0xff]
  %v55 = vld [vmem:[%s1 + $0x28] sm:$0xff]
  %v56 = vld [vmem:[%s1 + $0x30] sm:$0xff]
  %v57 = vld [vmem:[%s1 + $0x38] sm:$0xff]
  %v58 = vld [vmem:[%s1 + $0x40] sm:$0xff]
  %v59 = vld [vmem:[%s1 + $0x48] sm:$0xff]
  %v60 = vld [vmem:[%s1 + $0x50] sm:$0xff]
  %v61 = vld [vmem:[%s1 + $0x58] sm:$0xff]
  %v62 = vld [vmem:[%s1 + $0x60] sm:$0xff]
  %v63 = vld [vmem:[%s1 + $0x68] sm:$0xff]
  %v64 = vld [vmem:[%s1 + $0x70] sm:$0xff]
  %v65 = vld [vmem:[%s1 + $0x78] sm:$0xff]
  %v66 = vld [vmem:[%s1 + $0x80] sm:$0xff]
  %v67 = vld [vmem:[%s1 + $0x88] sm:$0xff]
  %v68 = vld [vmem:[%s1 + $0x90] sm:$0xff]
  %v69 = vld [vmem:[%s1 + $0x98] sm:$0xff]
  %v70 = vld [vmem:[%s1 + $0xa0] sm:$0xff]
  %v71 = vld [vmem:[%s1 + $0xa8] sm:$0xff]
  %v72 = vld [vmem:[%s1 + $0xb0] sm:$0xff]
  %v73 = vld [vmem:[%s1 + $0xb8] sm:$0xff]
  %v74 = vld [vmem:[%s1 + $0xc0] sm:$0xff]
  %v75 = vld [vmem:[%s1 + $0xc8] sm:$0xff]
  %v76 = vld [vmem:[%s1 + $0xd0] sm:$0xff]
  %v77 = vld [vmem:[%s1 + $0xd8] sm:$0xff]
  %v78 = vld [vmem:[%s1 + $0xe0] sm:$0xff]
  %v79 = vld [vmem:[%s1 + $0xe8] sm:$0xff]
  %v80 = vld [vmem:[%s1 + $0xf0] sm:$0xff]
  %v81 = vld [vmem:[%s1 + $0xf8] sm:$0xff]
  %v82 = vld [vmem:[%s1 + $0x100] sm:$0xff]
  %v83 = vld [vmem:[%s1 + $0x108] sm:$0xff]
  %v84 = vld [vmem:[%s1 + $0x110] sm:$0xff]
  %v85 = vld [vmem:[%s1 + $0x118] sm:$0xff]
  %v86 = vld [vmem:[%s1 + $0x120] sm:$0xff]
  %v87 = vld [vmem:[%s1 + $0x128] sm:$0xff]
  %v88 = vld [vmem:[%s1 + $0x130] sm:$0xff]
  %v89 = vld [vmem:[%s1 + $0x138] sm:$0xff]
  %v90 = vld [vmem:[%s1 + $0x140] sm:$0xff]
  %v91 = vld [vmem:[%s1 + $0x148] sm:$0xff]
  %v92 = vld [vmem:[%s1 + $0x150] sm:$0xff]
  %v93 = vld [vmem:[%s1 + $0x158] sm:$0xff]
  %v94 = vld [vmem:[%s1 + $0x160] sm:$0xff]
  %v95 = vld [vmem:[%s1 + $0x168] sm:$0xff]
  %v96 = vld [vmem:[%s1 + $0x170] sm:$0xff]
  %v97 = vld [vmem:[%s1 + $0x178] sm:$0xff]
  %v98 = vld [vmem:[%s1 + $0x180] sm:$0xff]
  %v99 = vld [vmem:[%s1 + $0x188] sm:$0xff]
  %v100 = vld [vmem:[%s1 + $0x190] sm:$0xff]
  %v101 = vld [vmem:[%s1 + $0x198] sm:$0xff]
  %v102 = vld [vmem:[%s1 + $0x1a0] sm:$0xff]
  %v103 = vld [vmem:[%s1 + $0x1a8] sm:$0xff]
  %v104 = vld [vmem:[%s1 + $0x1b0] sm:$0xff]
  %v105 = vld [vmem:[%s1 + $0x1b8] sm:$0xff]
  %v106 = vld [vmem:[%s1 + $0x1c0] sm:$0xff]
  %v107 = vld [vmem:[%s1 + $0x1c8] sm:$0xff]
  %v108 = vld [vmem:[%s1 + $0x1d0] sm:$0xff]
  %v109 = vld [vmem:[%s1 + $0x1d8] sm:$0xff]
  %v110 = vld [vmem:[%s1 + $0x1e0] sm:$0xff]
  %v111 = vld [vmem:[%s1 + $0x1e8] sm:$0xff]
  %v112 = vld [vmem:[%s1 + $0x1f0] sm:$0xff]
  %v113 = vld [vmem:[%s1 + $0x1f8] sm:$0xff]
  %v114 = vld [vmem:[%s1 + $0x200] sm:$0x7]
  %v115 = vld [vmem:[%s1 + $0x208] sm:$0x7]
  %v116 = vld [vmem:[%s4] sm:$0x3]
  %v118 = vperm.slane %v116, 0
  %v119 = vperm.slane %v116, 1
  %vm122 = vcmask 23552
  %v124 = vsel %vm122, %v28, 0
  %v127 = vsel %vm122, %v31, 0
  %v130 = vsel %vm122, %v34, 0
  %v133 = vsel %vm122, %v37, 0
  %v136 = vsel %vm122, %v40, 0
  %v139 = vsel %vm122, %v43, 0
  %v142 = vsel %vm122, %v46, 0
  %v145 = vsel %vm122, %v49, 0
  %vm147 = vcmask 1042432
  %v149 = vsel %vm147, %v114, 0
  %v152 = vsel %vm147, %v115, 0
  %154 = vmatpush.msra.mxu0 %v80
  %155 = vmatpush.msra.mxu0 %v78
  %156 = vmatpush.msra.mxu0 %v76
  %157 = vmatpush.msra.mxu0 %v74
  %158 = vmatpush.msra.mxu0 %v72
  %159 = vmatpush.msra.mxu0 %v70
  %160 = vmatpush.msra.mxu0 %v68
  %161 = vmatpush.msra.mxu0 %v66
  %162 = vmatpush.msra.mxu0 %v64
  %163 = vmatpush.msra.mxu0 %v62
  %164 = vmatpush.msra.mxu0 %v60
  %165 = vmatpush.msra.mxu0 %v58
  %166 = vmatpush.msra.mxu0 %v56
  %167 = vmatpush.msra.mxu0 %v54
  %168 = vmatpush.msra.mxu0 %v52
  %169 = vmatpush.msra.mxu0 %v50
  %170 = vmatmul.f32.gmra.mxu0 %v26
  %v171 = vpop.f32.mrf.mxu0
  %v172 = vadd.f32 %v118, %v171
  %173 = vmatmul.f32.gmra.mxu0 %v29
  %v174 = vpop.f32.mrf.mxu0
  %v175 = vadd.f32 %v118, %v174
  %176 = vmatmul.f32.gmra.mxu0 %v32
  %v177 = vpop.f32.mrf.mxu0
  %v178 = vadd.f32 %v118, %v177
  %179 = vmatmul.f32.gmra.mxu0 %v35
  %v180 = vpop.f32.mrf.mxu0
  %v181 = vadd.f32 %v118, %v180
  %182 = vmatmul.f32.gmra.mxu0 %v38
  %v183 = vpop.f32.mrf.mxu0
  %v184 = vadd.f32 %v118, %v183
  %185 = vmatmul.f32.gmra.mxu0 %v41
  %v186 = vpop.f32.mrf.mxu0
  %v187 = vadd.f32 %v118, %v186
  %188 = vmatmul.f32.gmra.mxu0 %v44
  %v189 = vpop.f32.mrf.mxu0
  %v190 = vadd.f32 %v118, %v189
  %191 = vmatmul.f32.gmra.mxu0 %v47
  %v192 = vpop.f32.mrf.mxu0
  %v193 = vadd.f32 %v118, %v192
  %194 = vdwg.mxu0
  %195 = vmatpush.msra.mxu0 %v112
  %196 = vmatpush.msra.mxu0 %v110
  %197 = vmatpush.msra.mxu0 %v108
  %198 = vmatpush.msra.mxu0 %v106
  %199 = vmatpush.msra.mxu0 %v104
  %200 = vmatpush.msra.mxu0 %v102
  %201 = vmatpush.msra.mxu0 %v100
  %202 = vmatpush.msra.mxu0 %v98
  %203 = vmatpush.msra.mxu0 %v96
  %204 = vmatpush.msra.mxu0 %v94
  %205 = vmatpush.msra.mxu0 %v92
  %206 = vmatpush.msra.mxu0 %v90
  %207 = vmatpush.msra.mxu0 %v88
  %208 = vmatpush.msra.mxu0 %v86
  %209 = vmatpush.msra.mxu0 %v84
  %210 = vmatpush.msra.mxu0 %v82
  %211 = vmatmul.f32.gmra.mxu0 %v27
  %v212 = vpop.f32.mrf.mxu0
  %v213 = vadd.f32 %v172, %v212
  %214 = vmatmul.f32.gmra.mxu0 %v30
  %v215 = vpop.f32.mrf.mxu0
  %v216 = vadd.f32 %v175, %v215
  %217 = vmatmul.f32.gmra.mxu0 %v33
  %v218 = vpop.f32.mrf.mxu0
  %v219 = vadd.f32 %v178, %v218
  %220 = vmatmul.f32.gmra.mxu0 %v36
  %v221 = vpop.f32.mrf.mxu0
  %v222 = vadd.f32 %v181, %v221
  %223 = vmatmul.f32.gmra.mxu0 %v39
  %v224 = vpop.f32.mrf.mxu0
  %v225 = vadd.f32 %v184, %v224
  %226 = vmatmul.f32.gmra.mxu0 %v42
  %v227 = vpop.f32.mrf.mxu0
  %v228 = vadd.f32 %v187, %v227
  %229 = vmatmul.f32.gmra.mxu0 %v45
  %v230 = vpop.f32.mrf.mxu0
  %v231 = vadd.f32 %v190, %v230
  %232 = vmatmul.f32.gmra.mxu0 %v48
  %v233 = vpop.f32.mrf.mxu0
  %v234 = vadd.f32 %v193, %v233
  %235 = vdwg.mxu0
  %236 = vmatpush.msra.mxu0 0.0
  %237 = vmatpush.msra.mxu0 0.0
  %238 = vmatpush.msra.mxu0 0.0
  %239 = vmatpush.msra.mxu0 0.0
  %240 = vmatpush.msra.mxu0 0.0
  %241 = vmatpush.msra.mxu0 0.0
  %242 = vmatpush.msra.mxu0 0.0
  %243 = vmatpush.msra.mxu0 0.0
  %244 = vmatpush.msra.mxu0 0.0
  %245 = vmatpush.msra.mxu0 0.0
  %246 = vmatpush.msra.mxu0 0.0
  %247 = vmatpush.msra.mxu0 0.0
  %248 = vmatpush.msra.mxu0 0.0
  %249 = vmatpush.msra.mxu0 0.0
  %250 = vmatpush.msra.mxu0 0.0
  %251 = vmatpush.msra.mxu0 %v149
  %252 = vmatmul.f32.gmra.mxu0 %v124
  %v253 = vpop.f32.mrf.mxu0
  %v254 = vadd.f32 %v213, %v253
  %255 = vmatmul.f32.gmra.mxu0 %v127
  %v256 = vpop.f32.mrf.mxu0
  %v257 = vadd.f32 %v216, %v256
  %258 = vmatmul.f32.gmra.mxu0 %v130
  %v259 = vpop.f32.mrf.mxu0
  %v260 = vadd.f32 %v219, %v259
  %261 = vmatmul.f32.gmra.mxu0 %v133
  %v262 = vpop.f32.mrf.mxu0
  %v263 = vadd.f32 %v222, %v262
  %264 = vmatmul.f32.gmra.mxu0 %v136
  %v265 = vpop.f32.mrf.mxu0
  %v266 = vadd.f32 %v225, %v265
  %267 = vmatmul.f32.gmra.mxu0 %v139
  %v268 = vpop.f32.mrf.mxu0
  %v269 = vadd.f32 %v228, %v268
  %270 = vmatmul.f32.gmra.mxu0 %v142
  %v271 = vpop.f32.mrf.mxu0
  %v272 = vadd.f32 %v231, %v271
  %273 = vmatmul.f32.gmra.mxu0 %v145
  %v274 = vpop.f32.mrf.mxu0
  %v275 = vadd.f32 %v234, %v274
  %276 = vdwg.mxu0
  %277 = vmatpush.msra.mxu0 %v81
  %278 = vmatpush.msra.mxu0 %v79
  %279 = vmatpush.msra.mxu0 %v77
  %280 = vmatpush.msra.mxu0 %v75
  %281 = vmatpush.msra.mxu0 %v73
  %282 = vmatpush.msra.mxu0 %v71
  %283 = vmatpush.msra.mxu0 %v69
  %284 = vmatpush.msra.mxu0 %v67
  %285 = vmatpush.msra.mxu0 %v65
  %286 = vmatpush.msra.mxu0 %v63
  %287 = vmatpush.msra.mxu0 %v61
  %288 = vmatpush.msra.mxu0 %v59
  %289 = vmatpush.msra.mxu0 %v57
  %290 = vmatpush.msra.mxu0 %v55
  %291 = vmatpush.msra.mxu0 %v53
  %292 = vmatpush.msra.mxu0 %v51
  %293 = vmatmul.f32.gmra.mxu0 %v26
  %v294 = vpop.f32.mrf.mxu0
  %v295 = vadd.f32 %v119, %v294
  %296 = vmatmul.f32.gmra.mxu0 %v29
  %v297 = vpop.f32.mrf.mxu0
  %v298 = vadd.f32 %v119, %v297
  %299 = vmatmul.f32.gmra.mxu0 %v32
  %v300 = vpop.f32.mrf.mxu0
  %v301 = vadd.f32 %v119, %v300
  %302 = vmatmul.f32.gmra.mxu0 %v35
  %v303 = vpop.f32.mrf.mxu0
  %v304 = vadd.f32 %v119, %v303
  %305 = vmatmul.f32.gmra.mxu0 %v38
  %v306 = vpop.f32.mrf.mxu0
  %v307 = vadd.f32 %v119, %v306
  %308 = vmatmul.f32.gmra.mxu0 %v41
  %v309 = vpop.f32.mrf.mxu0
  %v310 = vadd.f32 %v119, %v309
  %311 = vmatmul.f32.gmra.mxu0 %v44
  %v312 = vpop.f32.mrf.mxu0
  %v313 = vadd.f32 %v119, %v312
  %314 = vmatmul.f32.gmra.mxu0 %v47
  %v315 = vpop.f32.mrf.mxu0
  %v316 = vadd.f32 %v119, %v315
  %317 = vdwg.mxu0
  %318 = vmatpush.msra.mxu0 %v113
  %319 = vmatpush.msra.mxu0 %v111
  %320 = vmatpush.msra.mxu0 %v109
  %321 = vmatpush.msra.mxu0 %v107
  %322 = vmatpush.msra.mxu0 %v105
  %323 = vmatpush.msra.mxu0 %v103
  %324 = vmatpush.msra.mxu0 %v101
  %325 = vmatpush.msra.mxu0 %v99
  %326 = vmatpush.msra.mxu0 %v97
  %327 = vmatpush.msra.mxu0 %v95
  %328 = vmatpush.msra.mxu0 %v93
  %329 = vmatpush.msra.mxu0 %v91
  %330 = vmatpush.msra.mxu0 %v89
  %331 = vmatpush.msra.mxu0 %v87
  %332 = vmatpush.msra.mxu0 %v85
  %333 = vmatpush.msra.mxu0 %v83
  %334 = vmatmul.f32.gmra.mxu0 %v27
  %v335 = vpop.f32.mrf.mxu0
  %v336 = vadd.f32 %v295, %v335
  %337 = vmatmul.f32.gmra.mxu0 %v30
  %v338 = vpop.f32.mrf.mxu0
  %v339 = vadd.f32 %v298, %v338
  %340 = vmatmul.f32.gmra.mxu0 %v33
  %v341 = vpop.f32.mrf.mxu0
  %v342 = vadd.f32 %v301, %v341
  %343 = vmatmul.f32.gmra.mxu0 %v36
  %v344 = vpop.f32.mrf.mxu0
  %v345 = vadd.f32 %v304, %v344
  %346 = vmatmul.f32.gmra.mxu0 %v39
  %v347 = vpop.f32.mrf.mxu0
  %v348 = vadd.f32 %v307, %v347
  %349 = vmatmul.f32.gmra.mxu0 %v42
  %v350 = vpop.f32.mrf.mxu0
  %v351 = vadd.f32 %v310, %v350
  %352 = vmatmul.f32.gmra.mxu0 %v45
  %v353 = vpop.f32.mrf.mxu0
  %v354 = vadd.f32 %v313, %v353
  %355 = vmatmul.f32.gmra.mxu0 %v48
  %v356 = vpop.f32.mrf.mxu0
  %v357 = vadd.f32 %v316, %v356
  %358 = vdwg.mxu0
  %359 = vmatpush.msra.mxu0 0.0
  %360 = vmatpush.msra.mxu0 0.0
  %361 = vmatpush.msra.mxu0 0.0
  %362 = vmatpush.msra.mxu0 0.0
  %363 = vmatpush.msra.mxu0 0.0
  %364 = vmatpush.msra.mxu0 0.0
  %365 = vmatpush.msra.mxu0 0.0
  %366 = vmatpush.msra.mxu0 0.0
  %367 = vmatpush.msra.mxu0 0.0
  %368 = vmatpush.msra.mxu0 0.0
  %369 = vmatpush.msra.mxu0 0.0
  %370 = vmatpush.msra.mxu0 0.0
  %371 = vmatpush.msra.mxu0 0.0
  %372 = vmatpush.msra.mxu0 0.0
  %373 = vmatpush.msra.mxu0 0.0
  %374 = vmatpush.msra.mxu0 %v152
  %375 = vmatmul.f32.gmra.mxu0 %v124
  %v376 = vpop.f32.mrf.mxu0
  %v377 = vadd.f32 %v336, %v376
  %378 = vmatmul.f32.gmra.mxu0 %v127
  %v379 = vpop.f32.mrf.mxu0
  %v380 = vadd.f32 %v339, %v379
  %381 = vmatmul.f32.gmra.mxu0 %v130
  %v382 = vpop.f32.mrf.mxu0
  %v383 = vadd.f32 %v342, %v382
  %384 = vmatmul.f32.gmra.mxu0 %v133
  %v385 = vpop.f32.mrf.mxu0
  %v386 = vadd.f32 %v345, %v385
  %387 = vmatmul.f32.gmra.mxu0 %v136
  %v388 = vpop.f32.mrf.mxu0
  %v389 = vadd.f32 %v348, %v388
  %390 = vmatmul.f32.gmra.mxu0 %v139
  %v391 = vpop.f32.mrf.mxu0
  %v392 = vadd.f32 %v351, %v391
  %393 = vmatmul.f32.gmra.mxu0 %v142
  %v394 = vpop.f32.mrf.mxu0
  %v395 = vadd.f32 %v354, %v394
  %396 = vmatmul.f32.gmra.mxu0 %v145
  %v397 = vpop.f32.mrf.mxu0
  %v398 = vadd.f32 %v357, %v397
  %399 = vdwg.mxu0
  %v400 = vmax.f32 %v254, 0.0
  %v401 = vmax.f32 %v377, 0.0
  %v402 = vmax.f32 %v257, 0.0
  %v403 = vmax.f32 %v380, 0.0
  %v404 = vmax.f32 %v260, 0.0
  %v405 = vmax.f32 %v383, 0.0
  %v406 = vmax.f32 %v263, 0.0
  %v407 = vmax.f32 %v386, 0.0
  %v408 = vmax.f32 %v266, 0.0
  %v409 = vmax.f32 %v389, 0.0
  %v410 = vmax.f32 %v269, 0.0
  %v411 = vmax.f32 %v392, 0.0
  %v412 = vmax.f32 %v272, 0.0
  %v413 = vmax.f32 %v395, 0.0
  %v414 = vmax.f32 %v275, 0.0
  %v415 = vmax.f32 %v398, 0.0
  %v416 = vld [vmem:[%s2] sm:$0xff]
  %v417 = vld [vmem:[%s2 + $0x8] sm:$0xff]
  %v418 = vld [vmem:[%s2 + $0x10] sm:$0xff]
  %v419 = vld [vmem:[%s2 + $0x18] sm:$0xff]
  %v420 = vld [vmem:[%s2 + $0x20] sm:$0xff]
  %v421 = vld [vmem:[%s2 + $0x28] sm:$0xff]
  %v422 = vld [vmem:[%s2 + $0x30] sm:$0xff]
  %v423 = vld [vmem:[%s2 + $0x38] sm:$0xff]
  %v424 = vld [vmem:[%s2 + $0x40] sm:$0xff]
  %v425 = vld [vmem:[%s2 + $0x48] sm:$0xff]
  %v426 = vld [vmem:[%s2 + $0x50] sm:$0xff]
  %v427 = vld [vmem:[%s2 + $0x58] sm:$0xff]
  %v428 = vld [vmem:[%s2 + $0x60] sm:$0xff]
  %v429 = vld [vmem:[%s2 + $0x68] sm:$0xff]
  %v430 = vld [vmem:[%s2 + $0x70] sm:$0xff]
  %v431 = vld [vmem:[%s2 + $0x78] sm:$0xff]
  %v432 = vld [vmem:[%s2 + $0x80] sm:$0xff]
  %v433 = vld [vmem:[%s2 + $0x88] sm:$0xff]
  %v434 = vld [vmem:[%s2 + $0x90] sm:$0xff]
  %v435 = vld [vmem:[%s2 + $0x98] sm:$0xff]
  %v436 = vld [vmem:[%s2 + $0xa0] sm:$0xff]
  %v437 = vld [vmem:[%s2 + $0xa8] sm:$0xff]
  %v438 = vld [vmem:[%s2 + $0xb0] sm:$0xff]
  %v439 = vld [vmem:[%s2 + $0xb8] sm:$0xff]
  %v440 = vld [vmem:[%s2 + $0xc0] sm:$0xff]
  %v441 = vld [vmem:[%s2 + $0xc8] sm:$0xff]
  %v442 = vld [vmem:[%s2 + $0xd0] sm:$0xff]
  %v443 = vld [vmem:[%s2 + $0xd8] sm:$0xff]
  %v444 = vld [vmem:[%s2 + $0xe0] sm:$0xff]
  %v445 = vld [vmem:[%s2 + $0xe8] sm:$0xff]
  %v446 = vld [vmem:[%s2 + $0xf0] sm:$0xff]
  %v447 = vld [vmem:[%s2 + $0xf8] sm:$0xff]
  %v448 = vld [vmem:[%s2 + $0x100] sm:$0xff]
  %v449 = vld [vmem:[%s2 + $0x108] sm:$0xff]
  %v450 = vld [vmem:[%s2 + $0x110] sm:$0xff]
  %v451 = vld [vmem:[%s2 + $0x118] sm:$0xff]
  %v452 = vld [vmem:[%s2 + $0x120] sm:$0xff]
  %v453 = vld [vmem:[%s2 + $0x128] sm:$0xff]
  %v454 = vld [vmem:[%s2 + $0x130] sm:$0xff]
  %v455 = vld [vmem:[%s2 + $0x138] sm:$0xff]
  %v456 = vld [vmem:[%s2 + $0x140] sm:$0xff]
  %v457 = vld [vmem:[%s2 + $0x148] sm:$0xff]
  %v458 = vld [vmem:[%s2 + $0x150] sm:$0xff]
  %v459 = vld [vmem:[%s2 + $0x158] sm:$0xff]
  %v460 = vld [vmem:[%s2 + $0x160] sm:$0xff]
  %v461 = vld [vmem:[%s2 + $0x168] sm:$0xff]
  %v462 = vld [vmem:[%s2 + $0x170] sm:$0xff]
  %v463 = vld [vmem:[%s2 + $0x178] sm:$0xff]
  %v464 = vld [vmem:[%s2 + $0x180] sm:$0xff]
  %v465 = vld [vmem:[%s2 + $0x188] sm:$0xff]
  %v466 = vld [vmem:[%s2 + $0x190] sm:$0xff]
  %v467 = vld [vmem:[%s2 + $0x198] sm:$0xff]
  %v468 = vld [vmem:[%s2 + $0x1a0] sm:$0xff]
  %v469 = vld [vmem:[%s2 + $0x1a8] sm:$0xff]
  %v470 = vld [vmem:[%s2 + $0x1b0] sm:$0xff]
  %v471 = vld [vmem:[%s2 + $0x1b8] sm:$0xff]
  %v472 = vld [vmem:[%s2 + $0x1c0] sm:$0xff]
  %v473 = vld [vmem:[%s2 + $0x1c8] sm:$0xff]
  %v474 = vld [vmem:[%s2 + $0x1d0] sm:$0xff]
  %v475 = vld [vmem:[%s2 + $0x1d8] sm:$0xff]
  %v476 = vld [vmem:[%s2 + $0x1e0] sm:$0xff]
  %v477 = vld [vmem:[%s2 + $0x1e8] sm:$0xff]
  %v478 = vld [vmem:[%s2 + $0x1f0] sm:$0xff]
  %v479 = vld [vmem:[%s2 + $0x1f8] sm:$0xff]
  %v480 = vld [vmem:[%s5] sm:$0x3]
  %v482 = vperm.slane %v480, 0
  %v483 = vperm.slane %v480, 1
  %486 = vmatpush.msra.mxu0 %v446
  %487 = vmatpush.msra.mxu0 %v444
  %488 = vmatpush.msra.mxu0 %v442
  %489 = vmatpush.msra.mxu0 %v440
  %490 = vmatpush.msra.mxu0 %v438
  %491 = vmatpush.msra.mxu0 %v436
  %492 = vmatpush.msra.mxu0 %v434
  %493 = vmatpush.msra.mxu0 %v432
  %494 = vmatpush.msra.mxu0 %v430
  %495 = vmatpush.msra.mxu0 %v428
  %496 = vmatpush.msra.mxu0 %v426
  %497 = vmatpush.msra.mxu0 %v424
  %498 = vmatpush.msra.mxu0 %v422
  %499 = vmatpush.msra.mxu0 %v420
  %500 = vmatpush.msra.mxu0 %v418
  %501 = vmatpush.msra.mxu0 %v416
  %502 = vmatmul.f32.gmra.mxu0 %v400
  %v503 = vpop.f32.mrf.mxu0
  %v504 = vadd.f32 %v482, %v503
  %505 = vmatmul.f32.gmra.mxu0 %v402
  %v506 = vpop.f32.mrf.mxu0
  %v507 = vadd.f32 %v482, %v506
  %508 = vmatmul.f32.gmra.mxu0 %v404
  %v509 = vpop.f32.mrf.mxu0
  %v510 = vadd.f32 %v482, %v509
  %511 = vmatmul.f32.gmra.mxu0 %v406
  %v512 = vpop.f32.mrf.mxu0
  %v513 = vadd.f32 %v482, %v512
  %514 = vmatmul.f32.gmra.mxu0 %v408
  %v515 = vpop.f32.mrf.mxu0
  %v516 = vadd.f32 %v482, %v515
  %517 = vmatmul.f32.gmra.mxu0 %v410
  %v518 = vpop.f32.mrf.mxu0
  %v519 = vadd.f32 %v482, %v518
  %520 = vmatmul.f32.gmra.mxu0 %v412
  %v521 = vpop.f32.mrf.mxu0
  %v522 = vadd.f32 %v482, %v521
  %523 = vmatmul.f32.gmra.mxu0 %v414
  %v524 = vpop.f32.mrf.mxu0
  %v525 = vadd.f32 %v482, %v524
  %526 = vdwg.mxu0
  %527 = vmatpush.msra.mxu0 %v478
  %528 = vmatpush.msra.mxu0 %v476
  %529 = vmatpush.msra.mxu0 %v474
  %530 = vmatpush.msra.mxu0 %v472
  %531 = vmatpush.msra.mxu0 %v470
  %532 = vmatpush.msra.mxu0 %v468
  %533 = vmatpush.msra.mxu0 %v466
  %534 = vmatpush.msra.mxu0 %v464
  %535 = vmatpush.msra.mxu0 %v462
  %536 = vmatpush.msra.mxu0 %v460
  %537 = vmatpush.msra.mxu0 %v458
  %538 = vmatpush.msra.mxu0 %v456
  %539 = vmatpush.msra.mxu0 %v454
  %540 = vmatpush.msra.mxu0 %v452
  %541 = vmatpush.msra.mxu0 %v450
  %542 = vmatpush.msra.mxu0 %v448
  %543 = vmatmul.f32.gmra.mxu0 %v401
  %v544 = vpop.f32.mrf.mxu0
  %v545 = vadd.f32 %v504, %v544
  %546 = vmatmul.f32.gmra.mxu0 %v403
  %v547 = vpop.f32.mrf.mxu0
  %v548 = vadd.f32 %v507, %v547
  %549 = vmatmul.f32.gmra.mxu0 %v405
  %v550 = vpop.f32.mrf.mxu0
  %v551 = vadd.f32 %v510, %v550
  %552 = vmatmul.f32.gmra.mxu0 %v407
  %v553 = vpop.f32.mrf.mxu0
  %v554 = vadd.f32 %v513, %v553
  %555 = vmatmul.f32.gmra.mxu0 %v409
  %v556 = vpop.f32.mrf.mxu0
  %v557 = vadd.f32 %v516, %v556
  %558 = vmatmul.f32.gmra.mxu0 %v411
  %v559 = vpop.f32.mrf.mxu0
  %v560 = vadd.f32 %v519, %v559
  %561 = vmatmul.f32.gmra.mxu0 %v413
  %v562 = vpop.f32.mrf.mxu0
  %v563 = vadd.f32 %v522, %v562
  %564 = vmatmul.f32.gmra.mxu0 %v415
  %v565 = vpop.f32.mrf.mxu0
  %v566 = vadd.f32 %v525, %v565
  %567 = vdwg.mxu0
  %568 = vmatpush.msra.mxu0 %v447
  %569 = vmatpush.msra.mxu0 %v445
  %570 = vmatpush.msra.mxu0 %v443
  %571 = vmatpush.msra.mxu0 %v441
  %572 = vmatpush.msra.mxu0 %v439
  %573 = vmatpush.msra.mxu0 %v437
  %574 = vmatpush.msra.mxu0 %v435
  %575 = vmatpush.msra.mxu0 %v433
  %576 = vmatpush.msra.mxu0 %v431
  %577 = vmatpush.msra.mxu0 %v429
  %578 = vmatpush.msra.mxu0 %v427
  %579 = vmatpush.msra.mxu0 %v425
  %580 = vmatpush.msra.mxu0 %v423
  %581 = vmatpush.msra.mxu0 %v421
  %582 = vmatpush.msra.mxu0 %v419
  %583 = vmatpush.msra.mxu0 %v417
  %584 = vmatmul.f32.gmra.mxu0 %v400
  %v585 = vpop.f32.mrf.mxu0
  %v586 = vadd.f32 %v483, %v585
  %587 = vmatmul.f32.gmra.mxu0 %v402
  %v588 = vpop.f32.mrf.mxu0
  %v589 = vadd.f32 %v483, %v588
  %590 = vmatmul.f32.gmra.mxu0 %v404
  %v591 = vpop.f32.mrf.mxu0
  %v592 = vadd.f32 %v483, %v591
  %593 = vmatmul.f32.gmra.mxu0 %v406
  %v594 = vpop.f32.mrf.mxu0
  %v595 = vadd.f32 %v483, %v594
  %596 = vmatmul.f32.gmra.mxu0 %v408
  %v597 = vpop.f32.mrf.mxu0
  %v598 = vadd.f32 %v483, %v597
  %599 = vmatmul.f32.gmra.mxu0 %v410
  %v600 = vpop.f32.mrf.mxu0
  %v601 = vadd.f32 %v483, %v600
  %602 = vmatmul.f32.gmra.mxu0 %v412
  %v603 = vpop.f32.mrf.mxu0
  %v604 = vadd.f32 %v483, %v603
  %605 = vmatmul.f32.gmra.mxu0 %v414
  %v606 = vpop.f32.mrf.mxu0
  %v607 = vadd.f32 %v483, %v606
  %608 = vdwg.mxu0
  %609 = vmatpush.msra.mxu0 %v479
  %610 = vmatpush.msra.mxu0 %v477
  %611 = vmatpush.msra.mxu0 %v475
  %612 = vmatpush.msra.mxu0 %v473
  %613 = vmatpush.msra.mxu0 %v471
  %614 = vmatpush.msra.mxu0 %v469
  %615 = vmatpush.msra.mxu0 %v467
  %616 = vmatpush.msra.mxu0 %v465
  %617 = vmatpush.msra.mxu0 %v463
  %618 = vmatpush.msra.mxu0 %v461
  %619 = vmatpush.msra.mxu0 %v459
  %620 = vmatpush.msra.mxu0 %v457
  %621 = vmatpush.msra.mxu0 %v455
  %622 = vmatpush.msra.mxu0 %v453
  %623 = vmatpush.msra.mxu0 %v451
  %624 = vmatpush.msra.mxu0 %v449
  %625 = vmatmul.f32.gmra.mxu0 %v401
  %v626 = vpop.f32.mrf.mxu0
  %v627 = vadd.f32 %v586, %v626
  %628 = vmatmul.f32.gmra.mxu0 %v403
  %v629 = vpop.f32.mrf.mxu0
  %v630 = vadd.f32 %v589, %v629
  %631 = vmatmul.f32.gmra.mxu0 %v405
  %v632 = vpop.f32.mrf.mxu0
  %v633 = vadd.f32 %v592, %v632
  %634 = vmatmul.f32.gmra.mxu0 %v407
  %v635 = vpop.f32.mrf.mxu0
  %v636 = vadd.f32 %v595, %v635
  %637 = vmatmul.f32.gmra.mxu0 %v409
  %v638 = vpop.f32.mrf.mxu0
  %v639 = vadd.f32 %v598, %v638
  %640 = vmatmul.f32.gmra.mxu0 %v411
  %v641 = vpop.f32.mrf.mxu0
  %v642 = vadd.f32 %v601, %v641
  %643 = vmatmul.f32.gmra.mxu0 %v413
  %v644 = vpop.f32.mrf.mxu0
  %v645 = vadd.f32 %v604, %v644
  %646 = vmatmul.f32.gmra.mxu0 %v415
  %v647 = vpop.f32.mrf.mxu0
  %v648 = vadd.f32 %v607, %v647
  %649 = vdwg.mxu0
  %v650 = vmax.f32 %v545, 0.0
  %v651 = vmax.f32 %v627, 0.0
  %v652 = vmax.f32 %v548, 0.0
  %v653 = vmax.f32 %v630, 0.0
  %v654 = vmax.f32 %v551, 0.0
  %v655 = vmax.f32 %v633, 0.0
  %v656 = vmax.f32 %v554, 0.0
  %v657 = vmax.f32 %v636, 0.0
  %v658 = vmax.f32 %v557, 0.0
  %v659 = vmax.f32 %v639, 0.0
  %v660 = vmax.f32 %v560, 0.0
  %v661 = vmax.f32 %v642, 0.0
  %v662 = vmax.f32 %v563, 0.0
  %v663 = vmax.f32 %v645, 0.0
  %v664 = vmax.f32 %v566, 0.0
  %v665 = vmax.f32 %v648, 0.0
  %v666 = vld [vmem:[%s3] sm:$0xff]
  %v667 = vld [vmem:[%s3 + $0x8] sm:$0xff]
  %v668 = vld [vmem:[%s3 + $0x10] sm:$0xff]
  %v669 = vld [vmem:[%s3 + $0x18] sm:$0xff]
  %v670 = vld [vmem:[%s3 + $0x20] sm:$0xff]
  %v671 = vld [vmem:[%s3 + $0x28] sm:$0xff]
  %v672 = vld [vmem:[%s3 + $0x30] sm:$0xff]
  %v673 = vld [vmem:[%s3 + $0x38] sm:$0xff]
  %v674 = vld [vmem:[%s3 + $0x40] sm:$0xff]
  %v675 = vld [vmem:[%s3 + $0x48] sm:$0xff]
  %v676 = vld [vmem:[%s3 + $0x50] sm:$0xff]
  %v677 = vld [vmem:[%s3 + $0x58] sm:$0xff]
  %v678 = vld [vmem:[%s3 + $0x60] sm:$0xff]
  %v679 = vld [vmem:[%s3 + $0x68] sm:$0xff]
  %v680 = vld [vmem:[%s3 + $0x70] sm:$0xff]
  %v681 = vld [vmem:[%s3 + $0x78] sm:$0xff]
  %v682 = vld [vmem:[%s3 + $0x80] sm:$0xff]
  %v683 = vld [vmem:[%s3 + $0x88] sm:$0xff]
  %v684 = vld [vmem:[%s3 + $0x90] sm:$0xff]
  %v685 = vld [vmem:[%s3 + $0x98] sm:$0xff]
  %v686 = vld [vmem:[%s3 + $0xa0] sm:$0xff]
  %v687 = vld [vmem:[%s3 + $0xa8] sm:$0xff]
  %v688 = vld [vmem:[%s3 + $0xb0] sm:$0xff]
  %v689 = vld [vmem:[%s3 + $0xb8] sm:$0xff]
  %v690 = vld [vmem:[%s3 + $0xc0] sm:$0xff]
  %v691 = vld [vmem:[%s3 + $0xc8] sm:$0xff]
  %v692 = vld [vmem:[%s3 + $0xd0] sm:$0xff]
  %v693 = vld [vmem:[%s3 + $0xd8] sm:$0xff]
  %v694 = vld [vmem:[%s3 + $0xe0] sm:$0xff]
  %v695 = vld [vmem:[%s3 + $0xe8] sm:$0xff]
  %v696 = vld [vmem:[%s3 + $0xf0] sm:$0xff]
  %v697 = vld [vmem:[%s3 + $0xf8] sm:$0xff]
  %v698 = vld [vmem:[%s3 + $0x100] sm:$0xff]
  %v699 = vld [vmem:[%s3 + $0x108] sm:$0xff]
  %v700 = vld [vmem:[%s3 + $0x110] sm:$0xff]
  %v701 = vld [vmem:[%s3 + $0x118] sm:$0xff]
  %v702 = vld [vmem:[%s3 + $0x120] sm:$0xff]
  %v703 = vld [vmem:[%s3 + $0x128] sm:$0xff]
  %v704 = vld [vmem:[%s3 + $0x130] sm:$0xff]
  %v705 = vld [vmem:[%s3 + $0x138] sm:$0xff]
  %v706 = vld [vmem:[%s3 + $0x140] sm:$0xff]
  %v707 = vld [vmem:[%s3 + $0x148] sm:$0xff]
  %v708 = vld [vmem:[%s3 + $0x150] sm:$0xff]
  %v709 = vld [vmem:[%s3 + $0x158] sm:$0xff]
  %v710 = vld [vmem:[%s3 + $0x160] sm:$0xff]
  %v711 = vld [vmem:[%s3 + $0x168] sm:$0xff]
  %v712 = vld [vmem:[%s3 + $0x170] sm:$0xff]
  %v713 = vld [vmem:[%s3 + $0x178] sm:$0xff]
  %v714 = vld [vmem:[%s3 + $0x180] sm:$0xff]
  %v715 = vld [vmem:[%s3 + $0x188] sm:$0xff]
  %v716 = vld [vmem:[%s3 + $0x190] sm:$0xff]
  %v717 = vld [vmem:[%s3 + $0x198] sm:$0xff]
  %v718 = vld [vmem:[%s3 + $0x1a0] sm:$0xff]
  %v719 = vld [vmem:[%s3 + $0x1a8] sm:$0xff]
  %v720 = vld [vmem:[%s3 + $0x1b0] sm:$0xff]
  %v721 = vld [vmem:[%s3 + $0x1b8] sm:$0xff]
  %v722 = vld [vmem:[%s3 + $0x1c0] sm:$0xff]
  %v723 = vld [vmem:[%s3 + $0x1c8] sm:$0xff]
  %v724 = vld [vmem:[%s3 + $0x1d0] sm:$0xff]
  %v725 = vld [vmem:[%s3 + $0x1d8] sm:$0xff]
  %v726 = vld [vmem:[%s3 + $0x1e0] sm:$0xff]
  %v727 = vld [vmem:[%s3 + $0x1e8] sm:$0xff]
  %v728 = vld [vmem:[%s3 + $0x1f0] sm:$0xff]
  %v729 = vld [vmem:[%s3 + $0x1f8] sm:$0xff]
  %v730 = vld [vmem:[%s3 + $0x200] sm:$0xff]
  %v731 = vld [vmem:[%s3 + $0x208] sm:$0xff]
  %v732 = vld [vmem:[%s3 + $0x210] sm:$0xff]
  %v733 = vld [vmem:[%s3 + $0x218] sm:$0xff]
  %v734 = vld [vmem:[%s3 + $0x220] sm:$0xff]
  %v735 = vld [vmem:[%s3 + $0x228] sm:$0xff]
  %v736 = vld [vmem:[%s3 + $0x230] sm:$0xff]
  %v737 = vld [vmem:[%s3 + $0x238] sm:$0xff]
  %v738 = vld [vmem:[%s3 + $0x240] sm:$0xff]
  %v739 = vld [vmem:[%s3 + $0x248] sm:$0xff]
  %v740 = vld [vmem:[%s3 + $0x250] sm:$0xff]
  %v741 = vld [vmem:[%s3 + $0x258] sm:$0xff]
  %v742 = vld [vmem:[%s3 + $0x260] sm:$0xff]
  %v743 = vld [vmem:[%s3 + $0x268] sm:$0xff]
  %v744 = vld [vmem:[%s3 + $0x270] sm:$0xff]
  %v745 = vld [vmem:[%s3 + $0x278] sm:$0xff]
  %v746 = vld [vmem:[%s3 + $0x280] sm:$0xff]
  %v747 = vld [vmem:[%s3 + $0x288] sm:$0xff]
  %v748 = vld [vmem:[%s3 + $0x290] sm:$0xff]
  %v749 = vld [vmem:[%s3 + $0x298] sm:$0xff]
  %v750 = vld [vmem:[%s3 + $0x2a0] sm:$0xff]
  %v751 = vld [vmem:[%s3 + $0x2a8] sm:$0xff]
  %v752 = vld [vmem:[%s3 + $0x2b0] sm:$0xff]
  %v753 = vld [vmem:[%s3 + $0x2b8] sm:$0xff]
  %v754 = vld [vmem:[%s3 + $0x2c0] sm:$0xff]
  %v755 = vld [vmem:[%s3 + $0x2c8] sm:$0xff]
  %v756 = vld [vmem:[%s3 + $0x2d0] sm:$0xff]
  %v757 = vld [vmem:[%s3 + $0x2d8] sm:$0xff]
  %v758 = vld [vmem:[%s3 + $0x2e0] sm:$0xff]
  %v759 = vld [vmem:[%s3 + $0x2e8] sm:$0xff]
  %v760 = vld [vmem:[%s3 + $0x2f0] sm:$0xff]
  %v761 = vld [vmem:[%s3 + $0x2f8] sm:$0xff]
  %v762 = vld [vmem:[%s3 + $0x300] sm:$0xff]
  %v763 = vld [vmem:[%s3 + $0x308] sm:$0xff]
  %v764 = vld [vmem:[%s3 + $0x310] sm:$0xff]
  %v765 = vld [vmem:[%s3 + $0x318] sm:$0xff]
  %v766 = vld [vmem:[%s3 + $0x320] sm:$0xff]
  %v767 = vld [vmem:[%s3 + $0x328] sm:$0xff]
  %v768 = vld [vmem:[%s3 + $0x330] sm:$0xff]
  %v769 = vld [vmem:[%s3 + $0x338] sm:$0xff]
  %v770 = vld [vmem:[%s3 + $0x340] sm:$0xff]
  %v771 = vld [vmem:[%s3 + $0x348] sm:$0xff]
  %v772 = vld [vmem:[%s3 + $0x350] sm:$0xff]
  %v773 = vld [vmem:[%s3 + $0x358] sm:$0xff]
  %v774 = vld [vmem:[%s3 + $0x360] sm:$0xff]
  %v775 = vld [vmem:[%s3 + $0x368] sm:$0xff]
  %v776 = vld [vmem:[%s3 + $0x370] sm:$0xff]
  %v777 = vld [vmem:[%s3 + $0x378] sm:$0xff]
  %v778 = vld [vmem:[%s3 + $0x380] sm:$0xff]
  %v779 = vld [vmem:[%s3 + $0x388] sm:$0xff]
  %v780 = vld [vmem:[%s3 + $0x390] sm:$0xff]
  %v781 = vld [vmem:[%s3 + $0x398] sm:$0xff]
  %v782 = vld [vmem:[%s3 + $0x3a0] sm:$0xff]
  %v783 = vld [vmem:[%s3 + $0x3a8] sm:$0xff]
  %v784 = vld [vmem:[%s3 + $0x3b0] sm:$0xff]
  %v785 = vld [vmem:[%s3 + $0x3b8] sm:$0xff]
  %v786 = vld [vmem:[%s3 + $0x3c0] sm:$0xff]
  %v787 = vld [vmem:[%s3 + $0x3c8] sm:$0xff]
  %v788 = vld [vmem:[%s3 + $0x3d0] sm:$0xff]
  %v789 = vld [vmem:[%s3 + $0x3d8] sm:$0xff]
  %v790 = vld [vmem:[%s3 + $0x3e0] sm:$0xff]
  %v791 = vld [vmem:[%s3 + $0x3e8] sm:$0xff]
  %v792 = vld [vmem:[%s3 + $0x3f0] sm:$0xff]
  %v793 = vld [vmem:[%s3 + $0x3f8] sm:$0xff]
  %v794 = vld [vmem:[%s6] sm:$0xf]
  %v796 = vperm.slane %v794, 0
  %v797 = vperm.slane %v794, 1
  %v798 = vperm.slane %v794, 2
  %v799 = vperm.slane %v794, 3
  %804 = vmatpush.msra.mxu0 %v726
  %805 = vmatpush.msra.mxu0 %v722
  %806 = vmatpush.msra.mxu0 %v718
  %807 = vmatpush.msra.mxu0 %v714
  %808 = vmatpush.msra.mxu0 %v710
  %809 = vmatpush.msra.mxu0 %v706
  %810 = vmatpush.msra.mxu0 %v702
  %811 = vmatpush.msra.mxu0 %v698
  %812 = vmatpush.msra.mxu0 %v694
  %813 = vmatpush.msra.mxu0 %v690
  %814 = vmatpush.msra.mxu0 %v686
  %815 = vmatpush.msra.mxu0 %v682
  %816 = vmatpush.msra.mxu0 %v678
  %817 = vmatpush.msra.mxu0 %v674
  %818 = vmatpush.msra.mxu0 %v670
  %819 = vmatpush.msra.mxu0 %v666
  %820 = vmatmul.f32.gmra.mxu0 %v650
  %v821 = vpop.f32.mrf.mxu0
  %v822 = vadd.f32 %v796, %v821
  %823 = vmatmul.f32.gmra.mxu0 %v652
  %v824 = vpop.f32.mrf.mxu0
  %v825 = vadd.f32 %v796, %v824
  %826 = vmatmul.f32.gmra.mxu0 %v654
  %v827 = vpop.f32.mrf.mxu0
  %v828 = vadd.f32 %v796, %v827
  %829 = vmatmul.f32.gmra.mxu0 %v656
  %v830 = vpop.f32.mrf.mxu0
  %v831 = vadd.f32 %v796, %v830
  %832 = vmatmul.f32.gmra.mxu0 %v658
  %v833 = vpop.f32.mrf.mxu0
  %v834 = vadd.f32 %v796, %v833
  %835 = vmatmul.f32.gmra.mxu0 %v660
  %v836 = vpop.f32.mrf.mxu0
  %v837 = vadd.f32 %v796, %v836
  %838 = vmatmul.f32.gmra.mxu0 %v662
  %v839 = vpop.f32.mrf.mxu0
  %v840 = vadd.f32 %v796, %v839
  %841 = vmatmul.f32.gmra.mxu0 %v664
  %v842 = vpop.f32.mrf.mxu0
  %v843 = vadd.f32 %v796, %v842
  %844 = vdwg.mxu0
  %845 = vmatpush.msra.mxu0 %v790
  %846 = vmatpush.msra.mxu0 %v786
  %847 = vmatpush.msra.mxu0 %v782
  %848 = vmatpush.msra.mxu0 %v778
  %849 = vmatpush.msra.mxu0 %v774
  %850 = vmatpush.msra.mxu0 %v770
  %851 = vmatpush.msra.mxu0 %v766
  %852 = vmatpush.msra.mxu0 %v762
  %853 = vmatpush.msra.mxu0 %v758
  %854 = vmatpush.msra.mxu0 %v754
  %855 = vmatpush.msra.mxu0 %v750
  %856 = vmatpush.msra.mxu0 %v746
  %857 = vmatpush.msra.mxu0 %v742
  %858 = vmatpush.msra.mxu0 %v738
  %859 = vmatpush.msra.mxu0 %v734
  %860 = vmatpush.msra.mxu0 %v730
  %861 = vmatmul.f32.gmra.mxu0 %v651
  %v862 = vpop.f32.mrf.mxu0
  %v863 = vadd.f32 %v822, %v862
  %864 = vmatmul.f32.gmra.mxu0 %v653
  %v865 = vpop.f32.mrf.mxu0
  %v866 = vadd.f32 %v825, %v865
  %867 = vmatmul.f32.gmra.mxu0 %v655
  %v868 = vpop.f32.mrf.mxu0
  %v869 = vadd.f32 %v828, %v868
  %870 = vmatmul.f32.gmra.mxu0 %v657
  %v871 = vpop.f32.mrf.mxu0
  %v872 = vadd.f32 %v831, %v871
  %873 = vmatmul.f32.gmra.mxu0 %v659
  %v874 = vpop.f32.mrf.mxu0
  %v875 = vadd.f32 %v834, %v874
  %876 = vmatmul.f32.gmra.mxu0 %v661
  %v877 = vpop.f32.mrf.mxu0
  %v878 = vadd.f32 %v837, %v877
  %879 = vmatmul.f32.gmra.mxu0 %v663
  %v880 = vpop.f32.mrf.mxu0
  %v881 = vadd.f32 %v840, %v880
  %882 = vmatmul.f32.gmra.mxu0 %v665
  %v883 = vpop.f32.mrf.mxu0
  %v884 = vadd.f32 %v843, %v883
  %885 = vdwg.mxu0
  %886 = vmatpush.msra.mxu0 %v727
  %887 = vmatpush.msra.mxu0 %v723
  %888 = vmatpush.msra.mxu0 %v719
  %889 = vmatpush.msra.mxu0 %v715
  %890 = vmatpush.msra.mxu0 %v711
  %891 = vmatpush.msra.mxu0 %v707
  %892 = vmatpush.msra.mxu0 %v703
  %893 = vmatpush.msra.mxu0 %v699
  %894 = vmatpush.msra.mxu0 %v695
  %895 = vmatpush.msra.mxu0 %v691
  %896 = vmatpush.msra.mxu0 %v687
  %897 = vmatpush.msra.mxu0 %v683
  %898 = vmatpush.msra.mxu0 %v679
  %899 = vmatpush.msra.mxu0 %v675
  %900 = vmatpush.msra.mxu0 %v671
  %901 = vmatpush.msra.mxu0 %v667
  %902 = vmatmul.f32.gmra.mxu0 %v650
  %v903 = vpop.f32.mrf.mxu0
  %v904 = vadd.f32 %v797, %v903
  %905 = vmatmul.f32.gmra.mxu0 %v652
  %v906 = vpop.f32.mrf.mxu0
  %v907 = vadd.f32 %v797, %v906
  %908 = vmatmul.f32.gmra.mxu0 %v654
  %v909 = vpop.f32.mrf.mxu0
  %v910 = vadd.f32 %v797, %v909
  %911 = vmatmul.f32.gmra.mxu0 %v656
  %v912 = vpop.f32.mrf.mxu0
  %v913 = vadd.f32 %v797, %v912
  %914 = vmatmul.f32.gmra.mxu0 %v658
  %v915 = vpop.f32.mrf.mxu0
  %v916 = vadd.f32 %v797, %v915
  %917 = vmatmul.f32.gmra.mxu0 %v660
  %v918 = vpop.f32.mrf.mxu0
  %v919 = vadd.f32 %v797, %v918
  %920 = vmatmul.f32.gmra.mxu0 %v662
  %v921 = vpop.f32.mrf.mxu0
  %v922 = vadd.f32 %v797, %v921
  %923 = vmatmul.f32.gmra.mxu0 %v664
  %v924 = vpop.f32.mrf.mxu0
  %v925 = vadd.f32 %v797, %v924
  %926 = vdwg.mxu0
  %927 = vmatpush.msra.mxu0 %v791
  %928 = vmatpush.msra.mxu0 %v787
  %929 = vmatpush.msra.mxu0 %v783
  %930 = vmatpush.msra.mxu0 %v779
  %931 = vmatpush.msra.mxu0 %v775
  %932 = vmatpush.msra.mxu0 %v771
  %933 = vmatpush.msra.mxu0 %v767
  %934 = vmatpush.msra.mxu0 %v763
  %935 = vmatpush.msra.mxu0 %v759
  %936 = vmatpush.msra.mxu0 %v755
  %937 = vmatpush.msra.mxu0 %v751
  %938 = vmatpush.msra.mxu0 %v747
  %939 = vmatpush.msra.mxu0 %v743
  %940 = vmatpush.msra.mxu0 %v739
  %941 = vmatpush.msra.mxu0 %v735
  %942 = vmatpush.msra.mxu0 %v731
  %943 = vmatmul.f32.gmra.mxu0 %v651
  %v944 = vpop.f32.mrf.mxu0
  %v945 = vadd.f32 %v904, %v944
  %946 = vmatmul.f32.gmra.mxu0 %v653
  %v947 = vpop.f32.mrf.mxu0
  %v948 = vadd.f32 %v907, %v947
  %949 = vmatmul.f32.gmra.mxu0 %v655
  %v950 = vpop.f32.mrf.mxu0
  %v951 = vadd.f32 %v910, %v950
  %952 = vmatmul.f32.gmra.mxu0 %v657
  %v953 = vpop.f32.mrf.mxu0
  %v954 = vadd.f32 %v913, %v953
  %955 = vmatmul.f32.gmra.mxu0 %v659
  %v956 = vpop.f32.mrf.mxu0
  %v957 = vadd.f32 %v916, %v956
  %958 = vmatmul.f32.gmra.mxu0 %v661
  %v959 = vpop.f32.mrf.mxu0
  %v960 = vadd.f32 %v919, %v959
  %961 = vmatmul.f32.gmra.mxu0 %v663
  %v962 = vpop.f32.mrf.mxu0
  %v963 = vadd.f32 %v922, %v962
  %964 = vmatmul.f32.gmra.mxu0 %v665
  %v965 = vpop.f32.mrf.mxu0
  %v966 = vadd.f32 %v925, %v965
  %967 = vdwg.mxu0
  %968 = vmatpush.msra.mxu0 %v728
  %969 = vmatpush.msra.mxu0 %v724
  %970 = vmatpush.msra.mxu0 %v720
  %971 = vmatpush.msra.mxu0 %v716
  %972 = vmatpush.msra.mxu0 %v712
  %973 = vmatpush.msra.mxu0 %v708
  %974 = vmatpush.msra.mxu0 %v704
  %975 = vmatpush.msra.mxu0 %v700
  %976 = vmatpush.msra.mxu0 %v696
  %977 = vmatpush.msra.mxu0 %v692
  %978 = vmatpush.msra.mxu0 %v688
  %979 = vmatpush.msra.mxu0 %v684
  %980 = vmatpush.msra.mxu0 %v680
  %981 = vmatpush.msra.mxu0 %v676
  %982 = vmatpush.msra.mxu0 %v672
  %983 = vmatpush.msra.mxu0 %v668
  %984 = vmatmul.f32.gmra.mxu0 %v650
  %v985 = vpop.f32.mrf.mxu0
  %v986 = vadd.f32 %v798, %v985
  %987 = vmatmul.f32.gmra.mxu0 %v652
  %v988 = vpop.f32.mrf.mxu0
  %v989 = vadd.f32 %v798, %v988
  %990 = vmatmul.f32.gmra.mxu0 %v654
  %v991 = vpop.f32.mrf.mxu0
  %v992 = vadd.f32 %v798, %v991
  %993 = vmatmul.f32.gmra.mxu0 %v656
  %v994 = vpop.f32.mrf.mxu0
  %v995 = vadd.f32 %v798, %v994
  %996 = vmatmul.f32.gmra.mxu0 %v658
  %v997 = vpop.f32.mrf.mxu0
  %v998 = vadd.f32 %v798, %v997
  %999 = vmatmul.f32.gmra.mxu0 %v660
  %v1000 = vpop.f32.mrf.mxu0
  %v1001 = vadd.f32 %v798, %v1000
  %1002 = vmatmul.f32.gmra.mxu0 %v662
  %v1003 = vpop.f32.mrf.mxu0
  %v1004 = vadd.f32 %v798, %v1003
  %1005 = vmatmul.f32.gmra.mxu0 %v664
  %v1006 = vpop.f32.mrf.mxu0
  %v1007 = vadd.f32 %v798, %v1006
  %1008 = vdwg.mxu0
  %1009 = vmatpush.msra.mxu0 %v792
  %1010 = vmatpush.msra.mxu0 %v788
  %1011 = vmatpush.msra.mxu0 %v784
  %1012 = vmatpush.msra.mxu0 %v780
  %1013 = vmatpush.msra.mxu0 %v776
  %1014 = vmatpush.msra.mxu0 %v772
  %1015 = vmatpush.msra.mxu0 %v768
  %1016 = vmatpush.msra.mxu0 %v764
  %1017 = vmatpush.msra.mxu0 %v760
  %1018 = vmatpush.msra.mxu0 %v756
  %1019 = vmatpush.msra.mxu0 %v752
  %1020 = vmatpush.msra.mxu0 %v748
  %1021 = vmatpush.msra.mxu0 %v744
  %1022 = vmatpush.msra.mxu0 %v740
  %1023 = vmatpush.msra.mxu0 %v736
  %1024 = vmatpush.msra.mxu0 %v732
  %1025 = vmatmul.f32.gmra.mxu0 %v651
  %v1026 = vpop.f32.mrf.mxu0
  %v1027 = vadd.f32 %v986, %v1026
  %1028 = vmatmul.f32.gmra.mxu0 %v653
  %v1029 = vpop.f32.mrf.mxu0
  %v1030 = vadd.f32 %v989, %v1029
  %1031 = vmatmul.f32.gmra.mxu0 %v655
  %v1032 = vpop.f32.mrf.mxu0
  %v1033 = vadd.f32 %v992, %v1032
  %1034 = vmatmul.f32.gmra.mxu0 %v657
  %v1035 = vpop.f32.mrf.mxu0
  %v1036 = vadd.f32 %v995, %v1035
  %1037 = vmatmul.f32.gmra.mxu0 %v659
  %v1038 = vpop.f32.mrf.mxu0
  %v1039 = vadd.f32 %v998, %v1038
  %1040 = vmatmul.f32.gmra.mxu0 %v661
  %v1041 = vpop.f32.mrf.mxu0
  %v1042 = vadd.f32 %v1001, %v1041
  %1043 = vmatmul.f32.gmra.mxu0 %v663
  %v1044 = vpop.f32.mrf.mxu0
  %v1045 = vadd.f32 %v1004, %v1044
  %1046 = vmatmul.f32.gmra.mxu0 %v665
  %v1047 = vpop.f32.mrf.mxu0
  %v1048 = vadd.f32 %v1007, %v1047
  %1049 = vdwg.mxu0
  %1050 = vmatpush.msra.mxu0 %v729
  %1051 = vmatpush.msra.mxu0 %v725
  %1052 = vmatpush.msra.mxu0 %v721
  %1053 = vmatpush.msra.mxu0 %v717
  %1054 = vmatpush.msra.mxu0 %v713
  %1055 = vmatpush.msra.mxu0 %v709
  %1056 = vmatpush.msra.mxu0 %v705
  %1057 = vmatpush.msra.mxu0 %v701
  %1058 = vmatpush.msra.mxu0 %v697
  %1059 = vmatpush.msra.mxu0 %v693
  %1060 = vmatpush.msra.mxu0 %v689
  %1061 = vmatpush.msra.mxu0 %v685
  %1062 = vmatpush.msra.mxu0 %v681
  %1063 = vmatpush.msra.mxu0 %v677
  %1064 = vmatpush.msra.mxu0 %v673
  %1065 = vmatpush.msra.mxu0 %v669
  %1066 = vmatmul.f32.gmra.mxu0 %v650
  %v1067 = vpop.f32.mrf.mxu0
  %v1068 = vadd.f32 %v799, %v1067
  %1069 = vmatmul.f32.gmra.mxu0 %v652
  %v1070 = vpop.f32.mrf.mxu0
  %v1071 = vadd.f32 %v799, %v1070
  %1072 = vmatmul.f32.gmra.mxu0 %v654
  %v1073 = vpop.f32.mrf.mxu0
  %v1074 = vadd.f32 %v799, %v1073
  %1075 = vmatmul.f32.gmra.mxu0 %v656
  %v1076 = vpop.f32.mrf.mxu0
  %v1077 = vadd.f32 %v799, %v1076
  %1078 = vmatmul.f32.gmra.mxu0 %v658
  %v1079 = vpop.f32.mrf.mxu0
  %v1080 = vadd.f32 %v799, %v1079
  %1081 = vmatmul.f32.gmra.mxu0 %v660
  %v1082 = vpop.f32.mrf.mxu0
  %v1083 = vadd.f32 %v799, %v1082
  %1084 = vmatmul.f32.gmra.mxu0 %v662
  %v1085 = vpop.f32.mrf.mxu0
  %v1086 = vadd.f32 %v799, %v1085
  %1087 = vmatmul.f32.gmra.mxu0 %v664
  %v1088 = vpop.f32.mrf.mxu0
  %v1089 = vadd.f32 %v799, %v1088
  %1090 = vdwg.mxu0
  %1091 = vmatpush.msra.mxu0 %v793
  %1092 = vmatpush.msra.mxu0 %v789
  %1093 = vmatpush.msra.mxu0 %v785
  %1094 = vmatpush.msra.mxu0 %v781
  %1095 = vmatpush.msra.mxu0 %v777
  %1096 = vmatpush.msra.mxu0 %v773
  %1097 = vmatpush.msra.mxu0 %v769
  %1098 = vmatpush.msra.mxu0 %v765
  %1099 = vmatpush.msra.mxu0 %v761
  %1100 = vmatpush.msra.mxu0 %v757
  %1101 = vmatpush.msra.mxu0 %v753
  %1102 = vmatpush.msra.mxu0 %v749
  %1103 = vmatpush.msra.mxu0 %v745
  %1104 = vmatpush.msra.mxu0 %v741
  %1105 = vmatpush.msra.mxu0 %v737
  %1106 = vmatpush.msra.mxu0 %v733
  %1107 = vmatmul.f32.gmra.mxu0 %v651
  %v1108 = vpop.f32.mrf.mxu0
  %v1109 = vadd.f32 %v1068, %v1108
  %1110 = vmatmul.f32.gmra.mxu0 %v653
  %v1111 = vpop.f32.mrf.mxu0
  %v1112 = vadd.f32 %v1071, %v1111
  %1113 = vmatmul.f32.gmra.mxu0 %v655
  %v1114 = vpop.f32.mrf.mxu0
  %v1115 = vadd.f32 %v1074, %v1114
  %1116 = vmatmul.f32.gmra.mxu0 %v657
  %v1117 = vpop.f32.mrf.mxu0
  %v1118 = vadd.f32 %v1077, %v1117
  %1119 = vmatmul.f32.gmra.mxu0 %v659
  %v1120 = vpop.f32.mrf.mxu0
  %v1121 = vadd.f32 %v1080, %v1120
  %1122 = vmatmul.f32.gmra.mxu0 %v661
  %v1123 = vpop.f32.mrf.mxu0
  %v1124 = vadd.f32 %v1083, %v1123
  %1125 = vmatmul.f32.gmra.mxu0 %v663
  %v1126 = vpop.f32.mrf.mxu0
  %v1127 = vadd.f32 %v1086, %v1126
  %1128 = vmatmul.f32.gmra.mxu0 %v665
  %v1129 = vpop.f32.mrf.mxu0
  %v1130 = vadd.f32 %v1089, %v1129
  %1131 = vdwg.mxu0
  %v1132 = vmax.f32 %v863, 0.0
  %v1133 = vmax.f32 %v945, 0.0
  %v1134 = vmax.f32 %v1027, 0.0
  %v1135 = vmax.f32 %v1109, 0.0
  %v1136 = vmax.f32 %v866, 0.0
  %v1137 = vmax.f32 %v948, 0.0
  %v1138 = vmax.f32 %v1030, 0.0
  %v1139 = vmax.f32 %v1112, 0.0
  %v1140 = vmax.f32 %v869, 0.0
  %v1141 = vmax.f32 %v951, 0.0
  %v1142 = vmax.f32 %v1033, 0.0
  %v1143 = vmax.f32 %v1115, 0.0
  %v1144 = vmax.f32 %v872, 0.0
  %v1145 = vmax.f32 %v954, 0.0
  %v1146 = vmax.f32 %v1036, 0.0
  %v1147 = vmax.f32 %v1118, 0.0
  %v1148 = vmax.f32 %v875, 0.0
  %v1149 = vmax.f32 %v957, 0.0
  %v1150 = vmax.f32 %v1039, 0.0
  %v1151 = vmax.f32 %v1121, 0.0
  %v1152 = vmax.f32 %v878, 0.0
  %v1153 = vmax.f32 %v960, 0.0
  %v1154 = vmax.f32 %v1042, 0.0
  %v1155 = vmax.f32 %v1124, 0.0
  %v1156 = vmax.f32 %v881, 0.0
  %v1157 = vmax.f32 %v963, 0.0
  %v1158 = vmax.f32 %v1045, 0.0
  %v1159 = vmax.f32 %v1127, 0.0
  %v1160 = vmax.f32 %v884, 0.0
  %v1161 = vmax.f32 %v966, 0.0
  %v1162 = vmax.f32 %v1048, 0.0
  %v1163 = vmax.f32 %v1130, 0.0
  %v1164 = vrot.slane %v1132, 4
  %v1165 = vmax.f32 %v1132, %v1164
  %v1166 = vrot.slane %v1165, 2
  %v1167 = vmax.f32 %v1165, %v1166
  %v1168 = vrot.slane %v1167, 1
  %v1169 = vmax.f32 %v1167, %v1168
  %v1170 = vrot.slane %v1133, 4
  %v1171 = vmax.f32 %v1133, %v1170
  %v1172 = vrot.slane %v1171, 2
  %v1173 = vmax.f32 %v1171, %v1172
  %v1174 = vrot.slane %v1173, 1
  %v1175 = vmax.f32 %v1173, %v1174
  %v1176 = vrot.slane %v1134, 4
  %v1177 = vmax.f32 %v1134, %v1176
  %v1178 = vrot.slane %v1177, 2
  %v1179 = vmax.f32 %v1177, %v1178
  %v1180 = vrot.slane %v1179, 1
  %v1181 = vmax.f32 %v1179, %v1180
  %v1182 = vrot.slane %v1135, 4
  %v1183 = vmax.f32 %v1135, %v1182
  %v1184 = vrot.slane %v1183, 2
  %v1185 = vmax.f32 %v1183, %v1184
  %v1186 = vrot.slane %v1185, 1
  %v1187 = vmax.f32 %v1185, %v1186
  %v1188 = vrot.slane %v1136, 4
  %v1189 = vmax.f32 %v1136, %v1188
  %v1190 = vrot.slane %v1189, 2
  %v1191 = vmax.f32 %v1189, %v1190
  %v1192 = vrot.slane %v1191, 1
  %v1193 = vmax.f32 %v1191, %v1192
  %v1194 = vrot.slane %v1137, 4
  %v1195 = vmax.f32 %v1137, %v1194
  %v1196 = vrot.slane %v1195, 2
  %v1197 = vmax.f32 %v1195, %v1196
  %v1198 = vrot.slane %v1197, 1
  %v1199 = vmax.f32 %v1197, %v1198
  %v1200 = vrot.slane %v1138, 4
  %v1201 = vmax.f32 %v1138, %v1200
  %v1202 = vrot.slane %v1201, 2
  %v1203 = vmax.f32 %v1201, %v1202
  %v1204 = vrot.slane %v1203, 1
  %v1205 = vmax.f32 %v1203, %v1204
  %v1206 = vrot.slane %v1139, 4
  %v1207 = vmax.f32 %v1139, %v1206
  %v1208 = vrot.slane %v1207, 2
  %v1209 = vmax.f32 %v1207, %v1208
  %v1210 = vrot.slane %v1209, 1
  %v1211 = vmax.f32 %v1209, %v1210
  %v1212 = vrot.slane %v1140, 4
  %v1213 = vmax.f32 %v1140, %v1212
  %v1214 = vrot.slane %v1213, 2
  %v1215 = vmax.f32 %v1213, %v1214
  %v1216 = vrot.slane %v1215, 1
  %v1217 = vmax.f32 %v1215, %v1216
  %v1218 = vrot.slane %v1141, 4
  %v1219 = vmax.f32 %v1141, %v1218
  %v1220 = vrot.slane %v1219, 2
  %v1221 = vmax.f32 %v1219, %v1220
  %v1222 = vrot.slane %v1221, 1
  %v1223 = vmax.f32 %v1221, %v1222
  %v1224 = vrot.slane %v1142, 4
  %v1225 = vmax.f32 %v1142, %v1224
  %v1226 = vrot.slane %v1225, 2
  %v1227 = vmax.f32 %v1225, %v1226
  %v1228 = vrot.slane %v1227, 1
  %v1229 = vmax.f32 %v1227, %v1228
  %v1230 = vrot.slane %v1143, 4
  %v1231 = vmax.f32 %v1143, %v1230
  %v1232 = vrot.slane %v1231, 2
  %v1233 = vmax.f32 %v1231, %v1232
  %v1234 = vrot.slane %v1233, 1
  %v1235 = vmax.f32 %v1233, %v1234
  %v1236 = vrot.slane %v1144, 4
  %v1237 = vmax.f32 %v1144, %v1236
  %v1238 = vrot.slane %v1237, 2
  %v1239 = vmax.f32 %v1237, %v1238
  %v1240 = vrot.slane %v1239, 1
  %v1241 = vmax.f32 %v1239, %v1240
  %v1242 = vrot.slane %v1145, 4
  %v1243 = vmax.f32 %v1145, %v1242
  %v1244 = vrot.slane %v1243, 2
  %v1245 = vmax.f32 %v1243, %v1244
  %v1246 = vrot.slane %v1245, 1
  %v1247 = vmax.f32 %v1245, %v1246
  %v1248 = vrot.slane %v1146, 4
  %v1249 = vmax.f32 %v1146, %v1248
  %v1250 = vrot.slane %v1249, 2
  %v1251 = vmax.f32 %v1249, %v1250
  %v1252 = vrot.slane %v1251, 1
  %v1253 = vmax.f32 %v1251, %v1252
  %v1254 = vrot.slane %v1147, 4
  %v1255 = vmax.f32 %v1147, %v1254
  %v1256 = vrot.slane %v1255, 2
  %v1257 = vmax.f32 %v1255, %v1256
  %v1258 = vrot.slane %v1257, 1
  %v1259 = vmax.f32 %v1257, %v1258
  %v1260 = vrot.slane %v1148, 4
  %v1261 = vmax.f32 %v1148, %v1260
  %v1262 = vrot.slane %v1261, 2
  %v1263 = vmax.f32 %v1261, %v1262
  %v1264 = vrot.slane %v1263, 1
  %v1265 = vmax.f32 %v1263, %v1264
  %v1266 = vrot.slane %v1149, 4
  %v1267 = vmax.f32 %v1149, %v1266
  %v1268 = vrot.slane %v1267, 2
  %v1269 = vmax.f32 %v1267, %v1268
  %v1270 = vrot.slane %v1269, 1
  %v1271 = vmax.f32 %v1269, %v1270
  %v1272 = vrot.slane %v1150, 4
  %v1273 = vmax.f32 %v1150, %v1272
  %v1274 = vrot.slane %v1273, 2
  %v1275 = vmax.f32 %v1273, %v1274
  %v1276 = vrot.slane %v1275, 1
  %v1277 = vmax.f32 %v1275, %v1276
  %v1278 = vrot.slane %v1151, 4
  %v1279 = vmax.f32 %v1151, %v1278
  %v1280 = vrot.slane %v1279, 2
  %v1281 = vmax.f32 %v1279, %v1280
  %v1282 = vrot.slane %v1281, 1
  %v1283 = vmax.f32 %v1281, %v1282
  %v1284 = vrot.slane %v1152, 4
  %v1285 = vmax.f32 %v1152, %v1284
  %v1286 = vrot.slane %v1285, 2
  %v1287 = vmax.f32 %v1285, %v1286
  %v1288 = vrot.slane %v1287, 1
  %v1289 = vmax.f32 %v1287, %v1288
  %v1290 = vrot.slane %v1153, 4
  %v1291 = vmax.f32 %v1153, %v1290
  %v1292 = vrot.slane %v1291, 2
  %v1293 = vmax.f32 %v1291, %v1292
  %v1294 = vrot.slane %v1293, 1
  %v1295 = vmax.f32 %v1293, %v1294
  %v1296 = vrot.slane %v1154, 4
  %v1297 = vmax.f32 %v1154, %v1296
  %v1298 = vrot.slane %v1297, 2
  %v1299 = vmax.f32 %v1297, %v1298
  %v1300 = vrot.slane %v1299, 1
  %v1301 = vmax.f32 %v1299, %v1300
  %v1302 = vrot.slane %v1155, 4
  %v1303 = vmax.f32 %v1155, %v1302
  %v1304 = vrot.slane %v1303, 2
  %v1305 = vmax.f32 %v1303, %v1304
  %v1306 = vrot.slane %v1305, 1
  %v1307 = vmax.f32 %v1305, %v1306
  %v1308 = vrot.slane %v1156, 4
  %v1309 = vmax.f32 %v1156, %v1308
  %v1310 = vrot.slane %v1309, 2
  %v1311 = vmax.f32 %v1309, %v1310
  %v1312 = vrot.slane %v1311, 1
  %v1313 = vmax.f32 %v1311, %v1312
  %v1314 = vrot.slane %v1157, 4
  %v1315 = vmax.f32 %v1157, %v1314
  %v1316 = vrot.slane %v1315, 2
  %v1317 = vmax.f32 %v1315, %v1316
  %v1318 = vrot.slane %v1317, 1
  %v1319 = vmax.f32 %v1317, %v1318
  %v1320 = vrot.slane %v1158, 4
  %v1321 = vmax.f32 %v1158, %v1320
  %v1322 = vrot.slane %v1321, 2
  %v1323 = vmax.f32 %v1321, %v1322
  %v1324 = vrot.slane %v1323, 1
  %v1325 = vmax.f32 %v1323, %v1324
  %v1326 = vrot.slane %v1159, 4
  %v1327 = vmax.f32 %v1159, %v1326
  %v1328 = vrot.slane %v1327, 2
  %v1329 = vmax.f32 %v1327, %v1328
  %v1330 = vrot.slane %v1329, 1
  %v1331 = vmax.f32 %v1329, %v1330
  %v1332 = vrot.slane %v1160, 4
  %v1333 = vmax.f32 %v1160, %v1332
  %v1334 = vrot.slane %v1333, 2
  %v1335 = vmax.f32 %v1333, %v1334
  %v1336 = vrot.slane %v1335, 1
  %v1337 = vmax.f32 %v1335, %v1336
  %v1338 = vrot.slane %v1161, 4
  %v1339 = vmax.f32 %v1161, %v1338
  %v1340 = vrot.slane %v1339, 2
  %v1341 = vmax.f32 %v1339, %v1340
  %v1342 = vrot.slane %v1341, 1
  %v1343 = vmax.f32 %v1341, %v1342
  %v1344 = vrot.slane %v1162, 4
  %v1345 = vmax.f32 %v1162, %v1344
  %v1346 = vrot.slane %v1345, 2
  %v1347 = vmax.f32 %v1345, %v1346
  %v1348 = vrot.slane %v1347, 1
  %v1349 = vmax.f32 %v1347, %v1348
  %v1350 = vrot.slane %v1163, 4
  %v1351 = vmax.f32 %v1163, %v1350
  %v1352 = vrot.slane %v1351, 2
  %v1353 = vmax.f32 %v1351, %v1352
  %v1354 = vrot.slane %v1353, 1
  %v1355 = vmax.f32 %v1353, %v1354
  %vm1388 = vcmask 1041409
  %v1389 = vsel %vm1388, %v1193, %v1169
  %vm1390 = vcmask 1042434
  %v1391 = vsel %vm1390, %v1217, %v1389
  %vm1392 = vcmask 1043459
  %v1393 = vsel %vm1392, %v1241, %v1391
  %vm1394 = vcmask 1044484
  %v1395 = vsel %vm1394, %v1265, %v1393
  %vm1396 = vcmask 1045509
  %v1397 = vsel %vm1396, %v1289, %v1395
  %vm1398 = vcmask 1046534
  %v1399 = vsel %vm1398, %v1313, %v1397
  %vm1400 = vcmask 1047559
  %v1401 = vsel %vm1400, %v1337, %v1399
  %v1402 = vsel %vm1388, %v1199, %v1175
  %v1403 = vsel %vm1390, %v1223, %v1402
  %v1404 = vsel %vm1392, %v1247, %v1403
  %v1405 = vsel %vm1394, %v1271, %v1404
  %v1406 = vsel %vm1396, %v1295, %v1405
  %v1407 = vsel %vm1398, %v1319, %v1406
  %v1408 = vsel %vm1400, %v1343, %v1407
  %v1409 = vsel %vm1388, %v1205, %v1181
  %v1410 = vsel %vm1390, %v1229, %v1409
  %v1411 = vsel %vm1392, %v1253, %v1410
  %v1412 = vsel %vm1394, %v1277, %v1411
  %v1413 = vsel %vm1396, %v1301, %v1412
  %v1414 = vsel %vm1398, %v1325, %v1413
  %v1415 = vsel %vm1400, %v1349, %v1414
  %v1416 = vsel %vm1388, %v1211, %v1187
  %v1417 = vsel %vm1390, %v1235, %v1416
  %v1418 = vsel %vm1392, %v1259, %v1417
  %v1419 = vsel %vm1394, %v1283, %v1418
  %v1420 = vsel %vm1396, %v1307, %v1419
  %v1421 = vsel %vm1398, %v1331, %v1420
  %v1422 = vsel %vm1400, %v1355, %v1421
  %1427 = vst [vmem:[%s7] sm:$0xff] %v1401
  %1428 = vst [vmem:[%s7 + $0x8] sm:$0xff] %v1408
  %1429 = vst [vmem:[%s7 + $0x10] sm:$0xff] %v1415
  %1430 = vst [vmem:[%s7 + $0x18] sm:$0xff] %v1422
  // Predicated region
  $region30: #{pointnet2_ssg_seg_forward.12} parent=0 // pred_check
    _
  $region31: #{pointnet2_ssg_seg_forward.12} parent=0 // pred_check_branch
    %1432 = sbr.rel (0) target = $region33
  $region32: #{pointnet2_ssg_seg_forward.12} parent=0 // pred_region
    _
  $region33: #{pointnet2_ssg_seg_forward.12} parent=0 // pred_fallthru
    _
  // Predicated region
  $region34: #{pointnet2_ssg_seg_forward.12} parent=0 // pred_check
    _
  $region35: #{pointnet2_ssg_seg_forward.12} parent=0 // pred_check_branch
    %1434 = sbr.rel (0) target = $region37
  $region36: #{pointnet2_ssg_seg_forward.12} parent=0 // pred_region
    _
  $region37: #{pointnet2_ssg_seg_forward.12} parent=0 // pred_fallthru
    _

// kernel: neg.18
$region0: #{neg.18}
  #allocation0 [shape = 's32[1]{0}', space=sflag, size = 0x4, scoped, tag = 'scoped memory for neg.18']
  %s0 = inlined_call_operand.vmem [shape: f32[2,16,8], index: 0, kind: input, shape index: {}]
  %s1 = inlined_call_operand.vmem [shape: f32[2,16,8], index: 1, kind: output, shape index: {}]
  %v2 = vld [vmem:[%s0] sm:$0xff]
  %3 = xla_tuple %v2
  %4 = xla_tuple %3
  %v5 = vxor.u32 %v2, 2147483648
  %6 = xla_tuple %v5
  %7 = vst [vmem:[%s1] sm:$0xff] %v5
  %s8 = scalar_lea.vmem %s0, 8
  %v9 = vld [vmem:[%s8] sm:$0xff]
  %10 = xla_tuple %v9
  %11 = xla_tuple %10
  %v12 = vxor.u32 %v9, 2147483648
  %13 = xla_tuple %v12
  %s14 = scalar_lea.vmem %s1, 8
  %15 = vst [vmem:[%s14] sm:$0xff] %v12

// kernel: pointnet2_ssg_seg_forward.13
$region0: #{pointnet2_ssg_seg_forward.13}
  #allocation0 [shape = 'u32[]', space=smem, size = 0x4, offset = 0x4, fixed_abs, tag = 'smem constant byte address 0x4 - core index']
  #allocation1 [shape = 'u32[72,128]{1,0:T(1,128)}', space=vmem, size = 0x9000, scoped, tag = 'internal scratch']
  %s0 = inlined_call_operand.vmem [shape: f32[16,768], index: 0, kind: input, shape index: {}]
  %s1 = inlined_call_operand.vmem [shape: f32[768,256], index: 1, kind: input, shape index: {}]
  %s2 = inlined_call_operand.vmem [shape: f32[256,256], index: 2, kind: input, shape index: {}]
  %s3 = inlined_call_operand.vmem [shape: f32[1,256], index: 3, kind: input, shape index: {}]
  %s4 = inlined_call_operand.vmem [shape: f32[1,256], index: 4, kind: input, shape index: {}]
  %s5 = inlined_call_operand.vmem [shape: f32[16,256], index: 5, kind: output, shape index: {}]
  %s6 = sld [smem:[#allocation0]]
  $region53: #{pointnet2_ssg_seg_forward.13} parent=0
    _
  %s8 = ssub.s32 1, %s6
  %s9 = scalar_select 0, %s8, %s6
  loop: start=0, step=1, limit=4
  $region2: #{pointnet2_ssg_seg_forward.13} parent=0 // loop_pre_header
    _
  $region3: #{pointnet2_ssg_seg_forward.13} parent=0 // loop_header
    %s11 = sphi 0, %s15
    %p12 = scmp.ge.s32.totalorder %s11, 4
    %s21 = sphi 0, %s23
    %s24 = sphi 0, %s21
    %s25 = sphi 0, %s24
    %s41 = sphi 0, %s25
    %s45 = sphi 0, %s45
    %s47 = sphi 0, %s45
    %s48 = sphi 0, %s47
    %s62 = sphi 0, %s48
    %s66 = sphi 0, %s66
    %s68 = sphi 0, %s66
    %s69 = sphi 0, %s68
    %s83 = sphi 0, %s69
    %s87 = sphi 0, %s87
    %s89 = sphi 0, %s87
    %s90 = sphi 0, %s89
    %s104 = sphi 0, %s90
    %s108 = sphi 0, %s108
    %s110 = sphi 0, %s108
    %s111 = sphi 0, %s110
    %s125 = sphi 0, %s111
    %s131 = sphi 0, %s133
    %s134 = sphi 0, %s131
    %s135 = sphi 0, %s134
    %s151 = sphi 0, %s135
  $region4: #{pointnet2_ssg_seg_forward.13} parent=0 // loop_header_branch
    %14 = sbr.rel (%p12) target = $region8
  $region5: #{pointnet2_ssg_seg_forward.13} parent=0 // loop_body
    %s16 = ssub.s32 %s11, 1
    %s17 = ssub.s32 %s11, 2
    %s18 = sadd.s32 %s11, 1
    %s19 = ssub.s32 %s11, %s18
    %p20 = scmp.eq.s32.totalorder %s19, 0
    %s22 = sadd.s32 %s21, 1
    %s23 = scalar_select %p20, %s21, %s22
    %p26 = pneg %p20
    %p27 = scmp.eq.s32.totalorder %s11, 1
    %p28 = por %p26, %p27
    %p29 = scmp.ne.s32.totalorder %s21, %s24
    %p30 = scmp.eq.s32.totalorder %s11, 0
    %p31 = por %p29, %p30
    %p32 = scmp.ne.s32.totalorder %s21, %s24
    %p33 = scmp.eq.s32.totalorder %s16, 1
    %p34 = por %p32, %p33
    %p35 = scmp.ne.s32.totalorder %s24, %s25
    %p36 = scmp.eq.s32.totalorder %s16, 0
    %p37 = por %p35, %p36
    %p38 = scmp.ne.s32.totalorder %s24, %s25
    %p39 = scmp.eq.s32.totalorder %s17, 1
    %p40 = por %p38, %p39
    %p42 = scmp.ne.s32.totalorder %s25, %s41
    %p43 = scmp.eq.s32.totalorder %s17, 0
    %p44 = por %p42, %p43
    %s46 = sadd.s32 %s45, 1
    %p49 = scmp.eq.s32.totalorder %s11, 1
    %p50 = scmp.ne.s32.totalorder %s45, %s47
    %p51 = scmp.eq.s32.totalorder %s11, 0
    %p52 = por %p50, %p51
    %p53 = scmp.ne.s32.totalorder %s45, %s47
    %p54 = scmp.eq.s32.totalorder %s16, 1
    %p55 = por %p53, %p54
    %p56 = scmp.ne.s32.totalorder %s47, %s48
    %p57 = scmp.eq.s32.totalorder %s16, 0
    %p58 = por %p56, %p57
    %p59 = scmp.ne.s32.totalorder %s47, %s48
    %p60 = scmp.eq.s32.totalorder %s17, 1
    %p61 = por %p59, %p60
    %p63 = scmp.ne.s32.totalorder %s48, %s62
    %p64 = scmp.eq.s32.totalorder %s17, 0
    %p65 = por %p63, %p64
    %s67 = sadd.s32 %s66, 1
    %p70 = scmp.eq.s32.totalorder %s11, 1
    %p71 = scmp.ne.s32.totalorder %s66, %s68
    %p72 = scmp.eq.s32.totalorder %s11, 0
    %p73 = por %p71, %p72
    %p74 = scmp.ne.s32.totalorder %s66, %s68
    %p75 = scmp.eq.s32.totalorder %s16, 1
    %p76 = por %p74, %p75
    %p77 = scmp.ne.s32.totalorder %s68, %s69
    %p78 = scmp.eq.s32.totalorder %s16, 0
    %p79 = por %p77, %p78
    %p80 = scmp.ne.s32.totalorder %s68, %s69
    %p81 = scmp.eq.s32.totalorder %s17, 1
    %p82 = por %p80, %p81
    %p84 = scmp.ne.s32.totalorder %s69, %s83
    %p85 = scmp.eq.s32.totalorder %s17, 0
    %p86 = por %p84, %p85
    %s88 = sadd.s32 %s87, 1
    %p91 = scmp.eq.s32.totalorder %s11, 1
    %p92 = scmp.ne.s32.totalorder %s87, %s89
    %p93 = scmp.eq.s32.totalorder %s11, 0
    %p94 = por %p92, %p93
    %p95 = scmp.ne.s32.totalorder %s87, %s89
    %p96 = scmp.eq.s32.totalorder %s16, 1
    %p97 = por %p95, %p96
    %p98 = scmp.ne.s32.totalorder %s89, %s90
    %p99 = scmp.eq.s32.totalorder %s16, 0
    %p100 = por %p98, %p99
    %p101 = scmp.ne.s32.totalorder %s89, %s90
    %p102 = scmp.eq.s32.totalorder %s17, 1
    %p103 = por %p101, %p102
    %p105 = scmp.ne.s32.totalorder %s90, %s104
    %p106 = scmp.eq.s32.totalorder %s17, 0
    %p107 = por %p105, %p106
    %s109 = sadd.s32 %s108, 1
    %p112 = scmp.eq.s32.totalorder %s11, 1
    %p113 = scmp.ne.s32.totalorder %s108, %s110
    %p114 = scmp.eq.s32.totalorder %s11, 0
    %p115 = por %p113, %p114
    %p116 = scmp.ne.s32.totalorder %s108, %s110
    %p117 = scmp.eq.s32.totalorder %s16, 1
    %p118 = por %p116, %p117
    %p119 = scmp.ne.s32.totalorder %s110, %s111
    %p120 = scmp.eq.s32.totalorder %s16, 0
    %p121 = por %p119, %p120
    %p122 = scmp.ne.s32.totalorder %s110, %s111
    %p123 = scmp.eq.s32.totalorder %s17, 1
    %p124 = por %p122, %p123
    %p126 = scmp.ne.s32.totalorder %s111, %s125
    %p127 = scmp.eq.s32.totalorder %s17, 0
    %p128 = por %p126, %p127
    %s129 = ssub.s32 %s11, %s18
    %p130 = scmp.eq.s32.totalorder %s129, 0
    %s132 = sadd.s32 %s131, 1
    %s133 = scalar_select %p130, %s131, %s132
    %p136 = pneg %p130
    %p137 = scmp.eq.s32.totalorder %s11, 1
    %p138 = por %p136, %p137
    %p139 = scmp.ne.s32.totalorder %s131, %s134
    %p140 = scmp.eq.s32.totalorder %s11, 0
    %p141 = por %p139, %p140
    %p142 = scmp.ne.s32.totalorder %s131, %s134
    %p143 = scmp.eq.s32.totalorder %s16, 1
    %p144 = por %p142, %p143
    %p145 = scmp.ne.s32.totalorder %s134, %s135
    %p146 = scmp.eq.s32.totalorder %s16, 0
    %p147 = por %p145, %p146
    %p148 = scmp.ne.s32.totalorder %s134, %s135
    %p149 = scmp.eq.s32.totalorder %s17, 1
    %p150 = por %p148, %p149
    %p152 = scmp.ne.s32.totalorder %s135, %s151
    %p153 = scmp.eq.s32.totalorder %s17, 0
    %p154 = por %p152, %p153
    %p155 = scmp.le.s32.totalorder 1, %s11
    %p156 = scmp.lt.s32.totalorder %s11, 3
    %p157 = pnand %p155, %p156
    %p158 = pneg %p157
    // Predicated region
    $region9: #{pointnet2_ssg_seg_forward.13} parent=5 // pred_check
      _
    $region10: #{pointnet2_ssg_seg_forward.13} parent=5 // pred_check_branch
      %160 = sbr.rel (%p157) target = $region12
    $region11: #{pointnet2_ssg_seg_forward.13} parent=5 // pred_region
      %s161 = ssub.s32 %s11, 1
      // Predicated region
      $region13: #{pointnet2_ssg_seg_forward.13} parent=11 // pred_check
        %p162 = pneg %p58
      $region14: #{pointnet2_ssg_seg_forward.13} parent=11 // pred_check_branch
        %164 = sbr.rel (%p162) target = $region16
      $region15: #{pointnet2_ssg_seg_forward.13} parent=11 // pred_region
        _
      $region16: #{pointnet2_ssg_seg_forward.13} parent=11 // pred_fallthru
        _
      // Predicated region
      $region17: #{pointnet2_ssg_seg_forward.13} parent=11 // pred_check
        %p165 = pneg %p79
      $region18: #{pointnet2_ssg_seg_forward.13} parent=11 // pred_check_branch
        %167 = sbr.rel (%p165) target = $region20
      $region19: #{pointnet2_ssg_seg_forward.13} parent=11 // pred_region
        _
      $region20: #{pointnet2_ssg_seg_forward.13} parent=11 // pred_fallthru
        _
      // Predicated region
      $region21: #{pointnet2_ssg_seg_forward.13} parent=11 // pred_check
        %p168 = pneg %p100
      $region22: #{pointnet2_ssg_seg_forward.13} parent=11 // pred_check_branch
        %170 = sbr.rel (%p168) target = $region24
      $region23: #{pointnet2_ssg_seg_forward.13} parent=11 // pred_region
        _
      $region24: #{pointnet2_ssg_seg_forward.13} parent=11 // pred_fallthru
        _
      // Predicated region
      $region25: #{pointnet2_ssg_seg_forward.13} parent=11 // pred_check
        %p171 = pneg %p121
      $region26: #{pointnet2_ssg_seg_forward.13} parent=11 // pred_check_branch
        %173 = sbr.rel (%p171) target = $region28
      $region27: #{pointnet2_ssg_seg_forward.13} parent=11 // pred_region
        _
      $region28: #{pointnet2_ssg_seg_forward.13} parent=11 // pred_fallthru
        _
    $region12: #{pointnet2_ssg_seg_forward.13} parent=5 // pred_fallthru
      _
    %p174 = scmp.lt.s32.totalorder %s11, 2
    // Predicated region
    $region29: #{pointnet2_ssg_seg_forward.13} parent=5 // pred_check
      %p175 = pneg %p174
    $region30: #{pointnet2_ssg_seg_forward.13} parent=5 // pred_check_branch
      %177 = sbr.rel (%p175) target = $region32
    $region31: #{pointnet2_ssg_seg_forward.13} parent=5 // pred_region
      // Predicated region
      $region33: #{pointnet2_ssg_seg_forward.13} parent=31 // pred_check
        %p178 = pneg %p31
      $region34: #{pointnet2_ssg_seg_forward.13} parent=31 // pred_check_branch
        %180 = sbr.rel (%p178) target = $region36
      $region35: #{pointnet2_ssg_seg_forward.13} parent=31 // pred_region
        %p181 = scmp.lt.s32.totalorder %s11, 1
        %s182 = scalar_select %p181, %s11, 1
        %s183 = smul.addr %s182, 6
        %s184 = smul.addr %s183, 8
        %s185 = scalar_lea.vmem %s0, %s184
      $region36: #{pointnet2_ssg_seg_forward.13} parent=31 // pred_fallthru
        _
    $region32: #{pointnet2_ssg_seg_forward.13} parent=5 // pred_fallthru
      _
    %p186 = scmp.le.s32.totalorder 1, %s11
    %p187 = scmp.lt.s32.totalorder %s11, 3
    %p188 = pnand %p186, %p187
    %p189 = pneg %p188
    // Predicated region
    $region37: #{pointnet2_ssg_seg_forward.13} parent=5 // pred_check
      _
    $region38: #{pointnet2_ssg_seg_forward.13} parent=5 // pred_check_branch
      %191 = sbr.rel (%p188) target = $region40
    $region39: #{pointnet2_ssg_seg_forward.13} parent=5 // pred_region
      %s192 = ssub.s32 %s11, 1
      %p193 = scmp.lt.s32.totalorder %s16, 1
      %s194 = scalar_select %p193, %s16, 1
      %s195 = smul.addr %s194, 6
      %s196 = smul.addr %s195, 8
      %s197 = scalar_lea.vmem %s0, %s196
      %p198 = pneg %p37
      %p199 = pneg %p34
      %p200 = pneg %p58
      %p201 = pneg %p55
      %p202 = pneg %p79
      %p203 = pneg %p76
      %p204 = pneg %p100
      %p205 = pneg %p97
      %p206 = pneg %p121
      %p207 = pneg %p118
      %p208 = pneg %p147
      %p209 = pneg %p144
      %p210 = scmp.lt.s32.totalorder %s16, 1
      %s211 = scalar_select %p210, %s16, 1
      %s212 = smul.addr %s211, 2
      %s213 = smul.addr %s212, 8
      %s214 = scalar_lea.vmem %s5, %s213
      %p215 = scmp.lt.s32.totalorder %s16, 1
      %s216 = scalar_select %p215, %s16, 1
      %s217 = smul.addr %s216, 6
      %s218 = smul.addr %s217, 8
      %s219 = scalar_lea.vmem %s0, %s218
      %p220 = scmp.lt.s32.totalorder %s16, 1
      %s221 = scalar_select %p220, %s16, 1
      %s222 = smul.addr %s221, 2
      %s223 = smul.addr %s222, 8
      %s224 = scalar_lea.vmem %s5, %s223
      %v225 = vld [vmem:[%s219] sm:$0xff]
      %v226 = vld [vmem:[%s219 + $0x8] sm:$0xff]
      %v227 = vld [vmem:[%s219 + $0x10] sm:$0xff]
      %v228 = vld [vmem:[%s219 + $0x18] sm:$0xff]
      %v229 = vld [vmem:[%s219 + $0x20] sm:$0xff]
      %v230 = vld [vmem:[%s219 + $0x28] sm:$0xff]
      %v231 = vld [vmem:[%s1] sm:$0xff]
      %v232 = vld [vmem:[%s1 + $0x8] sm:$0xff]
      %v233 = vld [vmem:[%s1 + $0x10] sm:$0xff]
      %v234 = vld [vmem:[%s1 + $0x18] sm:$0xff]
      %v235 = vld [vmem:[%s1 + $0x20] sm:$0xff]
      %v236 = vld [vmem:[%s1 + $0x28] sm:$0xff]
      %v237 = vld [vmem:[%s1 + $0x30] sm:$0xff]
      %v238 = vld [vmem:[%s1 + $0x38] sm:$0xff]
      %v239 = vld [vmem:[%s1 + $0x40] sm:$0xff]
      %v240 = vld [vmem:[%s1 + $0x48] sm:$0xff]
      %v241 = vld [vmem:[%s1 + $0x50] sm:$0xff]
      %v242 = vld [vmem:[%s1 + $0x58] sm:$0xff]
      %v243 = vld [vmem:[%s1 + $0x60] sm:$0xff]
      %v244 = vld [vmem:[%s1 + $0x68] sm:$0xff]
      %v245 = vld [vmem:[%s1 + $0x70] sm:$0xff]
      %v246 = vld [vmem:[%s1 + $0x78] sm:$0xff]
      %v247 = vld [vmem:[%s1 + $0x80] sm:$0xff]
      %v248 = vld [vmem:[%s1 + $0x88] sm:$0xff]
      %v249 = vld [vmem:[%s1 + $0x90] sm:$0xff]
      %v250 = vld [vmem:[%s1 + $0x98] sm:$0xff]
      %v251 = vld [vmem:[%s1 + $0xa0] sm:$0xff]
      %v252 = vld [vmem:[%s1 + $0xa8] sm:$0xff]
      %v253 = vld [vmem:[%s1 + $0xb0] sm:$0xff]
      %v254 = vld [vmem:[%s1 + $0xb8] sm:$0xff]
      %v255 = vld [vmem:[%s1 + $0xc0] sm:$0xff]
      %v256 = vld [vmem:[%s1 + $0xc8] sm:$0xff]
      %v257 = vld [vmem:[%s1 + $0xd0] sm:$0xff]
      %v258 = vld [vmem:[%s1 + $0xd8] sm:$0xff]
      %v259 = vld [vmem:[%s1 + $0xe0] sm:$0xff]
      %v260 = vld [vmem:[%s1 + $0xe8] sm:$0xff]
      %v261 = vld [vmem:[%s1 + $0xf0] sm:$0xff]
      %v262 = vld [vmem:[%s1 + $0xf8] sm:$0xff]
      %v263 = vld [vmem:[%s1 + $0x100] sm:$0xff]
      %v264 = vld [vmem:[%s1 + $0x108] sm:$0xff]
      %v265 = vld [vmem:[%s1 + $0x110] sm:$0xff]
      %v266 = vld [vmem:[%s1 + $0x118] sm:$0xff]
      %v267 = vld [vmem:[%s1 + $0x120] sm:$0xff]
      %v268 = vld [vmem:[%s1 + $0x128] sm:$0xff]
      %v269 = vld [vmem:[%s1 + $0x130] sm:$0xff]
      %v270 = vld [vmem:[%s1 + $0x138] sm:$0xff]
      %v271 = vld [vmem:[%s1 + $0x140] sm:$0xff]
      %v272 = vld [vmem:[%s1 + $0x148] sm:$0xff]
      %v273 = vld [vmem:[%s1 + $0x150] sm:$0xff]
      %v274 = vld [vmem:[%s1 + $0x158] sm:$0xff]
      %v275 = vld [vmem:[%s1 + $0x160] sm:$0xff]
      %v276 = vld [vmem:[%s1 + $0x168] sm:$0xff]
      %v277 = vld [vmem:[%s1 + $0x170] sm:$0xff]
      %v278 = vld [vmem:[%s1 + $0x178] sm:$0xff]
      %v279 = vld [vmem:[%s1 + $0x180] sm:$0xff]
      %v280 = vld [vmem:[%s1 + $0x188] sm:$0xff]
      %v281 = vld [vmem:[%s1 + $0x190] sm:$0xff]
      %v282 = vld [vmem:[%s1 + $0x198] sm:$0xff]
      %v283 = vld [vmem:[%s1 + $0x1a0] sm:$0xff]
      %v284 = vld [vmem:[%s1 + $0x1a8] sm:$0xff]
      %v285 = vld [vmem:[%s1 + $0x1b0] sm:$0xff]
      %v286 = vld [vmem:[%s1 + $0x1b8] sm:$0xff]
      %v287 = vld [vmem:[%s1 + $0x1c0] sm:$0xff]
      %v288 = vld [vmem:[%s1 + $0x1c8] sm:$0xff]
      %v289 = vld [vmem:[%s1 + $0x1d0] sm:$0xff]
      %v290 = vld [vmem:[%s1 + $0x1d8] sm:$0xff]
      %v291 = vld [vmem:[%s1 + $0x1e0] sm:$0xff]
      %v292 = vld [vmem:[%s1 + $0x1e8] sm:$0xff]
      %v293 = vld [vmem:[%s1 + $0x1f0] sm:$0xff]
      %v294 = vld [vmem:[%s1 + $0x1f8] sm:$0xff]
      %v295 = vld [vmem:[%s1 + $0x200] sm:$0xff]
      %v296 = vld [vmem:[%s1 + $0x208] sm:$0xff]
      %v297 = vld [vmem:[%s1 + $0x210] sm:$0xff]
      %v298 = vld [vmem:[%s1 + $0x218] sm:$0xff]
      %v299 = vld [vmem:[%s1 + $0x220] sm:$0xff]
      %v300 = vld [vmem:[%s1 + $0x228] sm:$0xff]
      %v301 = vld [vmem:[%s1 + $0x230] sm:$0xff]
      %v302 = vld [vmem:[%s1 + $0x238] sm:$0xff]
      %v303 = vld [vmem:[%s1 + $0x240] sm:$0xff]
      %v304 = vld [vmem:[%s1 + $0x248] sm:$0xff]
      %v305 = vld [vmem:[%s1 + $0x250] sm:$0xff]
      %v306 = vld [vmem:[%s1 + $0x258] sm:$0xff]
      %v307 = vld [vmem:[%s1 + $0x260] sm:$0xff]
      %v308 = vld [vmem:[%s1 + $0x268] sm:$0xff]
      %v309 = vld [vmem:[%s1 + $0x270] sm:$0xff]
      %v310 = vld [vmem:[%s1 + $0x278] sm:$0xff]
      %v311 = vld [vmem:[%s1 + $0x280] sm:$0xff]
      %v312 = vld [vmem:[%s1 + $0x288] sm:$0xff]
      %v313 = vld [vmem:[%s1 + $0x290] sm:$0xff]
      %v314 = vld [vmem:[%s1 + $0x298] sm:$0xff]
      %v315 = vld [vmem:[%s1 + $0x2a0] sm:$0xff]
      %v316 = vld [vmem:[%s1 + $0x2a8] sm:$0xff]
      %v317 = vld [vmem:[%s1 + $0x2b0] sm:$0xff]
      %v318 = vld [vmem:[%s1 + $0x2b8] sm:$0xff]
      %v319 = vld [vmem:[%s1 + $0x2c0] sm:$0xff]
      %v320 = vld [vmem:[%s1 + $0x2c8] sm:$0xff]
      %v321 = vld [vmem:[%s1 + $0x2d0] sm:$0xff]
      %v322 = vld [vmem:[%s1 + $0x2d8] sm:$0xff]
      %v323 = vld [vmem:[%s1 + $0x2e0] sm:$0xff]
      %v324 = vld [vmem:[%s1 + $0x2e8] sm:$0xff]
      %v325 = vld [vmem:[%s1 + $0x2f0] sm:$0xff]
      %v326 = vld [vmem:[%s1 + $0x2f8] sm:$0xff]
      %v327 = vld [vmem:[%s1 + $0x300] sm:$0xff]
      %v328 = vld [vmem:[%s1 + $0x308] sm:$0xff]
      %v329 = vld [vmem:[%s1 + $0x310] sm:$0xff]
      %v330 = vld [vmem:[%s1 + $0x318] sm:$0xff]
      %v331 = vld [vmem:[%s1 + $0x320] sm:$0xff]
      %v332 = vld [vmem:[%s1 + $0x328] sm:$0xff]
      %v333 = vld [vmem:[%s1 + $0x330] sm:$0xff]
      %v334 = vld [vmem:[%s1 + $0x338] sm:$0xff]
      %v335 = vld [vmem:[%s1 + $0x340] sm:$0xff]
      %v336 = vld [vmem:[%s1 + $0x348] sm:$0xff]
      %v337 = vld [vmem:[%s1 + $0x350] sm:$0xff]
      %v338 = vld [vmem:[%s1 + $0x358] sm:$0xff]
      %v339 = vld [vmem:[%s1 + $0x360] sm:$0xff]
      %v340 = vld [vmem:[%s1 + $0x368] sm:$0xff]
      %v341 = vld [vmem:[%s1 + $0x370] sm:$0xff]
      %v342 = vld [vmem:[%s1 + $0x378] sm:$0xff]
      %v343 = vld [vmem:[%s1 + $0x380] sm:$0xff]
      %v344 = vld [vmem:[%s1 + $0x388] sm:$0xff]
      %v345 = vld [vmem:[%s1 + $0x390] sm:$0xff]
      %v346 = vld [vmem:[%s1 + $0x398] sm:$0xff]
      %v347 = vld [vmem:[%s1 + $0x3a0] sm:$0xff]
      %v348 = vld [vmem:[%s1 + $0x3a8] sm:$0xff]
      %v349 = vld [vmem:[%s1 + $0x3b0] sm:$0xff]
      %v350 = vld [vmem:[%s1 + $0x3b8] sm:$0xff]
      %v351 = vld [vmem:[%s1 + $0x3c0] sm:$0xff]
      %v352 = vld [vmem:[%s1 + $0x3c8] sm:$0xff]
      %v353 = vld [vmem:[%s1 + $0x3d0] sm:$0xff]
      %v354 = vld [vmem:[%s1 + $0x3d8] sm:$0xff]
      %v355 = vld [vmem:[%s1 + $0x3e0] sm:$0xff]
      %v356 = vld [vmem:[%s1 + $0x3e8] sm:$0xff]
      %v357 = vld [vmem:[%s1 + $0x3f0] sm:$0xff]
      %v358 = vld [vmem:[%s1 + $0x3f8] sm:$0xff]
      %v359 = vld [vmem:[%s1 + $0x400] sm:$0xff]
      %v360 = vld [vmem:[%s1 + $0x408] sm:$0xff]
      %v361 = vld [vmem:[%s1 + $0x410] sm:$0xff]
      %v362 = vld [vmem:[%s1 + $0x418] sm:$0xff]
      %v363 = vld [vmem:[%s1 + $0x420] sm:$0xff]
      %v364 = vld [vmem:[%s1 + $0x428] sm:$0xff]
      %v365 = vld [vmem:[%s1 + $0x430] sm:$0xff]
      %v366 = vld [vmem:[%s1 + $0x438] sm:$0xff]
      %v367 = vld [vmem:[%s1 + $0x440] sm:$0xff]
      %v368 = vld [vmem:[%s1 + $0x448] sm:$0xff]
      %v369 = vld [vmem:[%s1 + $0x450] sm:$0xff]
      %v370 = vld [vmem:[%s1 + $0x458] sm:$0xff]
      %v371 = vld [vmem:[%s1 + $0x460] sm:$0xff]
      %v372 = vld [vmem:[%s1 + $0x468] sm:$0xff]
      %v373 = vld [vmem:[%s1 + $0x470] sm:$0xff]
      %v374 = vld [vmem:[%s1 + $0x478] sm:$0xff]
      %v375 = vld [vmem:[%s1 + $0x480] sm:$0xff]
      %v376 = vld [vmem:[%s1 + $0x488] sm:$0xff]
      %v377 = vld [vmem:[%s1 + $0x490] sm:$0xff]
      %v378 = vld [vmem:[%s1 + $0x498] sm:$0xff]
      %v379 = vld [vmem:[%s1 + $0x4a0] sm:$0xff]
      %v380 = vld [vmem:[%s1 + $0x4a8] sm:$0xff]
      %v381 = vld [vmem:[%s1 + $0x4b0] sm:$0xff]
      %v382 = vld [vmem:[%s1 + $0x4b8] sm:$0xff]
      %v383 = vld [vmem:[%s1 + $0x4c0] sm:$0xff]
      %v384 = vld [vmem:[%s1 + $0x4c8] sm:$0xff]
      %v385 = vld [vmem:[%s1 + $0x4d0] sm:$0xff]
      %v386 = vld [vmem:[%s1 + $0x4d8] sm:$0xff]
      %v387 = vld [vmem:[%s1 + $0x4e0] sm:$0xff]
      %v388 = vld [vmem:[%s1 + $0x4e8] sm:$0xff]
      %v389 = vld [vmem:[%s1 + $0x4f0] sm:$0xff]
      %v390 = vld [vmem:[%s1 + $0x4f8] sm:$0xff]
      %v391 = vld [vmem:[%s1 + $0x500] sm:$0xff]
      %v392 = vld [vmem:[%s1 + $0x508] sm:$0xff]
      %v393 = vld [vmem:[%s1 + $0x510] sm:$0xff]
      %v394 = vld [vmem:[%s1 + $0x518] sm:$0xff]
      %v395 = vld [vmem:[%s1 + $0x520] sm:$0xff]
      %v396 = vld [vmem:[%s1 + $0x528] sm:$0xff]
      %v397 = vld [vmem:[%s1 + $0x530] sm:$0xff]
      %v398 = vld [vmem:[%s1 + $0x538] sm:$0xff]
      %v399 = vld [vmem:[%s1 + $0x540] sm:$0xff]
      %v400 = vld [vmem:[%s1 + $0x548] sm:$0xff]
      %v401 = vld [vmem:[%s1 + $0x550] sm:$0xff]
      %v402 = vld [vmem:[%s1 + $0x558] sm:$0xff]
      %v403 = vld [vmem:[%s1 + $0x560] sm:$0xff]
      %v404 = vld [vmem:[%s1 + $0x568] sm:$0xff]
      %v405 = vld [vmem:[%s1 + $0x570] sm:$0xff]
      %v406 = vld [vmem:[%s1 + $0x578] sm:$0xff]
      %v407 = vld [vmem:[%s1 + $0x580] sm:$0xff]
      %v408 = vld [vmem:[%s1 + $0x588] sm:$0xff]
      %v409 = vld [vmem:[%s1 + $0x590] sm:$0xff]
      %v410 = vld [vmem:[%s1 + $0x598] sm:$0xff]
      %v411 = vld [vmem:[%s1 + $0x5a0] sm:$0xff]
      %v412 = vld [vmem:[%s1 + $0x5a8] sm:$0xff]
      %v413 = vld [vmem:[%s1 + $0x5b0] sm:$0xff]
      %v414 = vld [vmem:[%s1 + $0x5b8] sm:$0xff]
      %v415 = vld [vmem:[%s1 + $0x5c0] sm:$0xff]
      %v416 = vld [vmem:[%s1 + $0x5c8] sm:$0xff]
      %v417 = vld [vmem:[%s1 + $0x5d0] sm:$0xff]
      %v418 = vld [vmem:[%s1 + $0x5d8] sm:$0xff]
      %v419 = vld [vmem:[%s1 + $0x5e0] sm:$0xff]
      %v420 = vld [vmem:[%s1 + $0x5e8] sm:$0xff]
      %v421 = vld [vmem:[%s1 + $0x5f0] sm:$0xff]
      %v422 = vld [vmem:[%s1 + $0x5f8] sm:$0xff]
      %v423 = vld [vmem:[%s3] sm:$0x3]
      %v425 = vperm.slane %v423, 0
      %v426 = vperm.slane %v423, 1
      %429 = vmatpush.msra.mxu0 %v261
      %430 = vmatpush.msra.mxu0 %v259
      %431 = vmatpush.msra.mxu0 %v257
      %432 = vmatpush.msra.mxu0 %v255
      %433 = vmatpush.msra.mxu0 %v253
      %434 = vmatpush.msra.mxu0 %v251
      %435 = vmatpush.msra.mxu0 %v249
      %436 = vmatpush.msra.mxu0 %v247
      %437 = vmatpush.msra.mxu0 %v245
      %438 = vmatpush.msra.mxu0 %v243
      %439 = vmatpush.msra.mxu0 %v241
      %440 = vmatpush.msra.mxu0 %v239
      %441 = vmatpush.msra.mxu0 %v237
      %442 = vmatpush.msra.mxu0 %v235
      %443 = vmatpush.msra.mxu0 %v233
      %444 = vmatpush.msra.mxu0 %v231
      %445 = vmatmul.f32.gmra.mxu0 %v225
      %v446 = vpop.f32.mrf.mxu0
      %v447 = vadd.f32 %v425, %v446
      %448 = vdwg.mxu0
      %449 = vmatpush.msra.mxu0 %v293
      %450 = vmatpush.msra.mxu0 %v291
      %451 = vmatpush.msra.mxu0 %v289
      %452 = vmatpush.msra.mxu0 %v287
      %453 = vmatpush.msra.mxu0 %v285
      %454 = vmatpush.msra.mxu0 %v283
      %455 = vmatpush.msra.mxu0 %v281
      %456 = vmatpush.msra.mxu0 %v279
      %457 = vmatpush.msra.mxu0 %v277
      %458 = vmatpush.msra.mxu0 %v275
      %459 = vmatpush.msra.mxu0 %v273
      %460 = vmatpush.msra.mxu0 %v271
      %461 = vmatpush.msra.mxu0 %v269
      %462 = vmatpush.msra.mxu0 %v267
      %463 = vmatpush.msra.mxu0 %v265
      %464 = vmatpush.msra.mxu0 %v263
      %465 = vmatmul.f32.gmra.mxu0 %v226
      %v466 = vpop.f32.mrf.mxu0
      %v467 = vadd.f32 %v447, %v466
      %468 = vdwg.mxu0
      %469 = vmatpush.msra.mxu0 %v325
      %470 = vmatpush.msra.mxu0 %v323
      %471 = vmatpush.msra.mxu0 %v321
      %472 = vmatpush.msra.mxu0 %v319
      %473 = vmatpush.msra.mxu0 %v317
      %474 = vmatpush.msra.mxu0 %v315
      %475 = vmatpush.msra.mxu0 %v313
      %476 = vmatpush.msra.mxu0 %v311
      %477 = vmatpush.msra.mxu0 %v309
      %478 = vmatpush.msra.mxu0 %v307
      %479 = vmatpush.msra.mxu0 %v305
      %480 = vmatpush.msra.mxu0 %v303
      %481 = vmatpush.msra.mxu0 %v301
      %482 = vmatpush.msra.mxu0 %v299
      %483 = vmatpush.msra.mxu0 %v297
      %484 = vmatpush.msra.mxu0 %v295
      %485 = vmatmul.f32.gmra.mxu0 %v227
      %v486 = vpop.f32.mrf.mxu0
      %v487 = vadd.f32 %v467, %v486
      %488 = vdwg.mxu0
      %489 = vmatpush.msra.mxu0 %v357
      %490 = vmatpush.msra.mxu0 %v355
      %491 = vmatpush.msra.mxu0 %v353
      %492 = vmatpush.msra.mxu0 %v351
      %493 = vmatpush.msra.mxu0 %v349
      %494 = vmatpush.msra.mxu0 %v347
      %495 = vmatpush.msra.mxu0 %v345
      %496 = vmatpush.msra.mxu0 %v343
      %497 = vmatpush.msra.mxu0 %v341
      %498 = vmatpush.msra.mxu0 %v339
      %499 = vmatpush.msra.mxu0 %v337
      %500 = vmatpush.msra.mxu0 %v335
      %501 = vmatpush.msra.mxu0 %v333
      %502 = vmatpush.msra.mxu0 %v331
      %503 = vmatpush.msra.mxu0 %v329
      %504 = vmatpush.msra.mxu0 %v327
      %505 = vmatmul.f32.gmra.mxu0 %v228
      %v506 = vpop.f32.mrf.mxu0
      %v507 = vadd.f32 %v487, %v506
      %508 = vdwg.mxu0
      %509 = vmatpush.msra.mxu0 %v389
      %510 = vmatpush.msra.mxu0 %v387
      %511 = vmatpush.msra.mxu0 %v385
      %512 = vmatpush.msra.mxu0 %v383
      %513 = vmatpush.msra.mxu0 %v381
      %514 = vmatpush.msra.mxu0 %v379
      %515 = vmatpush.msra.mxu0 %v377
      %516 = vmatpush.msra.mxu0 %v375
      %517 = vmatpush.msra.mxu0 %v373
      %518 = vmatpush.msra.mxu0 %v371
      %519 = vmatpush.msra.mxu0 %v369
      %520 = vmatpush.msra.mxu0 %v367
      %521 = vmatpush.msra.mxu0 %v365
      %522 = vmatpush.msra.mxu0 %v363
      %523 = vmatpush.msra.mxu0 %v361
      %524 = vmatpush.msra.mxu0 %v359
      %525 = vmatmul.f32.gmra.mxu0 %v229
      %v526 = vpop.f32.mrf.mxu0
      %v527 = vadd.f32 %v507, %v526
      %528 = vdwg.mxu0
      %529 = vmatpush.msra.mxu0 %v421
      %530 = vmatpush.msra.mxu0 %v419
      %531 = vmatpush.msra.mxu0 %v417
      %532 = vmatpush.msra.mxu0 %v415
      %533 = vmatpush.msra.mxu0 %v413
      %534 = vmatpush.msra.mxu0 %v411
      %535 = vmatpush.msra.mxu0 %v409
      %536 = vmatpush.msra.mxu0 %v407
      %537 = vmatpush.msra.mxu0 %v405
      %538 = vmatpush.msra.mxu0 %v403
      %539 = vmatpush.msra.mxu0 %v401
      %540 = vmatpush.msra.mxu0 %v399
      %541 = vmatpush.msra.mxu0 %v397
      %542 = vmatpush.msra.mxu0 %v395
      %543 = vmatpush.msra.mxu0 %v393
      %544 = vmatpush.msra.mxu0 %v391
      %545 = vmatmul.f32.gmra.mxu0 %v230
      %v546 = vpop.f32.mrf.mxu0
      %v547 = vadd.f32 %v527, %v546
      %548 = vdwg.mxu0
      %549 = vmatpush.msra.mxu0 %v262
      %550 = vmatpush.msra.mxu0 %v260
      %551 = vmatpush.msra.mxu0 %v258
      %552 = vmatpush.msra.mxu0 %v256
      %553 = vmatpush.msra.mxu0 %v254
      %554 = vmatpush.msra.mxu0 %v252
      %555 = vmatpush.msra.mxu0 %v250
      %556 = vmatpush.msra.mxu0 %v248
      %557 = vmatpush.msra.mxu0 %v246
      %558 = vmatpush.msra.mxu0 %v244
      %559 = vmatpush.msra.mxu0 %v242
      %560 = vmatpush.msra.mxu0 %v240
      %561 = vmatpush.msra.mxu0 %v238
      %562 = vmatpush.msra.mxu0 %v236
      %563 = vmatpush.msra.mxu0 %v234
      %564 = vmatpush.msra.mxu0 %v232
      %565 = vmatmul.f32.gmra.mxu0 %v225
      %v566 = vpop.f32.mrf.mxu0
      %v567 = vadd.f32 %v426, %v566
      %568 = vdwg.mxu0
      %569 = vmatpush.msra.mxu0 %v294
      %570 = vmatpush.msra.mxu0 %v292
      %571 = vmatpush.msra.mxu0 %v290
      %572 = vmatpush.msra.mxu0 %v288
      %573 = vmatpush.msra.mxu0 %v286
      %574 = vmatpush.msra.mxu0 %v284
      %575 = vmatpush.msra.mxu0 %v282
      %576 = vmatpush.msra.mxu0 %v280
      %577 = vmatpush.msra.mxu0 %v278
      %578 = vmatpush.msra.mxu0 %v276
      %579 = vmatpush.msra.mxu0 %v274
      %580 = vmatpush.msra.mxu0 %v272
      %581 = vmatpush.msra.mxu0 %v270
      %582 = vmatpush.msra.mxu0 %v268
      %583 = vmatpush.msra.mxu0 %v266
      %584 = vmatpush.msra.mxu0 %v264
      %585 = vmatmul.f32.gmra.mxu0 %v226
      %v586 = vpop.f32.mrf.mxu0
      %v587 = vadd.f32 %v567, %v586
      %588 = vdwg.mxu0
      %589 = vmatpush.msra.mxu0 %v326
      %590 = vmatpush.msra.mxu0 %v324
      %591 = vmatpush.msra.mxu0 %v322
      %592 = vmatpush.msra.mxu0 %v320
      %593 = vmatpush.msra.mxu0 %v318
      %594 = vmatpush.msra.mxu0 %v316
      %595 = vmatpush.msra.mxu0 %v314
      %596 = vmatpush.msra.mxu0 %v312
      %597 = vmatpush.msra.mxu0 %v310
      %598 = vmatpush.msra.mxu0 %v308
      %599 = vmatpush.msra.mxu0 %v306
      %600 = vmatpush.msra.mxu0 %v304
      %601 = vmatpush.msra.mxu0 %v302
      %602 = vmatpush.msra.mxu0 %v300
      %603 = vmatpush.msra.mxu0 %v298
      %604 = vmatpush.msra.mxu0 %v296
      %605 = vmatmul.f32.gmra.mxu0 %v227
      %v606 = vpop.f32.mrf.mxu0
      %v607 = vadd.f32 %v587, %v606
      %608 = vdwg.mxu0
      %609 = vmatpush.msra.mxu0 %v358
      %610 = vmatpush.msra.mxu0 %v356
      %611 = vmatpush.msra.mxu0 %v354
      %612 = vmatpush.msra.mxu0 %v352
      %613 = vmatpush.msra.mxu0 %v350
      %614 = vmatpush.msra.mxu0 %v348
      %615 = vmatpush.msra.mxu0 %v346
      %616 = vmatpush.msra.mxu0 %v344
      %617 = vmatpush.msra.mxu0 %v342
      %618 = vmatpush.msra.mxu0 %v340
      %619 = vmatpush.msra.mxu0 %v338
      %620 = vmatpush.msra.mxu0 %v336
      %621 = vmatpush.msra.mxu0 %v334
      %622 = vmatpush.msra.mxu0 %v332
      %623 = vmatpush.msra.mxu0 %v330
      %624 = vmatpush.msra.mxu0 %v328
      %625 = vmatmul.f32.gmra.mxu0 %v228
      %v626 = vpop.f32.mrf.mxu0
      %v627 = vadd.f32 %v607, %v626
      %628 = vdwg.mxu0
      %629 = vmatpush.msra.mxu0 %v390
      %630 = vmatpush.msra.mxu0 %v388
      %631 = vmatpush.msra.mxu0 %v386
      %632 = vmatpush.msra.mxu0 %v384
      %633 = vmatpush.msra.mxu0 %v382
      %634 = vmatpush.msra.mxu0 %v380
      %635 = vmatpush.msra.mxu0 %v378
      %636 = vmatpush.msra.mxu0 %v376
      %637 = vmatpush.msra.mxu0 %v374
      %638 = vmatpush.msra.mxu0 %v372
      %639 = vmatpush.msra.mxu0 %v370
      %640 = vmatpush.msra.mxu0 %v368
      %641 = vmatpush.msra.mxu0 %v366
      %642 = vmatpush.msra.mxu0 %v364
      %643 = vmatpush.msra.mxu0 %v362
      %644 = vmatpush.msra.mxu0 %v360
      %645 = vmatmul.f32.gmra.mxu0 %v229
      %v646 = vpop.f32.mrf.mxu0
      %v647 = vadd.f32 %v627, %v646
      %648 = vdwg.mxu0
      %649 = vmatpush.msra.mxu0 %v422
      %650 = vmatpush.msra.mxu0 %v420
      %651 = vmatpush.msra.mxu0 %v418
      %652 = vmatpush.msra.mxu0 %v416
      %653 = vmatpush.msra.mxu0 %v414
      %654 = vmatpush.msra.mxu0 %v412
      %655 = vmatpush.msra.mxu0 %v410
      %656 = vmatpush.msra.mxu0 %v408
      %657 = vmatpush.msra.mxu0 %v406
      %658 = vmatpush.msra.mxu0 %v404
      %659 = vmatpush.msra.mxu0 %v402
      %660 = vmatpush.msra.mxu0 %v400
      %661 = vmatpush.msra.mxu0 %v398
      %662 = vmatpush.msra.mxu0 %v396
      %663 = vmatpush.msra.mxu0 %v394
      %664 = vmatpush.msra.mxu0 %v392
      %665 = vmatmul.f32.gmra.mxu0 %v230
      %v666 = vpop.f32.mrf.mxu0
      %v667 = vadd.f32 %v647, %v666
      %668 = vdwg.mxu0
      %v669 = vmax.f32 %v547, 0.0
      %v670 = vmax.f32 %v667, 0.0
      %v671 = vld [vmem:[%s2] sm:$0xff]
      %v672 = vld [vmem:[%s2 + $0x8] sm:$0xff]
      %v673 = vld [vmem:[%s2 + $0x10] sm:$0xff]
      %v674 = vld [vmem:[%s2 + $0x18] sm:$0xff]
      %v675 = vld [vmem:[%s2 + $0x20] sm:$0xff]
      %v676 = vld [vmem:[%s2 + $0x28] sm:$0xff]
      %v677 = vld [vmem:[%s2 + $0x30] sm:$0xff]
      %v678 = vld [vmem:[%s2 + $0x38] sm:$0xff]
      %v679 = vld [vmem:[%s2 + $0x40] sm:$0xff]
      %v680 = vld [vmem:[%s2 + $0x48] sm:$0xff]
      %v681 = vld [vmem:[%s2 + $0x50] sm:$0xff]
      %v682 = vld [vmem:[%s2 + $0x58] sm:$0xff]
      %v683 = vld [vmem:[%s2 + $0x60] sm:$0xff]
      %v684 = vld [vmem:[%s2 + $0x68] sm:$0xff]
      %v685 = vld [vmem:[%s2 + $0x70] sm:$0xff]
      %v686 = vld [vmem:[%s2 + $0x78] sm:$0xff]
      %v687 = vld [vmem:[%s2 + $0x80] sm:$0xff]
      %v688 = vld [vmem:[%s2 + $0x88] sm:$0xff]
      %v689 = vld [vmem:[%s2 + $0x90] sm:$0xff]
      %v690 = vld [vmem:[%s2 + $0x98] sm:$0xff]
      %v691 = vld [vmem:[%s2 + $0xa0] sm:$0xff]
      %v692 = vld [vmem:[%s2 + $0xa8] sm:$0xff]
      %v693 = vld [vmem:[%s2 + $0xb0] sm:$0xff]
      %v694 = vld [vmem:[%s2 + $0xb8] sm:$0xff]
      %v695 = vld [vmem:[%s2 + $0xc0] sm:$0xff]
      %v696 = vld [vmem:[%s2 + $0xc8] sm:$0xff]
      %v697 = vld [vmem:[%s2 + $0xd0] sm:$0xff]
      %v698 = vld [vmem:[%s2 + $0xd8] sm:$0xff]
      %v699 = vld [vmem:[%s2 + $0xe0] sm:$0xff]
      %v700 = vld [vmem:[%s2 + $0xe8] sm:$0xff]
      %v701 = vld [vmem:[%s2 + $0xf0] sm:$0xff]
      %v702 = vld [vmem:[%s2 + $0xf8] sm:$0xff]
      %v703 = vld [vmem:[%s2 + $0x100] sm:$0xff]
      %v704 = vld [vmem:[%s2 + $0x108] sm:$0xff]
      %v705 = vld [vmem:[%s2 + $0x110] sm:$0xff]
      %v706 = vld [vmem:[%s2 + $0x118] sm:$0xff]
      %v707 = vld [vmem:[%s2 + $0x120] sm:$0xff]
      %v708 = vld [vmem:[%s2 + $0x128] sm:$0xff]
      %v709 = vld [vmem:[%s2 + $0x130] sm:$0xff]
      %v710 = vld [vmem:[%s2 + $0x138] sm:$0xff]
      %v711 = vld [vmem:[%s2 + $0x140] sm:$0xff]
      %v712 = vld [vmem:[%s2 + $0x148] sm:$0xff]
      %v713 = vld [vmem:[%s2 + $0x150] sm:$0xff]
      %v714 = vld [vmem:[%s2 + $0x158] sm:$0xff]
      %v715 = vld [vmem:[%s2 + $0x160] sm:$0xff]
      %v716 = vld [vmem:[%s2 + $0x168] sm:$0xff]
      %v717 = vld [vmem:[%s2 + $0x170] sm:$0xff]
      %v718 = vld [vmem:[%s2 + $0x178] sm:$0xff]
      %v719 = vld [vmem:[%s2 + $0x180] sm:$0xff]
      %v720 = vld [vmem:[%s2 + $0x188] sm:$0xff]
      %v721 = vld [vmem:[%s2 + $0x190] sm:$0xff]
      %v722 = vld [vmem:[%s2 + $0x198] sm:$0xff]
      %v723 = vld [vmem:[%s2 + $0x1a0] sm:$0xff]
      %v724 = vld [vmem:[%s2 + $0x1a8] sm:$0xff]
      %v725 = vld [vmem:[%s2 + $0x1b0] sm:$0xff]
      %v726 = vld [vmem:[%s2 + $0x1b8] sm:$0xff]
      %v727 = vld [vmem:[%s2 + $0x1c0] sm:$0xff]
      %v728 = vld [vmem:[%s2 + $0x1c8] sm:$0xff]
      %v729 = vld [vmem:[%s2 + $0x1d0] sm:$0xff]
      %v730 = vld [vmem:[%s2 + $0x1d8] sm:$0xff]
      %v731 = vld [vmem:[%s2 + $0x1e0] sm:$0xff]
      %v732 = vld [vmem:[%s2 + $0x1e8] sm:$0xff]
      %v733 = vld [vmem:[%s2 + $0x1f0] sm:$0xff]
      %v734 = vld [vmem:[%s2 + $0x1f8] sm:$0xff]
      %v735 = vld [vmem:[%s4] sm:$0x3]
      %v737 = vperm.slane %v735, 0
      %v738 = vperm.slane %v735, 1
      %741 = vmatpush.msra.mxu0 %v701
      %742 = vmatpush.msra.mxu0 %v699
      %743 = vmatpush.msra.mxu0 %v697
      %744 = vmatpush.msra.mxu0 %v695
      %745 = vmatpush.msra.mxu0 %v693
      %746 = vmatpush.msra.mxu0 %v691
      %747 = vmatpush.msra.mxu0 %v689
      %748 = vmatpush.msra.mxu0 %v687
      %749 = vmatpush.msra.mxu0 %v685
      %750 = vmatpush.msra.mxu0 %v683
      %751 = vmatpush.msra.mxu0 %v681
      %752 = vmatpush.msra.mxu0 %v679
      %753 = vmatpush.msra.mxu0 %v677
      %754 = vmatpush.msra.mxu0 %v675
      %755 = vmatpush.msra.mxu0 %v673
      %756 = vmatpush.msra.mxu0 %v671
      %757 = vmatmul.f32.gmra.mxu0 %v669
      %v758 = vpop.f32.mrf.mxu0
      %v759 = vadd.f32 %v737, %v758
      %760 = vdwg.mxu0
      %761 = vmatpush.msra.mxu0 %v733
      %762 = vmatpush.msra.mxu0 %v731
      %763 = vmatpush.msra.mxu0 %v729
      %764 = vmatpush.msra.mxu0 %v727
      %765 = vmatpush.msra.mxu0 %v725
      %766 = vmatpush.msra.mxu0 %v723
      %767 = vmatpush.msra.mxu0 %v721
      %768 = vmatpush.msra.mxu0 %v719
      %769 = vmatpush.msra.mxu0 %v717
      %770 = vmatpush.msra.mxu0 %v715
      %771 = vmatpush.msra.mxu0 %v713
      %772 = vmatpush.msra.mxu0 %v711
      %773 = vmatpush.msra.mxu0 %v709
      %774 = vmatpush.msra.mxu0 %v707
      %775 = vmatpush.msra.mxu0 %v705
      %776 = vmatpush.msra.mxu0 %v703
      %777 = vmatmul.f32.gmra.mxu0 %v670
      %v778 = vpop.f32.mrf.mxu0
      %v779 = vadd.f32 %v759, %v778
      %780 = vdwg.mxu0
      %781 = vmatpush.msra.mxu0 %v702
      %782 = vmatpush.msra.mxu0 %v700
      %783 = vmatpush.msra.mxu0 %v698
      %784 = vmatpush.msra.mxu0 %v696
      %785 = vmatpush.msra.mxu0 %v694
      %786 = vmatpush.msra.mxu0 %v692
      %787 = vmatpush.msra.mxu0 %v690
      %788 = vmatpush.msra.mxu0 %v688
      %789 = vmatpush.msra.mxu0 %v686
      %790 = vmatpush.msra.mxu0 %v684
      %791 = vmatpush.msra.mxu0 %v682
      %792 = vmatpush.msra.mxu0 %v680
      %793 = vmatpush.msra.mxu0 %v678
      %794 = vmatpush.msra.mxu0 %v676
      %795 = vmatpush.msra.mxu0 %v674
      %796 = vmatpush.msra.mxu0 %v672
      %797 = vmatmul.f32.gmra.mxu0 %v669
      %v798 = vpop.f32.mrf.mxu0
      %v799 = vadd.f32 %v738, %v798
      %800 = vdwg.mxu0
      %801 = vmatpush.msra.mxu0 %v734
      %802 = vmatpush.msra.mxu0 %v732
      %803 = vmatpush.msra.mxu0 %v730
      %804 = vmatpush.msra.mxu0 %v728
      %805 = vmatpush.msra.mxu0 %v726
      %806 = vmatpush.msra.mxu0 %v724
      %807 = vmatpush.msra.mxu0 %v722
      %808 = vmatpush.msra.mxu0 %v720
      %809 = vmatpush.msra.mxu0 %v718
      %810 = vmatpush.msra.mxu0 %v716
      %811 = vmatpush.msra.mxu0 %v714
      %812 = vmatpush.msra.mxu0 %v712
      %813 = vmatpush.msra.mxu0 %v710
      %814 = vmatpush.msra.mxu0 %v708
      %815 = vmatpush.msra.mxu0 %v706
      %816 = vmatpush.msra.mxu0 %v704
      %817 = vmatmul.f32.gmra.mxu0 %v670
      %v818 = vpop.f32.mrf.mxu0
      %v819 = vadd.f32 %v799, %v818
      %820 = vdwg.mxu0
      %v821 = vmax.f32 %v779, 0.0
      %v822 = vmax.f32 %v819, 0.0
      %823 = vst [vmem:[%s224] sm:$0xff] %v821
      %824 = vst [vmem:[%s224 + $0x8] sm:$0xff] %v822
      %p825 = scmp.lt.s32.totalorder %s16, 1
      %s826 = scalar_select %p825, %s16, 1
      %s827 = smul.addr %s826, 2
      %s828 = smul.addr %s827, 8
      %s829 = scalar_lea.vmem %s5, %s828
      // Predicated region
      $region41: #{pointnet2_ssg_seg_forward.13} parent=39 // pred_check
        %p830 = pneg %p144
      $region42: #{pointnet2_ssg_seg_forward.13} parent=39 // pred_check_branch
        %832 = sbr.rel (%p830) target = $region44
      $region43: #{pointnet2_ssg_seg_forward.13} parent=39 // pred_region
        _
      $region44: #{pointnet2_ssg_seg_forward.13} parent=39 // pred_fallthru
        _
    $region40: #{pointnet2_ssg_seg_forward.13} parent=5 // pred_fallthru
      _
    %p833 = scmp.le.s32.totalorder 2, %s11
    // Predicated region
    $region45: #{pointnet2_ssg_seg_forward.13} parent=5 // pred_check
      %p834 = pneg %p833
    $region46: #{pointnet2_ssg_seg_forward.13} parent=5 // pred_check_branch
      %836 = sbr.rel (%p834) target = $region48
    $region47: #{pointnet2_ssg_seg_forward.13} parent=5 // pred_region
      %s837 = ssub.s32 %s11, 2
      // Predicated region
      $region49: #{pointnet2_ssg_seg_forward.13} parent=47 // pred_check
        %p838 = pneg %p150
      $region50: #{pointnet2_ssg_seg_forward.13} parent=47 // pred_check_branch
        %840 = sbr.rel (%p838) target = $region52
      $region51: #{pointnet2_ssg_seg_forward.13} parent=47 // pred_region
        %p841 = scmp.lt.s32.totalorder %s17, 1
        %s842 = scalar_select %p841, %s17, 1
        %s843 = smul.addr %s842, 2
        %s844 = smul.addr %s843, 8
        %s845 = scalar_lea.vmem %s5, %s844
      $region52: #{pointnet2_ssg_seg_forward.13} parent=47 // pred_fallthru
        _
    $region48: #{pointnet2_ssg_seg_forward.13} parent=5 // pred_fallthru
      _
  $region6: #{pointnet2_ssg_seg_forward.13} parent=0 // loop_footer
    %s15 = sadd.s32 1, %s11
  $region7: #{pointnet2_ssg_seg_forward.13} parent=0 // loop_footer_branch
    %10 = sbr.rel target = $region3
  $region8: #{pointnet2_ssg_seg_forward.13} parent=0 // loop_exit
    _

// kernel: neg.20
$region0: #{neg.20}
  #allocation0 [shape = 's32[1]{0}', space=sflag, size = 0x4, scoped, tag = 'scoped memory for neg.20']
  %s0 = inlined_call_operand.vmem [shape: f32[2,32,16], index: 0, kind: input, shape index: {}]
  %s1 = inlined_call_operand.vmem [shape: f32[2,32,16], index: 1, kind: output, shape index: {}]
  %v2 = vld [vmem:[%s0] sm:$0xff]
  %3 = xla_tuple %v2
  %4 = xla_tuple %3
  %v5 = vxor.u32 %v2, 2147483648
  %6 = xla_tuple %v5
  %7 = vst [vmem:[%s1] sm:$0xff] %v5
  %s8 = scalar_lea.vmem %s0, 16
  %v9 = vld [vmem:[%s8] sm:$0xff]
  %10 = xla_tuple %v9
  %11 = xla_tuple %10
  %v12 = vxor.u32 %v9, 2147483648
  %13 = xla_tuple %v12
  %s14 = scalar_lea.vmem %s1, 16
  %15 = vst [vmem:[%s14] sm:$0xff] %v12
  %s16 = scalar_lea.vmem %s0, 8
  %v17 = vld [vmem:[%s16] sm:$0xff]
  %18 = xla_tuple %v17
  %19 = xla_tuple %18
  %v20 = vxor.u32 %v17, 2147483648
  %21 = xla_tuple %v20
  %s22 = scalar_lea.vmem %s1, 8
  %23 = vst [vmem:[%s22] sm:$0xff] %v20
  %s24 = scalar_lea.vmem %s0, 24
  %v25 = vld [vmem:[%s24] sm:$0xff]
  %26 = xla_tuple %v25
  %27 = xla_tuple %26
  %v28 = vxor.u32 %v25, 2147483648
  %29 = xla_tuple %v28
  %s30 = scalar_lea.vmem %s1, 24
  %31 = vst [vmem:[%s30] sm:$0xff] %v28

// kernel: pointnet2_ssg_seg_forward.14
$region0: #{pointnet2_ssg_seg_forward.14}
  #allocation0 [shape = 'u32[]', space=smem, size = 0x4, offset = 0x4, fixed_abs, tag = 'smem constant byte address 0x4 - core index']
  #allocation1 [shape = 'u32[72,128]{1,0:T(1,128)}', space=vmem, size = 0x9000, scoped, tag = 'internal scratch']
  %s0 = inlined_call_operand.vmem [shape: f32[32,384], index: 0, kind: input, shape index: {}]
  %s1 = inlined_call_operand.vmem [shape: f32[384,256], index: 1, kind: input, shape index: {}]
  %s2 = inlined_call_operand.vmem [shape: f32[256,256], index: 2, kind: input, shape index: {}]
  %s3 = inlined_call_operand.vmem [shape: f32[1,256], index: 3, kind: input, shape index: {}]
  %s4 = inlined_call_operand.vmem [shape: f32[1,256], index: 4, kind: input, shape index: {}]
  %s5 = inlined_call_operand.vmem [shape: f32[32,256], index: 5, kind: output, shape index: {}]
  %s6 = sld [smem:[#allocation0]]
  $region53: #{pointnet2_ssg_seg_forward.14} parent=0
    _
  %s8 = ssub.s32 1, %s6
  %s9 = scalar_select 0, %s8, %s6
  loop: start=0, step=1, limit=4
  $region2: #{pointnet2_ssg_seg_forward.14} parent=0 // loop_pre_header
    _
  $region3: #{pointnet2_ssg_seg_forward.14} parent=0 // loop_header
    %s11 = sphi 0, %s15
    %p12 = scmp.ge.s32.totalorder %s11, 4
    %s21 = sphi 0, %s23
    %s24 = sphi 0, %s21
    %s25 = sphi 0, %s24
    %s41 = sphi 0, %s25
    %s45 = sphi 0, %s45
    %s47 = sphi 0, %s45
    %s48 = sphi 0, %s47
    %s62 = sphi 0, %s48
    %s66 = sphi 0, %s66
    %s68 = sphi 0, %s66
    %s69 = sphi 0, %s68
    %s83 = sphi 0, %s69
    %s87 = sphi 0, %s87
    %s89 = sphi 0, %s87
    %s90 = sphi 0, %s89
    %s104 = sphi 0, %s90
    %s108 = sphi 0, %s108
    %s110 = sphi 0, %s108
    %s111 = sphi 0, %s110
    %s125 = sphi 0, %s111
    %s131 = sphi 0, %s133
    %s134 = sphi 0, %s131
    %s135 = sphi 0, %s134
    %s151 = sphi 0, %s135
  $region4: #{pointnet2_ssg_seg_forward.14} parent=0 // loop_header_branch
    %14 = sbr.rel (%p12) target = $region8
  $region5: #{pointnet2_ssg_seg_forward.14} parent=0 // loop_body
    %s16 = ssub.s32 %s11, 1
    %s17 = ssub.s32 %s11, 2
    %s18 = sadd.s32 %s11, 1
    %s19 = ssub.s32 %s11, %s18
    %p20 = scmp.eq.s32.totalorder %s19, 0
    %s22 = sadd.s32 %s21, 1
    %s23 = scalar_select %p20, %s21, %s22
    %p26 = pneg %p20
    %p27 = scmp.eq.s32.totalorder %s11, 1
    %p28 = por %p26, %p27
    %p29 = scmp.ne.s32.totalorder %s21, %s24
    %p30 = scmp.eq.s32.totalorder %s11, 0
    %p31 = por %p29, %p30
    %p32 = scmp.ne.s32.totalorder %s21, %s24
    %p33 = scmp.eq.s32.totalorder %s16, 1
    %p34 = por %p32, %p33
    %p35 = scmp.ne.s32.totalorder %s24, %s25
    %p36 = scmp.eq.s32.totalorder %s16, 0
    %p37 = por %p35, %p36
    %p38 = scmp.ne.s32.totalorder %s24, %s25
    %p39 = scmp.eq.s32.totalorder %s17, 1
    %p40 = por %p38, %p39
    %p42 = scmp.ne.s32.totalorder %s25, %s41
    %p43 = scmp.eq.s32.totalorder %s17, 0
    %p44 = por %p42, %p43
    %s46 = sadd.s32 %s45, 1
    %p49 = scmp.eq.s32.totalorder %s11, 1
    %p50 = scmp.ne.s32.totalorder %s45, %s47
    %p51 = scmp.eq.s32.totalorder %s11, 0
    %p52 = por %p50, %p51
    %p53 = scmp.ne.s32.totalorder %s45, %s47
    %p54 = scmp.eq.s32.totalorder %s16, 1
    %p55 = por %p53, %p54
    %p56 = scmp.ne.s32.totalorder %s47, %s48
    %p57 = scmp.eq.s32.totalorder %s16, 0
    %p58 = por %p56, %p57
    %p59 = scmp.ne.s32.totalorder %s47, %s48
    %p60 = scmp.eq.s32.totalorder %s17, 1
    %p61 = por %p59, %p60
    %p63 = scmp.ne.s32.totalorder %s48, %s62
    %p64 = scmp.eq.s32.totalorder %s17, 0
    %p65 = por %p63, %p64
    %s67 = sadd.s32 %s66, 1
    %p70 = scmp.eq.s32.totalorder %s11, 1
    %p71 = scmp.ne.s32.totalorder %s66, %s68
    %p72 = scmp.eq.s32.totalorder %s11, 0
    %p73 = por %p71, %p72
    %p74 = scmp.ne.s32.totalorder %s66, %s68
    %p75 = scmp.eq.s32.totalorder %s16, 1
    %p76 = por %p74, %p75
    %p77 = scmp.ne.s32.totalorder %s68, %s69
    %p78 = scmp.eq.s32.totalorder %s16, 0
    %p79 = por %p77, %p78
    %p80 = scmp.ne.s32.totalorder %s68, %s69
    %p81 = scmp.eq.s32.totalorder %s17, 1
    %p82 = por %p80, %p81
    %p84 = scmp.ne.s32.totalorder %s69, %s83
    %p85 = scmp.eq.s32.totalorder %s17, 0
    %p86 = por %p84, %p85
    %s88 = sadd.s32 %s87, 1
    %p91 = scmp.eq.s32.totalorder %s11, 1
    %p92 = scmp.ne.s32.totalorder %s87, %s89
    %p93 = scmp.eq.s32.totalorder %s11, 0
    %p94 = por %p92, %p93
    %p95 = scmp.ne.s32.totalorder %s87, %s89
    %p96 = scmp.eq.s32.totalorder %s16, 1
    %p97 = por %p95, %p96
    %p98 = scmp.ne.s32.totalorder %s89, %s90
    %p99 = scmp.eq.s32.totalorder %s16, 0
    %p100 = por %p98, %p99
    %p101 = scmp.ne.s32.totalorder %s89, %s90
    %p102 = scmp.eq.s32.totalorder %s17, 1
    %p103 = por %p101, %p102
    %p105 = scmp.ne.s32.totalorder %s90, %s104
    %p106 = scmp.eq.s32.totalorder %s17, 0
    %p107 = por %p105, %p106
    %s109 = sadd.s32 %s108, 1
    %p112 = scmp.eq.s32.totalorder %s11, 1
    %p113 = scmp.ne.s32.totalorder %s108, %s110
    %p114 = scmp.eq.s32.totalorder %s11, 0
    %p115 = por %p113, %p114
    %p116 = scmp.ne.s32.totalorder %s108, %s110
    %p117 = scmp.eq.s32.totalorder %s16, 1
    %p118 = por %p116, %p117
    %p119 = scmp.ne.s32.totalorder %s110, %s111
    %p120 = scmp.eq.s32.totalorder %s16, 0
    %p121 = por %p119, %p120
    %p122 = scmp.ne.s32.totalorder %s110, %s111
    %p123 = scmp.eq.s32.totalorder %s17, 1
    %p124 = por %p122, %p123
    %p126 = scmp.ne.s32.totalorder %s111, %s125
    %p127 = scmp.eq.s32.totalorder %s17, 0
    %p128 = por %p126, %p127
    %s129 = ssub.s32 %s11, %s18
    %p130 = scmp.eq.s32.totalorder %s129, 0
    %s132 = sadd.s32 %s131, 1
    %s133 = scalar_select %p130, %s131, %s132
    %p136 = pneg %p130
    %p137 = scmp.eq.s32.totalorder %s11, 1
    %p138 = por %p136, %p137
    %p139 = scmp.ne.s32.totalorder %s131, %s134
    %p140 = scmp.eq.s32.totalorder %s11, 0
    %p141 = por %p139, %p140
    %p142 = scmp.ne.s32.totalorder %s131, %s134
    %p143 = scmp.eq.s32.totalorder %s16, 1
    %p144 = por %p142, %p143
    %p145 = scmp.ne.s32.totalorder %s134, %s135
    %p146 = scmp.eq.s32.totalorder %s16, 0
    %p147 = por %p145, %p146
    %p148 = scmp.ne.s32.totalorder %s134, %s135
    %p149 = scmp.eq.s32.totalorder %s17, 1
    %p150 = por %p148, %p149
    %p152 = scmp.ne.s32.totalorder %s135, %s151
    %p153 = scmp.eq.s32.totalorder %s17, 0
    %p154 = por %p152, %p153
    %p155 = scmp.le.s32.totalorder 1, %s11
    %p156 = scmp.lt.s32.totalorder %s11, 3
    %p157 = pnand %p155, %p156
    %p158 = pneg %p157
    // Predicated region
    $region9: #{pointnet2_ssg_seg_forward.14} parent=5 // pred_check
      _
    $region10: #{pointnet2_ssg_seg_forward.14} parent=5 // pred_check_branch
      %160 = sbr.rel (%p157) target = $region12
    $region11: #{pointnet2_ssg_seg_forward.14} parent=5 // pred_region
      %s161 = ssub.s32 %s11, 1
      // Predicated region
      $region13: #{pointnet2_ssg_seg_forward.14} parent=11 // pred_check
        %p162 = pneg %p58
      $region14: #{pointnet2_ssg_seg_forward.14} parent=11 // pred_check_branch
        %164 = sbr.rel (%p162) target = $region16
      $region15: #{pointnet2_ssg_seg_forward.14} parent=11 // pred_region
        _
      $region16: #{pointnet2_ssg_seg_forward.14} parent=11 // pred_fallthru
        _
      // Predicated region
      $region17: #{pointnet2_ssg_seg_forward.14} parent=11 // pred_check
        %p165 = pneg %p79
      $region18: #{pointnet2_ssg_seg_forward.14} parent=11 // pred_check_branch
        %167 = sbr.rel (%p165) target = $region20
      $region19: #{pointnet2_ssg_seg_forward.14} parent=11 // pred_region
        _
      $region20: #{pointnet2_ssg_seg_forward.14} parent=11 // pred_fallthru
        _
      // Predicated region
      $region21: #{pointnet2_ssg_seg_forward.14} parent=11 // pred_check
        %p168 = pneg %p100
      $region22: #{pointnet2_ssg_seg_forward.14} parent=11 // pred_check_branch
        %170 = sbr.rel (%p168) target = $region24
      $region23: #{pointnet2_ssg_seg_forward.14} parent=11 // pred_region
        _
      $region24: #{pointnet2_ssg_seg_forward.14} parent=11 // pred_fallthru
        _
      // Predicated region
      $region25: #{pointnet2_ssg_seg_forward.14} parent=11 // pred_check
        %p171 = pneg %p121
      $region26: #{pointnet2_ssg_seg_forward.14} parent=11 // pred_check_branch
        %173 = sbr.rel (%p171) target = $region28
      $region27: #{pointnet2_ssg_seg_forward.14} parent=11 // pred_region
        _
      $region28: #{pointnet2_ssg_seg_forward.14} parent=11 // pred_fallthru
        _
    $region12: #{pointnet2_ssg_seg_forward.14} parent=5 // pred_fallthru
      _
    %p174 = scmp.lt.s32.totalorder %s11, 2
    // Predicated region
    $region29: #{pointnet2_ssg_seg_forward.14} parent=5 // pred_check
      %p175 = pneg %p174
    $region30: #{pointnet2_ssg_seg_forward.14} parent=5 // pred_check_branch
      %177 = sbr.rel (%p175) target = $region32
    $region31: #{pointnet2_ssg_seg_forward.14} parent=5 // pred_region
      // Predicated region
      $region33: #{pointnet2_ssg_seg_forward.14} parent=31 // pred_check
        %p178 = pneg %p31
      $region34: #{pointnet2_ssg_seg_forward.14} parent=31 // pred_check_branch
        %180 = sbr.rel (%p178) target = $region36
      $region35: #{pointnet2_ssg_seg_forward.14} parent=31 // pred_region
        %s181 = smul.u32 2, %s11
        %p182 = scmp.lt.s32.totalorder %s181, 3
        %s183 = scalar_select %p182, %s181, 3
        %s184 = smul.addr %s183, 3
        %s185 = smul.addr %s184, 8
        %s186 = scalar_lea.vmem %s0, %s185
        %s187 = smul.u32 2, %s11
      $region36: #{pointnet2_ssg_seg_forward.14} parent=31 // pred_fallthru
        _
    $region32: #{pointnet2_ssg_seg_forward.14} parent=5 // pred_fallthru
      _
    %p188 = scmp.le.s32.totalorder 1, %s11
    %p189 = scmp.lt.s32.totalorder %s11, 3
    %p190 = pnand %p188, %p189
    %p191 = pneg %p190
    // Predicated region
    $region37: #{pointnet2_ssg_seg_forward.14} parent=5 // pred_check
      _
    $region38: #{pointnet2_ssg_seg_forward.14} parent=5 // pred_check_branch
      %193 = sbr.rel (%p190) target = $region40
    $region39: #{pointnet2_ssg_seg_forward.14} parent=5 // pred_region
      %s194 = ssub.s32 %s11, 1
      %s195 = smul.u32 2, %s16
      %p196 = scmp.lt.s32.totalorder %s195, 3
      %s197 = scalar_select %p196, %s195, 3
      %s198 = smul.addr %s197, 3
      %s199 = smul.addr %s198, 8
      %s200 = scalar_lea.vmem %s0, %s199
      %p201 = pneg %p37
      %p202 = pneg %p34
      %p203 = pneg %p58
      %p204 = pneg %p55
      %p205 = pneg %p79
      %p206 = pneg %p76
      %p207 = pneg %p100
      %p208 = pneg %p97
      %p209 = pneg %p121
      %p210 = pneg %p118
      %p211 = pneg %p147
      %p212 = pneg %p144
      %s213 = smul.u32 2, %s16
      %p214 = scmp.lt.s32.totalorder %s213, 3
      %s215 = scalar_select %p214, %s213, 3
      %s216 = smul.addr %s215, 2
      %s217 = smul.addr %s216, 8
      %s218 = scalar_lea.vmem %s5, %s217
      %s219 = smul.u32 2, %s16
      %p220 = scmp.lt.s32.totalorder %s219, 3
      %s221 = scalar_select %p220, %s219, 3
      %s222 = smul.addr %s221, 3
      %s223 = smul.addr %s222, 8
      %s224 = scalar_lea.vmem %s0, %s223
      %s225 = smul.u32 2, %s16
      %s226 = smul.u32 2, %s16
      %p227 = scmp.lt.s32.totalorder %s226, 3
      %s228 = scalar_select %p227, %s226, 3
      %s229 = smul.addr %s228, 2
      %s230 = smul.addr %s229, 8
      %s231 = scalar_lea.vmem %s5, %s230
      %s232 = smul.u32 2, %s16
      %v233 = vld [vmem:[%s224] sm:$0xff]
      %v234 = vld [vmem:[%s224 + $0x8] sm:$0xff]
      %v235 = vld [vmem:[%s224 + $0x10] sm:$0xff]
      %v236 = vld [vmem:[%s224 + $0x18] sm:$0xff]
      %v237 = vld [vmem:[%s224 + $0x20] sm:$0xff]
      %v238 = vld [vmem:[%s224 + $0x28] sm:$0xff]
      %v239 = vld [vmem:[%s1] sm:$0xff]
      %v240 = vld [vmem:[%s1 + $0x8] sm:$0xff]
      %v241 = vld [vmem:[%s1 + $0x10] sm:$0xff]
      %v242 = vld [vmem:[%s1 + $0x18] sm:$0xff]
      %v243 = vld [vmem:[%s1 + $0x20] sm:$0xff]
      %v244 = vld [vmem:[%s1 + $0x28] sm:$0xff]
      %v245 = vld [vmem:[%s1 + $0x30] sm:$0xff]
      %v246 = vld [vmem:[%s1 + $0x38] sm:$0xff]
      %v247 = vld [vmem:[%s1 + $0x40] sm:$0xff]
      %v248 = vld [vmem:[%s1 + $0x48] sm:$0xff]
      %v249 = vld [vmem:[%s1 + $0x50] sm:$0xff]
      %v250 = vld [vmem:[%s1 + $0x58] sm:$0xff]
      %v251 = vld [vmem:[%s1 + $0x60] sm:$0xff]
      %v252 = vld [vmem:[%s1 + $0x68] sm:$0xff]
      %v253 = vld [vmem:[%s1 + $0x70] sm:$0xff]
      %v254 = vld [vmem:[%s1 + $0x78] sm:$0xff]
      %v255 = vld [vmem:[%s1 + $0x80] sm:$0xff]
      %v256 = vld [vmem:[%s1 + $0x88] sm:$0xff]
      %v257 = vld [vmem:[%s1 + $0x90] sm:$0xff]
      %v258 = vld [vmem:[%s1 + $0x98] sm:$0xff]
      %v259 = vld [vmem:[%s1 + $0xa0] sm:$0xff]
      %v260 = vld [vmem:[%s1 + $0xa8] sm:$0xff]
      %v261 = vld [vmem:[%s1 + $0xb0] sm:$0xff]
      %v262 = vld [vmem:[%s1 + $0xb8] sm:$0xff]
      %v263 = vld [vmem:[%s1 + $0xc0] sm:$0xff]
      %v264 = vld [vmem:[%s1 + $0xc8] sm:$0xff]
      %v265 = vld [vmem:[%s1 + $0xd0] sm:$0xff]
      %v266 = vld [vmem:[%s1 + $0xd8] sm:$0xff]
      %v267 = vld [vmem:[%s1 + $0xe0] sm:$0xff]
      %v268 = vld [vmem:[%s1 + $0xe8] sm:$0xff]
      %v269 = vld [vmem:[%s1 + $0xf0] sm:$0xff]
      %v270 = vld [vmem:[%s1 + $0xf8] sm:$0xff]
      %v271 = vld [vmem:[%s1 + $0x100] sm:$0xff]
      %v272 = vld [vmem:[%s1 + $0x108] sm:$0xff]
      %v273 = vld [vmem:[%s1 + $0x110] sm:$0xff]
      %v274 = vld [vmem:[%s1 + $0x118] sm:$0xff]
      %v275 = vld [vmem:[%s1 + $0x120] sm:$0xff]
      %v276 = vld [vmem:[%s1 + $0x128] sm:$0xff]
      %v277 = vld [vmem:[%s1 + $0x130] sm:$0xff]
      %v278 = vld [vmem:[%s1 + $0x138] sm:$0xff]
      %v279 = vld [vmem:[%s1 + $0x140] sm:$0xff]
      %v280 = vld [vmem:[%s1 + $0x148] sm:$0xff]
      %v281 = vld [vmem:[%s1 + $0x150] sm:$0xff]
      %v282 = vld [vmem:[%s1 + $0x158] sm:$0xff]
      %v283 = vld [vmem:[%s1 + $0x160] sm:$0xff]
      %v284 = vld [vmem:[%s1 + $0x168] sm:$0xff]
      %v285 = vld [vmem:[%s1 + $0x170] sm:$0xff]
      %v286 = vld [vmem:[%s1 + $0x178] sm:$0xff]
      %v287 = vld [vmem:[%s1 + $0x180] sm:$0xff]
      %v288 = vld [vmem:[%s1 + $0x188] sm:$0xff]
      %v289 = vld [vmem:[%s1 + $0x190] sm:$0xff]
      %v290 = vld [vmem:[%s1 + $0x198] sm:$0xff]
      %v291 = vld [vmem:[%s1 + $0x1a0] sm:$0xff]
      %v292 = vld [vmem:[%s1 + $0x1a8] sm:$0xff]
      %v293 = vld [vmem:[%s1 + $0x1b0] sm:$0xff]
      %v294 = vld [vmem:[%s1 + $0x1b8] sm:$0xff]
      %v295 = vld [vmem:[%s1 + $0x1c0] sm:$0xff]
      %v296 = vld [vmem:[%s1 + $0x1c8] sm:$0xff]
      %v297 = vld [vmem:[%s1 + $0x1d0] sm:$0xff]
      %v298 = vld [vmem:[%s1 + $0x1d8] sm:$0xff]
      %v299 = vld [vmem:[%s1 + $0x1e0] sm:$0xff]
      %v300 = vld [vmem:[%s1 + $0x1e8] sm:$0xff]
      %v301 = vld [vmem:[%s1 + $0x1f0] sm:$0xff]
      %v302 = vld [vmem:[%s1 + $0x1f8] sm:$0xff]
      %v303 = vld [vmem:[%s1 + $0x200] sm:$0xff]
      %v304 = vld [vmem:[%s1 + $0x208] sm:$0xff]
      %v305 = vld [vmem:[%s1 + $0x210] sm:$0xff]
      %v306 = vld [vmem:[%s1 + $0x218] sm:$0xff]
      %v307 = vld [vmem:[%s1 + $0x220] sm:$0xff]
      %v308 = vld [vmem:[%s1 + $0x228] sm:$0xff]
      %v309 = vld [vmem:[%s1 + $0x230] sm:$0xff]
      %v310 = vld [vmem:[%s1 + $0x238] sm:$0xff]
      %v311 = vld [vmem:[%s1 + $0x240] sm:$0xff]
      %v312 = vld [vmem:[%s1 + $0x248] sm:$0xff]
      %v313 = vld [vmem:[%s1 + $0x250] sm:$0xff]
      %v314 = vld [vmem:[%s1 + $0x258] sm:$0xff]
      %v315 = vld [vmem:[%s1 + $0x260] sm:$0xff]
      %v316 = vld [vmem:[%s1 + $0x268] sm:$0xff]
      %v317 = vld [vmem:[%s1 + $0x270] sm:$0xff]
      %v318 = vld [vmem:[%s1 + $0x278] sm:$0xff]
      %v319 = vld [vmem:[%s1 + $0x280] sm:$0xff]
      %v320 = vld [vmem:[%s1 + $0x288] sm:$0xff]
      %v321 = vld [vmem:[%s1 + $0x290] sm:$0xff]
      %v322 = vld [vmem:[%s1 + $0x298] sm:$0xff]
      %v323 = vld [vmem:[%s1 + $0x2a0] sm:$0xff]
      %v324 = vld [vmem:[%s1 + $0x2a8] sm:$0xff]
      %v325 = vld [vmem:[%s1 + $0x2b0] sm:$0xff]
      %v326 = vld [vmem:[%s1 + $0x2b8] sm:$0xff]
      %v327 = vld [vmem:[%s1 + $0x2c0] sm:$0xff]
      %v328 = vld [vmem:[%s1 + $0x2c8] sm:$0xff]
      %v329 = vld [vmem:[%s1 + $0x2d0] sm:$0xff]
      %v330 = vld [vmem:[%s1 + $0x2d8] sm:$0xff]
      %v331 = vld [vmem:[%s1 + $0x2e0] sm:$0xff]
      %v332 = vld [vmem:[%s1 + $0x2e8] sm:$0xff]
      %v333 = vld [vmem:[%s1 + $0x2f0] sm:$0xff]
      %v334 = vld [vmem:[%s1 + $0x2f8] sm:$0xff]
      %v335 = vld [vmem:[%s3] sm:$0x3]
      %v337 = vperm.slane %v335, 0
      %v338 = vperm.slane %v335, 1
      %341 = vmatpush.msra.mxu0 %v269
      %342 = vmatpush.msra.mxu0 %v267
      %343 = vmatpush.msra.mxu0 %v265
      %344 = vmatpush.msra.mxu0 %v263
      %345 = vmatpush.msra.mxu0 %v261
      %346 = vmatpush.msra.mxu0 %v259
      %347 = vmatpush.msra.mxu0 %v257
      %348 = vmatpush.msra.mxu0 %v255
      %349 = vmatpush.msra.mxu0 %v253
      %350 = vmatpush.msra.mxu0 %v251
      %351 = vmatpush.msra.mxu0 %v249
      %352 = vmatpush.msra.mxu0 %v247
      %353 = vmatpush.msra.mxu0 %v245
      %354 = vmatpush.msra.mxu0 %v243
      %355 = vmatpush.msra.mxu0 %v241
      %356 = vmatpush.msra.mxu0 %v239
      %357 = vmatmul.f32.gmra.mxu0 %v233
      %v358 = vpop.f32.mrf.mxu0
      %v359 = vadd.f32 %v337, %v358
      %360 = vmatmul.f32.gmra.mxu0 %v236
      %v361 = vpop.f32.mrf.mxu0
      %v362 = vadd.f32 %v337, %v361
      %363 = vdwg.mxu0
      %364 = vmatpush.msra.mxu0 %v301
      %365 = vmatpush.msra.mxu0 %v299
      %366 = vmatpush.msra.mxu0 %v297
      %367 = vmatpush.msra.mxu0 %v295
      %368 = vmatpush.msra.mxu0 %v293
      %369 = vmatpush.msra.mxu0 %v291
      %370 = vmatpush.msra.mxu0 %v289
      %371 = vmatpush.msra.mxu0 %v287
      %372 = vmatpush.msra.mxu0 %v285
      %373 = vmatpush.msra.mxu0 %v283
      %374 = vmatpush.msra.mxu0 %v281
      %375 = vmatpush.msra.mxu0 %v279
      %376 = vmatpush.msra.mxu0 %v277
      %377 = vmatpush.msra.mxu0 %v275
      %378 = vmatpush.msra.mxu0 %v273
      %379 = vmatpush.msra.mxu0 %v271
      %380 = vmatmul.f32.gmra.mxu0 %v234
      %v381 = vpop.f32.mrf.mxu0
      %v382 = vadd.f32 %v359, %v381
      %383 = vmatmul.f32.gmra.mxu0 %v237
      %v384 = vpop.f32.mrf.mxu0
      %v385 = vadd.f32 %v362, %v384
      %386 = vdwg.mxu0
      %387 = vmatpush.msra.mxu0 %v333
      %388 = vmatpush.msra.mxu0 %v331
      %389 = vmatpush.msra.mxu0 %v329
      %390 = vmatpush.msra.mxu0 %v327
      %391 = vmatpush.msra.mxu0 %v325
      %392 = vmatpush.msra.mxu0 %v323
      %393 = vmatpush.msra.mxu0 %v321
      %394 = vmatpush.msra.mxu0 %v319
      %395 = vmatpush.msra.mxu0 %v317
      %396 = vmatpush.msra.mxu0 %v315
      %397 = vmatpush.msra.mxu0 %v313
      %398 = vmatpush.msra.mxu0 %v311
      %399 = vmatpush.msra.mxu0 %v309
      %400 = vmatpush.msra.mxu0 %v307
      %401 = vmatpush.msra.mxu0 %v305
      %402 = vmatpush.msra.mxu0 %v303
      %403 = vmatmul.f32.gmra.mxu0 %v235
      %v404 = vpop.f32.mrf.mxu0
      %v405 = vadd.f32 %v382, %v404
      %406 = vmatmul.f32.gmra.mxu0 %v238
      %v407 = vpop.f32.mrf.mxu0
      %v408 = vadd.f32 %v385, %v407
      %409 = vdwg.mxu0
      %410 = vmatpush.msra.mxu0 %v270
      %411 = vmatpush.msra.mxu0 %v268
      %412 = vmatpush.msra.mxu0 %v266
      %413 = vmatpush.msra.mxu0 %v264
      %414 = vmatpush.msra.mxu0 %v262
      %415 = vmatpush.msra.mxu0 %v260
      %416 = vmatpush.msra.mxu0 %v258
      %417 = vmatpush.msra.mxu0 %v256
      %418 = vmatpush.msra.mxu0 %v254
      %419 = vmatpush.msra.mxu0 %v252
      %420 = vmatpush.msra.mxu0 %v250
      %421 = vmatpush.msra.mxu0 %v248
      %422 = vmatpush.msra.mxu0 %v246
      %423 = vmatpush.msra.mxu0 %v244
      %424 = vmatpush.msra.mxu0 %v242
      %425 = vmatpush.msra.mxu0 %v240
      %426 = vmatmul.f32.gmra.mxu0 %v233
      %v427 = vpop.f32.mrf.mxu0
      %v428 = vadd.f32 %v338, %v427
      %429 = vmatmul.f32.gmra.mxu0 %v236
      %v430 = vpop.f32.mrf.mxu0
      %v431 = vadd.f32 %v338, %v430
      %432 = vdwg.mxu0
      %433 = vmatpush.msra.mxu0 %v302
      %434 = vmatpush.msra.mxu0 %v300
      %435 = vmatpush.msra.mxu0 %v298
      %436 = vmatpush.msra.mxu0 %v296
      %437 = vmatpush.msra.mxu0 %v294
      %438 = vmatpush.msra.mxu0 %v292
      %439 = vmatpush.msra.mxu0 %v290
      %440 = vmatpush.msra.mxu0 %v288
      %441 = vmatpush.msra.mxu0 %v286
      %442 = vmatpush.msra.mxu0 %v284
      %443 = vmatpush.msra.mxu0 %v282
      %444 = vmatpush.msra.mxu0 %v280
      %445 = vmatpush.msra.mxu0 %v278
      %446 = vmatpush.msra.mxu0 %v276
      %447 = vmatpush.msra.mxu0 %v274
      %448 = vmatpush.msra.mxu0 %v272
      %449 = vmatmul.f32.gmra.mxu0 %v234
      %v450 = vpop.f32.mrf.mxu0
      %v451 = vadd.f32 %v428, %v450
      %452 = vmatmul.f32.gmra.mxu0 %v237
      %v453 = vpop.f32.mrf.mxu0
      %v454 = vadd.f32 %v431, %v453
      %455 = vdwg.mxu0
      %456 = vmatpush.msra.mxu0 %v334
      %457 = vmatpush.msra.mxu0 %v332
      %458 = vmatpush.msra.mxu0 %v330
      %459 = vmatpush.msra.mxu0 %v328
      %460 = vmatpush.msra.mxu0 %v326
      %461 = vmatpush.msra.mxu0 %v324
      %462 = vmatpush.msra.mxu0 %v322
      %463 = vmatpush.msra.mxu0 %v320
      %464 = vmatpush.msra.mxu0 %v318
      %465 = vmatpush.msra.mxu0 %v316
      %466 = vmatpush.msra.mxu0 %v314
      %467 = vmatpush.msra.mxu0 %v312
      %468 = vmatpush.msra.mxu0 %v310
      %469 = vmatpush.msra.mxu0 %v308
      %470 = vmatpush.msra.mxu0 %v306
      %471 = vmatpush.msra.mxu0 %v304
      %472 = vmatmul.f32.gmra.mxu0 %v235
      %v473 = vpop.f32.mrf.mxu0
      %v474 = vadd.f32 %v451, %v473
      %475 = vmatmul.f32.gmra.mxu0 %v238
      %v476 = vpop.f32.mrf.mxu0
      %v477 = vadd.f32 %v454, %v476
      %478 = vdwg.mxu0
      %v479 = vmax.f32 %v405, 0.0
      %v480 = vmax.f32 %v474, 0.0
      %v481 = vmax.f32 %v408, 0.0
      %v482 = vmax.f32 %v477, 0.0
      %v483 = vld [vmem:[%s2] sm:$0xff]
      %v484 = vld [vmem:[%s2 + $0x8] sm:$0xff]
      %v485 = vld [vmem:[%s2 + $0x10] sm:$0xff]
      %v486 = vld [vmem:[%s2 + $0x18] sm:$0xff]
      %v487 = vld [vmem:[%s2 + $0x20] sm:$0xff]
      %v488 = vld [vmem:[%s2 + $0x28] sm:$0xff]
      %v489 = vld [vmem:[%s2 + $0x30] sm:$0xff]
      %v490 = vld [vmem:[%s2 + $0x38] sm:$0xff]
      %v491 = vld [vmem:[%s2 + $0x40] sm:$0xff]
      %v492 = vld [vmem:[%s2 + $0x48] sm:$0xff]
      %v493 = vld [vmem:[%s2 + $0x50] sm:$0xff]
      %v494 = vld [vmem:[%s2 + $0x58] sm:$0xff]
      %v495 = vld [vmem:[%s2 + $0x60] sm:$0xff]
      %v496 = vld [vmem:[%s2 + $0x68] sm:$0xff]
      %v497 = vld [vmem:[%s2 + $0x70] sm:$0xff]
      %v498 = vld [vmem:[%s2 + $0x78] sm:$0xff]
      %v499 = vld [vmem:[%s2 + $0x80] sm:$0xff]
      %v500 = vld [vmem:[%s2 + $0x88] sm:$0xff]
      %v501 = vld [vmem:[%s2 + $0x90] sm:$0xff]
      %v502 = vld [vmem:[%s2 + $0x98] sm:$0xff]
      %v503 = vld [vmem:[%s2 + $0xa0] sm:$0xff]
      %v504 = vld [vmem:[%s2 + $0xa8] sm:$0xff]
      %v505 = vld [vmem:[%s2 + $0xb0] sm:$0xff]
      %v506 = vld [vmem:[%s2 + $0xb8] sm:$0xff]
      %v507 = vld [vmem:[%s2 + $0xc0] sm:$0xff]
      %v508 = vld [vmem:[%s2 + $0xc8] sm:$0xff]
      %v509 = vld [vmem:[%s2 + $0xd0] sm:$0xff]
      %v510 = vld [vmem:[%s2 + $0xd8] sm:$0xff]
      %v511 = vld [vmem:[%s2 + $0xe0] sm:$0xff]
      %v512 = vld [vmem:[%s2 + $0xe8] sm:$0xff]
      %v513 = vld [vmem:[%s2 + $0xf0] sm:$0xff]
      %v514 = vld [vmem:[%s2 + $0xf8] sm:$0xff]
      %v515 = vld [vmem:[%s2 + $0x100] sm:$0xff]
      %v516 = vld [vmem:[%s2 + $0x108] sm:$0xff]
      %v517 = vld [vmem:[%s2 + $0x110] sm:$0xff]
      %v518 = vld [vmem:[%s2 + $0x118] sm:$0xff]
      %v519 = vld [vmem:[%s2 + $0x120] sm:$0xff]
      %v520 = vld [vmem:[%s2 + $0x128] sm:$0xff]
      %v521 = vld [vmem:[%s2 + $0x130] sm:$0xff]
      %v522 = vld [vmem:[%s2 + $0x138] sm:$0xff]
      %v523 = vld [vmem:[%s2 + $0x140] sm:$0xff]
      %v524 = vld [vmem:[%s2 + $0x148] sm:$0xff]
      %v525 = vld [vmem:[%s2 + $0x150] sm:$0xff]
      %v526 = vld [vmem:[%s2 + $0x158] sm:$0xff]
      %v527 = vld [vmem:[%s2 + $0x160] sm:$0xff]
      %v528 = vld [vmem:[%s2 + $0x168] sm:$0xff]
      %v529 = vld [vmem:[%s2 + $0x170] sm:$0xff]
      %v530 = vld [vmem:[%s2 + $0x178] sm:$0xff]
      %v531 = vld [vmem:[%s2 + $0x180] sm:$0xff]
      %v532 = vld [vmem:[%s2 + $0x188] sm:$0xff]
      %v533 = vld [vmem:[%s2 + $0x190] sm:$0xff]
      %v534 = vld [vmem:[%s2 + $0x198] sm:$0xff]
      %v535 = vld [vmem:[%s2 + $0x1a0] sm:$0xff]
      %v536 = vld [vmem:[%s2 + $0x1a8] sm:$0xff]
      %v537 = vld [vmem:[%s2 + $0x1b0] sm:$0xff]
      %v538 = vld [vmem:[%s2 + $0x1b8] sm:$0xff]
      %v539 = vld [vmem:[%s2 + $0x1c0] sm:$0xff]
      %v540 = vld [vmem:[%s2 + $0x1c8] sm:$0xff]
      %v541 = vld [vmem:[%s2 + $0x1d0] sm:$0xff]
      %v542 = vld [vmem:[%s2 + $0x1d8] sm:$0xff]
      %v543 = vld [vmem:[%s2 + $0x1e0] sm:$0xff]
      %v544 = vld [vmem:[%s2 + $0x1e8] sm:$0xff]
      %v545 = vld [vmem:[%s2 + $0x1f0] sm:$0xff]
      %v546 = vld [vmem:[%s2 + $0x1f8] sm:$0xff]
      %v547 = vld [vmem:[%s4] sm:$0x3]
      %v549 = vperm.slane %v547, 0
      %v550 = vperm.slane %v547, 1
      %553 = vmatpush.msra.mxu0 %v513
      %554 = vmatpush.msra.mxu0 %v511
      %555 = vmatpush.msra.mxu0 %v509
      %556 = vmatpush.msra.mxu0 %v507
      %557 = vmatpush.msra.mxu0 %v505
      %558 = vmatpush.msra.mxu0 %v503
      %559 = vmatpush.msra.mxu0 %v501
      %560 = vmatpush.msra.mxu0 %v499
      %561 = vmatpush.msra.mxu0 %v497
      %562 = vmatpush.msra.mxu0 %v495
      %563 = vmatpush.msra.mxu0 %v493
      %564 = vmatpush.msra.mxu0 %v491
      %565 = vmatpush.msra.mxu0 %v489
      %566 = vmatpush.msra.mxu0 %v487
      %567 = vmatpush.msra.mxu0 %v485
      %568 = vmatpush.msra.mxu0 %v483
      %569 = vmatmul.f32.gmra.mxu0 %v479
      %v570 = vpop.f32.mrf.mxu0
      %v571 = vadd.f32 %v549, %v570
      %572 = vmatmul.f32.gmra.mxu0 %v481
      %v573 = vpop.f32.mrf.mxu0
      %v574 = vadd.f32 %v549, %v573
      %575 = vdwg.mxu0
      %576 = vmatpush.msra.mxu0 %v545
      %577 = vmatpush.msra.mxu0 %v543
      %578 = vmatpush.msra.mxu0 %v541
      %579 = vmatpush.msra.mxu0 %v539
      %580 = vmatpush.msra.mxu0 %v537
      %581 = vmatpush.msra.mxu0 %v535
      %582 = vmatpush.msra.mxu0 %v533
      %583 = vmatpush.msra.mxu0 %v531
      %584 = vmatpush.msra.mxu0 %v529
      %585 = vmatpush.msra.mxu0 %v527
      %586 = vmatpush.msra.mxu0 %v525
      %587 = vmatpush.msra.mxu0 %v523
      %588 = vmatpush.msra.mxu0 %v521
      %589 = vmatpush.msra.mxu0 %v519
      %590 = vmatpush.msra.mxu0 %v517
      %591 = vmatpush.msra.mxu0 %v515
      %592 = vmatmul.f32.gmra.mxu0 %v480
      %v593 = vpop.f32.mrf.mxu0
      %v594 = vadd.f32 %v571, %v593
      %595 = vmatmul.f32.gmra.mxu0 %v482
      %v596 = vpop.f32.mrf.mxu0
      %v597 = vadd.f32 %v574, %v596
      %598 = vdwg.mxu0
      %599 = vmatpush.msra.mxu0 %v514
      %600 = vmatpush.msra.mxu0 %v512
      %601 = vmatpush.msra.mxu0 %v510
      %602 = vmatpush.msra.mxu0 %v508
      %603 = vmatpush.msra.mxu0 %v506
      %604 = vmatpush.msra.mxu0 %v504
      %605 = vmatpush.msra.mxu0 %v502
      %606 = vmatpush.msra.mxu0 %v500
      %607 = vmatpush.msra.mxu0 %v498
      %608 = vmatpush.msra.mxu0 %v496
      %609 = vmatpush.msra.mxu0 %v494
      %610 = vmatpush.msra.mxu0 %v492
      %611 = vmatpush.msra.mxu0 %v490
      %612 = vmatpush.msra.mxu0 %v488
      %613 = vmatpush.msra.mxu0 %v486
      %614 = vmatpush.msra.mxu0 %v484
      %615 = vmatmul.f32.gmra.mxu0 %v479
      %v616 = vpop.f32.mrf.mxu0
      %v617 = vadd.f32 %v550, %v616
      %618 = vmatmul.f32.gmra.mxu0 %v481
      %v619 = vpop.f32.mrf.mxu0
      %v620 = vadd.f32 %v550, %v619
      %621 = vdwg.mxu0
      %622 = vmatpush.msra.mxu0 %v546
      %623 = vmatpush.msra.mxu0 %v544
      %624 = vmatpush.msra.mxu0 %v542
      %625 = vmatpush.msra.mxu0 %v540
      %626 = vmatpush.msra.mxu0 %v538
      %627 = vmatpush.msra.mxu0 %v536
      %628 = vmatpush.msra.mxu0 %v534
      %629 = vmatpush.msra.mxu0 %v532
      %630 = vmatpush.msra.mxu0 %v530
      %631 = vmatpush.msra.mxu0 %v528
      %632 = vmatpush.msra.mxu0 %v526
      %633 = vmatpush.msra.mxu0 %v524
      %634 = vmatpush.msra.mxu0 %v522
      %635 = vmatpush.msra.mxu0 %v520
      %636 = vmatpush.msra.mxu0 %v518
      %637 = vmatpush.msra.mxu0 %v516
      %638 = vmatmul.f32.gmra.mxu0 %v480
      %v639 = vpop.f32.mrf.mxu0
      %v640 = vadd.f32 %v617, %v639
      %641 = vmatmul.f32.gmra.mxu0 %v482
      %v642 = vpop.f32.mrf.mxu0
      %v643 = vadd.f32 %v620, %v642
      %644 = vdwg.mxu0
      %v645 = vmax.f32 %v594, 0.0
      %v646 = vmax.f32 %v640, 0.0
      %v647 = vmax.f32 %v597, 0.0
      %v648 = vmax.f32 %v643, 0.0
      %649 = vst [vmem:[%s231] sm:$0xff] %v645
      %650 = vst [vmem:[%s231 + $0x8] sm:$0xff] %v646
      %651 = vst [vmem:[%s231 + $0x10] sm:$0xff] %v647
      %652 = vst [vmem:[%s231 + $0x18] sm:$0xff] %v648
      %s653 = smul.u32 2, %s16
      %p654 = scmp.lt.s32.totalorder %s653, 3
      %s655 = scalar_select %p654, %s653, 3
      %s656 = smul.addr %s655, 2
      %s657 = smul.addr %s656, 8
      %s658 = scalar_lea.vmem %s5, %s657
      // Predicated region
      $region41: #{pointnet2_ssg_seg_forward.14} parent=39 // pred_check
        %p659 = pneg %p144
      $region42: #{pointnet2_ssg_seg_forward.14} parent=39 // pred_check_branch
        %661 = sbr.rel (%p659) target = $region44
      $region43: #{pointnet2_ssg_seg_forward.14} parent=39 // pred_region
        %s662 = smul.u32 2, %s16
      $region44: #{pointnet2_ssg_seg_forward.14} parent=39 // pred_fallthru
        _
    $region40: #{pointnet2_ssg_seg_forward.14} parent=5 // pred_fallthru
      _
    %p663 = scmp.le.s32.totalorder 2, %s11
    // Predicated region
    $region45: #{pointnet2_ssg_seg_forward.14} parent=5 // pred_check
      %p664 = pneg %p663
    $region46: #{pointnet2_ssg_seg_forward.14} parent=5 // pred_check_branch
      %666 = sbr.rel (%p664) target = $region48
    $region47: #{pointnet2_ssg_seg_forward.14} parent=5 // pred_region
      %s667 = ssub.s32 %s11, 2
      // Predicated region
      $region49: #{pointnet2_ssg_seg_forward.14} parent=47 // pred_check
        %p668 = pneg %p150
      $region50: #{pointnet2_ssg_seg_forward.14} parent=47 // pred_check_branch
        %670 = sbr.rel (%p668) target = $region52
      $region51: #{pointnet2_ssg_seg_forward.14} parent=47 // pred_region
        %s671 = smul.u32 2, %s17
        %p672 = scmp.lt.s32.totalorder %s671, 3
        %s673 = scalar_select %p672, %s671, 3
        %s674 = smul.addr %s673, 2
        %s675 = smul.addr %s674, 8
        %s676 = scalar_lea.vmem %s5, %s675
      $region52: #{pointnet2_ssg_seg_forward.14} parent=47 // pred_fallthru
        _
    $region48: #{pointnet2_ssg_seg_forward.14} parent=5 // pred_fallthru
      _
  $region6: #{pointnet2_ssg_seg_forward.14} parent=0 // loop_footer
    %s15 = sadd.s32 1, %s11
  $region7: #{pointnet2_ssg_seg_forward.14} parent=0 // loop_footer_branch
    %10 = sbr.rel target = $region3
  $region8: #{pointnet2_ssg_seg_forward.14} parent=0 // loop_exit
    _

// kernel: neg.22
$region0: #{neg.22}
  #allocation0 [shape = 's32[1]{0}', space=sflag, size = 0x4, scoped, tag = 'scoped memory for neg.22']
  %s0 = inlined_call_operand.vmem [shape: f32[2,64,32], index: 0, kind: input, shape index: {}]
  %s1 = inlined_call_operand.vmem [shape: f32[2,64,32], index: 1, kind: output, shape index: {}]
  %v2 = vld [vmem:[%s0] sm:$0xff]
  %3 = xla_tuple %v2
  %4 = xla_tuple %3
  %v5 = vxor.u32 %v2, 2147483648
  %6 = xla_tuple %v5
  %7 = vst [vmem:[%s1] sm:$0xff] %v5
  %s8 = scalar_lea.vmem %s0, 32
  %v9 = vld [vmem:[%s8] sm:$0xff]
  %10 = xla_tuple %v9
  %11 = xla_tuple %10
  %v12 = vxor.u32 %v9, 2147483648
  %13 = xla_tuple %v12
  %s14 = scalar_lea.vmem %s1, 32
  %15 = vst [vmem:[%s14] sm:$0xff] %v12
  %s16 = scalar_lea.vmem %s0, 8
  %v17 = vld [vmem:[%s16] sm:$0xff]
  %18 = xla_tuple %v17
  %19 = xla_tuple %18
  %v20 = vxor.u32 %v17, 2147483648
  %21 = xla_tuple %v20
  %s22 = scalar_lea.vmem %s1, 8
  %23 = vst [vmem:[%s22] sm:$0xff] %v20
  %s24 = scalar_lea.vmem %s0, 40
  %v25 = vld [vmem:[%s24] sm:$0xff]
  %26 = xla_tuple %v25
  %27 = xla_tuple %26
  %v28 = vxor.u32 %v25, 2147483648
  %29 = xla_tuple %v28
  %s30 = scalar_lea.vmem %s1, 40
  %31 = vst [vmem:[%s30] sm:$0xff] %v28
  %s32 = scalar_lea.vmem %s0, 16
  %v33 = vld [vmem:[%s32] sm:$0xff]
  %34 = xla_tuple %v33
  %35 = xla_tuple %34
  %v36 = vxor.u32 %v33, 2147483648
  %37 = xla_tuple %v36
  %s38 = scalar_lea.vmem %s1, 16
  %39 = vst [vmem:[%s38] sm:$0xff] %v36
  %s40 = scalar_lea.vmem %s0, 48
  %v41 = vld [vmem:[%s40] sm:$0xff]
  %42 = xla_tuple %v41
  %43 = xla_tuple %42
  %v44 = vxor.u32 %v41, 2147483648
  %45 = xla_tuple %v44
  %s46 = scalar_lea.vmem %s1, 48
  %47 = vst [vmem:[%s46] sm:$0xff] %v44
  %s48 = scalar_lea.vmem %s0, 24
  %v49 = vld [vmem:[%s48] sm:$0xff]
  %50 = xla_tuple %v49
  %51 = xla_tuple %50
  %v52 = vxor.u32 %v49, 2147483648
  %53 = xla_tuple %v52
  %s54 = scalar_lea.vmem %s1, 24
  %55 = vst [vmem:[%s54] sm:$0xff] %v52
  %s56 = scalar_lea.vmem %s0, 56
  %v57 = vld [vmem:[%s56] sm:$0xff]
  %58 = xla_tuple %v57
  %59 = xla_tuple %58
  %v60 = vxor.u32 %v57, 2147483648
  %61 = xla_tuple %v60
  %s62 = scalar_lea.vmem %s1, 56
  %63 = vst [vmem:[%s62] sm:$0xff] %v60

// kernel: pointnet2_ssg_seg_forward.15
$region0: #{pointnet2_ssg_seg_forward.15}
  #allocation0 [shape = 'u32[]', space=smem, size = 0x4, offset = 0x4, fixed_abs, tag = 'smem constant byte address 0x4 - core index']
  #allocation1 [shape = 'u32[72,128]{1,0:T(1,128)}', space=vmem, size = 0x9000, scoped, tag = 'internal scratch']
  %s0 = inlined_call_operand.vmem [shape: f32[64,320], index: 0, kind: input, shape index: {}]
  %s1 = inlined_call_operand.vmem [shape: f32[320,256], index: 1, kind: input, shape index: {}]
  %s2 = inlined_call_operand.vmem [shape: f32[256,128], index: 2, kind: input, shape index: {}]
  %s3 = inlined_call_operand.vmem [shape: f32[1,256], index: 3, kind: input, shape index: {}]
  %s4 = inlined_call_operand.vmem [shape: f32[1,128], index: 4, kind: input, shape index: {}]
  %s5 = inlined_call_operand.vmem [shape: f32[64,128], index: 5, kind: output, shape index: {}]
  %s6 = sld [smem:[#allocation0]]
  $region53: #{pointnet2_ssg_seg_forward.15} parent=0
    _
  %s8 = ssub.s32 1, %s6
  %s9 = scalar_select 0, %s8, %s6
  loop: start=0, step=1, limit=4
  $region2: #{pointnet2_ssg_seg_forward.15} parent=0 // loop_pre_header
    _
  $region3: #{pointnet2_ssg_seg_forward.15} parent=0 // loop_header
    %s11 = sphi 0, %s15
    %p12 = scmp.ge.s32.totalorder %s11, 4
    %s21 = sphi 0, %s23
    %s24 = sphi 0, %s21
    %s25 = sphi 0, %s24
    %s41 = sphi 0, %s25
    %s45 = sphi 0, %s45
    %s47 = sphi 0, %s45
    %s48 = sphi 0, %s47
    %s62 = sphi 0, %s48
    %s66 = sphi 0, %s66
    %s68 = sphi 0, %s66
    %s69 = sphi 0, %s68
    %s83 = sphi 0, %s69
    %s87 = sphi 0, %s87
    %s89 = sphi 0, %s87
    %s90 = sphi 0, %s89
    %s104 = sphi 0, %s90
    %s108 = sphi 0, %s108
    %s110 = sphi 0, %s108
    %s111 = sphi 0, %s110
    %s125 = sphi 0, %s111
    %s131 = sphi 0, %s133
    %s134 = sphi 0, %s131
    %s135 = sphi 0, %s134
    %s151 = sphi 0, %s135
  $region4: #{pointnet2_ssg_seg_forward.15} parent=0 // loop_header_branch
    %14 = sbr.rel (%p12) target = $region8
  $region5: #{pointnet2_ssg_seg_forward.15} parent=0 // loop_body
    %s16 = ssub.s32 %s11, 1
    %s17 = ssub.s32 %s11, 2
    %s18 = sadd.s32 %s11, 1
    %s19 = ssub.s32 %s11, %s18
    %p20 = scmp.eq.s32.totalorder %s19, 0
    %s22 = sadd.s32 %s21, 1
    %s23 = scalar_select %p20, %s21, %s22
    %p26 = pneg %p20
    %p27 = scmp.eq.s32.totalorder %s11, 1
    %p28 = por %p26, %p27
    %p29 = scmp.ne.s32.totalorder %s21, %s24
    %p30 = scmp.eq.s32.totalorder %s11, 0
    %p31 = por %p29, %p30
    %p32 = scmp.ne.s32.totalorder %s21, %s24
    %p33 = scmp.eq.s32.totalorder %s16, 1
    %p34 = por %p32, %p33
    %p35 = scmp.ne.s32.totalorder %s24, %s25
    %p36 = scmp.eq.s32.totalorder %s16, 0
    %p37 = por %p35, %p36
    %p38 = scmp.ne.s32.totalorder %s24, %s25
    %p39 = scmp.eq.s32.totalorder %s17, 1
    %p40 = por %p38, %p39
    %p42 = scmp.ne.s32.totalorder %s25, %s41
    %p43 = scmp.eq.s32.totalorder %s17, 0
    %p44 = por %p42, %p43
    %s46 = sadd.s32 %s45, 1
    %p49 = scmp.eq.s32.totalorder %s11, 1
    %p50 = scmp.ne.s32.totalorder %s45, %s47
    %p51 = scmp.eq.s32.totalorder %s11, 0
    %p52 = por %p50, %p51
    %p53 = scmp.ne.s32.totalorder %s45, %s47
    %p54 = scmp.eq.s32.totalorder %s16, 1
    %p55 = por %p53, %p54
    %p56 = scmp.ne.s32.totalorder %s47, %s48
    %p57 = scmp.eq.s32.totalorder %s16, 0
    %p58 = por %p56, %p57
    %p59 = scmp.ne.s32.totalorder %s47, %s48
    %p60 = scmp.eq.s32.totalorder %s17, 1
    %p61 = por %p59, %p60
    %p63 = scmp.ne.s32.totalorder %s48, %s62
    %p64 = scmp.eq.s32.totalorder %s17, 0
    %p65 = por %p63, %p64
    %s67 = sadd.s32 %s66, 1
    %p70 = scmp.eq.s32.totalorder %s11, 1
    %p71 = scmp.ne.s32.totalorder %s66, %s68
    %p72 = scmp.eq.s32.totalorder %s11, 0
    %p73 = por %p71, %p72
    %p74 = scmp.ne.s32.totalorder %s66, %s68
    %p75 = scmp.eq.s32.totalorder %s16, 1
    %p76 = por %p74, %p75
    %p77 = scmp.ne.s32.totalorder %s68, %s69
    %p78 = scmp.eq.s32.totalorder %s16, 0
    %p79 = por %p77, %p78
    %p80 = scmp.ne.s32.totalorder %s68, %s69
    %p81 = scmp.eq.s32.totalorder %s17, 1
    %p82 = por %p80, %p81
    %p84 = scmp.ne.s32.totalorder %s69, %s83
    %p85 = scmp.eq.s32.totalorder %s17, 0
    %p86 = por %p84, %p85
    %s88 = sadd.s32 %s87, 1
    %p91 = scmp.eq.s32.totalorder %s11, 1
    %p92 = scmp.ne.s32.totalorder %s87, %s89
    %p93 = scmp.eq.s32.totalorder %s11, 0
    %p94 = por %p92, %p93
    %p95 = scmp.ne.s32.totalorder %s87, %s89
    %p96 = scmp.eq.s32.totalorder %s16, 1
    %p97 = por %p95, %p96
    %p98 = scmp.ne.s32.totalorder %s89, %s90
    %p99 = scmp.eq.s32.totalorder %s16, 0
    %p100 = por %p98, %p99
    %p101 = scmp.ne.s32.totalorder %s89, %s90
    %p102 = scmp.eq.s32.totalorder %s17, 1
    %p103 = por %p101, %p102
    %p105 = scmp.ne.s32.totalorder %s90, %s104
    %p106 = scmp.eq.s32.totalorder %s17, 0
    %p107 = por %p105, %p106
    %s109 = sadd.s32 %s108, 1
    %p112 = scmp.eq.s32.totalorder %s11, 1
    %p113 = scmp.ne.s32.totalorder %s108, %s110
    %p114 = scmp.eq.s32.totalorder %s11, 0
    %p115 = por %p113, %p114
    %p116 = scmp.ne.s32.totalorder %s108, %s110
    %p117 = scmp.eq.s32.totalorder %s16, 1
    %p118 = por %p116, %p117
    %p119 = scmp.ne.s32.totalorder %s110, %s111
    %p120 = scmp.eq.s32.totalorder %s16, 0
    %p121 = por %p119, %p120
    %p122 = scmp.ne.s32.totalorder %s110, %s111
    %p123 = scmp.eq.s32.totalorder %s17, 1
    %p124 = por %p122, %p123
    %p126 = scmp.ne.s32.totalorder %s111, %s125
    %p127 = scmp.eq.s32.totalorder %s17, 0
    %p128 = por %p126, %p127
    %s129 = ssub.s32 %s11, %s18
    %p130 = scmp.eq.s32.totalorder %s129, 0
    %s132 = sadd.s32 %s131, 1
    %s133 = scalar_select %p130, %s131, %s132
    %p136 = pneg %p130
    %p137 = scmp.eq.s32.totalorder %s11, 1
    %p138 = por %p136, %p137
    %p139 = scmp.ne.s32.totalorder %s131, %s134
    %p140 = scmp.eq.s32.totalorder %s11, 0
    %p141 = por %p139, %p140
    %p142 = scmp.ne.s32.totalorder %s131, %s134
    %p143 = scmp.eq.s32.totalorder %s16, 1
    %p144 = por %p142, %p143
    %p145 = scmp.ne.s32.totalorder %s134, %s135
    %p146 = scmp.eq.s32.totalorder %s16, 0
    %p147 = por %p145, %p146
    %p148 = scmp.ne.s32.totalorder %s134, %s135
    %p149 = scmp.eq.s32.totalorder %s17, 1
    %p150 = por %p148, %p149
    %p152 = scmp.ne.s32.totalorder %s135, %s151
    %p153 = scmp.eq.s32.totalorder %s17, 0
    %p154 = por %p152, %p153
    %p155 = scmp.le.s32.totalorder 1, %s11
    %p156 = scmp.lt.s32.totalorder %s11, 3
    %p157 = pnand %p155, %p156
    %p158 = pneg %p157
    // Predicated region
    $region9: #{pointnet2_ssg_seg_forward.15} parent=5 // pred_check
      _
    $region10: #{pointnet2_ssg_seg_forward.15} parent=5 // pred_check_branch
      %160 = sbr.rel (%p157) target = $region12
    $region11: #{pointnet2_ssg_seg_forward.15} parent=5 // pred_region
      %s161 = ssub.s32 %s11, 1
      // Predicated region
      $region13: #{pointnet2_ssg_seg_forward.15} parent=11 // pred_check
        %p162 = pneg %p58
      $region14: #{pointnet2_ssg_seg_forward.15} parent=11 // pred_check_branch
        %164 = sbr.rel (%p162) target = $region16
      $region15: #{pointnet2_ssg_seg_forward.15} parent=11 // pred_region
        _
      $region16: #{pointnet2_ssg_seg_forward.15} parent=11 // pred_fallthru
        _
      // Predicated region
      $region17: #{pointnet2_ssg_seg_forward.15} parent=11 // pred_check
        %p165 = pneg %p79
      $region18: #{pointnet2_ssg_seg_forward.15} parent=11 // pred_check_branch
        %167 = sbr.rel (%p165) target = $region20
      $region19: #{pointnet2_ssg_seg_forward.15} parent=11 // pred_region
        _
      $region20: #{pointnet2_ssg_seg_forward.15} parent=11 // pred_fallthru
        _
      // Predicated region
      $region21: #{pointnet2_ssg_seg_forward.15} parent=11 // pred_check
        %p168 = pneg %p100
      $region22: #{pointnet2_ssg_seg_forward.15} parent=11 // pred_check_branch
        %170 = sbr.rel (%p168) target = $region24
      $region23: #{pointnet2_ssg_seg_forward.15} parent=11 // pred_region
        _
      $region24: #{pointnet2_ssg_seg_forward.15} parent=11 // pred_fallthru
        _
      // Predicated region
      $region25: #{pointnet2_ssg_seg_forward.15} parent=11 // pred_check
        %p171 = pneg %p121
      $region26: #{pointnet2_ssg_seg_forward.15} parent=11 // pred_check_branch
        %173 = sbr.rel (%p171) target = $region28
      $region27: #{pointnet2_ssg_seg_forward.15} parent=11 // pred_region
        _
      $region28: #{pointnet2_ssg_seg_forward.15} parent=11 // pred_fallthru
        _
    $region12: #{pointnet2_ssg_seg_forward.15} parent=5 // pred_fallthru
      _
    %p174 = scmp.lt.s32.totalorder %s11, 2
    // Predicated region
    $region29: #{pointnet2_ssg_seg_forward.15} parent=5 // pred_check
      %p175 = pneg %p174
    $region30: #{pointnet2_ssg_seg_forward.15} parent=5 // pred_check_branch
      %177 = sbr.rel (%p175) target = $region32
    $region31: #{pointnet2_ssg_seg_forward.15} parent=5 // pred_region
      // Predicated region
      $region33: #{pointnet2_ssg_seg_forward.15} parent=31 // pred_check
        %p178 = pneg %p31
      $region34: #{pointnet2_ssg_seg_forward.15} parent=31 // pred_check_branch
        %180 = sbr.rel (%p178) target = $region36
      $region35: #{pointnet2_ssg_seg_forward.15} parent=31 // pred_region
        %s181 = smul.u32 4, %s11
        %p182 = scmp.lt.s32.totalorder %s181, 7
        %s183 = scalar_select %p182, %s181, 7
        %s184 = smul.addr %s183, 3
        %s185 = smul.addr %s184, 8
        %s186 = scalar_lea.vmem %s0, %s185
        %s187 = smul.u32 4, %s11
      $region36: #{pointnet2_ssg_seg_forward.15} parent=31 // pred_fallthru
        _
    $region32: #{pointnet2_ssg_seg_forward.15} parent=5 // pred_fallthru
      _
    %p188 = scmp.le.s32.totalorder 1, %s11
    %p189 = scmp.lt.s32.totalorder %s11, 3
    %p190 = pnand %p188, %p189
    %p191 = pneg %p190
    // Predicated region
    $region37: #{pointnet2_ssg_seg_forward.15} parent=5 // pred_check
      _
    $region38: #{pointnet2_ssg_seg_forward.15} parent=5 // pred_check_branch
      %193 = sbr.rel (%p190) target = $region40
    $region39: #{pointnet2_ssg_seg_forward.15} parent=5 // pred_region
      %s194 = ssub.s32 %s11, 1
      %s195 = smul.u32 4, %s16
      %p196 = scmp.lt.s32.totalorder %s195, 7
      %s197 = scalar_select %p196, %s195, 7
      %s198 = smul.addr %s197, 3
      %s199 = smul.addr %s198, 8
      %s200 = scalar_lea.vmem %s0, %s199
      %p201 = pneg %p37
      %p202 = pneg %p34
      %p203 = pneg %p58
      %p204 = pneg %p55
      %p205 = pneg %p79
      %p206 = pneg %p76
      %p207 = pneg %p100
      %p208 = pneg %p97
      %p209 = pneg %p121
      %p210 = pneg %p118
      %p211 = pneg %p147
      %p212 = pneg %p144
      %s213 = smul.u32 4, %s16
      %p214 = scmp.lt.s32.totalorder %s213, 7
      %s215 = scalar_select %p214, %s213, 7
      %s216 = smul.addr %s215, 8
      %s217 = scalar_lea.vmem %s5, %s216
      %s218 = smul.u32 4, %s16
      %p219 = scmp.lt.s32.totalorder %s218, 7
      %s220 = scalar_select %p219, %s218, 7
      %s221 = smul.addr %s220, 3
      %s222 = smul.addr %s221, 8
      %s223 = scalar_lea.vmem %s0, %s222
      %s224 = smul.u32 4, %s16
      %s225 = smul.u32 4, %s16
      %p226 = scmp.lt.s32.totalorder %s225, 7
      %s227 = scalar_select %p226, %s225, 7
      %s228 = smul.addr %s227, 8
      %s229 = scalar_lea.vmem %s5, %s228
      %s230 = smul.u32 4, %s16
      %v231 = vld [vmem:[%s223] sm:$0xff]
      %v232 = vld [vmem:[%s223 + $0x8] sm:$0xff]
      %v233 = vld [vmem:[%s223 + $0x10] sm:$0xff]
      %v234 = vld [vmem:[%s223 + $0x18] sm:$0xff]
      %v235 = vld [vmem:[%s223 + $0x20] sm:$0xff]
      %v236 = vld [vmem:[%s223 + $0x28] sm:$0xff]
      %v237 = vld [vmem:[%s223 + $0x30] sm:$0xff]
      %v238 = vld [vmem:[%s223 + $0x38] sm:$0xff]
      %v239 = vld [vmem:[%s223 + $0x40] sm:$0xff]
      %v240 = vld [vmem:[%s223 + $0x48] sm:$0xff]
      %v241 = vld [vmem:[%s223 + $0x50] sm:$0xff]
      %v242 = vld [vmem:[%s223 + $0x58] sm:$0xff]
      %v243 = vld [vmem:[%s1] sm:$0xff]
      %v244 = vld [vmem:[%s1 + $0x8] sm:$0xff]
      %v245 = vld [vmem:[%s1 + $0x10] sm:$0xff]
      %v246 = vld [vmem:[%s1 + $0x18] sm:$0xff]
      %v247 = vld [vmem:[%s1 + $0x20] sm:$0xff]
      %v248 = vld [vmem:[%s1 + $0x28] sm:$0xff]
      %v249 = vld [vmem:[%s1 + $0x30] sm:$0xff]
      %v250 = vld [vmem:[%s1 + $0x38] sm:$0xff]
      %v251 = vld [vmem:[%s1 + $0x40] sm:$0xff]
      %v252 = vld [vmem:[%s1 + $0x48] sm:$0xff]
      %v253 = vld [vmem:[%s1 + $0x50] sm:$0xff]
      %v254 = vld [vmem:[%s1 + $0x58] sm:$0xff]
      %v255 = vld [vmem:[%s1 + $0x60] sm:$0xff]
      %v256 = vld [vmem:[%s1 + $0x68] sm:$0xff]
      %v257 = vld [vmem:[%s1 + $0x70] sm:$0xff]
      %v258 = vld [vmem:[%s1 + $0x78] sm:$0xff]
      %v259 = vld [vmem:[%s1 + $0x80] sm:$0xff]
      %v260 = vld [vmem:[%s1 + $0x88] sm:$0xff]
      %v261 = vld [vmem:[%s1 + $0x90] sm:$0xff]
      %v262 = vld [vmem:[%s1 + $0x98] sm:$0xff]
      %v263 = vld [vmem:[%s1 + $0xa0] sm:$0xff]
      %v264 = vld [vmem:[%s1 + $0xa8] sm:$0xff]
      %v265 = vld [vmem:[%s1 + $0xb0] sm:$0xff]
      %v266 = vld [vmem:[%s1 + $0xb8] sm:$0xff]
      %v267 = vld [vmem:[%s1 + $0xc0] sm:$0xff]
      %v268 = vld [vmem:[%s1 + $0xc8] sm:$0xff]
      %v269 = vld [vmem:[%s1 + $0xd0] sm:$0xff]
      %v270 = vld [vmem:[%s1 + $0xd8] sm:$0xff]
      %v271 = vld [vmem:[%s1 + $0xe0] sm:$0xff]
      %v272 = vld [vmem:[%s1 + $0xe8] sm:$0xff]
      %v273 = vld [vmem:[%s1 + $0xf0] sm:$0xff]
      %v274 = vld [vmem:[%s1 + $0xf8] sm:$0xff]
      %v275 = vld [vmem:[%s1 + $0x100] sm:$0xff]
      %v276 = vld [vmem:[%s1 + $0x108] sm:$0xff]
      %v277 = vld [vmem:[%s1 + $0x110] sm:$0xff]
      %v278 = vld [vmem:[%s1 + $0x118] sm:$0xff]
      %v279 = vld [vmem:[%s1 + $0x120] sm:$0xff]
      %v280 = vld [vmem:[%s1 + $0x128] sm:$0xff]
      %v281 = vld [vmem:[%s1 + $0x130] sm:$0xff]
      %v282 = vld [vmem:[%s1 + $0x138] sm:$0xff]
      %v283 = vld [vmem:[%s1 + $0x140] sm:$0xff]
      %v284 = vld [vmem:[%s1 + $0x148] sm:$0xff]
      %v285 = vld [vmem:[%s1 + $0x150] sm:$0xff]
      %v286 = vld [vmem:[%s1 + $0x158] sm:$0xff]
      %v287 = vld [vmem:[%s1 + $0x160] sm:$0xff]
      %v288 = vld [vmem:[%s1 + $0x168] sm:$0xff]
      %v289 = vld [vmem:[%s1 + $0x170] sm:$0xff]
      %v290 = vld [vmem:[%s1 + $0x178] sm:$0xff]
      %v291 = vld [vmem:[%s1 + $0x180] sm:$0xff]
      %v292 = vld [vmem:[%s1 + $0x188] sm:$0xff]
      %v293 = vld [vmem:[%s1 + $0x190] sm:$0xff]
      %v294 = vld [vmem:[%s1 + $0x198] sm:$0xff]
      %v295 = vld [vmem:[%s1 + $0x1a0] sm:$0xff]
      %v296 = vld [vmem:[%s1 + $0x1a8] sm:$0xff]
      %v297 = vld [vmem:[%s1 + $0x1b0] sm:$0xff]
      %v298 = vld [vmem:[%s1 + $0x1b8] sm:$0xff]
      %v299 = vld [vmem:[%s1 + $0x1c0] sm:$0xff]
      %v300 = vld [vmem:[%s1 + $0x1c8] sm:$0xff]
      %v301 = vld [vmem:[%s1 + $0x1d0] sm:$0xff]
      %v302 = vld [vmem:[%s1 + $0x1d8] sm:$0xff]
      %v303 = vld [vmem:[%s1 + $0x1e0] sm:$0xff]
      %v304 = vld [vmem:[%s1 + $0x1e8] sm:$0xff]
      %v305 = vld [vmem:[%s1 + $0x1f0] sm:$0xff]
      %v306 = vld [vmem:[%s1 + $0x1f8] sm:$0xff]
      %v307 = vld [vmem:[%s1 + $0x200] sm:$0xff]
      %v308 = vld [vmem:[%s1 + $0x208] sm:$0xff]
      %v309 = vld [vmem:[%s1 + $0x210] sm:$0xff]
      %v310 = vld [vmem:[%s1 + $0x218] sm:$0xff]
      %v311 = vld [vmem:[%s1 + $0x220] sm:$0xff]
      %v312 = vld [vmem:[%s1 + $0x228] sm:$0xff]
      %v313 = vld [vmem:[%s1 + $0x230] sm:$0xff]
      %v314 = vld [vmem:[%s1 + $0x238] sm:$0xff]
      %v315 = vld [vmem:[%s1 + $0x240] sm:$0xff]
      %v316 = vld [vmem:[%s1 + $0x248] sm:$0xff]
      %v317 = vld [vmem:[%s1 + $0x250] sm:$0xff]
      %v318 = vld [vmem:[%s1 + $0x258] sm:$0xff]
      %v319 = vld [vmem:[%s1 + $0x260] sm:$0xff]
      %v320 = vld [vmem:[%s1 + $0x268] sm:$0xff]
      %v321 = vld [vmem:[%s1 + $0x270] sm:$0xff]
      %v322 = vld [vmem:[%s1 + $0x278] sm:$0xff]
      %v323 = vld [vmem:[%s3] sm:$0x3]
      %v325 = vperm.slane %v323, 0
      %v326 = vperm.slane %v323, 1
      %vm329 = vcmask 523264
      %v331 = vsel %vm329, %v233, 0
      %v334 = vsel %vm329, %v236, 0
      %v337 = vsel %vm329, %v239, 0
      %v340 = vsel %vm329, %v242, 0
      %342 = vmatpush.msra.mxu0 %v273
      %343 = vmatpush.msra.mxu0 %v271
      %344 = vmatpush.msra.mxu0 %v269
      %345 = vmatpush.msra.mxu0 %v267
      %346 = vmatpush.msra.mxu0 %v265
      %347 = vmatpush.msra.mxu0 %v263
      %348 = vmatpush.msra.mxu0 %v261
      %349 = vmatpush.msra.mxu0 %v259
      %350 = vmatpush.msra.mxu0 %v257
      %351 = vmatpush.msra.mxu0 %v255
      %352 = vmatpush.msra.mxu0 %v253
      %353 = vmatpush.msra.mxu0 %v251
      %354 = vmatpush.msra.mxu0 %v249
      %355 = vmatpush.msra.mxu0 %v247
      %356 = vmatpush.msra.mxu0 %v245
      %357 = vmatpush.msra.mxu0 %v243
      %358 = vmatmul.f32.gmra.mxu0 %v231
      %v359 = vpop.f32.mrf.mxu0
      %v360 = vadd.f32 %v325, %v359
      %361 = vmatmul.f32.gmra.mxu0 %v234
      %v362 = vpop.f32.mrf.mxu0
      %v363 = vadd.f32 %v325, %v362
      %364 = vmatmul.f32.gmra.mxu0 %v237
      %v365 = vpop.f32.mrf.mxu0
      %v366 = vadd.f32 %v325, %v365
      %367 = vmatmul.f32.gmra.mxu0 %v240
      %v368 = vpop.f32.mrf.mxu0
      %v369 = vadd.f32 %v325, %v368
      %370 = vdwg.mxu0
      %371 = vmatpush.msra.mxu0 %v305
      %372 = vmatpush.msra.mxu0 %v303
      %373 = vmatpush.msra.mxu0 %v301
      %374 = vmatpush.msra.mxu0 %v299
      %375 = vmatpush.msra.mxu0 %v297
      %376 = vmatpush.msra.mxu0 %v295
      %377 = vmatpush.msra.mxu0 %v293
      %378 = vmatpush.msra.mxu0 %v291
      %379 = vmatpush.msra.mxu0 %v289
      %380 = vmatpush.msra.mxu0 %v287
      %381 = vmatpush.msra.mxu0 %v285
      %382 = vmatpush.msra.mxu0 %v283
      %383 = vmatpush.msra.mxu0 %v281
      %384 = vmatpush.msra.mxu0 %v279
      %385 = vmatpush.msra.mxu0 %v277
      %386 = vmatpush.msra.mxu0 %v275
      %387 = vmatmul.f32.gmra.mxu0 %v232
      %v388 = vpop.f32.mrf.mxu0
      %v389 = vadd.f32 %v360, %v388
      %390 = vmatmul.f32.gmra.mxu0 %v235
      %v391 = vpop.f32.mrf.mxu0
      %v392 = vadd.f32 %v363, %v391
      %393 = vmatmul.f32.gmra.mxu0 %v238
      %v394 = vpop.f32.mrf.mxu0
      %v395 = vadd.f32 %v366, %v394
      %396 = vmatmul.f32.gmra.mxu0 %v241
      %v397 = vpop.f32.mrf.mxu0
      %v398 = vadd.f32 %v369, %v397
      %399 = vdwg.mxu0
      %400 = vmatpush.msra.mxu0 0.0
      %401 = vmatpush.msra.mxu0 0.0
      %402 = vmatpush.msra.mxu0 0.0
      %403 = vmatpush.msra.mxu0 0.0
      %404 = vmatpush.msra.mxu0 0.0
      %405 = vmatpush.msra.mxu0 0.0
      %406 = vmatpush.msra.mxu0 0.0
      %407 = vmatpush.msra.mxu0 0.0
      %408 = vmatpush.msra.mxu0 %v321
      %409 = vmatpush.msra.mxu0 %v319
      %410 = vmatpush.msra.mxu0 %v317
      %411 = vmatpush.msra.mxu0 %v315
      %412 = vmatpush.msra.mxu0 %v313
      %413 = vmatpush.msra.mxu0 %v311
      %414 = vmatpush.msra.mxu0 %v309
      %415 = vmatpush.msra.mxu0 %v307
      %416 = vmatmul.f32.gmra.mxu0 %v331
      %v417 = vpop.f32.mrf.mxu0
      %v418 = vadd.f32 %v389, %v417
      %419 = vmatmul.f32.gmra.mxu0 %v334
      %v420 = vpop.f32.mrf.mxu0
      %v421 = vadd.f32 %v392, %v420
      %422 = vmatmul.f32.gmra.mxu0 %v337
      %v423 = vpop.f32.mrf.mxu0
      %v424 = vadd.f32 %v395, %v423
      %425 = vmatmul.f32.gmra.mxu0 %v340
      %v426 = vpop.f32.mrf.mxu0
      %v427 = vadd.f32 %v398, %v426
      %428 = vdwg.mxu0
      %429 = vmatpush.msra.mxu0 %v274
      %430 = vmatpush.msra.mxu0 %v272
      %431 = vmatpush.msra.mxu0 %v270
      %432 = vmatpush.msra.mxu0 %v268
      %433 = vmatpush.msra.mxu0 %v266
      %434 = vmatpush.msra.mxu0 %v264
      %435 = vmatpush.msra.mxu0 %v262
      %436 = vmatpush.msra.mxu0 %v260
      %437 = vmatpush.msra.mxu0 %v258
      %438 = vmatpush.msra.mxu0 %v256
      %439 = vmatpush.msra.mxu0 %v254
      %440 = vmatpush.msra.mxu0 %v252
      %441 = vmatpush.msra.mxu0 %v250
      %442 = vmatpush.msra.mxu0 %v248
      %443 = vmatpush.msra.mxu0 %v246
      %444 = vmatpush.msra.mxu0 %v244
      %445 = vmatmul.f32.gmra.mxu0 %v231
      %v446 = vpop.f32.mrf.mxu0
      %v447 = vadd.f32 %v326, %v446
      %448 = vmatmul.f32.gmra.mxu0 %v234
      %v449 = vpop.f32.mrf.mxu0
      %v450 = vadd.f32 %v326, %v449
      %451 = vmatmul.f32.gmra.mxu0 %v237
      %v452 = vpop.f32.mrf.mxu0
      %v453 = vadd.f32 %v326, %v452
      %454 = vmatmul.f32.gmra.mxu0 %v240
      %v455 = vpop.f32.mrf.mxu0
      %v456 = vadd.f32 %v326, %v455
      %457 = vdwg.mxu0
      %458 = vmatpush.msra.mxu0 %v306
      %459 = vmatpush.msra.mxu0 %v304
      %460 = vmatpush.msra.mxu0 %v302
      %461 = vmatpush.msra.mxu0 %v300
      %462 = vmatpush.msra.mxu0 %v298
      %463 = vmatpush.msra.mxu0 %v296
      %464 = vmatpush.msra.mxu0 %v294
      %465 = vmatpush.msra.mxu0 %v292
      %466 = vmatpush.msra.mxu0 %v290
      %467 = vmatpush.msra.mxu0 %v288
      %468 = vmatpush.msra.mxu0 %v286
      %469 = vmatpush.msra.mxu0 %v284
      %470 = vmatpush.msra.mxu0 %v282
      %471 = vmatpush.msra.mxu0 %v280
      %472 = vmatpush.msra.mxu0 %v278
      %473 = vmatpush.msra.mxu0 %v276
      %474 = vmatmul.f32.gmra.mxu0 %v232
      %v475 = vpop.f32.mrf.mxu0
      %v476 = vadd.f32 %v447, %v475
      %477 = vmatmul.f32.gmra.mxu0 %v235
      %v478 = vpop.f32.mrf.mxu0
      %v479 = vadd.f32 %v450, %v478
      %480 = vmatmul.f32.gmra.mxu0 %v238
      %v481 = vpop.f32.mrf.mxu0
      %v482 = vadd.f32 %v453, %v481
      %483 = vmatmul.f32.gmra.mxu0 %v241
      %v484 = vpop.f32.mrf.mxu0
      %v485 = vadd.f32 %v456, %v484
      %486 = vdwg.mxu0
      %487 = vmatpush.msra.mxu0 0.0
      %488 = vmatpush.msra.mxu0 0.0
      %489 = vmatpush.msra.mxu0 0.0
      %490 = vmatpush.msra.mxu0 0.0
      %491 = vmatpush.msra.mxu0 0.0
      %492 = vmatpush.msra.mxu0 0.0
      %493 = vmatpush.msra.mxu0 0.0
      %494 = vmatpush.msra.mxu0 0.0
      %495 = vmatpush.msra.mxu0 %v322
      %496 = vmatpush.msra.mxu0 %v320
      %497 = vmatpush.msra.mxu0 %v318
      %498 = vmatpush.msra.mxu0 %v316
      %499 = vmatpush.msra.mxu0 %v314
      %500 = vmatpush.msra.mxu0 %v312
      %501 = vmatpush.msra.mxu0 %v310
      %502 = vmatpush.msra.mxu0 %v308
      %503 = vmatmul.f32.gmra.mxu0 %v331
      %v504 = vpop.f32.mrf.mxu0
      %v505 = vadd.f32 %v476, %v504
      %506 = vmatmul.f32.gmra.mxu0 %v334
      %v507 = vpop.f32.mrf.mxu0
      %v508 = vadd.f32 %v479, %v507
      %509 = vmatmul.f32.gmra.mxu0 %v337
      %v510 = vpop.f32.mrf.mxu0
      %v511 = vadd.f32 %v482, %v510
      %512 = vmatmul.f32.gmra.mxu0 %v340
      %v513 = vpop.f32.mrf.mxu0
      %v514 = vadd.f32 %v485, %v513
      %515 = vdwg.mxu0
      %v516 = vmax.f32 %v418, 0.0
      %v517 = vmax.f32 %v505, 0.0
      %v518 = vmax.f32 %v421, 0.0
      %v519 = vmax.f32 %v508, 0.0
      %v520 = vmax.f32 %v424, 0.0
      %v521 = vmax.f32 %v511, 0.0
      %v522 = vmax.f32 %v427, 0.0
      %v523 = vmax.f32 %v514, 0.0
      %v524 = vld [vmem:[%s2] sm:$0xff]
      %v525 = vld [vmem:[%s2 + $0x8] sm:$0xff]
      %v526 = vld [vmem:[%s2 + $0x10] sm:$0xff]
      %v527 = vld [vmem:[%s2 + $0x18] sm:$0xff]
      %v528 = vld [vmem:[%s2 + $0x20] sm:$0xff]
      %v529 = vld [vmem:[%s2 + $0x28] sm:$0xff]
      %v530 = vld [vmem:[%s2 + $0x30] sm:$0xff]
      %v531 = vld [vmem:[%s2 + $0x38] sm:$0xff]
      %v532 = vld [vmem:[%s2 + $0x40] sm:$0xff]
      %v533 = vld [vmem:[%s2 + $0x48] sm:$0xff]
      %v534 = vld [vmem:[%s2 + $0x50] sm:$0xff]
      %v535 = vld [vmem:[%s2 + $0x58] sm:$0xff]
      %v536 = vld [vmem:[%s2 + $0x60] sm:$0xff]
      %v537 = vld [vmem:[%s2 + $0x68] sm:$0xff]
      %v538 = vld [vmem:[%s2 + $0x70] sm:$0xff]
      %v539 = vld [vmem:[%s2 + $0x78] sm:$0xff]
      %v540 = vld [vmem:[%s2 + $0x80] sm:$0xff]
      %v541 = vld [vmem:[%s2 + $0x88] sm:$0xff]
      %v542 = vld [vmem:[%s2 + $0x90] sm:$0xff]
      %v543 = vld [vmem:[%s2 + $0x98] sm:$0xff]
      %v544 = vld [vmem:[%s2 + $0xa0] sm:$0xff]
      %v545 = vld [vmem:[%s2 + $0xa8] sm:$0xff]
      %v546 = vld [vmem:[%s2 + $0xb0] sm:$0xff]
      %v547 = vld [vmem:[%s2 + $0xb8] sm:$0xff]
      %v548 = vld [vmem:[%s2 + $0xc0] sm:$0xff]
      %v549 = vld [vmem:[%s2 + $0xc8] sm:$0xff]
      %v550 = vld [vmem:[%s2 + $0xd0] sm:$0xff]
      %v551 = vld [vmem:[%s2 + $0xd8] sm:$0xff]
      %v552 = vld [vmem:[%s2 + $0xe0] sm:$0xff]
      %v553 = vld [vmem:[%s2 + $0xe8] sm:$0xff]
      %v554 = vld [vmem:[%s2 + $0xf0] sm:$0xff]
      %v555 = vld [vmem:[%s2 + $0xf8] sm:$0xff]
      %v556 = vld [vmem:[%s4] sm:$0x1]
      %v558 = vperm.slane %v556, 0
      %560 = vmatpush.msra.mxu0 %v539
      %561 = vmatpush.msra.mxu0 %v538
      %562 = vmatpush.msra.mxu0 %v537
      %563 = vmatpush.msra.mxu0 %v536
      %564 = vmatpush.msra.mxu0 %v535
      %565 = vmatpush.msra.mxu0 %v534
      %566 = vmatpush.msra.mxu0 %v533
      %567 = vmatpush.msra.mxu0 %v532
      %568 = vmatpush.msra.mxu0 %v531
      %569 = vmatpush.msra.mxu0 %v530
      %570 = vmatpush.msra.mxu0 %v529
      %571 = vmatpush.msra.mxu0 %v528
      %572 = vmatpush.msra.mxu0 %v527
      %573 = vmatpush.msra.mxu0 %v526
      %574 = vmatpush.msra.mxu0 %v525
      %575 = vmatpush.msra.mxu0 %v524
      %576 = vmatmul.f32.gmra.mxu0 %v516
      %v577 = vpop.f32.mrf.mxu0
      %v578 = vadd.f32 %v558, %v577
      %579 = vmatmul.f32.gmra.mxu0 %v518
      %v580 = vpop.f32.mrf.mxu0
      %v581 = vadd.f32 %v558, %v580
      %582 = vmatmul.f32.gmra.mxu0 %v520
      %v583 = vpop.f32.mrf.mxu0
      %v584 = vadd.f32 %v558, %v583
      %585 = vmatmul.f32.gmra.mxu0 %v522
      %v586 = vpop.f32.mrf.mxu0
      %v587 = vadd.f32 %v558, %v586
      %588 = vdwg.mxu0
      %589 = vmatpush.msra.mxu0 %v555
      %590 = vmatpush.msra.mxu0 %v554
      %591 = vmatpush.msra.mxu0 %v553
      %592 = vmatpush.msra.mxu0 %v552
      %593 = vmatpush.msra.mxu0 %v551
      %594 = vmatpush.msra.mxu0 %v550
      %595 = vmatpush.msra.mxu0 %v549
      %596 = vmatpush.msra.mxu0 %v548
      %597 = vmatpush.msra.mxu0 %v547
      %598 = vmatpush.msra.mxu0 %v546
      %599 = vmatpush.msra.mxu0 %v545
      %600 = vmatpush.msra.mxu0 %v544
      %601 = vmatpush.msra.mxu0 %v543
      %602 = vmatpush.msra.mxu0 %v542
      %603 = vmatpush.msra.mxu0 %v541
      %604 = vmatpush.msra.mxu0 %v540
      %605 = vmatmul.f32.gmra.mxu0 %v517
      %v606 = vpop.f32.mrf.mxu0
      %v607 = vadd.f32 %v578, %v606
      %608 = vmatmul.f32.gmra.mxu0 %v519
      %v609 = vpop.f32.mrf.mxu0
      %v610 = vadd.f32 %v581, %v609
      %611 = vmatmul.f32.gmra.mxu0 %v521
      %v612 = vpop.f32.mrf.mxu0
      %v613 = vadd.f32 %v584, %v612
      %614 = vmatmul.f32.gmra.mxu0 %v523
      %v615 = vpop.f32.mrf.mxu0
      %v616 = vadd.f32 %v587, %v615
      %617 = vdwg.mxu0
      %v618 = vmax.f32 %v607, 0.0
      %v619 = vmax.f32 %v610, 0.0
      %v620 = vmax.f32 %v613, 0.0
      %v621 = vmax.f32 %v616, 0.0
      %622 = vst [vmem:[%s229] sm:$0xff] %v618
      %623 = vst [vmem:[%s229 + $0x8] sm:$0xff] %v619
      %624 = vst [vmem:[%s229 + $0x10] sm:$0xff] %v620
      %625 = vst [vmem:[%s229 + $0x18] sm:$0xff] %v621
      %s626 = smul.u32 4, %s16
      %p627 = scmp.lt.s32.totalorder %s626, 7
      %s628 = scalar_select %p627, %s626, 7
      %s629 = smul.addr %s628, 8
      %s630 = scalar_lea.vmem %s5, %s629
      // Predicated region
      $region41: #{pointnet2_ssg_seg_forward.15} parent=39 // pred_check
        %p631 = pneg %p144
      $region42: #{pointnet2_ssg_seg_forward.15} parent=39 // pred_check_branch
        %633 = sbr.rel (%p631) target = $region44
      $region43: #{pointnet2_ssg_seg_forward.15} parent=39 // pred_region
        %s634 = smul.u32 4, %s16
      $region44: #{pointnet2_ssg_seg_forward.15} parent=39 // pred_fallthru
        _
    $region40: #{pointnet2_ssg_seg_forward.15} parent=5 // pred_fallthru
      _
    %p635 = scmp.le.s32.totalorder 2, %s11
    // Predicated region
    $region45: #{pointnet2_ssg_seg_forward.15} parent=5 // pred_check
      %p636 = pneg %p635
    $region46: #{pointnet2_ssg_seg_forward.15} parent=5 // pred_check_branch
      %638 = sbr.rel (%p636) target = $region48
    $region47: #{pointnet2_ssg_seg_forward.15} parent=5 // pred_region
      %s639 = ssub.s32 %s11, 2
      // Predicated region
      $region49: #{pointnet2_ssg_seg_forward.15} parent=47 // pred_check
        %p640 = pneg %p150
      $region50: #{pointnet2_ssg_seg_forward.15} parent=47 // pred_check_branch
        %642 = sbr.rel (%p640) target = $region52
      $region51: #{pointnet2_ssg_seg_forward.15} parent=47 // pred_region
        %s643 = smul.u32 4, %s17
        %p644 = scmp.lt.s32.totalorder %s643, 7
        %s645 = scalar_select %p644, %s643, 7
        %s646 = smul.addr %s645, 8
        %s647 = scalar_lea.vmem %s5, %s646
      $region52: #{pointnet2_ssg_seg_forward.15} parent=47 // pred_fallthru
        _
    $region48: #{pointnet2_ssg_seg_forward.15} parent=5 // pred_fallthru
      _
  $region6: #{pointnet2_ssg_seg_forward.15} parent=0 // loop_footer
    %s15 = sadd.s32 1, %s11
  $region7: #{pointnet2_ssg_seg_forward.15} parent=0 // loop_footer_branch
    %10 = sbr.rel target = $region3
  $region8: #{pointnet2_ssg_seg_forward.15} parent=0 // loop_exit
    _

// kernel: pointnet2_ssg_seg_forward.16
$region0: #{pointnet2_ssg_seg_forward.16}
  #allocation0 [shape = 'u32[]', space=smem, size = 0x4, offset = 0x4, fixed_abs, tag = 'smem constant byte address 0x4 - core index']
  #allocation1 [shape = 'u32[72,128]{1,0:T(1,128)}', space=vmem, size = 0x9000, scoped, tag = 'internal scratch']
  %s0 = inlined_call_operand.vmem [shape: f32[128,131], index: 0, kind: input, shape index: {}]
  %s1 = inlined_call_operand.vmem [shape: f32[131,128], index: 1, kind: input, shape index: {}]
  %s2 = inlined_call_operand.vmem [shape: f32[128,128], index: 2, kind: input, shape index: {}]
  %s3 = inlined_call_operand.vmem [shape: f32[128,128], index: 3, kind: input, shape index: {}]
  %s4 = inlined_call_operand.vmem [shape: f32[1,128], index: 4, kind: input, shape index: {}]
  %s5 = inlined_call_operand.vmem [shape: f32[1,128], index: 5, kind: input, shape index: {}]
  %s6 = inlined_call_operand.vmem [shape: f32[1,128], index: 6, kind: input, shape index: {}]
  %s7 = inlined_call_operand.vmem [shape: f32[128,128], index: 7, kind: output, shape index: {}]
  %s8 = sld [smem:[#allocation0]]
  $region61: #{pointnet2_ssg_seg_forward.16} parent=0
    _
  %s10 = ssub.s32 1, %s8
  %s11 = scalar_select 0, %s10, %s8
  loop: start=0, step=1, limit=4
  $region2: #{pointnet2_ssg_seg_forward.16} parent=0 // loop_pre_header
    _
  $region3: #{pointnet2_ssg_seg_forward.16} parent=0 // loop_header
    %s13 = sphi 0, %s17
    %p14 = scmp.ge.s32.totalorder %s13, 4
    %s23 = sphi 0, %s25
    %s26 = sphi 0, %s23
    %s27 = sphi 0, %s26
    %s43 = sphi 0, %s27
    %s47 = sphi 0, %s47
    %s49 = sphi 0, %s47
    %s50 = sphi 0, %s49
    %s64 = sphi 0, %s50
    %s68 = sphi 0, %s68
    %s70 = sphi 0, %s68
    %s71 = sphi 0, %s70
    %s85 = sphi 0, %s71
    %s89 = sphi 0, %s89
    %s91 = sphi 0, %s89
    %s92 = sphi 0, %s91
    %s106 = sphi 0, %s92
    %s110 = sphi 0, %s110
    %s112 = sphi 0, %s110
    %s113 = sphi 0, %s112
    %s127 = sphi 0, %s113
    %s131 = sphi 0, %s131
    %s133 = sphi 0, %s131
    %s134 = sphi 0, %s133
    %s148 = sphi 0, %s134
    %s152 = sphi 0, %s152
    %s154 = sphi 0, %s152
    %s155 = sphi 0, %s154
    %s169 = sphi 0, %s155
    %s175 = sphi 0, %s177
    %s178 = sphi 0, %s175
    %s179 = sphi 0, %s178
    %s195 = sphi 0, %s179
  $region4: #{pointnet2_ssg_seg_forward.16} parent=0 // loop_header_branch
    %16 = sbr.rel (%p14) target = $region8
  $region5: #{pointnet2_ssg_seg_forward.16} parent=0 // loop_body
    %s18 = ssub.s32 %s13, 1
    %s19 = ssub.s32 %s13, 2
    %s20 = sadd.s32 %s13, 1
    %s21 = ssub.s32 %s13, %s20
    %p22 = scmp.eq.s32.totalorder %s21, 0
    %s24 = sadd.s32 %s23, 1
    %s25 = scalar_select %p22, %s23, %s24
    %p28 = pneg %p22
    %p29 = scmp.eq.s32.totalorder %s13, 1
    %p30 = por %p28, %p29
    %p31 = scmp.ne.s32.totalorder %s23, %s26
    %p32 = scmp.eq.s32.totalorder %s13, 0
    %p33 = por %p31, %p32
    %p34 = scmp.ne.s32.totalorder %s23, %s26
    %p35 = scmp.eq.s32.totalorder %s18, 1
    %p36 = por %p34, %p35
    %p37 = scmp.ne.s32.totalorder %s26, %s27
    %p38 = scmp.eq.s32.totalorder %s18, 0
    %p39 = por %p37, %p38
    %p40 = scmp.ne.s32.totalorder %s26, %s27
    %p41 = scmp.eq.s32.totalorder %s19, 1
    %p42 = por %p40, %p41
    %p44 = scmp.ne.s32.totalorder %s27, %s43
    %p45 = scmp.eq.s32.totalorder %s19, 0
    %p46 = por %p44, %p45
    %s48 = sadd.s32 %s47, 1
    %p51 = scmp.eq.s32.totalorder %s13, 1
    %p52 = scmp.ne.s32.totalorder %s47, %s49
    %p53 = scmp.eq.s32.totalorder %s13, 0
    %p54 = por %p52, %p53
    %p55 = scmp.ne.s32.totalorder %s47, %s49
    %p56 = scmp.eq.s32.totalorder %s18, 1
    %p57 = por %p55, %p56
    %p58 = scmp.ne.s32.totalorder %s49, %s50
    %p59 = scmp.eq.s32.totalorder %s18, 0
    %p60 = por %p58, %p59
    %p61 = scmp.ne.s32.totalorder %s49, %s50
    %p62 = scmp.eq.s32.totalorder %s19, 1
    %p63 = por %p61, %p62
    %p65 = scmp.ne.s32.totalorder %s50, %s64
    %p66 = scmp.eq.s32.totalorder %s19, 0
    %p67 = por %p65, %p66
    %s69 = sadd.s32 %s68, 1
    %p72 = scmp.eq.s32.totalorder %s13, 1
    %p73 = scmp.ne.s32.totalorder %s68, %s70
    %p74 = scmp.eq.s32.totalorder %s13, 0
    %p75 = por %p73, %p74
    %p76 = scmp.ne.s32.totalorder %s68, %s70
    %p77 = scmp.eq.s32.totalorder %s18, 1
    %p78 = por %p76, %p77
    %p79 = scmp.ne.s32.totalorder %s70, %s71
    %p80 = scmp.eq.s32.totalorder %s18, 0
    %p81 = por %p79, %p80
    %p82 = scmp.ne.s32.totalorder %s70, %s71
    %p83 = scmp.eq.s32.totalorder %s19, 1
    %p84 = por %p82, %p83
    %p86 = scmp.ne.s32.totalorder %s71, %s85
    %p87 = scmp.eq.s32.totalorder %s19, 0
    %p88 = por %p86, %p87
    %s90 = sadd.s32 %s89, 1
    %p93 = scmp.eq.s32.totalorder %s13, 1
    %p94 = scmp.ne.s32.totalorder %s89, %s91
    %p95 = scmp.eq.s32.totalorder %s13, 0
    %p96 = por %p94, %p95
    %p97 = scmp.ne.s32.totalorder %s89, %s91
    %p98 = scmp.eq.s32.totalorder %s18, 1
    %p99 = por %p97, %p98
    %p100 = scmp.ne.s32.totalorder %s91, %s92
    %p101 = scmp.eq.s32.totalorder %s18, 0
    %p102 = por %p100, %p101
    %p103 = scmp.ne.s32.totalorder %s91, %s92
    %p104 = scmp.eq.s32.totalorder %s19, 1
    %p105 = por %p103, %p104
    %p107 = scmp.ne.s32.totalorder %s92, %s106
    %p108 = scmp.eq.s32.totalorder %s19, 0
    %p109 = por %p107, %p108
    %s111 = sadd.s32 %s110, 1
    %p114 = scmp.eq.s32.totalorder %s13, 1
    %p115 = scmp.ne.s32.totalorder %s110, %s112
    %p116 = scmp.eq.s32.totalorder %s13, 0
    %p117 = por %p115, %p116
    %p118 = scmp.ne.s32.totalorder %s110, %s112
    %p119 = scmp.eq.s32.totalorder %s18, 1
    %p120 = por %p118, %p119
    %p121 = scmp.ne.s32.totalorder %s112, %s113
    %p122 = scmp.eq.s32.totalorder %s18, 0
    %p123 = por %p121, %p122
    %p124 = scmp.ne.s32.totalorder %s112, %s113
    %p125 = scmp.eq.s32.totalorder %s19, 1
    %p126 = por %p124, %p125
    %p128 = scmp.ne.s32.totalorder %s113, %s127
    %p129 = scmp.eq.s32.totalorder %s19, 0
    %p130 = por %p128, %p129
    %s132 = sadd.s32 %s131, 1
    %p135 = scmp.eq.s32.totalorder %s13, 1
    %p136 = scmp.ne.s32.totalorder %s131, %s133
    %p137 = scmp.eq.s32.totalorder %s13, 0
    %p138 = por %p136, %p137
    %p139 = scmp.ne.s32.totalorder %s131, %s133
    %p140 = scmp.eq.s32.totalorder %s18, 1
    %p141 = por %p139, %p140
    %p142 = scmp.ne.s32.totalorder %s133, %s134
    %p143 = scmp.eq.s32.totalorder %s18, 0
    %p144 = por %p142, %p143
    %p145 = scmp.ne.s32.totalorder %s133, %s134
    %p146 = scmp.eq.s32.totalorder %s19, 1
    %p147 = por %p145, %p146
    %p149 = scmp.ne.s32.totalorder %s134, %s148
    %p150 = scmp.eq.s32.totalorder %s19, 0
    %p151 = por %p149, %p150
    %s153 = sadd.s32 %s152, 1
    %p156 = scmp.eq.s32.totalorder %s13, 1
    %p157 = scmp.ne.s32.totalorder %s152, %s154
    %p158 = scmp.eq.s32.totalorder %s13, 0
    %p159 = por %p157, %p158
    %p160 = scmp.ne.s32.totalorder %s152, %s154
    %p161 = scmp.eq.s32.totalorder %s18, 1
    %p162 = por %p160, %p161
    %p163 = scmp.ne.s32.totalorder %s154, %s155
    %p164 = scmp.eq.s32.totalorder %s18, 0
    %p165 = por %p163, %p164
    %p166 = scmp.ne.s32.totalorder %s154, %s155
    %p167 = scmp.eq.s32.totalorder %s19, 1
    %p168 = por %p166, %p167
    %p170 = scmp.ne.s32.totalorder %s155, %s169
    %p171 = scmp.eq.s32.totalorder %s19, 0
    %p172 = por %p170, %p171
    %s173 = ssub.s32 %s13, %s20
    %p174 = scmp.eq.s32.totalorder %s173, 0
    %s176 = sadd.s32 %s175, 1
    %s177 = scalar_select %p174, %s175, %s176
    %p180 = pneg %p174
    %p181 = scmp.eq.s32.totalorder %s13, 1
    %p182 = por %p180, %p181
    %p183 = scmp.ne.s32.totalorder %s175, %s178
    %p184 = scmp.eq.s32.totalorder %s13, 0
    %p185 = por %p183, %p184
    %p186 = scmp.ne.s32.totalorder %s175, %s178
    %p187 = scmp.eq.s32.totalorder %s18, 1
    %p188 = por %p186, %p187
    %p189 = scmp.ne.s32.totalorder %s178, %s179
    %p190 = scmp.eq.s32.totalorder %s18, 0
    %p191 = por %p189, %p190
    %p192 = scmp.ne.s32.totalorder %s178, %s179
    %p193 = scmp.eq.s32.totalorder %s19, 1
    %p194 = por %p192, %p193
    %p196 = scmp.ne.s32.totalorder %s179, %s195
    %p197 = scmp.eq.s32.totalorder %s19, 0
    %p198 = por %p196, %p197
    %p199 = scmp.le.s32.totalorder 1, %s13
    %p200 = scmp.lt.s32.totalorder %s13, 3
    %p201 = pnand %p199, %p200
    %p202 = pneg %p201
    // Predicated region
    $region9: #{pointnet2_ssg_seg_forward.16} parent=5 // pred_check
      _
    $region10: #{pointnet2_ssg_seg_forward.16} parent=5 // pred_check_branch
      %204 = sbr.rel (%p201) target = $region12
    $region11: #{pointnet2_ssg_seg_forward.16} parent=5 // pred_region
      %s205 = ssub.s32 %s13, 1
      // Predicated region
      $region13: #{pointnet2_ssg_seg_forward.16} parent=11 // pred_check
        %p206 = pneg %p60
      $region14: #{pointnet2_ssg_seg_forward.16} parent=11 // pred_check_branch
        %208 = sbr.rel (%p206) target = $region16
      $region15: #{pointnet2_ssg_seg_forward.16} parent=11 // pred_region
        _
      $region16: #{pointnet2_ssg_seg_forward.16} parent=11 // pred_fallthru
        _
      // Predicated region
      $region17: #{pointnet2_ssg_seg_forward.16} parent=11 // pred_check
        %p209 = pneg %p81
      $region18: #{pointnet2_ssg_seg_forward.16} parent=11 // pred_check_branch
        %211 = sbr.rel (%p209) target = $region20
      $region19: #{pointnet2_ssg_seg_forward.16} parent=11 // pred_region
        _
      $region20: #{pointnet2_ssg_seg_forward.16} parent=11 // pred_fallthru
        _
      // Predicated region
      $region21: #{pointnet2_ssg_seg_forward.16} parent=11 // pred_check
        %p212 = pneg %p102
      $region22: #{pointnet2_ssg_seg_forward.16} parent=11 // pred_check_branch
        %214 = sbr.rel (%p212) target = $region24
      $region23: #{pointnet2_ssg_seg_forward.16} parent=11 // pred_region
        _
      $region24: #{pointnet2_ssg_seg_forward.16} parent=11 // pred_fallthru
        _
      // Predicated region
      $region25: #{pointnet2_ssg_seg_forward.16} parent=11 // pred_check
        %p215 = pneg %p123
      $region26: #{pointnet2_ssg_seg_forward.16} parent=11 // pred_check_branch
        %217 = sbr.rel (%p215) target = $region28
      $region27: #{pointnet2_ssg_seg_forward.16} parent=11 // pred_region
        _
      $region28: #{pointnet2_ssg_seg_forward.16} parent=11 // pred_fallthru
        _
      // Predicated region
      $region29: #{pointnet2_ssg_seg_forward.16} parent=11 // pred_check
        %p218 = pneg %p144
      $region30: #{pointnet2_ssg_seg_forward.16} parent=11 // pred_check_branch
        %220 = sbr.rel (%p218) target = $region32
      $region31: #{pointnet2_ssg_seg_forward.16} parent=11 // pred_region
        _
      $region32: #{pointnet2_ssg_seg_forward.16} parent=11 // pred_fallthru
        _
      // Predicated region
      $region33: #{pointnet2_ssg_seg_forward.16} parent=11 // pred_check
        %p221 = pneg %p165
      $region34: #{pointnet2_ssg_seg_forward.16} parent=11 // pred_check_branch
        %223 = sbr.rel (%p221) target = $region36
      $region35: #{pointnet2_ssg_seg_forward.16} parent=11 // pred_region
        _
      $region36: #{pointnet2_ssg_seg_forward.16} parent=11 // pred_fallthru
        _
    $region12: #{pointnet2_ssg_seg_forward.16} parent=5 // pred_fallthru
      _
    %p224 = scmp.lt.s32.totalorder %s13, 2
    // Predicated region
    $region37: #{pointnet2_ssg_seg_forward.16} parent=5 // pred_check
      %p225 = pneg %p224
    $region38: #{pointnet2_ssg_seg_forward.16} parent=5 // pred_check_branch
      %227 = sbr.rel (%p225) target = $region40
    $region39: #{pointnet2_ssg_seg_forward.16} parent=5 // pred_region
      // Predicated region
      $region41: #{pointnet2_ssg_seg_forward.16} parent=39 // pred_check
        %p228 = pneg %p33
      $region42: #{pointnet2_ssg_seg_forward.16} parent=39 // pred_check_branch
        %230 = sbr.rel (%p228) target = $region44
      $region43: #{pointnet2_ssg_seg_forward.16} parent=39 // pred_region
        %s231 = smul.u32 8, %s13
        %p232 = scmp.lt.s32.totalorder %s231, 15
        %s233 = scalar_select %p232, %s231, 15
        %s234 = smul.addr %s233, 2
        %s235 = smul.addr %s234, 8
        %s236 = scalar_lea.vmem %s0, %s235
        %s237 = smul.u32 8, %s13
      $region44: #{pointnet2_ssg_seg_forward.16} parent=39 // pred_fallthru
        _
    $region40: #{pointnet2_ssg_seg_forward.16} parent=5 // pred_fallthru
      _
    %p238 = scmp.le.s32.totalorder 1, %s13
    %p239 = scmp.lt.s32.totalorder %s13, 3
    %p240 = pnand %p238, %p239
    %p241 = pneg %p240
    // Predicated region
    $region45: #{pointnet2_ssg_seg_forward.16} parent=5 // pred_check
      _
    $region46: #{pointnet2_ssg_seg_forward.16} parent=5 // pred_check_branch
      %243 = sbr.rel (%p240) target = $region48
    $region47: #{pointnet2_ssg_seg_forward.16} parent=5 // pred_region
      %s244 = ssub.s32 %s13, 1
      %s245 = smul.u32 8, %s18
      %p246 = scmp.lt.s32.totalorder %s245, 15
      %s247 = scalar_select %p246, %s245, 15
      %s248 = smul.addr %s247, 2
      %s249 = smul.addr %s248, 8
      %s250 = scalar_lea.vmem %s0, %s249
      %p251 = pneg %p39
      %p252 = pneg %p36
      %p253 = pneg %p60
      %p254 = pneg %p57
      %p255 = pneg %p81
      %p256 = pneg %p78
      %p257 = pneg %p102
      %p258 = pneg %p99
      %p259 = pneg %p123
      %p260 = pneg %p120
      %p261 = pneg %p144
      %p262 = pneg %p141
      %p263 = pneg %p165
      %p264 = pneg %p162
      %p265 = pneg %p191
      %p266 = pneg %p188
      %s267 = smul.u32 8, %s18
      %p268 = scmp.lt.s32.totalorder %s267, 15
      %s269 = scalar_select %p268, %s267, 15
      %s270 = smul.addr %s269, 8
      %s271 = scalar_lea.vmem %s7, %s270
      %s272 = smul.u32 8, %s18
      %p273 = scmp.lt.s32.totalorder %s272, 15
      %s274 = scalar_select %p273, %s272, 15
      %s275 = smul.addr %s274, 2
      %s276 = smul.addr %s275, 8
      %s277 = scalar_lea.vmem %s0, %s276
      %s278 = smul.u32 8, %s18
      %s279 = smul.u32 8, %s18
      %p280 = scmp.lt.s32.totalorder %s279, 15
      %s281 = scalar_select %p280, %s279, 15
      %s282 = smul.addr %s281, 8
      %s283 = scalar_lea.vmem %s7, %s282
      %s284 = smul.u32 8, %s18
      %v285 = vld [vmem:[%s277] sm:$0xff]
      %v286 = vld [vmem:[%s277 + $0x8] sm:$0xff]
      %v287 = vld [vmem:[%s277 + $0x10] sm:$0xff]
      %v288 = vld [vmem:[%s277 + $0x18] sm:$0xff]
      %v289 = vld [vmem:[%s277 + $0x20] sm:$0xff]
      %v290 = vld [vmem:[%s277 + $0x28] sm:$0xff]
      %v291 = vld [vmem:[%s277 + $0x30] sm:$0xff]
      %v292 = vld [vmem:[%s277 + $0x38] sm:$0xff]
      %v293 = vld [vmem:[%s277 + $0x40] sm:$0xff]
      %v294 = vld [vmem:[%s277 + $0x48] sm:$0xff]
      %v295 = vld [vmem:[%s277 + $0x50] sm:$0xff]
      %v296 = vld [vmem:[%s277 + $0x58] sm:$0xff]
      %v297 = vld [vmem:[%s277 + $0x60] sm:$0xff]
      %v298 = vld [vmem:[%s277 + $0x68] sm:$0xff]
      %v299 = vld [vmem:[%s277 + $0x70] sm:$0xff]
      %v300 = vld [vmem:[%s277 + $0x78] sm:$0xff]
      %v301 = vld [vmem:[%s1] sm:$0xff]
      %v302 = vld [vmem:[%s1 + $0x8] sm:$0xff]
      %v303 = vld [vmem:[%s1 + $0x10] sm:$0xff]
      %v304 = vld [vmem:[%s1 + $0x18] sm:$0xff]
      %v305 = vld [vmem:[%s1 + $0x20] sm:$0xff]
      %v306 = vld [vmem:[%s1 + $0x28] sm:$0xff]
      %v307 = vld [vmem:[%s1 + $0x30] sm:$0xff]
      %v308 = vld [vmem:[%s1 + $0x38] sm:$0xff]
      %v309 = vld [vmem:[%s1 + $0x40] sm:$0xff]
      %v310 = vld [vmem:[%s1 + $0x48] sm:$0xff]
      %v311 = vld [vmem:[%s1 + $0x50] sm:$0xff]
      %v312 = vld [vmem:[%s1 + $0x58] sm:$0xff]
      %v313 = vld [vmem:[%s1 + $0x60] sm:$0xff]
      %v314 = vld [vmem:[%s1 + $0x68] sm:$0xff]
      %v315 = vld [vmem:[%s1 + $0x70] sm:$0xff]
      %v316 = vld [vmem:[%s1 + $0x78] sm:$0xff]
      %v317 = vld [vmem:[%s1 + $0x80] sm:$0x7]
      %v318 = vld [vmem:[%s4] sm:$0x1]
      %v320 = vperm.slane %v318, 0
      %vm322 = vcmask 23552
      %v324 = vsel %vm322, %v286, 0
      %v327 = vsel %vm322, %v288, 0
      %v330 = vsel %vm322, %v290, 0
      %v333 = vsel %vm322, %v292, 0
      %v336 = vsel %vm322, %v294, 0
      %v339 = vsel %vm322, %v296, 0
      %v342 = vsel %vm322, %v298, 0
      %v345 = vsel %vm322, %v300, 0
      %vm347 = vcmask 1042432
      %v349 = vsel %vm347, %v317, 0
      %351 = vmatpush.msra.mxu0 %v316
      %352 = vmatpush.msra.mxu0 %v315
      %353 = vmatpush.msra.mxu0 %v314
      %354 = vmatpush.msra.mxu0 %v313
      %355 = vmatpush.msra.mxu0 %v312
      %356 = vmatpush.msra.mxu0 %v311
      %357 = vmatpush.msra.mxu0 %v310
      %358 = vmatpush.msra.mxu0 %v309
      %359 = vmatpush.msra.mxu0 %v308
      %360 = vmatpush.msra.mxu0 %v307
      %361 = vmatpush.msra.mxu0 %v306
      %362 = vmatpush.msra.mxu0 %v305
      %363 = vmatpush.msra.mxu0 %v304
      %364 = vmatpush.msra.mxu0 %v303
      %365 = vmatpush.msra.mxu0 %v302
      %366 = vmatpush.msra.mxu0 %v301
      %367 = vmatmul.f32.gmra.mxu0 %v285
      %v368 = vpop.f32.mrf.mxu0
      %v369 = vadd.f32 %v320, %v368
      %370 = vmatmul.f32.gmra.mxu0 %v287
      %v371 = vpop.f32.mrf.mxu0
      %v372 = vadd.f32 %v320, %v371
      %373 = vmatmul.f32.gmra.mxu0 %v289
      %v374 = vpop.f32.mrf.mxu0
      %v375 = vadd.f32 %v320, %v374
      %376 = vmatmul.f32.gmra.mxu0 %v291
      %v377 = vpop.f32.mrf.mxu0
      %v378 = vadd.f32 %v320, %v377
      %379 = vmatmul.f32.gmra.mxu0 %v293
      %v380 = vpop.f32.mrf.mxu0
      %v381 = vadd.f32 %v320, %v380
      %382 = vmatmul.f32.gmra.mxu0 %v295
      %v383 = vpop.f32.mrf.mxu0
      %v384 = vadd.f32 %v320, %v383
      %385 = vmatmul.f32.gmra.mxu0 %v297
      %v386 = vpop.f32.mrf.mxu0
      %v387 = vadd.f32 %v320, %v386
      %388 = vmatmul.f32.gmra.mxu0 %v299
      %v389 = vpop.f32.mrf.mxu0
      %v390 = vadd.f32 %v320, %v389
      %391 = vdwg.mxu0
      %392 = vmatpush.msra.mxu0 0.0
      %393 = vmatpush.msra.mxu0 0.0
      %394 = vmatpush.msra.mxu0 0.0
      %395 = vmatpush.msra.mxu0 0.0
      %396 = vmatpush.msra.mxu0 0.0
      %397 = vmatpush.msra.mxu0 0.0
      %398 = vmatpush.msra.mxu0 0.0
      %399 = vmatpush.msra.mxu0 0.0
      %400 = vmatpush.msra.mxu0 0.0
      %401 = vmatpush.msra.mxu0 0.0
      %402 = vmatpush.msra.mxu0 0.0
      %403 = vmatpush.msra.mxu0 0.0
      %404 = vmatpush.msra.mxu0 0.0
      %405 = vmatpush.msra.mxu0 0.0
      %406 = vmatpush.msra.mxu0 0.0
      %407 = vmatpush.msra.mxu0 %v349
      %408 = vmatmul.f32.gmra.mxu0 %v324
      %v409 = vpop.f32.mrf.mxu0
      %v410 = vadd.f32 %v369, %v409
      %411 = vmatmul.f32.gmra.mxu0 %v327
      %v412 = vpop.f32.mrf.mxu0
      %v413 = vadd.f32 %v372, %v412
      %414 = vmatmul.f32.gmra.mxu0 %v330
      %v415 = vpop.f32.mrf.mxu0
      %v416 = vadd.f32 %v375, %v415
      %417 = vmatmul.f32.gmra.mxu0 %v333
      %v418 = vpop.f32.mrf.mxu0
      %v419 = vadd.f32 %v378, %v418
      %420 = vmatmul.f32.gmra.mxu0 %v336
      %v421 = vpop.f32.mrf.mxu0
      %v422 = vadd.f32 %v381, %v421
      %423 = vmatmul.f32.gmra.mxu0 %v339
      %v424 = vpop.f32.mrf.mxu0
      %v425 = vadd.f32 %v384, %v424
      %426 = vmatmul.f32.gmra.mxu0 %v342
      %v427 = vpop.f32.mrf.mxu0
      %v428 = vadd.f32 %v387, %v427
      %429 = vmatmul.f32.gmra.mxu0 %v345
      %v430 = vpop.f32.mrf.mxu0
      %v431 = vadd.f32 %v390, %v430
      %432 = vdwg.mxu0
      %v433 = vmax.f32 %v410, 0.0
      %v434 = vmax.f32 %v413, 0.0
      %v435 = vmax.f32 %v416, 0.0
      %v436 = vmax.f32 %v419, 0.0
      %v437 = vmax.f32 %v422, 0.0
      %v438 = vmax.f32 %v425, 0.0
      %v439 = vmax.f32 %v428, 0.0
      %v440 = vmax.f32 %v431, 0.0
      %v441 = vld [vmem:[%s2] sm:$0xff]
      %v442 = vld [vmem:[%s2 + $0x8] sm:$0xff]
      %v443 = vld [vmem:[%s2 + $0x10] sm:$0xff]
      %v444 = vld [vmem:[%s2 + $0x18] sm:$0xff]
      %v445 = vld [vmem:[%s2 + $0x20] sm:$0xff]
      %v446 = vld [vmem:[%s2 + $0x28] sm:$0xff]
      %v447 = vld [vmem:[%s2 + $0x30] sm:$0xff]
      %v448 = vld [vmem:[%s2 + $0x38] sm:$0xff]
      %v449 = vld [vmem:[%s2 + $0x40] sm:$0xff]
      %v450 = vld [vmem:[%s2 + $0x48] sm:$0xff]
      %v451 = vld [vmem:[%s2 + $0x50] sm:$0xff]
      %v452 = vld [vmem:[%s2 + $0x58] sm:$0xff]
      %v453 = vld [vmem:[%s2 + $0x60] sm:$0xff]
      %v454 = vld [vmem:[%s2 + $0x68] sm:$0xff]
      %v455 = vld [vmem:[%s2 + $0x70] sm:$0xff]
      %v456 = vld [vmem:[%s2 + $0x78] sm:$0xff]
      %v457 = vld [vmem:[%s5] sm:$0x1]
      %v459 = vperm.slane %v457, 0
      %461 = vmatpush.msra.mxu0 %v456
      %462 = vmatpush.msra.mxu0 %v455
      %463 = vmatpush.msra.mxu0 %v454
      %464 = vmatpush.msra.mxu0 %v453
      %465 = vmatpush.msra.mxu0 %v452
      %466 = vmatpush.msra.mxu0 %v451
      %467 = vmatpush.msra.mxu0 %v450
      %468 = vmatpush.msra.mxu0 %v449
      %469 = vmatpush.msra.mxu0 %v448
      %470 = vmatpush.msra.mxu0 %v447
      %471 = vmatpush.msra.mxu0 %v446
      %472 = vmatpush.msra.mxu0 %v445
      %473 = vmatpush.msra.mxu0 %v444
      %474 = vmatpush.msra.mxu0 %v443
      %475 = vmatpush.msra.mxu0 %v442
      %476 = vmatpush.msra.mxu0 %v441
      %477 = vmatmul.f32.gmra.mxu0 %v433
      %v478 = vpop.f32.mrf.mxu0
      %v479 = vadd.f32 %v459, %v478
      %480 = vmatmul.f32.gmra.mxu0 %v434
      %v481 = vpop.f32.mrf.mxu0
      %v482 = vadd.f32 %v459, %v481
      %483 = vmatmul.f32.gmra.mxu0 %v435
      %v484 = vpop.f32.mrf.mxu0
      %v485 = vadd.f32 %v459, %v484
      %486 = vmatmul.f32.gmra.mxu0 %v436
      %v487 = vpop.f32.mrf.mxu0
      %v488 = vadd.f32 %v459, %v487
      %489 = vmatmul.f32.gmra.mxu0 %v437
      %v490 = vpop.f32.mrf.mxu0
      %v491 = vadd.f32 %v459, %v490
      %492 = vmatmul.f32.gmra.mxu0 %v438
      %v493 = vpop.f32.mrf.mxu0
      %v494 = vadd.f32 %v459, %v493
      %495 = vmatmul.f32.gmra.mxu0 %v439
      %v496 = vpop.f32.mrf.mxu0
      %v497 = vadd.f32 %v459, %v496
      %498 = vmatmul.f32.gmra.mxu0 %v440
      %v499 = vpop.f32.mrf.mxu0
      %v500 = vadd.f32 %v459, %v499
      %501 = vdwg.mxu0
      %v502 = vmax.f32 %v479, 0.0
      %v503 = vmax.f32 %v482, 0.0
      %v504 = vmax.f32 %v485, 0.0
      %v505 = vmax.f32 %v488, 0.0
      %v506 = vmax.f32 %v491, 0.0
      %v507 = vmax.f32 %v494, 0.0
      %v508 = vmax.f32 %v497, 0.0
      %v509 = vmax.f32 %v500, 0.0
      %v510 = vld [vmem:[%s3] sm:$0xff]
      %v511 = vld [vmem:[%s3 + $0x8] sm:$0xff]
      %v512 = vld [vmem:[%s3 + $0x10] sm:$0xff]
      %v513 = vld [vmem:[%s3 + $0x18] sm:$0xff]
      %v514 = vld [vmem:[%s3 + $0x20] sm:$0xff]
      %v515 = vld [vmem:[%s3 + $0x28] sm:$0xff]
      %v516 = vld [vmem:[%s3 + $0x30] sm:$0xff]
      %v517 = vld [vmem:[%s3 + $0x38] sm:$0xff]
      %v518 = vld [vmem:[%s3 + $0x40] sm:$0xff]
      %v519 = vld [vmem:[%s3 + $0x48] sm:$0xff]
      %v520 = vld [vmem:[%s3 + $0x50] sm:$0xff]
      %v521 = vld [vmem:[%s3 + $0x58] sm:$0xff]
      %v522 = vld [vmem:[%s3 + $0x60] sm:$0xff]
      %v523 = vld [vmem:[%s3 + $0x68] sm:$0xff]
      %v524 = vld [vmem:[%s3 + $0x70] sm:$0xff]
      %v525 = vld [vmem:[%s3 + $0x78] sm:$0xff]
      %v526 = vld [vmem:[%s6] sm:$0x1]
      %v528 = vperm.slane %v526, 0
      %530 = vmatpush.msra.mxu0 %v525
      %531 = vmatpush.msra.mxu0 %v524
      %532 = vmatpush.msra.mxu0 %v523
      %533 = vmatpush.msra.mxu0 %v522
      %534 = vmatpush.msra.mxu0 %v521
      %535 = vmatpush.msra.mxu0 %v520
      %536 = vmatpush.msra.mxu0 %v519
      %537 = vmatpush.msra.mxu0 %v518
      %538 = vmatpush.msra.mxu0 %v517
      %539 = vmatpush.msra.mxu0 %v516
      %540 = vmatpush.msra.mxu0 %v515
      %541 = vmatpush.msra.mxu0 %v514
      %542 = vmatpush.msra.mxu0 %v513
      %543 = vmatpush.msra.mxu0 %v512
      %544 = vmatpush.msra.mxu0 %v511
      %545 = vmatpush.msra.mxu0 %v510
      %546 = vmatmul.f32.gmra.mxu0 %v502
      %v547 = vpop.f32.mrf.mxu0
      %v548 = vadd.f32 %v528, %v547
      %549 = vmatmul.f32.gmra.mxu0 %v503
      %v550 = vpop.f32.mrf.mxu0
      %v551 = vadd.f32 %v528, %v550
      %552 = vmatmul.f32.gmra.mxu0 %v504
      %v553 = vpop.f32.mrf.mxu0
      %v554 = vadd.f32 %v528, %v553
      %555 = vmatmul.f32.gmra.mxu0 %v505
      %v556 = vpop.f32.mrf.mxu0
      %v557 = vadd.f32 %v528, %v556
      %558 = vmatmul.f32.gmra.mxu0 %v506
      %v559 = vpop.f32.mrf.mxu0
      %v560 = vadd.f32 %v528, %v559
      %561 = vmatmul.f32.gmra.mxu0 %v507
      %v562 = vpop.f32.mrf.mxu0
      %v563 = vadd.f32 %v528, %v562
      %564 = vmatmul.f32.gmra.mxu0 %v508
      %v565 = vpop.f32.mrf.mxu0
      %v566 = vadd.f32 %v528, %v565
      %567 = vmatmul.f32.gmra.mxu0 %v509
      %v568 = vpop.f32.mrf.mxu0
      %v569 = vadd.f32 %v528, %v568
      %570 = vdwg.mxu0
      %v571 = vmax.f32 %v548, 0.0
      %v572 = vmax.f32 %v551, 0.0
      %v573 = vmax.f32 %v554, 0.0
      %v574 = vmax.f32 %v557, 0.0
      %v575 = vmax.f32 %v560, 0.0
      %v576 = vmax.f32 %v563, 0.0
      %v577 = vmax.f32 %v566, 0.0
      %v578 = vmax.f32 %v569, 0.0
      %579 = vst [vmem:[%s283] sm:$0xff] %v571
      %580 = vst [vmem:[%s283 + $0x8] sm:$0xff] %v572
      %581 = vst [vmem:[%s283 + $0x10] sm:$0xff] %v573
      %582 = vst [vmem:[%s283 + $0x18] sm:$0xff] %v574
      %583 = vst [vmem:[%s283 + $0x20] sm:$0xff] %v575
      %584 = vst [vmem:[%s283 + $0x28] sm:$0xff] %v576
      %585 = vst [vmem:[%s283 + $0x30] sm:$0xff] %v577
      %586 = vst [vmem:[%s283 + $0x38] sm:$0xff] %v578
      %s587 = smul.u32 8, %s18
      %p588 = scmp.lt.s32.totalorder %s587, 15
      %s589 = scalar_select %p588, %s587, 15
      %s590 = smul.addr %s589, 8
      %s591 = scalar_lea.vmem %s7, %s590
      // Predicated region
      $region49: #{pointnet2_ssg_seg_forward.16} parent=47 // pred_check
        %p592 = pneg %p188
      $region50: #{pointnet2_ssg_seg_forward.16} parent=47 // pred_check_branch
        %594 = sbr.rel (%p592) target = $region52
      $region51: #{pointnet2_ssg_seg_forward.16} parent=47 // pred_region
        %s595 = smul.u32 8, %s18
      $region52: #{pointnet2_ssg_seg_forward.16} parent=47 // pred_fallthru
        _
    $region48: #{pointnet2_ssg_seg_forward.16} parent=5 // pred_fallthru
      _
    %p596 = scmp.le.s32.totalorder 2, %s13
    // Predicated region
    $region53: #{pointnet2_ssg_seg_forward.16} parent=5 // pred_check
      %p597 = pneg %p596
    $region54: #{pointnet2_ssg_seg_forward.16} parent=5 // pred_check_branch
      %599 = sbr.rel (%p597) target = $region56
    $region55: #{pointnet2_ssg_seg_forward.16} parent=5 // pred_region
      %s600 = ssub.s32 %s13, 2
      // Predicated region
      $region57: #{pointnet2_ssg_seg_forward.16} parent=55 // pred_check
        %p601 = pneg %p194
      $region58: #{pointnet2_ssg_seg_forward.16} parent=55 // pred_check_branch
        %603 = sbr.rel (%p601) target = $region60
      $region59: #{pointnet2_ssg_seg_forward.16} parent=55 // pred_region
        %s604 = smul.u32 8, %s19
        %p605 = scmp.lt.s32.totalorder %s604, 15
        %s606 = scalar_select %p605, %s604, 15
        %s607 = smul.addr %s606, 8
        %s608 = scalar_lea.vmem %s7, %s607
      $region60: #{pointnet2_ssg_seg_forward.16} parent=55 // pred_fallthru
        _
    $region56: #{pointnet2_ssg_seg_forward.16} parent=5 // pred_fallthru
      _
  $region6: #{pointnet2_ssg_seg_forward.16} parent=0 // loop_footer
    %s17 = sadd.s32 1, %s13
  $region7: #{pointnet2_ssg_seg_forward.16} parent=0 // loop_footer_branch
    %12 = sbr.rel target = $region3
  $region8: #{pointnet2_ssg_seg_forward.16} parent=0 // loop_exit
    _

// kernel: pointnet2_ssg_seg_forward.17
$region0: #{pointnet2_ssg_seg_forward.17}
  #allocation0 [shape = 'u32[]', space=smem, size = 0x4, offset = 0x4, fixed_abs, tag = 'smem constant byte address 0x4 - core index']
  #allocation1 [shape = 'u32[72,128]{1,0:T(1,128)}', space=vmem, size = 0x9000, scoped, tag = 'internal scratch']
  %s0 = inlined_call_operand.vmem [shape: f32[128,128], index: 0, kind: input, shape index: {}]
  %s1 = inlined_call_operand.vmem [shape: f32[128,128], index: 1, kind: input, shape index: {}]
  %s2 = inlined_call_operand.vmem [shape: f32[128,128], index: 2, kind: input, shape index: {}]
  %s3 = inlined_call_operand.vmem [shape: f32[1,128], index: 3, kind: input, shape index: {}]
  %s4 = inlined_call_operand.vmem [shape: f32[1,128], index: 4, kind: input, shape index: {}]
  %s5 = inlined_call_operand.vmem [shape: f32[128,128], index: 5, kind: output, shape index: {}]
  %s6 = sld [smem:[#allocation0]]
  $region53: #{pointnet2_ssg_seg_forward.17} parent=0
    _
  %s8 = ssub.s32 1, %s6
  %s9 = scalar_select 0, %s8, %s6
  loop: start=0, step=1, limit=4
  $region2: #{pointnet2_ssg_seg_forward.17} parent=0 // loop_pre_header
    _
  $region3: #{pointnet2_ssg_seg_forward.17} parent=0 // loop_header
    %s11 = sphi 0, %s15
    %p12 = scmp.ge.s32.totalorder %s11, 4
    %s21 = sphi 0, %s23
    %s24 = sphi 0, %s21
    %s25 = sphi 0, %s24
    %s41 = sphi 0, %s25
    %s45 = sphi 0, %s45
    %s47 = sphi 0, %s45
    %s48 = sphi 0, %s47
    %s62 = sphi 0, %s48
    %s66 = sphi 0, %s66
    %s68 = sphi 0, %s66
    %s69 = sphi 0, %s68
    %s83 = sphi 0, %s69
    %s87 = sphi 0, %s87
    %s89 = sphi 0, %s87
    %s90 = sphi 0, %s89
    %s104 = sphi 0, %s90
    %s108 = sphi 0, %s108
    %s110 = sphi 0, %s108
    %s111 = sphi 0, %s110
    %s125 = sphi 0, %s111
    %s131 = sphi 0, %s133
    %s134 = sphi 0, %s131
    %s135 = sphi 0, %s134
    %s151 = sphi 0, %s135
  $region4: #{pointnet2_ssg_seg_forward.17} parent=0 // loop_header_branch
    %14 = sbr.rel (%p12) target = $region8
  $region5: #{pointnet2_ssg_seg_forward.17} parent=0 // loop_body
    %s16 = ssub.s32 %s11, 1
    %s17 = ssub.s32 %s11, 2
    %s18 = sadd.s32 %s11, 1
    %s19 = ssub.s32 %s11, %s18
    %p20 = scmp.eq.s32.totalorder %s19, 0
    %s22 = sadd.s32 %s21, 1
    %s23 = scalar_select %p20, %s21, %s22
    %p26 = pneg %p20
    %p27 = scmp.eq.s32.totalorder %s11, 1
    %p28 = por %p26, %p27
    %p29 = scmp.ne.s32.totalorder %s21, %s24
    %p30 = scmp.eq.s32.totalorder %s11, 0
    %p31 = por %p29, %p30
    %p32 = scmp.ne.s32.totalorder %s21, %s24
    %p33 = scmp.eq.s32.totalorder %s16, 1
    %p34 = por %p32, %p33
    %p35 = scmp.ne.s32.totalorder %s24, %s25
    %p36 = scmp.eq.s32.totalorder %s16, 0
    %p37 = por %p35, %p36
    %p38 = scmp.ne.s32.totalorder %s24, %s25
    %p39 = scmp.eq.s32.totalorder %s17, 1
    %p40 = por %p38, %p39
    %p42 = scmp.ne.s32.totalorder %s25, %s41
    %p43 = scmp.eq.s32.totalorder %s17, 0
    %p44 = por %p42, %p43
    %s46 = sadd.s32 %s45, 1
    %p49 = scmp.eq.s32.totalorder %s11, 1
    %p50 = scmp.ne.s32.totalorder %s45, %s47
    %p51 = scmp.eq.s32.totalorder %s11, 0
    %p52 = por %p50, %p51
    %p53 = scmp.ne.s32.totalorder %s45, %s47
    %p54 = scmp.eq.s32.totalorder %s16, 1
    %p55 = por %p53, %p54
    %p56 = scmp.ne.s32.totalorder %s47, %s48
    %p57 = scmp.eq.s32.totalorder %s16, 0
    %p58 = por %p56, %p57
    %p59 = scmp.ne.s32.totalorder %s47, %s48
    %p60 = scmp.eq.s32.totalorder %s17, 1
    %p61 = por %p59, %p60
    %p63 = scmp.ne.s32.totalorder %s48, %s62
    %p64 = scmp.eq.s32.totalorder %s17, 0
    %p65 = por %p63, %p64
    %s67 = sadd.s32 %s66, 1
    %p70 = scmp.eq.s32.totalorder %s11, 1
    %p71 = scmp.ne.s32.totalorder %s66, %s68
    %p72 = scmp.eq.s32.totalorder %s11, 0
    %p73 = por %p71, %p72
    %p74 = scmp.ne.s32.totalorder %s66, %s68
    %p75 = scmp.eq.s32.totalorder %s16, 1
    %p76 = por %p74, %p75
    %p77 = scmp.ne.s32.totalorder %s68, %s69
    %p78 = scmp.eq.s32.totalorder %s16, 0
    %p79 = por %p77, %p78
    %p80 = scmp.ne.s32.totalorder %s68, %s69
    %p81 = scmp.eq.s32.totalorder %s17, 1
    %p82 = por %p80, %p81
    %p84 = scmp.ne.s32.totalorder %s69, %s83
    %p85 = scmp.eq.s32.totalorder %s17, 0
    %p86 = por %p84, %p85
    %s88 = sadd.s32 %s87, 1
    %p91 = scmp.eq.s32.totalorder %s11, 1
    %p92 = scmp.ne.s32.totalorder %s87, %s89
    %p93 = scmp.eq.s32.totalorder %s11, 0
    %p94 = por %p92, %p93
    %p95 = scmp.ne.s32.totalorder %s87, %s89
    %p96 = scmp.eq.s32.totalorder %s16, 1
    %p97 = por %p95, %p96
    %p98 = scmp.ne.s32.totalorder %s89, %s90
    %p99 = scmp.eq.s32.totalorder %s16, 0
    %p100 = por %p98, %p99
    %p101 = scmp.ne.s32.totalorder %s89, %s90
    %p102 = scmp.eq.s32.totalorder %s17, 1
    %p103 = por %p101, %p102
    %p105 = scmp.ne.s32.totalorder %s90, %s104
    %p106 = scmp.eq.s32.totalorder %s17, 0
    %p107 = por %p105, %p106
    %s109 = sadd.s32 %s108, 1
    %p112 = scmp.eq.s32.totalorder %s11, 1
    %p113 = scmp.ne.s32.totalorder %s108, %s110
    %p114 = scmp.eq.s32.totalorder %s11, 0
    %p115 = por %p113, %p114
    %p116 = scmp.ne.s32.totalorder %s108, %s110
    %p117 = scmp.eq.s32.totalorder %s16, 1
    %p118 = por %p116, %p117
    %p119 = scmp.ne.s32.totalorder %s110, %s111
    %p120 = scmp.eq.s32.totalorder %s16, 0
    %p121 = por %p119, %p120
    %p122 = scmp.ne.s32.totalorder %s110, %s111
    %p123 = scmp.eq.s32.totalorder %s17, 1
    %p124 = por %p122, %p123
    %p126 = scmp.ne.s32.totalorder %s111, %s125
    %p127 = scmp.eq.s32.totalorder %s17, 0
    %p128 = por %p126, %p127
    %s129 = ssub.s32 %s11, %s18
    %p130 = scmp.eq.s32.totalorder %s129, 0
    %s132 = sadd.s32 %s131, 1
    %s133 = scalar_select %p130, %s131, %s132
    %p136 = pneg %p130
    %p137 = scmp.eq.s32.totalorder %s11, 1
    %p138 = por %p136, %p137
    %p139 = scmp.ne.s32.totalorder %s131, %s134
    %p140 = scmp.eq.s32.totalorder %s11, 0
    %p141 = por %p139, %p140
    %p142 = scmp.ne.s32.totalorder %s131, %s134
    %p143 = scmp.eq.s32.totalorder %s16, 1
    %p144 = por %p142, %p143
    %p145 = scmp.ne.s32.totalorder %s134, %s135
    %p146 = scmp.eq.s32.totalorder %s16, 0
    %p147 = por %p145, %p146
    %p148 = scmp.ne.s32.totalorder %s134, %s135
    %p149 = scmp.eq.s32.totalorder %s17, 1
    %p150 = por %p148, %p149
    %p152 = scmp.ne.s32.totalorder %s135, %s151
    %p153 = scmp.eq.s32.totalorder %s17, 0
    %p154 = por %p152, %p153
    %p155 = scmp.le.s32.totalorder 1, %s11
    %p156 = scmp.lt.s32.totalorder %s11, 3
    %p157 = pnand %p155, %p156
    %p158 = pneg %p157
    // Predicated region
    $region9: #{pointnet2_ssg_seg_forward.17} parent=5 // pred_check
      _
    $region10: #{pointnet2_ssg_seg_forward.17} parent=5 // pred_check_branch
      %160 = sbr.rel (%p157) target = $region12
    $region11: #{pointnet2_ssg_seg_forward.17} parent=5 // pred_region
      %s161 = ssub.s32 %s11, 1
      // Predicated region
      $region13: #{pointnet2_ssg_seg_forward.17} parent=11 // pred_check
        %p162 = pneg %p58
      $region14: #{pointnet2_ssg_seg_forward.17} parent=11 // pred_check_branch
        %164 = sbr.rel (%p162) target = $region16
      $region15: #{pointnet2_ssg_seg_forward.17} parent=11 // pred_region
        _
      $region16: #{pointnet2_ssg_seg_forward.17} parent=11 // pred_fallthru
        _
      // Predicated region
      $region17: #{pointnet2_ssg_seg_forward.17} parent=11 // pred_check
        %p165 = pneg %p79
      $region18: #{pointnet2_ssg_seg_forward.17} parent=11 // pred_check_branch
        %167 = sbr.rel (%p165) target = $region20
      $region19: #{pointnet2_ssg_seg_forward.17} parent=11 // pred_region
        _
      $region20: #{pointnet2_ssg_seg_forward.17} parent=11 // pred_fallthru
        _
      // Predicated region
      $region21: #{pointnet2_ssg_seg_forward.17} parent=11 // pred_check
        %p168 = pneg %p100
      $region22: #{pointnet2_ssg_seg_forward.17} parent=11 // pred_check_branch
        %170 = sbr.rel (%p168) target = $region24
      $region23: #{pointnet2_ssg_seg_forward.17} parent=11 // pred_region
        _
      $region24: #{pointnet2_ssg_seg_forward.17} parent=11 // pred_fallthru
        _
      // Predicated region
      $region25: #{pointnet2_ssg_seg_forward.17} parent=11 // pred_check
        %p171 = pneg %p121
      $region26: #{pointnet2_ssg_seg_forward.17} parent=11 // pred_check_branch
        %173 = sbr.rel (%p171) target = $region28
      $region27: #{pointnet2_ssg_seg_forward.17} parent=11 // pred_region
        _
      $region28: #{pointnet2_ssg_seg_forward.17} parent=11 // pred_fallthru
        _
    $region12: #{pointnet2_ssg_seg_forward.17} parent=5 // pred_fallthru
      _
    %p174 = scmp.lt.s32.totalorder %s11, 2
    // Predicated region
    $region29: #{pointnet2_ssg_seg_forward.17} parent=5 // pred_check
      %p175 = pneg %p174
    $region30: #{pointnet2_ssg_seg_forward.17} parent=5 // pred_check_branch
      %177 = sbr.rel (%p175) target = $region32
    $region31: #{pointnet2_ssg_seg_forward.17} parent=5 // pred_region
      // Predicated region
      $region33: #{pointnet2_ssg_seg_forward.17} parent=31 // pred_check
        %p178 = pneg %p31
      $region34: #{pointnet2_ssg_seg_forward.17} parent=31 // pred_check_branch
        %180 = sbr.rel (%p178) target = $region36
      $region35: #{pointnet2_ssg_seg_forward.17} parent=31 // pred_region
        %s181 = smul.u32 8, %s11
        %p182 = scmp.lt.s32.totalorder %s181, 15
        %s183 = scalar_select %p182, %s181, 15
        %s184 = smul.addr %s183, 8
        %s185 = scalar_lea.vmem %s0, %s184
        %s186 = smul.u32 8, %s11
      $region36: #{pointnet2_ssg_seg_forward.17} parent=31 // pred_fallthru
        _
    $region32: #{pointnet2_ssg_seg_forward.17} parent=5 // pred_fallthru
      _
    %p187 = scmp.le.s32.totalorder 1, %s11
    %p188 = scmp.lt.s32.totalorder %s11, 3
    %p189 = pnand %p187, %p188
    %p190 = pneg %p189
    // Predicated region
    $region37: #{pointnet2_ssg_seg_forward.17} parent=5 // pred_check
      _
    $region38: #{pointnet2_ssg_seg_forward.17} parent=5 // pred_check_branch
      %192 = sbr.rel (%p189) target = $region40
    $region39: #{pointnet2_ssg_seg_forward.17} parent=5 // pred_region
      %s193 = ssub.s32 %s11, 1
      %s194 = smul.u32 8, %s16
      %p195 = scmp.lt.s32.totalorder %s194, 15
      %s196 = scalar_select %p195, %s194, 15
      %s197 = smul.addr %s196, 8
      %s198 = scalar_lea.vmem %s0, %s197
      %p199 = pneg %p37
      %p200 = pneg %p34
      %p201 = pneg %p58
      %p202 = pneg %p55
      %p203 = pneg %p79
      %p204 = pneg %p76
      %p205 = pneg %p100
      %p206 = pneg %p97
      %p207 = pneg %p121
      %p208 = pneg %p118
      %p209 = pneg %p147
      %p210 = pneg %p144
      %s211 = smul.u32 8, %s16
      %p212 = scmp.lt.s32.totalorder %s211, 15
      %s213 = scalar_select %p212, %s211, 15
      %s214 = smul.addr %s213, 8
      %s215 = scalar_lea.vmem %s5, %s214
      %s216 = smul.u32 8, %s16
      %p217 = scmp.lt.s32.totalorder %s216, 15
      %s218 = scalar_select %p217, %s216, 15
      %s219 = smul.addr %s218, 8
      %s220 = scalar_lea.vmem %s0, %s219
      %s221 = smul.u32 8, %s16
      %s222 = smul.u32 8, %s16
      %p223 = scmp.lt.s32.totalorder %s222, 15
      %s224 = scalar_select %p223, %s222, 15
      %s225 = smul.addr %s224, 8
      %s226 = scalar_lea.vmem %s5, %s225
      %s227 = smul.u32 8, %s16
      %v228 = vld [vmem:[%s220] sm:$0xff]
      %v229 = vld [vmem:[%s220 + $0x8] sm:$0xff]
      %v230 = vld [vmem:[%s220 + $0x10] sm:$0xff]
      %v231 = vld [vmem:[%s220 + $0x18] sm:$0xff]
      %v232 = vld [vmem:[%s220 + $0x20] sm:$0xff]
      %v233 = vld [vmem:[%s220 + $0x28] sm:$0xff]
      %v234 = vld [vmem:[%s220 + $0x30] sm:$0xff]
      %v235 = vld [vmem:[%s220 + $0x38] sm:$0xff]
      %v236 = vld [vmem:[%s1] sm:$0xff]
      %v237 = vld [vmem:[%s1 + $0x8] sm:$0xff]
      %v238 = vld [vmem:[%s1 + $0x10] sm:$0xff]
      %v239 = vld [vmem:[%s1 + $0x18] sm:$0xff]
      %v240 = vld [vmem:[%s1 + $0x20] sm:$0xff]
      %v241 = vld [vmem:[%s1 + $0x28] sm:$0xff]
      %v242 = vld [vmem:[%s1 + $0x30] sm:$0xff]
      %v243 = vld [vmem:[%s1 + $0x38] sm:$0xff]
      %v244 = vld [vmem:[%s1 + $0x40] sm:$0xff]
      %v245 = vld [vmem:[%s1 + $0x48] sm:$0xff]
      %v246 = vld [vmem:[%s1 + $0x50] sm:$0xff]
      %v247 = vld [vmem:[%s1 + $0x58] sm:$0xff]
      %v248 = vld [vmem:[%s1 + $0x60] sm:$0xff]
      %v249 = vld [vmem:[%s1 + $0x68] sm:$0xff]
      %v250 = vld [vmem:[%s1 + $0x70] sm:$0xff]
      %v251 = vld [vmem:[%s1 + $0x78] sm:$0xff]
      %v252 = vld [vmem:[%s3] sm:$0x1]
      %v254 = vperm.slane %v252, 0
      %256 = vmatpush.msra.mxu0 %v251
      %257 = vmatpush.msra.mxu0 %v250
      %258 = vmatpush.msra.mxu0 %v249
      %259 = vmatpush.msra.mxu0 %v248
      %260 = vmatpush.msra.mxu0 %v247
      %261 = vmatpush.msra.mxu0 %v246
      %262 = vmatpush.msra.mxu0 %v245
      %263 = vmatpush.msra.mxu0 %v244
      %264 = vmatpush.msra.mxu0 %v243
      %265 = vmatpush.msra.mxu0 %v242
      %266 = vmatpush.msra.mxu0 %v241
      %267 = vmatpush.msra.mxu0 %v240
      %268 = vmatpush.msra.mxu0 %v239
      %269 = vmatpush.msra.mxu0 %v238
      %270 = vmatpush.msra.mxu0 %v237
      %271 = vmatpush.msra.mxu0 %v236
      %272 = vmatmul.f32.gmra.mxu0 %v228
      %v273 = vpop.f32.mrf.mxu0
      %v274 = vadd.f32 %v254, %v273
      %275 = vmatmul.f32.gmra.mxu0 %v229
      %v276 = vpop.f32.mrf.mxu0
      %v277 = vadd.f32 %v254, %v276
      %278 = vmatmul.f32.gmra.mxu0 %v230
      %v279 = vpop.f32.mrf.mxu0
      %v280 = vadd.f32 %v254, %v279
      %281 = vmatmul.f32.gmra.mxu0 %v231
      %v282 = vpop.f32.mrf.mxu0
      %v283 = vadd.f32 %v254, %v282
      %284 = vmatmul.f32.gmra.mxu0 %v232
      %v285 = vpop.f32.mrf.mxu0
      %v286 = vadd.f32 %v254, %v285
      %287 = vmatmul.f32.gmra.mxu0 %v233
      %v288 = vpop.f32.mrf.mxu0
      %v289 = vadd.f32 %v254, %v288
      %290 = vmatmul.f32.gmra.mxu0 %v234
      %v291 = vpop.f32.mrf.mxu0
      %v292 = vadd.f32 %v254, %v291
      %293 = vmatmul.f32.gmra.mxu0 %v235
      %v294 = vpop.f32.mrf.mxu0
      %v295 = vadd.f32 %v254, %v294
      %296 = vdwg.mxu0
      %v297 = vmax.f32 %v274, 0.0
      %v298 = vmax.f32 %v277, 0.0
      %v299 = vmax.f32 %v280, 0.0
      %v300 = vmax.f32 %v283, 0.0
      %v301 = vmax.f32 %v286, 0.0
      %v302 = vmax.f32 %v289, 0.0
      %v303 = vmax.f32 %v292, 0.0
      %v304 = vmax.f32 %v295, 0.0
      %v305 = vld [vmem:[%s2] sm:$0xff]
      %v306 = vld [vmem:[%s2 + $0x8] sm:$0xff]
      %v307 = vld [vmem:[%s2 + $0x10] sm:$0xff]
      %v308 = vld [vmem:[%s2 + $0x18] sm:$0xff]
      %v309 = vld [vmem:[%s2 + $0x20] sm:$0xff]
      %v310 = vld [vmem:[%s2 + $0x28] sm:$0xff]
      %v311 = vld [vmem:[%s2 + $0x30] sm:$0xff]
      %v312 = vld [vmem:[%s2 + $0x38] sm:$0xff]
      %v313 = vld [vmem:[%s2 + $0x40] sm:$0xff]
      %v314 = vld [vmem:[%s2 + $0x48] sm:$0xff]
      %v315 = vld [vmem:[%s2 + $0x50] sm:$0xff]
      %v316 = vld [vmem:[%s2 + $0x58] sm:$0xff]
      %v317 = vld [vmem:[%s2 + $0x60] sm:$0xff]
      %v318 = vld [vmem:[%s2 + $0x68] sm:$0xff]
      %v319 = vld [vmem:[%s2 + $0x70] sm:$0xff]
      %v320 = vld [vmem:[%s2 + $0x78] sm:$0xff]
      %v321 = vld [vmem:[%s4] sm:$0x1]
      %v323 = vperm.slane %v321, 0
      %325 = vmatpush.msra.mxu0 %v320
      %326 = vmatpush.msra.mxu0 %v319
      %327 = vmatpush.msra.mxu0 %v318
      %328 = vmatpush.msra.mxu0 %v317
      %329 = vmatpush.msra.mxu0 %v316
      %330 = vmatpush.msra.mxu0 %v315
      %331 = vmatpush.msra.mxu0 %v314
      %332 = vmatpush.msra.mxu0 %v313
      %333 = vmatpush.msra.mxu0 %v312
      %334 = vmatpush.msra.mxu0 %v311
      %335 = vmatpush.msra.mxu0 %v310
      %336 = vmatpush.msra.mxu0 %v309
      %337 = vmatpush.msra.mxu0 %v308
      %338 = vmatpush.msra.mxu0 %v307
      %339 = vmatpush.msra.mxu0 %v306
      %340 = vmatpush.msra.mxu0 %v305
      %341 = vmatmul.f32.gmra.mxu0 %v297
      %v342 = vpop.f32.mrf.mxu0
      %v343 = vadd.f32 %v323, %v342
      %344 = vmatmul.f32.gmra.mxu0 %v298
      %v345 = vpop.f32.mrf.mxu0
      %v346 = vadd.f32 %v323, %v345
      %347 = vmatmul.f32.gmra.mxu0 %v299
      %v348 = vpop.f32.mrf.mxu0
      %v349 = vadd.f32 %v323, %v348
      %350 = vmatmul.f32.gmra.mxu0 %v300
      %v351 = vpop.f32.mrf.mxu0
      %v352 = vadd.f32 %v323, %v351
      %353 = vmatmul.f32.gmra.mxu0 %v301
      %v354 = vpop.f32.mrf.mxu0
      %v355 = vadd.f32 %v323, %v354
      %356 = vmatmul.f32.gmra.mxu0 %v302
      %v357 = vpop.f32.mrf.mxu0
      %v358 = vadd.f32 %v323, %v357
      %359 = vmatmul.f32.gmra.mxu0 %v303
      %v360 = vpop.f32.mrf.mxu0
      %v361 = vadd.f32 %v323, %v360
      %362 = vmatmul.f32.gmra.mxu0 %v304
      %v363 = vpop.f32.mrf.mxu0
      %v364 = vadd.f32 %v323, %v363
      %365 = vdwg.mxu0
      %366 = vst [vmem:[%s226] sm:$0xff] %v343
      %367 = vst [vmem:[%s226 + $0x8] sm:$0xff] %v346
      %368 = vst [vmem:[%s226 + $0x10] sm:$0xff] %v349
      %369 = vst [vmem:[%s226 + $0x18] sm:$0xff] %v352
      %370 = vst [vmem:[%s226 + $0x20] sm:$0xff] %v355
      %371 = vst [vmem:[%s226 + $0x28] sm:$0xff] %v358
      %372 = vst [vmem:[%s226 + $0x30] sm:$0xff] %v361
      %373 = vst [vmem:[%s226 + $0x38] sm:$0xff] %v364
      %s374 = smul.u32 8, %s16
      %p375 = scmp.lt.s32.totalorder %s374, 15
      %s376 = scalar_select %p375, %s374, 15
      %s377 = smul.addr %s376, 8
      %s378 = scalar_lea.vmem %s5, %s377
      // Predicated region
      $region41: #{pointnet2_ssg_seg_forward.17} parent=39 // pred_check
        %p379 = pneg %p144
      $region42: #{pointnet2_ssg_seg_forward.17} parent=39 // pred_check_branch
        %381 = sbr.rel (%p379) target = $region44
      $region43: #{pointnet2_ssg_seg_forward.17} parent=39 // pred_region
        %s382 = smul.u32 8, %s16
      $region44: #{pointnet2_ssg_seg_forward.17} parent=39 // pred_fallthru
        _
    $region40: #{pointnet2_ssg_seg_forward.17} parent=5 // pred_fallthru
      _
    %p383 = scmp.le.s32.totalorder 2, %s11
    // Predicated region
    $region45: #{pointnet2_ssg_seg_forward.17} parent=5 // pred_check
      %p384 = pneg %p383
    $region46: #{pointnet2_ssg_seg_forward.17} parent=5 // pred_check_branch
      %386 = sbr.rel (%p384) target = $region48
    $region47: #{pointnet2_ssg_seg_forward.17} parent=5 // pred_region
      %s387 = ssub.s32 %s11, 2
      // Predicated region
      $region49: #{pointnet2_ssg_seg_forward.17} parent=47 // pred_check
        %p388 = pneg %p150
      $region50: #{pointnet2_ssg_seg_forward.17} parent=47 // pred_check_branch
        %390 = sbr.rel (%p388) target = $region52
      $region51: #{pointnet2_ssg_seg_forward.17} parent=47 // pred_region
        %s391 = smul.u32 8, %s17
        %p392 = scmp.lt.s32.totalorder %s391, 15
        %s393 = scalar_select %p392, %s391, 15
        %s394 = smul.addr %s393, 8
        %s395 = scalar_lea.vmem %s5, %s394
      $region52: #{pointnet2_ssg_seg_forward.17} parent=47 // pred_fallthru
        _
    $region48: #{pointnet2_ssg_seg_forward.17} parent=5 // pred_fallthru
      _
  $region6: #{pointnet2_ssg_seg_forward.17} parent=0 // loop_footer
    %s15 = sadd.s32 1, %s11
  $region7: #{pointnet2_ssg_seg_forward.17} parent=0 // loop_footer_branch
    %10 = sbr.rel target = $region3
  $region8: #{pointnet2_ssg_seg_forward.17} parent=0 // loop_exit
    _

</llo_original>
